<compile_context>
chip_gen: v6e
topology: v6e:2x2x1
jax: 0.10.0
libtpu: 0.0.40
codegen_flags: <defaults>
</compile_context>

<pallas_src>
import jax
import jax.numpy as jnp
from jax import lax
from jax.experimental import pallas as pl
from jax.experimental.pallas import tpu as pltpu

BR = 128                    # per-branch output channels (fixed inside MCM3)
OUT_C = 4 * BR              # concat of 4 branches -> 512
_NEG = float(jnp.finfo(jnp.float32).min)   # -inf stand-in for maxpool padding


# --------------------------------------------------------------------------- #
# Kernel 1: all four branches for one (image, row-tile) grid step.
# --------------------------------------------------------------------------- #
def _branches_kernel(x_ref, wf_ref, bf_ref, w3_ref, b3_ref, w5_ref, b5_ref,
                     wm_ref, bm_ref, y_ref, sum_ref, sq_ref):
    _, hp4, W, Cin = x_ref.shape
    H = hp4 - 4
    TH = y_ref.shape[1]
    h = pl.program_id(1)
    r0 = h * TH                                     # first padded-domain row of tile

    # Halo window: padded-domain rows [r0, r0+TH+4) <-> image rows r0-2 .. r0+TH+1.
    xw = x_ref[0, pl.ds(r0, TH + 4)]                # (TH+4, W, Cin) f32
    ridx = (r0 - 2) + lax.broadcasted_iota(jnp.int32, (TH + 4, 1, 1), 0)
    valid = jnp.logical_and(ridx >= 0, ridx < H)    # rows inside the image

    # ---- fused input-side 1x1 convs: [Branch1x1 | Branch3x3_1 | Branch5x5_1] ----
    xf = xw.reshape((TH + 4) * W, Cin).astype(jnp.bfloat16)
    u = jnp.dot(xf, wf_ref[...], preferred_element_type=jnp.float32) + bf_ref[...]
    u = u.reshape(TH + 4, W, 3 * BR)
    um = jnp.where(valid, u, jnp.float32(0.0))      # zero (not bias) outside image

    # ---- Branch 1: 1x1 conv -----------------------------------------------------
    br1 = um[2:2 + TH, :, 0:BR].reshape(TH * W, BR)
    y_ref[0, :, :, 0:BR] = br1.reshape(TH, W, BR).astype(y_ref.dtype)

    # ---- Branch 2: 3x3 conv (pad 1) — single im2col dot, K = 9*BR ----------------
    t3 = um[1:TH + 3, :, BR:2 * BR].astype(jnp.bfloat16)         # (TH+2, W, BR)
    t3p = jnp.pad(t3, ((0, 0), (1, 1), (0, 0)))                  # zero-pad W
    slab3 = jnp.concatenate([t3p[:, kw:kw + W, :] for kw in range(3)], axis=-1)
    x9 = jnp.concatenate([slab3[kh:kh + TH] for kh in range(3)], axis=-1)
    br2 = (jnp.dot(x9.reshape(TH * W, 9 * BR), w3_ref[...],
                   preferred_element_type=jnp.float32) + b3_ref[...])
    y_ref[0, :, :, BR:2 * BR] = br2.reshape(TH, W, BR).astype(y_ref.dtype)

    # ---- Branch 3: 5x5 conv (pad 2) — single im2col dot, K = 25*BR ---------------
    t5 = um[:, :, 2 * BR:3 * BR].astype(jnp.bfloat16)            # (TH+4, W, BR)
    t5p = jnp.pad(t5, ((0, 0), (2, 2), (0, 0)))
    slab5 = jnp.concatenate([t5p[:, kw:kw + W, :] for kw in range(5)], axis=-1)
    x25 = jnp.concatenate([slab5[kh:kh + TH] for kh in range(5)], axis=-1)
    br3 = (jnp.dot(x25.reshape(TH * W, 25 * BR), w5_ref[...],
                   preferred_element_type=jnp.float32) + b5_ref[...])
    y_ref[0, :, :, 2 * BR:3 * BR] = br3.reshape(TH, W, BR).astype(y_ref.dtype)

    # ---- Branch 4: separable 3x3 maxpool (s1, p1) -> 1x1 conv --------------------
    xm = jnp.where(valid[1:TH + 3], xw[1:TH + 3], jnp.float32(_NEG))  # (TH+2, W, Cin)
    xm = jnp.pad(xm, ((0, 0), (1, 1), (0, 0)), constant_values=_NEG)
    hmax = jnp.maximum(jnp.maximum(xm[:, 0:W, :], xm[:, 1:W + 1, :]),
                       xm[:, 2:W + 2, :])                            # (TH+2, W, Cin)
    mp = jnp.maximum(jnp.maximum(hmax[0:TH], hmax[1:TH + 1]), hmax[2:TH + 2])
    br4 = (jnp.dot(mp.reshape(TH * W, Cin).astype(jnp.bfloat16), wm_ref[...],
                   preferred_element_type=jnp.float32) + bm_ref[...])
    y_ref[0, :, :, 3 * BR:4 * BR] = br4.reshape(TH, W, BR).astype(y_ref.dtype)

    # ---- per-tile channel statistics for BatchNorm (from live f32 results) ------
    sum_ref[0, 0] = jnp.concatenate(
        [jnp.sum(b, axis=0, keepdims=True) for b in (br1, br2, br3, br4)], axis=-1)
    sq_ref[0, 0] = jnp.concatenate(
        [jnp.sum(b * b, axis=0, keepdims=True) for b in (br1, br2, br3, br4)], axis=-1)


# --------------------------------------------------------------------------- #
# Kernel 2: BN scale/shift + ReLU + fused NHWC->NCHW transpose (lane-dense store).
# --------------------------------------------------------------------------- #
def _bn_relu_kernel(scale_ref, shift_ref, y_ref, o_ref):
    _, th, w, c = y_ref.shape
    y = y_ref[0].reshape(th * w, c).astype(jnp.float32)
    z = jnp.maximum(y * scale_ref[...] + shift_ref[...], jnp.float32(0.0))
    o_ref[0] = jnp.transpose(z)                     # (OUT_C, th*w) — NCHW slab


def _largest_row_tile(H, W, max_pixels, lane_multiple=None):
    """Largest divisor th of H with th*W <= max_pixels (optionally th*W % lane_multiple == 0)."""
    for th in range(H, 0, -1):
        if H % th:
            continue
        if th * W > max_pixels:
            continue
        if lane_multiple is not None and (th * W) % lane_multiple:
            continue
        return th
    return None


def mcm3_forward(x_nchw, params):
    N, Cin, H, W = x_nchw.shape

    # NCHW -> NHWC plus a 2-row zero halo (tiny: x has only Cin channels vs 512 out).
    x = jnp.transpose(x_nchw, (0, 2, 3, 1)).astype(jnp.float32)
    x = jnp.pad(x, ((0, 0), (2, 2), (0, 0), (0, 0)))               # (N, H+4, W, Cin)

    # Fused input-side 1x1 weights (bf16 operands, f32 accumulation).
    wf = jnp.concatenate([params["w1"], params["w21"], params["w51"]],
                         axis=1).astype(jnp.bfloat16)
    bf = jnp.concatenate([params["b1"], params["b21"], params["b51"]], axis=1)
    wm = params["wm"].astype(jnp.bfloat16)

    # Kernel-1 row tile: M >= 256 per dot when possible, bounded so the
    # (TH*W, 25*BR) bf16 im2col slab + double-buffered blocks fit v7x VMEM.
    th1 = _largest_row_tile(H, W, max_pixels=1024) or H
    ht1 = H // th1

    def const_spec(shape):
        nd = len(shape)
        return pl.BlockSpec(shape, lambda n, h, _nd=nd: (0,) * _nd)

    flops = 2 * N * H * W * (Cin * 3 * BR + 9 * BR * BR + 25 * BR * BR + Cin * BR)
    bytes_accessed = (x.size * 4 + N * H * W * OUT_C * 2
                      + (wf.size + wm.size + params["w3"].size + params["w5"].size) * 2)

    y, s, sq = pl.pallas_call(
        _branches_kernel,
        out_shape=(jax.ShapeDtypeStruct((N, H, W, OUT_C), jnp.bfloat16),
                   jax.ShapeDtypeStruct((N, ht1, 1, OUT_C), jnp.float32),
                   jax.ShapeDtypeStruct((N, ht1, 1, OUT_C), jnp.float32)),
        grid=(N, ht1),
        in_specs=[
            pl.BlockSpec((1, H + 4, W, Cin), lambda n, h: (n, 0, 0, 0)),
            const_spec((Cin, 3 * BR)), const_spec((1, 3 * BR)),     # fused 1x1
            const_spec((9 * BR, BR)), const_spec((1, BR)),          # 3x3 im2col
            const_spec((25 * BR, BR)), const_spec((1, BR)),         # 5x5 im2col
            const_spec((Cin, BR)), const_spec((1, BR)),             # maxpool 1x1
        ],
        out_specs=(
            pl.BlockSpec((1, th1, W, OUT_C), lambda n, h: (n, h, 0, 0)),
            pl.BlockSpec((1, 1, 1, OUT_C), lambda n, h: (n, h, 0, 0)),
            pl.BlockSpec((1, 1, 1, OUT_C), lambda n, h: (n, h, 0, 0)),
        ),
        compiler_params=pltpu.CompilerParams(
            dimension_semantics=("parallel", "parallel"),
            vmem_limit_bytes=64 * 1024 * 1024),
        cost_estimate=pl.CostEstimate(flops=flops, transcendentals=0,
                                      bytes_accessed=bytes_accessed),
    )(x, wf, bf, params["w3"], params["b3"], params["w5"], params["b5"], wm,
      params["bm"])

    # BatchNorm constants (training-mode batch stats, eps=1e-3) — 512-element math
    # hoisted out of the per-tile kernel.
    cnt = jnp.float32(N * H * W)
    mean = jnp.sum(s, axis=(0, 1)) / cnt                  # (1, OUT_C)
    var = jnp.sum(sq, axis=(0, 1)) / cnt - mean * mean    # biased batch variance
    inv = lax.rsqrt(var + jnp.float32(1e-3))
    scale = params["gamma"] * inv
    shift = params["beta"] - mean * scale

    # Kernel-2 row tile: lane-dense transposed output (th*W multiple of 128 when
    # possible), block size well above the per-step-overhead regime.
    th2 = (_largest_row_tile(H, W, max_pixels=2048, lane_multiple=128)
           or _largest_row_tile(H, W, max_pixels=2048) or H)
    ht2 = H // th2

    out = pl.pallas_call(
        _bn_relu_kernel,
        out_shape=jax.ShapeDtypeStruct((N, OUT_C, H * W), jnp.float32),
        grid=(N, ht2),
        in_specs=[
            pl.BlockSpec((1, OUT_C), lambda n, h: (0, 0)),
            pl.BlockSpec((1, OUT_C), lambda n, h: (0, 0)),
            pl.BlockSpec((1, th2, W, OUT_C), lambda n, h: (n, h, 0, 0)),
        ],
        out_specs=pl.BlockSpec((1, OUT_C, th2 * W), lambda n, h: (n, 0, h)),
        compiler_params=pltpu.CompilerParams(
            dimension_semantics=("parallel", "parallel"),
            vmem_limit_bytes=32 * 1024 * 1024),
    )(scale, shift, y)

    # Transpose already happened in-kernel; this reshape moves no data.
    return out.reshape(N, OUT_C, H, W)


# --------------------------------------------------------------------------- #
# Parameters (PyTorch layout) + conversion to kernel layout + pure-JAX reference.
# --------------------------------------------------------------------------- #
def init_torch_params(key, in_channels):
    ks = jax.random.split(key, 12)

    def conv(k, cout, cin, ksz):
        return 0.05 * jax.random.normal(k, (cout, cin, ksz, ksz), jnp.float32)

    def bias(k, cout):
        return 0.05 * jax.random.normal(k, (cout,), jnp.float32)

    return dict(
        w1=conv(ks[0], BR, in_channels, 1),  b1=bias(ks[1], BR),
        w21=conv(ks[2], BR, in_channels, 1), b21=bias(ks[3], BR),
        w3=conv(ks[4], BR, BR, 3),           b3=bias(ks[5], BR),
        w51=conv(ks[6], BR, in_channels, 1), b51=bias(ks[7], BR),
        w5=conv(ks[8], BR, BR, 5),           b5=bias(ks[9], BR),
        wm=conv(ks[10], BR, in_channels, 1), bm=bias(ks[11], BR),
        gamma=jnp.ones((OUT_C,), jnp.float32),   # nn.BatchNorm2d default weight
        beta=jnp.zeros((OUT_C,), jnp.float32),   # nn.BatchNorm2d default bias
    )


def prepare_kernel_params(p):
    def c1x1(w):                        # (out, in, 1, 1) -> (in, out)
        return jnp.transpose(w[:, :, 0, 0], (1, 0))

    def im2col_w(w):                    # (out, in, kh, kw) -> (kh*kw*in, out) bf16
        ksz = w.shape[2]
        return (jnp.transpose(w, (2, 3, 1, 0))
                .reshape(ksz * ksz * w.shape[1], w.shape[0]).astype(jnp.bfloat16))

    def b2d(v):
        return v.reshape(1, -1)

    return dict(
        w1=c1x1(p["w1"]), b1=b2d(p["b1"]),
        w21=c1x1(p["w21"]), b21=b2d(p["b21"]),
        w3=im2col_w(p["w3"]), b3=b2d(p["b3"]),
        w51=c1x1(p["w51"]), b51=b2d(p["b51"]),
        w5=im2col_w(p["w5"]), b5=b2d(p["b5"]),
        wm=c1x1(p["wm"]), bm=b2d(p["bm"]),
        gamma=b2d(p["gamma"]), beta=b2d(p["beta"]),
    )


def mcm3_reference(x, p):
    """Pure-JAX (XLA) reference of the PyTorch forward (NCHW, f32)."""
    def conv(x, w, b, pad):
        y = lax.conv_general_dilated(x, w, (1, 1), ((pad, pad), (pad, pad)),
                                     dimension_numbers=("NCHW", "OIHW", "NCHW"),
                                     precision=lax.Precision.HIGHEST)
        return y + b.reshape(1, -1, 1, 1)

    br1 = conv(x, p["w1"], p["b1"], 0)
    br2 = conv(conv(x, p["w21"], p["b21"], 0), p["w3"], p["b3"], 1)
    br3 = conv(conv(x, p["w51"], p["b51"], 0), p["w5"], p["b5"], 2)
    mp = lax.reduce_window(x, -jnp.inf, lax.max, (1, 1, 3, 3), (1, 1, 1, 1),
                           ((0, 0), (0, 0), (1, 1), (1, 1)))
    br4 = conv(mp, p["wm"], p["bm"], 0)
    y = jnp.concatenate([br1, br2, br3, br4], axis=1)
    mean = jnp.mean(y, axis=(0, 2, 3), keepdims=True)
    var = jnp.mean((y - mean) ** 2, axis=(0, 2, 3), keepdims=True)
    yn = (y - mean) * lax.rsqrt(var + 1e-3)
    yn = yn * p["gamma"].reshape(1, -1, 1, 1) + p["beta"].reshape(1, -1, 1, 1)
    return jnp.maximum(yn, 0.0)


if __name__ == "__main__":
    key = jax.random.PRNGKey(0)
    kx, kp = jax.random.split(key)

    N, Cin, H, W = 2, 4, 16, 16                      # small NCHW input, in_channels=4
    x = jax.random.normal(kx, (N, Cin, H, W), jnp.float32)
    torch_params = init_torch_params(kp, Cin)
    kparams = prepare_kernel_params(torch_params)

    fwd = jax.jit(mcm3_forward)
    out = jax.block_until_ready(fwd(x, kparams))
    assert out.shape == (N, OUT_C, H, W)
    assert bool(jnp.all(out >= 0.0))                 # ReLU output

    ref = jax.block_until_ready(mcm3_reference(x, torch_params))
    err = float(jnp.max(jnp.abs(out - ref)))
    assert err < 1e-1, f"max abs err vs reference: {err}"   # bf16-operand tolerance
    print("KERNEL_OK")
</pallas_src>

<mosaic_0001>
module attributes {stable_mosaic.version = 11 : i64} {
  func.func @_bn_relu_kernel(%arg0: i32, %arg1: i32, %arg2: memref<1x512xf32, #tpu.memory_space<vmem>>, %arg3: memref<1x512xf32, #tpu.memory_space<vmem>>, %arg4: memref<1x16x16x512xbf16, #tpu.memory_space<vmem>>, %arg5: memref<1x512x256xf32, #tpu.memory_space<vmem>>) attributes {dimension_semantics = [#tpu.dimension_semantics<parallel>, #tpu.dimension_semantics<parallel>], iteration_bounds = array<i64: 2, 1>, scalar_prefetch = 0 : i64, scratch_operands = 0 : i64, tpu.core_type = #tpu.core_type<tc>, window_params = [{pipeline_mode = #tpu.pipeline_mode<synchronous>, transform_indices = @transform_0, window_bounds = array<i64: 1, 512>}, {pipeline_mode = #tpu.pipeline_mode<synchronous>, transform_indices = @transform_1, window_bounds = array<i64: 1, 512>}, {transform_indices = @transform_2, window_bounds = array<i64: 1, 16, 16, 512>}, {transform_indices = @transform_3, window_bounds = array<i64: 1, 512, 256>}]} {
    %c0 = arith.constant 0 : index
    %c0_0 = arith.constant 0 : index
    %c0_1 = arith.constant 0 : index
    %c0_2 = arith.constant 0 : index
    %0 = vector.load %arg4[%c0, %c0_0, %c0_1, %c0_2] : memref<1x16x16x512xbf16, #tpu.memory_space<vmem>>, vector<1x16x16x512xbf16>
    %1 = vector.shape_cast %0 : vector<1x16x16x512xbf16> to vector<16x16x512xbf16>
    %2 = vector.shape_cast %1 : vector<16x16x512xbf16> to vector<256x512xbf16>
    %3 = arith.extf %2 : vector<256x512xbf16> to vector<256x512xf32>
    %c0_3 = arith.constant 0 : index
    %c0_4 = arith.constant 0 : index
    %4 = vector.load %arg2[%c0_3, %c0_4] : memref<1x512xf32, #tpu.memory_space<vmem>>, vector<1x512xf32>
    %5 = vector.broadcast %4 : vector<1x512xf32> to vector<256x512xf32>
    %6 = arith.mulf %3, %5 : vector<256x512xf32>
    %c0_5 = arith.constant 0 : index
    %c0_6 = arith.constant 0 : index
    %7 = vector.load %arg3[%c0_5, %c0_6] : memref<1x512xf32, #tpu.memory_space<vmem>>, vector<1x512xf32>
    %8 = vector.broadcast %7 : vector<1x512xf32> to vector<256x512xf32>
    %9 = arith.addf %6, %8 : vector<256x512xf32>
    %cst = arith.constant 0.000000e+00 : f32
    %10 = vector.broadcast %cst : f32 to vector<256x512xf32>
    %11 = arith.maximumf %9, %10 : vector<256x512xf32>
    %12 = tpu.transpose %11, [1, 0] : vector<256x512xf32> -> vector<512x256xf32>
    %c0_7 = arith.constant 0 : index
    %c0_8 = arith.constant 0 : index
    %c0_9 = arith.constant 0 : index
    %13 = vector.load %arg5[%c0_7, %c0_8, %c0_9] : memref<1x512x256xf32, #tpu.memory_space<vmem>>, vector<1x512x256xf32>
    %14 = vector.shape_cast %13 : vector<1x512x256xf32> to vector<512x256xf32>
    %15 = vector.shape_cast %12 : vector<512x256xf32> to vector<1x512x256xf32>
    tpu.vector_store %arg5[%c0_7, %c0_8, %c0_9], %15 {strides = array<i32>} : memref<1x512x256xf32, #tpu.memory_space<vmem>>, vector<1x512x256xf32>,
    return
  }
  func.func @transform_0(%arg0: i32, %arg1: i32) -> (i32, i32) {
    %c0_i32 = arith.constant 0 : i32
    %c0_i32_0 = arith.constant 0 : i32
    %c0_i32_1 = arith.constant 0 : i32
    return %c0_i32, %c0_i32_0 : i32, i32
  }
  func.func @transform_1(%arg0: i32, %arg1: i32) -> (i32, i32) {
    %c0_i32 = arith.constant 0 : i32
    %c0_i32_0 = arith.constant 0 : i32
    %c0_i32_1 = arith.constant 0 : i32
    return %c0_i32, %c0_i32_0 : i32, i32
  }
  func.func @transform_2(%arg0: i32, %arg1: i32) -> (i32, i32, i32, i32) {
    %c0_i32 = arith.constant 0 : i32
    %c0_i32_0 = arith.constant 0 : i32
    %c0_i32_1 = arith.constant 0 : i32
    return %arg0, %arg1, %c0_i32, %c0_i32_0 : i32, i32, i32, i32
  }
  func.func @transform_3(%arg0: i32, %arg1: i32) -> (i32, i32, i32) {
    %c0_i32 = arith.constant 0 : i32
    %c0_i32_0 = arith.constant 0 : i32
    return %arg0, %c0_i32, %arg1 : i32, i32, i32
  }
}

module attributes {stable_mosaic.version = 11 : i64} {
  func.func @_branches_kernel(%arg0: i32, %arg1: i32, %arg2: memref<1x20x16x4xf32, #tpu.memory_space<vmem>>, %arg3: memref<4x384xbf16, #tpu.memory_space<vmem>>, %arg4: memref<1x384xf32, #tpu.memory_space<vmem>>, %arg5: memref<1152x128xbf16, #tpu.memory_space<vmem>>, %arg6: memref<1x128xf32, #tpu.memory_space<vmem>>, %arg7: memref<3200x128xbf16, #tpu.memory_space<vmem>>, %arg8: memref<1x128xf32, #tpu.memory_space<vmem>>, %arg9: memref<4x128xbf16, #tpu.memory_space<vmem>>, %arg10: memref<1x128xf32, #tpu.memory_space<vmem>>, %arg11: memref<1x16x16x512xbf16, #tpu.memory_space<vmem>>, %arg12: memref<1x1x1x512xf32, #tpu.memory_space<vmem>>, %arg13: memref<1x1x1x512xf32, #tpu.memory_space<vmem>>) attributes {dimension_semantics = [#tpu.dimension_semantics<parallel>, #tpu.dimension_semantics<parallel>], iteration_bounds = array<i64: 2, 1>, scalar_prefetch = 0 : i64, scratch_operands = 0 : i64, tpu.core_type = #tpu.core_type<tc>, window_params = [{transform_indices = @transform_0, window_bounds = array<i64: 1, 20, 16, 4>}, {pipeline_mode = #tpu.pipeline_mode<synchronous>, transform_indices = @transform_1, window_bounds = array<i64: 4, 384>}, {pipeline_mode = #tpu.pipeline_mode<synchronous>, transform_indices = @transform_2, window_bounds = array<i64: 1, 384>}, {pipeline_mode = #tpu.pipeline_mode<synchronous>, transform_indices = @transform_3, window_bounds = array<i64: 1152, 128>}, {pipeline_mode = #tpu.pipeline_mode<synchronous>, transform_indices = @transform_4, window_bounds = array<i64: 1, 128>}, {pipeline_mode = #tpu.pipeline_mode<synchronous>, transform_indices = @transform_5, window_bounds = array<i64: 3200, 128>}, {pipeline_mode = #tpu.pipeline_mode<synchronous>, transform_indices = @transform_6, window_bounds = array<i64: 1, 128>}, {pipeline_mode = #tpu.pipeline_mode<synchronous>, transform_indices = @transform_7, window_bounds = array<i64: 4, 128>}, {pipeline_mode = #tpu.pipeline_mode<synchronous>, transform_indices = @transform_8, window_bounds = array<i64: 1, 128>}, {transform_indices = @transform_9, window_bounds = array<i64: 1, 16, 16, 512>}, {transform_indices = @transform_10, window_bounds = array<i64: 1, 1, 1, 512>}, {transform_indices = @transform_11, window_bounds = array<i64: 1, 1, 1, 512>}]} {
    %c16_i32 = arith.constant 16 : i32
    %0 = arith.muli %arg1, %c16_i32 : i32
    %c0 = arith.constant 0 : index
    %1 = arith.index_cast %0 : i32 to index
    %c0_0 = arith.constant 0 : index
    %c0_1 = arith.constant 0 : index
    %2 = vector.load %arg2[%c0, %1, %c0_0, %c0_1] : memref<1x20x16x4xf32, #tpu.memory_space<vmem>>, vector<1x20x16x4xf32>
    %3 = vector.shape_cast %2 : vector<1x20x16x4xf32> to vector<20x16x4xf32>
    %c2_i32 = arith.constant 2 : i32
    %4 = arith.subi %0, %c2_i32 : i32
    %5 = tpu.iota {dimensions = array<i32: 0>} : vector<20x1x1xi32>
    %6 = vector.broadcast %4 : i32 to vector<20x1x1xi32>
    %7 = arith.addi %6, %5 : vector<20x1x1xi32>
    %c0_i32 = arith.constant 0 : i32
    %8 = vector.broadcast %c0_i32 : i32 to vector<20x1x1xi32>
    %9 = arith.cmpi sge, %7, %8 : vector<20x1x1xi32>
    %c16_i32_2 = arith.constant 16 : i32
    %10 = vector.broadcast %c16_i32_2 : i32 to vector<20x1x1xi32>
    %11 = arith.cmpi slt, %7, %10 : vector<20x1x1xi32>
    %12 = arith.andi %9, %11 : vector<20x1x1xi1>
    %13 = vector.shape_cast %3 : vector<20x16x4xf32> to vector<320x4xf32>
    %14 = arith.truncf %13 : vector<320x4xf32> to vector<320x4xbf16>
    %c0_3 = arith.constant 0 : index
    %c0_4 = arith.constant 0 : index
    %15 = vector.load %arg3[%c0_3, %c0_4] : memref<4x384xbf16, #tpu.memory_space<vmem>>, vector<4x384xbf16>
    %cst = arith.constant dense<0.000000e+00> : vector<320x384xf32>
    %16 = tpu.matmul %14, %15, %cst {dimension_numbers = #tpu.dot_dimension_numbers<[1], [0], [0], [1], [0, 0, 1, 1], [], []>} : vector<320x4xbf16>, vector<4x384xbf16>, vector<320x384xf32> -> vector<320x384xf32>
    %c0_5 = arith.constant 0 : index
    %c0_6 = arith.constant 0 : index
    %17 = vector.load %arg4[%c0_5, %c0_6] : memref<1x384xf32, #tpu.memory_space<vmem>>, vector<1x384xf32>
    %18 = vector.broadcast %17 : vector<1x384xf32> to vector<320x384xf32>
    %19 = arith.addf %16, %18 : vector<320x384xf32>
    %20 = vector.shape_cast %19 : vector<320x384xf32> to vector<20x16x384xf32>
    %cst_7 = arith.constant 0.000000e+00 : f32
    %21 = vector.shape_cast %12 : vector<20x1x1xi1> to vector<20x1x1xi1>
    %22 = vector.broadcast %21 : vector<20x1x1xi1> to vector<20x16x384xi1>
    %23 = vector.broadcast %cst_7 : f32 to vector<20x16x384xf32>
    %24 = arith.select %22, %20, %23 : vector<20x16x384xi1>, vector<20x16x384xf32>
    %25 = vector.extract_strided_slice %24 {offsets = [2, 0, 0], sizes = [16, 16, 128], strides = [1, 1, 1]} : vector<20x16x384xf32> to vector<16x16x128xf32>
    %26 = vector.shape_cast %25 : vector<16x16x128xf32> to vector<256x128xf32>
    %27 = vector.shape_cast %26 : vector<256x128xf32> to vector<16x16x128xf32>
    %28 = arith.truncf %27 : vector<16x16x128xf32> to vector<16x16x128xbf16>
    %c0_8 = arith.constant 0 : index
    %c0_9 = arith.constant 0 : index
    %c0_10 = arith.constant 0 : index
    %c0_11 = arith.constant 0 : index
    %29 = vector.load %arg11[%c0_8, %c0_9, %c0_10, %c0_11] : memref<1x16x16x512xbf16, #tpu.memory_space<vmem>>, vector<1x16x16x128xbf16>
    %30 = vector.shape_cast %29 : vector<1x16x16x128xbf16> to vector<16x16x128xbf16>
    %31 = vector.shape_cast %28 : vector<16x16x128xbf16> to vector<1x16x16x128xbf16>
    tpu.vector_store %arg11[%c0_8, %c0_9, %c0_10, %c0_11], %31 {strides = array<i32>} : memref<1x16x16x512xbf16, #tpu.memory_space<vmem>>, vector<1x16x16x128xbf16>,
    %32 = vector.extract_strided_slice %24 {offsets = [1, 0, 128], sizes = [18, 16, 128], strides = [1, 1, 1]} : vector<20x16x384xf32> to vector<18x16x128xf32>
    %33 = arith.truncf %32 : vector<18x16x128xf32> to vector<18x16x128xbf16>
    %c0_i32_12 = arith.constant 0 : i32
    %34 = arith.sitofp %c0_i32_12 : i32 to bf16
    %35 = vector.broadcast %34 : bf16 to vector<18x1x128xbf16>
    %36 = tpu.concatenate %35, %33 in 1 : vector<18x1x128xbf16>, vector<18x16x128xbf16> -> vector<18x17x128xbf16>
    %37 = vector.broadcast %34 : bf16 to vector<18x1x128xbf16>
    %38 = tpu.concatenate %36, %37 in 1 : vector<18x17x128xbf16>, vector<18x1x128xbf16> -> vector<18x18x128xbf16>
    %39 = vector.extract_strided_slice %38 {offsets = [0, 0, 0], sizes = [18, 16, 128], strides = [1, 1, 1]} : vector<18x18x128xbf16> to vector<18x16x128xbf16>
    %40 = vector.extract_strided_slice %38 {offsets = [0, 1, 0], sizes = [18, 16, 128], strides = [1, 1, 1]} : vector<18x18x128xbf16> to vector<18x16x128xbf16>
    %41 = vector.extract_strided_slice %38 {offsets = [0, 2, 0], sizes = [18, 16, 128], strides = [1, 1, 1]} : vector<18x18x128xbf16> to vector<18x16x128xbf16>
    %42 = tpu.concatenate %39, %40, %41 in 2 : vector<18x16x128xbf16>, vector<18x16x128xbf16>, vector<18x16x128xbf16> -> vector<18x16x384xbf16>
    %43 = vector.extract_strided_slice %42 {offsets = [0, 0, 0], sizes = [16, 16, 384], strides = [1, 1, 1]} : vector<18x16x384xbf16> to vector<16x16x384xbf16>
    %44 = vector.extract_strided_slice %42 {offsets = [1, 0, 0], sizes = [16, 16, 384], strides = [1, 1, 1]} : vector<18x16x384xbf16> to vector<16x16x384xbf16>
    %45 = vector.extract_strided_slice %42 {offsets = [2, 0, 0], sizes = [16, 16, 384], strides = [1, 1, 1]} : vector<18x16x384xbf16> to vector<16x16x384xbf16>
    %46 = tpu.concatenate %43, %44, %45 in 2 : vector<16x16x384xbf16>, vector<16x16x384xbf16>, vector<16x16x384xbf16> -> vector<16x16x1152xbf16>
    %47 = vector.shape_cast %46 : vector<16x16x1152xbf16> to vector<256x1152xbf16>
    %c0_13 = arith.constant 0 : index
    %c0_14 = arith.constant 0 : index
    %48 = vector.load %arg5[%c0_13, %c0_14] : memref<1152x128xbf16, #tpu.memory_space<vmem>>, vector<1152x128xbf16>
    %cst_15 = arith.constant dense<0.000000e+00> : vector<256x128xf32>
    %49 = tpu.matmul %47, %48, %cst_15 {dimension_numbers = #tpu.dot_dimension_numbers<[1], [0], [0], [1], [0, 0, 1, 1], [], []>} : vector<256x1152xbf16>, vector<1152x128xbf16>, vector<256x128xf32> -> vector<256x128xf32>
    %c0_16 = arith.constant 0 : index
    %c0_17 = arith.constant 0 : index
    %50 = vector.load %arg6[%c0_16, %c0_17] : memref<1x128xf32, #tpu.memory_space<vmem>>, vector<1x128xf32>
    %51 = vector.broadcast %50 : vector<1x128xf32> to vector<256x128xf32>
    %52 = arith.addf %49, %51 : vector<256x128xf32>
    %53 = vector.shape_cast %52 : vector<256x128xf32> to vector<16x16x128xf32>
    %54 = arith.truncf %53 : vector<16x16x128xf32> to vector<16x16x128xbf16>
    %c0_18 = arith.constant 0 : index
    %c0_19 = arith.constant 0 : index
    %c0_20 = arith.constant 0 : index
    %c128 = arith.constant 128 : index
    %55 = vector.load %arg11[%c0_18, %c0_19, %c0_20, %c128] : memref<1x16x16x512xbf16, #tpu.memory_space<vmem>>, vector<1x16x16x128xbf16>
    %56 = vector.shape_cast %55 : vector<1x16x16x128xbf16> to vector<16x16x128xbf16>
    %57 = vector.shape_cast %54 : vector<16x16x128xbf16> to vector<1x16x16x128xbf16>
    tpu.vector_store %arg11[%c0_18, %c0_19, %c0_20, %c128], %57 {strides = array<i32>} : memref<1x16x16x512xbf16, #tpu.memory_space<vmem>>, vector<1x16x16x128xbf16>,
    %58 = vector.extract_strided_slice %24 {offsets = [0, 0, 256], sizes = [20, 16, 128], strides = [1, 1, 1]} : vector<20x16x384xf32> to vector<20x16x128xf32>
    %59 = arith.truncf %58 : vector<20x16x128xf32> to vector<20x16x128xbf16>
    %c0_i32_21 = arith.constant 0 : i32
    %60 = arith.sitofp %c0_i32_21 : i32 to bf16
    %61 = vector.broadcast %60 : bf16 to vector<20x2x128xbf16>
    %62 = tpu.concatenate %61, %59 in 1 : vector<20x2x128xbf16>, vector<20x16x128xbf16> -> vector<20x18x128xbf16>
    %63 = vector.broadcast %60 : bf16 to vector<20x2x128xbf16>
    %64 = tpu.concatenate %62, %63 in 1 : vector<20x18x128xbf16>, vector<20x2x128xbf16> -> vector<20x20x128xbf16>
    %65 = vector.extract_strided_slice %64 {offsets = [0, 0, 0], sizes = [20, 16, 128], strides = [1, 1, 1]} : vector<20x20x128xbf16> to vector<20x16x128xbf16>
    %66 = vector.extract_strided_slice %64 {offsets = [0, 1, 0], sizes = [20, 16, 128], strides = [1, 1, 1]} : vector<20x20x128xbf16> to vector<20x16x128xbf16>
    %67 = vector.extract_strided_slice %64 {offsets = [0, 2, 0], sizes = [20, 16, 128], strides = [1, 1, 1]} : vector<20x20x128xbf16> to vector<20x16x128xbf16>
    %68 = vector.extract_strided_slice %64 {offsets = [0, 3, 0], sizes = [20, 16, 128], strides = [1, 1, 1]} : vector<20x20x128xbf16> to vector<20x16x128xbf16>
    %69 = vector.extract_strided_slice %64 {offsets = [0, 4, 0], sizes = [20, 16, 128], strides = [1, 1, 1]} : vector<20x20x128xbf16> to vector<20x16x128xbf16>
    %70 = tpu.concatenate %65, %66, %67, %68, %69 in 2 : vector<20x16x128xbf16>, vector<20x16x128xbf16>, vector<20x16x128xbf16>, vector<20x16x128xbf16>, vector<20x16x128xbf16> -> vector<20x16x640xbf16>
    %71 = vector.extract_strided_slice %70 {offsets = [0, 0, 0], sizes = [16, 16, 640], strides = [1, 1, 1]} : vector<20x16x640xbf16> to vector<16x16x640xbf16>
    %72 = vector.extract_strided_slice %70 {offsets = [1, 0, 0], sizes = [16, 16, 640], strides = [1, 1, 1]} : vector<20x16x640xbf16> to vector<16x16x640xbf16>
    %73 = vector.extract_strided_slice %70 {offsets = [2, 0, 0], sizes = [16, 16, 640], strides = [1, 1, 1]} : vector<20x16x640xbf16> to vector<16x16x640xbf16>
    %74 = vector.extract_strided_slice %70 {offsets = [3, 0, 0], sizes = [16, 16, 640], strides = [1, 1, 1]} : vector<20x16x640xbf16> to vector<16x16x640xbf16>
    %75 = vector.extract_strided_slice %70 {offsets = [4, 0, 0], sizes = [16, 16, 640], strides = [1, 1, 1]} : vector<20x16x640xbf16> to vector<16x16x640xbf16>
    %76 = tpu.concatenate %71, %72, %73, %74, %75 in 2 : vector<16x16x640xbf16>, vector<16x16x640xbf16>, vector<16x16x640xbf16>, vector<16x16x640xbf16>, vector<16x16x640xbf16> -> vector<16x16x3200xbf16>
    %77 = vector.shape_cast %76 : vector<16x16x3200xbf16> to vector<256x3200xbf16>
    %c0_22 = arith.constant 0 : index
    %c0_23 = arith.constant 0 : index
    %78 = vector.load %arg7[%c0_22, %c0_23] : memref<3200x128xbf16, #tpu.memory_space<vmem>>, vector<3200x128xbf16>
    %cst_24 = arith.constant dense<0.000000e+00> : vector<256x128xf32>
    %79 = tpu.matmul %77, %78, %cst_24 {dimension_numbers = #tpu.dot_dimension_numbers<[1], [0], [0], [1], [0, 0, 1, 1], [], []>} : vector<256x3200xbf16>, vector<3200x128xbf16>, vector<256x128xf32> -> vector<256x128xf32>
    %c0_25 = arith.constant 0 : index
    %c0_26 = arith.constant 0 : index
    %80 = vector.load %arg8[%c0_25, %c0_26] : memref<1x128xf32, #tpu.memory_space<vmem>>, vector<1x128xf32>
    %81 = vector.broadcast %80 : vector<1x128xf32> to vector<256x128xf32>
    %82 = arith.addf %79, %81 : vector<256x128xf32>
    %83 = vector.shape_cast %82 : vector<256x128xf32> to vector<16x16x128xf32>
    %84 = arith.truncf %83 : vector<16x16x128xf32> to vector<16x16x128xbf16>
    %c0_27 = arith.constant 0 : index
    %c0_28 = arith.constant 0 : index
    %c0_29 = arith.constant 0 : index
    %c256 = arith.constant 256 : index
    %85 = vector.load %arg11[%c0_27, %c0_28, %c0_29, %c256] : memref<1x16x16x512xbf16, #tpu.memory_space<vmem>>, vector<1x16x16x128xbf16>
    %86 = vector.shape_cast %85 : vector<1x16x16x128xbf16> to vector<16x16x128xbf16>
    %87 = vector.shape_cast %84 : vector<16x16x128xbf16> to vector<1x16x16x128xbf16>
    tpu.vector_store %arg11[%c0_27, %c0_28, %c0_29, %c256], %87 {strides = array<i32>} : memref<1x16x16x512xbf16, #tpu.memory_space<vmem>>, vector<1x16x16x128xbf16>,
    %88 = vector.extract_strided_slice %12 {offsets = [1, 0, 0], sizes = [18, 1, 1], strides = [1, 1, 1]} : vector<20x1x1xi1> to vector<18x1x1xi1>
    %89 = vector.extract_strided_slice %3 {offsets = [1, 0, 0], sizes = [18, 16, 4], strides = [1, 1, 1]} : vector<20x16x4xf32> to vector<18x16x4xf32>
    %cst_30 = arith.constant -3.40282347E+38 : f32
    %90 = vector.shape_cast %88 : vector<18x1x1xi1> to vector<18x1x1xi1>
    %91 = vector.broadcast %90 : vector<18x1x1xi1> to vector<18x16x4xi1>
    %92 = vector.broadcast %cst_30 : f32 to vector<18x16x4xf32>
    %93 = arith.select %91, %89, %92 : vector<18x16x4xi1>, vector<18x16x4xf32>
    %cst_31 = arith.constant -3.40282347E+38 : f32
    %94 = vector.broadcast %cst_31 : f32 to vector<18x1x4xf32>
    %95 = tpu.concatenate %94, %93 in 1 : vector<18x1x4xf32>, vector<18x16x4xf32> -> vector<18x17x4xf32>
    %96 = vector.broadcast %cst_31 : f32 to vector<18x1x4xf32>
    %97 = tpu.concatenate %95, %96 in 1 : vector<18x17x4xf32>, vector<18x1x4xf32> -> vector<18x18x4xf32>
    %98 = vector.extract_strided_slice %97 {offsets = [0, 0, 0], sizes = [18, 16, 4], strides = [1, 1, 1]} : vector<18x18x4xf32> to vector<18x16x4xf32>
    %99 = vector.extract_strided_slice %97 {offsets = [0, 1, 0], sizes = [18, 16, 4], strides = [1, 1, 1]} : vector<18x18x4xf32> to vector<18x16x4xf32>
    %100 = arith.maximumf %98, %99 : vector<18x16x4xf32>
    %101 = vector.extract_strided_slice %97 {offsets = [0, 2, 0], sizes = [18, 16, 4], strides = [1, 1, 1]} : vector<18x18x4xf32> to vector<18x16x4xf32>
    %102 = arith.maximumf %100, %101 : vector<18x16x4xf32>
    %103 = vector.extract_strided_slice %102 {offsets = [0, 0, 0], sizes = [16, 16, 4], strides = [1, 1, 1]} : vector<18x16x4xf32> to vector<16x16x4xf32>
    %104 = vector.extract_strided_slice %102 {offsets = [1, 0, 0], sizes = [16, 16, 4], strides = [1, 1, 1]} : vector<18x16x4xf32> to vector<16x16x4xf32>
    %105 = arith.maximumf %103, %104 : vector<16x16x4xf32>
    %106 = vector.extract_strided_slice %102 {offsets = [2, 0, 0], sizes = [16, 16, 4], strides = [1, 1, 1]} : vector<18x16x4xf32> to vector<16x16x4xf32>
    %107 = arith.maximumf %105, %106 : vector<16x16x4xf32>
    %108 = vector.shape_cast %107 : vector<16x16x4xf32> to vector<256x4xf32>
    %109 = arith.truncf %108 : vector<256x4xf32> to vector<256x4xbf16>
    %c0_32 = arith.constant 0 : index
    %c0_33 = arith.constant 0 : index
    %110 = vector.load %arg9[%c0_32, %c0_33] : memref<4x128xbf16, #tpu.memory_space<vmem>>, vector<4x128xbf16>
    %cst_34 = arith.constant dense<0.000000e+00> : vector<256x128xf32>
    %111 = tpu.matmul %109, %110, %cst_34 {dimension_numbers = #tpu.dot_dimension_numbers<[1], [0], [0], [1], [0, 0, 1, 1], [], []>} : vector<256x4xbf16>, vector<4x128xbf16>, vector<256x128xf32> -> vector<256x128xf32>
    %c0_35 = arith.constant 0 : index
    %c0_36 = arith.constant 0 : index
    %112 = vector.load %arg10[%c0_35, %c0_36] : memref<1x128xf32, #tpu.memory_space<vmem>>, vector<1x128xf32>
    %113 = vector.broadcast %112 : vector<1x128xf32> to vector<256x128xf32>
    %114 = arith.addf %111, %113 : vector<256x128xf32>
    %115 = vector.shape_cast %114 : vector<256x128xf32> to vector<16x16x128xf32>
    %116 = arith.truncf %115 : vector<16x16x128xf32> to vector<16x16x128xbf16>
    %c0_37 = arith.constant 0 : index
    %c0_38 = arith.constant 0 : index
    %c0_39 = arith.constant 0 : index
    %c384 = arith.constant 384 : index
    %117 = vector.load %arg11[%c0_37, %c0_38, %c0_39, %c384] : memref<1x16x16x512xbf16, #tpu.memory_space<vmem>>, vector<1x16x16x128xbf16>
    %118 = vector.shape_cast %117 : vector<1x16x16x128xbf16> to vector<16x16x128xbf16>
    %119 = vector.shape_cast %116 : vector<16x16x128xbf16> to vector<1x16x16x128xbf16>
    tpu.vector_store %arg11[%c0_37, %c0_38, %c0_39, %c384], %119 {strides = array<i32>} : memref<1x16x16x512xbf16, #tpu.memory_space<vmem>>, vector<1x16x16x128xbf16>,
    %cst_40 = arith.constant dense<0.000000e+00> : vector<128xf32>
    %120 = vector.multi_reduction <add>, %26, %cst_40 [0] : vector<256x128xf32> to vector<128xf32>
    %121 = vector.shape_cast %120 : vector<128xf32> to vector<1x128xf32>
    %cst_41 = arith.constant dense<0.000000e+00> : vector<128xf32>
    %122 = vector.multi_reduction <add>, %52, %cst_41 [0] : vector<256x128xf32> to vector<128xf32>
    %123 = vector.shape_cast %122 : vector<128xf32> to vector<1x128xf32>
    %cst_42 = arith.constant dense<0.000000e+00> : vector<128xf32>
    %124 = vector.multi_reduction <add>, %82, %cst_42 [0] : vector<256x128xf32> to vector<128xf32>
    %125 = vector.shape_cast %124 : vector<128xf32> to vector<1x128xf32>
    %cst_43 = arith.constant dense<0.000000e+00> : vector<128xf32>
    %126 = vector.multi_reduction <add>, %114, %cst_43 [0] : vector<256x128xf32> to vector<128xf32>
    %127 = vector.shape_cast %126 : vector<128xf32> to vector<1x128xf32>
    %128 = tpu.concatenate %121, %123, %125, %127 in 1 : vector<1x128xf32>, vector<1x128xf32>, vector<1x128xf32>, vector<1x128xf32> -> vector<1x512xf32>
    %c0_44 = arith.constant 0 : index
    %c0_45 = arith.constant 0 : index
    %c0_46 = arith.constant 0 : index
    %c0_47 = arith.constant 0 : index
    %129 = vector.load %arg12[%c0_44, %c0_45, %c0_46, %c0_47] : memref<1x1x1x512xf32, #tpu.memory_space<vmem>>, vector<1x1x1x512xf32>
    %130 = vector.shape_cast %129 : vector<1x1x1x512xf32> to vector<1x512xf32>
    %131 = vector.shape_cast %128 : vector<1x512xf32> to vector<1x1x1x512xf32>
    tpu.vector_store %arg12[%c0_44, %c0_45, %c0_46, %c0_47], %131 {strides = array<i32>} : memref<1x1x1x512xf32, #tpu.memory_space<vmem>>, vector<1x1x1x512xf32>,
    %132 = arith.mulf %26, %26 : vector<256x128xf32>
    %cst_48 = arith.constant dense<0.000000e+00> : vector<128xf32>
    %133 = vector.multi_reduction <add>, %132, %cst_48 [0] : vector<256x128xf32> to vector<128xf32>
    %134 = vector.shape_cast %133 : vector<128xf32> to vector<1x128xf32>
    %135 = arith.mulf %52, %52 : vector<256x128xf32>
    %cst_49 = arith.constant dense<0.000000e+00> : vector<128xf32>
    %136 = vector.multi_reduction <add>, %135, %cst_49 [0] : vector<256x128xf32> to vector<128xf32>
    %137 = vector.shape_cast %136 : vector<128xf32> to vector<1x128xf32>
    %138 = arith.mulf %82, %82 : vector<256x128xf32>
    %cst_50 = arith.constant dense<0.000000e+00> : vector<128xf32>
    %139 = vector.multi_reduction <add>, %138, %cst_50 [0] : vector<256x128xf32> to vector<128xf32>
    %140 = vector.shape_cast %139 : vector<128xf32> to vector<1x128xf32>
    %141 = arith.mulf %114, %114 : vector<256x128xf32>
    %cst_51 = arith.constant dense<0.000000e+00> : vector<128xf32>
    %142 = vector.multi_reduction <add>, %141, %cst_51 [0] : vector<256x128xf32> to vector<128xf32>
    %143 = vector.shape_cast %142 : vector<128xf32> to vector<1x128xf32>
    %144 = tpu.concatenate %134, %137, %140, %143 in 1 : vector<1x128xf32>, vector<1x128xf32>, vector<1x128xf32>, vector<1x128xf32> -> vector<1x512xf32>
    %c0_52 = arith.constant 0 : index
    %c0_53 = arith.constant 0 : index
    %c0_54 = arith.constant 0 : index
    %c0_55 = arith.constant 0 : index
    %145 = vector.load %arg13[%c0_52, %c0_53, %c0_54, %c0_55] : memref<1x1x1x512xf32, #tpu.memory_space<vmem>>, vector<1x1x1x512xf32>
    %146 = vector.shape_cast %145 : vector<1x1x1x512xf32> to vector<1x512xf32>
    %147 = vector.shape_cast %144 : vector<1x512xf32> to vector<1x1x1x512xf32>
    tpu.vector_store %arg13[%c0_52, %c0_53, %c0_54, %c0_55], %147 {strides = array<i32>} : memref<1x1x1x512xf32, #tpu.memory_space<vmem>>, vector<1x1x1x512xf32>,
    return
  }
  func.func @transform_0(%arg0: i32, %arg1: i32) -> (i32, i32, i32, i32) {
    %c0_i32 = arith.constant 0 : i32
    %c0_i32_0 = arith.constant 0 : i32
    %c0_i32_1 = arith.constant 0 : i32
    %c0_i32_2 = arith.constant 0 : i32
    return %arg0, %c0_i32, %c0_i32_0, %c0_i32_1 : i32, i32, i32, i32
  }
  func.func @transform_1(%arg0: i32, %arg1: i32) -> (i32, i32) {
    %c0_i32 = arith.constant 0 : i32
    %c0_i32_0 = arith.constant 0 : i32
    %c0_i32_1 = arith.constant 0 : i32
    return %c0_i32, %c0_i32_0 : i32, i32
  }
  func.func @transform_2(%arg0: i32, %arg1: i32) -> (i32, i32) {
    %c0_i32 = arith.constant 0 : i32
    %c0_i32_0 = arith.constant 0 : i32
    %c0_i32_1 = arith.constant 0 : i32
    return %c0_i32, %c0_i32_0 : i32, i32
  }
  func.func @transform_3(%arg0: i32, %arg1: i32) -> (i32, i32) {
    %c0_i32 = arith.constant 0 : i32
    %c0_i32_0 = arith.constant 0 : i32
    %c0_i32_1 = arith.constant 0 : i32
    return %c0_i32, %c0_i32_0 : i32, i32
  }
  func.func @transform_4(%arg0: i32, %arg1: i32) -> (i32, i32) {
    %c0_i32 = arith.constant 0 : i32
    %c0_i32_0 = arith.constant 0 : i32
    %c0_i32_1 = arith.constant 0 : i32
    return %c0_i32, %c0_i32_0 : i32, i32
  }
  func.func @transform_5(%arg0: i32, %arg1: i32) -> (i32, i32) {
    %c0_i32 = arith.constant 0 : i32
    %c0_i32_0 = arith.constant 0 : i32
    %c0_i32_1 = arith.constant 0 : i32
    return %c0_i32, %c0_i32_0 : i32, i32
  }
  func.func @transform_6(%arg0: i32, %arg1: i32) -> (i32, i32) {
    %c0_i32 = arith.constant 0 : i32
    %c0_i32_0 = arith.constant 0 : i32
    %c0_i32_1 = arith.constant 0 : i32
    return %c0_i32, %c0_i32_0 : i32, i32
  }
  func.func @transform_7(%arg0: i32, %arg1: i32) -> (i32, i32) {
    %c0_i32 = arith.constant 0 : i32
    %c0_i32_0 = arith.constant 0 : i32
    %c0_i32_1 = arith.constant 0 : i32
    return %c0_i32, %c0_i32_0 : i32, i32
  }
  func.func @transform_8(%arg0: i32, %arg1: i32) -> (i32, i32) {
    %c0_i32 = arith.constant 0 : i32
    %c0_i32_0 = arith.constant 0 : i32
    %c0_i32_1 = arith.constant 0 : i32
    return %c0_i32, %c0_i32_0 : i32, i32
  }
  func.func @transform_9(%arg0: i32, %arg1: i32) -> (i32, i32, i32, i32) {
    %c0_i32 = arith.constant 0 : i32
    %c0_i32_0 = arith.constant 0 : i32
    %c0_i32_1 = arith.constant 0 : i32
    return %arg0, %arg1, %c0_i32, %c0_i32_0 : i32, i32, i32, i32
  }
  func.func @transform_10(%arg0: i32, %arg1: i32) -> (i32, i32, i32, i32) {
    %c0_i32 = arith.constant 0 : i32
    %c0_i32_0 = arith.constant 0 : i32
    %c0_i32_1 = arith.constant 0 : i32
    return %arg0, %arg1, %c0_i32, %c0_i32_0 : i32, i32, i32, i32
  }
  func.func @transform_11(%arg0: i32, %arg1: i32) -> (i32, i32, i32, i32) {
    %c0_i32 = arith.constant 0 : i32
    %c0_i32_0 = arith.constant 0 : i32
    %c0_i32_1 = arith.constant 0 : i32
    return %arg0, %arg1, %c0_i32, %c0_i32_0 : i32, i32, i32, i32
  }
}

</mosaic_0001>

<llo_original>
// kernel: mcm3_forward.3
$region0: #{mcm3_forward.3}
  #allocation0 [shape = 'u32[]', space=smem, size = 0x4, offset = 0x4, fixed_abs, tag = 'smem constant byte address 0x4 - core index']
  #allocation1 [shape = 'u32[144,128]{1,0:T(1,128)}', space=vmem, size = 0x12000, scoped, tag = 'internal scratch']
  %s0 = inlined_call_operand.vmem [shape: f32[1,512], index: 0, kind: input, shape index: {}]
  %s1 = inlined_call_operand.vmem [shape: f32[1,512], index: 1, kind: input, shape index: {}]
  %s2 = inlined_call_operand.vmem [shape: bf16[2,16,16,512], index: 2, kind: input, shape index: {}]
  %s3 = inlined_call_operand.vmem [shape: f32[2,512,256], index: 3, kind: output, shape index: {}]
  %s4 = sld [smem:[#allocation0]]
  $region45: #{mcm3_forward.3} parent=0
    _
  %s6 = ssub.s32 1, %s4
  %s7 = scalar_select 0, %s6, %s4
  loop: start=0, step=1, limit=4
  $region2: #{mcm3_forward.3} parent=0 // loop_pre_header
    _
  $region3: #{mcm3_forward.3} parent=0 // loop_header
    %s9 = sphi 0, %s13
    %p10 = scmp.ge.s32.totalorder %s9, 4
    %s16 = sphi 0, %s28
    %s17 = sphi 0, %s24
    %s18 = sphi 0, %s16
    %s19 = sphi 0, %s17
    %s20 = sphi 0, %s18
    %s21 = sphi 0, %s19
    %s29 = sphi 0, %s29
    %s31 = sphi 0, %s29
    %s32 = sphi 0, %s31
    %s46 = sphi 0, %s32
    %s50 = sphi 0, %s50
    %s52 = sphi 0, %s50
    %s53 = sphi 0, %s52
    %s67 = sphi 0, %s53
    %s75 = sphi 0, %s77
    %s78 = sphi 0, %s75
    %s79 = sphi 0, %s78
    %s95 = sphi 0, %s79
    %s103 = sphi 0, %s105
    %s106 = sphi 0, %s103
    %s107 = sphi 0, %s106
    %s123 = sphi 0, %s107
  $region4: #{mcm3_forward.3} parent=0 // loop_header_branch
    %12 = sbr.rel (%p10) target = $region8
  $region5: #{mcm3_forward.3} parent=0 // loop_body
    %s14 = ssub.s32 %s9, 1
    %s15 = ssub.s32 %s9, 2
    %s22 = sadd.s32 1, %s17
    %p23 = scmp.ge.s32.totalorder %s22, 1
    %s24 = scalar_select %p23, 0, %s22
    %s25 = sadd.s32 1, %s16
    %s26 = scalar_select %p23, %s25, %s16
    %p27 = scmp.ge.s32.totalorder %s26, 2
    %s28 = scalar_select %p27, 0, %s26
    %s30 = sadd.s32 %s29, 1
    %p33 = scmp.eq.s32.totalorder %s9, 1
    %p34 = scmp.ne.s32.totalorder %s29, %s31
    %p35 = scmp.eq.s32.totalorder %s9, 0
    %p36 = por %p34, %p35
    %p37 = scmp.ne.s32.totalorder %s29, %s31
    %p38 = scmp.eq.s32.totalorder %s14, 1
    %p39 = por %p37, %p38
    %p40 = scmp.ne.s32.totalorder %s31, %s32
    %p41 = scmp.eq.s32.totalorder %s14, 0
    %p42 = por %p40, %p41
    %p43 = scmp.ne.s32.totalorder %s31, %s32
    %p44 = scmp.eq.s32.totalorder %s15, 1
    %p45 = por %p43, %p44
    %p47 = scmp.ne.s32.totalorder %s32, %s46
    %p48 = scmp.eq.s32.totalorder %s15, 0
    %p49 = por %p47, %p48
    %s51 = sadd.s32 %s50, 1
    %p54 = scmp.eq.s32.totalorder %s9, 1
    %p55 = scmp.ne.s32.totalorder %s50, %s52
    %p56 = scmp.eq.s32.totalorder %s9, 0
    %p57 = por %p55, %p56
    %p58 = scmp.ne.s32.totalorder %s50, %s52
    %p59 = scmp.eq.s32.totalorder %s14, 1
    %p60 = por %p58, %p59
    %p61 = scmp.ne.s32.totalorder %s52, %s53
    %p62 = scmp.eq.s32.totalorder %s14, 0
    %p63 = por %p61, %p62
    %p64 = scmp.ne.s32.totalorder %s52, %s53
    %p65 = scmp.eq.s32.totalorder %s15, 1
    %p66 = por %p64, %p65
    %p68 = scmp.ne.s32.totalorder %s53, %s67
    %p69 = scmp.eq.s32.totalorder %s15, 0
    %p70 = por %p68, %p69
    %s71 = ssub.s32 %s16, %s28
    %s72 = ssub.s32 %s17, %s24
    %s73 = sor.u32 %s71, %s72
    %p74 = scmp.eq.s32.totalorder %s73, 0
    %s76 = sadd.s32 %s75, 1
    %s77 = scalar_select %p74, %s75, %s76
    %p80 = pneg %p74
    %p81 = scmp.eq.s32.totalorder %s9, 1
    %p82 = por %p80, %p81
    %p83 = scmp.ne.s32.totalorder %s75, %s78
    %p84 = scmp.eq.s32.totalorder %s9, 0
    %p85 = por %p83, %p84
    %p86 = scmp.ne.s32.totalorder %s75, %s78
    %p87 = scmp.eq.s32.totalorder %s14, 1
    %p88 = por %p86, %p87
    %p89 = scmp.ne.s32.totalorder %s78, %s79
    %p90 = scmp.eq.s32.totalorder %s14, 0
    %p91 = por %p89, %p90
    %p92 = scmp.ne.s32.totalorder %s78, %s79
    %p93 = scmp.eq.s32.totalorder %s15, 1
    %p94 = por %p92, %p93
    %p96 = scmp.ne.s32.totalorder %s79, %s95
    %p97 = scmp.eq.s32.totalorder %s15, 0
    %p98 = por %p96, %p97
    %s99 = ssub.s32 %s16, %s28
    %s100 = ssub.s32 %s17, %s24
    %s101 = sor.u32 %s99, %s100
    %p102 = scmp.eq.s32.totalorder %s101, 0
    %s104 = sadd.s32 %s103, 1
    %s105 = scalar_select %p102, %s103, %s104
    %p108 = pneg %p102
    %p109 = scmp.eq.s32.totalorder %s9, 1
    %p110 = por %p108, %p109
    %p111 = scmp.ne.s32.totalorder %s103, %s106
    %p112 = scmp.eq.s32.totalorder %s9, 0
    %p113 = por %p111, %p112
    %p114 = scmp.ne.s32.totalorder %s103, %s106
    %p115 = scmp.eq.s32.totalorder %s14, 1
    %p116 = por %p114, %p115
    %p117 = scmp.ne.s32.totalorder %s106, %s107
    %p118 = scmp.eq.s32.totalorder %s14, 0
    %p119 = por %p117, %p118
    %p120 = scmp.ne.s32.totalorder %s106, %s107
    %p121 = scmp.eq.s32.totalorder %s15, 1
    %p122 = por %p120, %p121
    %p124 = scmp.ne.s32.totalorder %s107, %s123
    %p125 = scmp.eq.s32.totalorder %s15, 0
    %p126 = por %p124, %p125
    %p127 = scmp.le.s32.totalorder 1, %s9
    %p128 = scmp.lt.s32.totalorder %s9, 3
    %p129 = pnand %p127, %p128
    %p130 = pneg %p129
    // Predicated region
    $region9: #{mcm3_forward.3} parent=5 // pred_check
      _
    $region10: #{mcm3_forward.3} parent=5 // pred_check_branch
      %132 = sbr.rel (%p129) target = $region12
    $region11: #{mcm3_forward.3} parent=5 // pred_region
      %s133 = ssub.s32 %s9, 1
      // Predicated region
      $region13: #{mcm3_forward.3} parent=11 // pred_check
        %p134 = pneg %p42
      $region14: #{mcm3_forward.3} parent=11 // pred_check_branch
        %136 = sbr.rel (%p134) target = $region16
      $region15: #{mcm3_forward.3} parent=11 // pred_region
        _
      $region16: #{mcm3_forward.3} parent=11 // pred_fallthru
        _
      // Predicated region
      $region17: #{mcm3_forward.3} parent=11 // pred_check
        %p137 = pneg %p63
      $region18: #{mcm3_forward.3} parent=11 // pred_check_branch
        %139 = sbr.rel (%p137) target = $region20
      $region19: #{mcm3_forward.3} parent=11 // pred_region
        _
      $region20: #{mcm3_forward.3} parent=11 // pred_fallthru
        _
    $region12: #{mcm3_forward.3} parent=5 // pred_fallthru
      _
    %p140 = scmp.lt.s32.totalorder %s9, 2
    // Predicated region
    $region21: #{mcm3_forward.3} parent=5 // pred_check
      %p141 = pneg %p140
    $region22: #{mcm3_forward.3} parent=5 // pred_check_branch
      %143 = sbr.rel (%p141) target = $region24
    $region23: #{mcm3_forward.3} parent=5 // pred_region
      // Predicated region
      $region25: #{mcm3_forward.3} parent=23 // pred_check
        %p144 = pneg %p85
      $region26: #{mcm3_forward.3} parent=23 // pred_check_branch
        %146 = sbr.rel (%p144) target = $region28
      $region27: #{mcm3_forward.3} parent=23 // pred_region
        %s147 = smul.u32 16, %s17
        %p148 = scmp.lt.s32.totalorder %s16, 1
        %s149 = scalar_select %p148, %s16, 1
        %p150 = scmp.lt.s32.totalorder %s147, 15
        %s151 = scalar_select %p150, %s147, 15
        %s152 = smul.addr %s151, 8
        %s153 = smul.addr %s149, 128
        %s154 = sadd.s32 %s152, %s153
        %s155 = smul.addr %s154, 4
        %s156 = scalar_lea.vmem %s2, %s155
        %s157 = smul.u32 16, %s17
      $region28: #{mcm3_forward.3} parent=23 // pred_fallthru
        _
    $region24: #{mcm3_forward.3} parent=5 // pred_fallthru
      _
    %p158 = scmp.le.s32.totalorder 1, %s9
    %p159 = scmp.lt.s32.totalorder %s9, 3
    %p160 = pnand %p158, %p159
    %p161 = pneg %p160
    // Predicated region
    $region29: #{mcm3_forward.3} parent=5 // pred_check
      _
    $region30: #{mcm3_forward.3} parent=5 // pred_check_branch
      %163 = sbr.rel (%p160) target = $region32
    $region31: #{mcm3_forward.3} parent=5 // pred_region
      %s164 = ssub.s32 %s9, 1
      %p165 = pneg %p42
      %p166 = pneg %p39
      %p167 = pneg %p63
      %p168 = pneg %p60
      %s169 = smul.u32 16, %s19
      %p170 = scmp.lt.s32.totalorder %s18, 1
      %s171 = scalar_select %p170, %s18, 1
      %p172 = scmp.lt.s32.totalorder %s169, 15
      %s173 = scalar_select %p172, %s169, 15
      %s174 = smul.addr %s173, 8
      %s175 = smul.addr %s171, 128
      %s176 = sadd.s32 %s174, %s175
      %s177 = smul.addr %s176, 4
      %s178 = scalar_lea.vmem %s2, %s177
      %p179 = pneg %p91
      %p180 = pneg %p88
      %p181 = pneg %p119
      %p182 = pneg %p116
      %s183 = smul.u32 2, %s19
      %p184 = scmp.lt.s32.totalorder %s18, 1
      %s185 = scalar_select %p184, %s18, 1
      %p186 = scmp.lt.s32.totalorder %s183, 1
      %s187 = scalar_select %p186, %s183, 1
      %s188 = smul.addr %s185, 128
      %s189 = sadd.s32 %s187, %s188
      %s190 = smul.addr %s189, 8
      %s191 = scalar_lea.vmem %s3, %s190
      %s192 = smul.u32 16, %s19
      %p193 = scmp.lt.s32.totalorder %s18, 1
      %s194 = scalar_select %p193, %s18, 1
      %p195 = scmp.lt.s32.totalorder %s192, 15
      %s196 = scalar_select %p195, %s192, 15
      %s197 = smul.addr %s196, 8
      %s198 = smul.addr %s194, 128
      %s199 = sadd.s32 %s197, %s198
      %s200 = smul.addr %s199, 4
      %s201 = scalar_lea.vmem %s2, %s200
      %s202 = smul.u32 16, %s19
      %s203 = smul.u32 2, %s19
      %p204 = scmp.lt.s32.totalorder %s18, 1
      %s205 = scalar_select %p204, %s18, 1
      %p206 = scmp.lt.s32.totalorder %s203, 1
      %s207 = scalar_select %p206, %s203, 1
      %s208 = smul.addr %s205, 128
      %s209 = sadd.s32 %s207, %s208
      %s210 = smul.addr %s209, 8
      %s211 = scalar_lea.vmem %s3, %s210
      %s212 = smul.u32 2, %s19
      %v213 = vld [vmem:[%s201] sm:$0xff]
      %v214 = vld [vmem:[%s201 + $0x8] sm:$0xff]
      %v215 = vld [vmem:[%s201 + $0x10] sm:$0xff]
      %v216 = vld [vmem:[%s201 + $0x18] sm:$0xff]
      %v217 = vld [vmem:[%s201 + $0x20] sm:$0xff]
      %v218 = vld [vmem:[%s201 + $0x28] sm:$0xff]
      %v219 = vld [vmem:[%s201 + $0x30] sm:$0xff]
      %v220 = vld [vmem:[%s201 + $0x38] sm:$0xff]
      %v221 = vld [vmem:[%s201 + $0x40] sm:$0xff]
      %v222 = vld [vmem:[%s201 + $0x48] sm:$0xff]
      %v223 = vld [vmem:[%s201 + $0x50] sm:$0xff]
      %v224 = vld [vmem:[%s201 + $0x58] sm:$0xff]
      %v225 = vld [vmem:[%s201 + $0x60] sm:$0xff]
      %v226 = vld [vmem:[%s201 + $0x68] sm:$0xff]
      %v227 = vld [vmem:[%s201 + $0x70] sm:$0xff]
      %v228 = vld [vmem:[%s201 + $0x78] sm:$0xff]
      %v229 = vld [vmem:[%s201 + $0x80] sm:$0xff]
      %v230 = vld [vmem:[%s201 + $0x88] sm:$0xff]
      %v231 = vld [vmem:[%s201 + $0x90] sm:$0xff]
      %v232 = vld [vmem:[%s201 + $0x98] sm:$0xff]
      %v233 = vld [vmem:[%s201 + $0xa0] sm:$0xff]
      %v234 = vld [vmem:[%s201 + $0xa8] sm:$0xff]
      %v235 = vld [vmem:[%s201 + $0xb0] sm:$0xff]
      %v236 = vld [vmem:[%s201 + $0xb8] sm:$0xff]
      %v237 = vld [vmem:[%s201 + $0xc0] sm:$0xff]
      %v238 = vld [vmem:[%s201 + $0xc8] sm:$0xff]
      %v239 = vld [vmem:[%s201 + $0xd0] sm:$0xff]
      %v240 = vld [vmem:[%s201 + $0xd8] sm:$0xff]
      %v241 = vld [vmem:[%s201 + $0xe0] sm:$0xff]
      %v242 = vld [vmem:[%s201 + $0xe8] sm:$0xff]
      %v243 = vld [vmem:[%s201 + $0xf0] sm:$0xff]
      %v244 = vld [vmem:[%s201 + $0xf8] sm:$0xff]
      %v245 = vld [vmem:[%s201 + $0x100] sm:$0xff]
      %v246 = vld [vmem:[%s201 + $0x108] sm:$0xff]
      %v247 = vld [vmem:[%s201 + $0x110] sm:$0xff]
      %v248 = vld [vmem:[%s201 + $0x118] sm:$0xff]
      %v249 = vld [vmem:[%s201 + $0x120] sm:$0xff]
      %v250 = vld [vmem:[%s201 + $0x128] sm:$0xff]
      %v251 = vld [vmem:[%s201 + $0x130] sm:$0xff]
      %v252 = vld [vmem:[%s201 + $0x138] sm:$0xff]
      %v253 = vld [vmem:[%s201 + $0x140] sm:$0xff]
      %v254 = vld [vmem:[%s201 + $0x148] sm:$0xff]
      %v255 = vld [vmem:[%s201 + $0x150] sm:$0xff]
      %v256 = vld [vmem:[%s201 + $0x158] sm:$0xff]
      %v257 = vld [vmem:[%s201 + $0x160] sm:$0xff]
      %v258 = vld [vmem:[%s201 + $0x168] sm:$0xff]
      %v259 = vld [vmem:[%s201 + $0x170] sm:$0xff]
      %v260 = vld [vmem:[%s201 + $0x178] sm:$0xff]
      %v261 = vld [vmem:[%s201 + $0x180] sm:$0xff]
      %v262 = vld [vmem:[%s201 + $0x188] sm:$0xff]
      %v263 = vld [vmem:[%s201 + $0x190] sm:$0xff]
      %v264 = vld [vmem:[%s201 + $0x198] sm:$0xff]
      %v265 = vld [vmem:[%s201 + $0x1a0] sm:$0xff]
      %v266 = vld [vmem:[%s201 + $0x1a8] sm:$0xff]
      %v267 = vld [vmem:[%s201 + $0x1b0] sm:$0xff]
      %v268 = vld [vmem:[%s201 + $0x1b8] sm:$0xff]
      %v269 = vld [vmem:[%s201 + $0x1c0] sm:$0xff]
      %v270 = vld [vmem:[%s201 + $0x1c8] sm:$0xff]
      %v271 = vld [vmem:[%s201 + $0x1d0] sm:$0xff]
      %v272 = vld [vmem:[%s201 + $0x1d8] sm:$0xff]
      %v273 = vld [vmem:[%s201 + $0x1e0] sm:$0xff]
      %v274 = vld [vmem:[%s201 + $0x1e8] sm:$0xff]
      %v275 = vld [vmem:[%s201 + $0x1f0] sm:$0xff]
      %v276 = vld [vmem:[%s201 + $0x1f8] sm:$0xff]
      %v277 = vunpack.c.l.bf16 %v213
      %v278 = vunpack.c.h.bf16 %v213
      %v279 = vunpack.c.l.bf16 %v214
      %v280 = vunpack.c.h.bf16 %v214
      %v281 = vunpack.c.l.bf16 %v215
      %v282 = vunpack.c.h.bf16 %v215
      %v283 = vunpack.c.l.bf16 %v216
      %v284 = vunpack.c.h.bf16 %v216
      %v285 = vunpack.c.l.bf16 %v217
      %v286 = vunpack.c.h.bf16 %v217
      %v287 = vunpack.c.l.bf16 %v218
      %v288 = vunpack.c.h.bf16 %v218
      %v289 = vunpack.c.l.bf16 %v219
      %v290 = vunpack.c.h.bf16 %v219
      %v291 = vunpack.c.l.bf16 %v220
      %v292 = vunpack.c.h.bf16 %v220
      %v293 = vunpack.c.l.bf16 %v221
      %v294 = vunpack.c.h.bf16 %v221
      %v295 = vunpack.c.l.bf16 %v222
      %v296 = vunpack.c.h.bf16 %v222
      %v297 = vunpack.c.l.bf16 %v223
      %v298 = vunpack.c.h.bf16 %v223
      %v299 = vunpack.c.l.bf16 %v224
      %v300 = vunpack.c.h.bf16 %v224
      %v301 = vunpack.c.l.bf16 %v225
      %v302 = vunpack.c.h.bf16 %v225
      %v303 = vunpack.c.l.bf16 %v226
      %v304 = vunpack.c.h.bf16 %v226
      %v305 = vunpack.c.l.bf16 %v227
      %v306 = vunpack.c.h.bf16 %v227
      %v307 = vunpack.c.l.bf16 %v228
      %v308 = vunpack.c.h.bf16 %v228
      %v309 = vunpack.c.l.bf16 %v229
      %v310 = vunpack.c.h.bf16 %v229
      %v311 = vunpack.c.l.bf16 %v230
      %v312 = vunpack.c.h.bf16 %v230
      %v313 = vunpack.c.l.bf16 %v231
      %v314 = vunpack.c.h.bf16 %v231
      %v315 = vunpack.c.l.bf16 %v232
      %v316 = vunpack.c.h.bf16 %v232
      %v317 = vunpack.c.l.bf16 %v233
      %v318 = vunpack.c.h.bf16 %v233
      %v319 = vunpack.c.l.bf16 %v234
      %v320 = vunpack.c.h.bf16 %v234
      %v321 = vunpack.c.l.bf16 %v235
      %v322 = vunpack.c.h.bf16 %v235
      %v323 = vunpack.c.l.bf16 %v236
      %v324 = vunpack.c.h.bf16 %v236
      %v325 = vunpack.c.l.bf16 %v237
      %v326 = vunpack.c.h.bf16 %v237
      %v327 = vunpack.c.l.bf16 %v238
      %v328 = vunpack.c.h.bf16 %v238
      %v329 = vunpack.c.l.bf16 %v239
      %v330 = vunpack.c.h.bf16 %v239
      %v331 = vunpack.c.l.bf16 %v240
      %v332 = vunpack.c.h.bf16 %v240
      %v333 = vunpack.c.l.bf16 %v241
      %v334 = vunpack.c.h.bf16 %v241
      %v335 = vunpack.c.l.bf16 %v242
      %v336 = vunpack.c.h.bf16 %v242
      %v337 = vunpack.c.l.bf16 %v243
      %v338 = vunpack.c.h.bf16 %v243
      %v339 = vunpack.c.l.bf16 %v244
      %v340 = vunpack.c.h.bf16 %v244
      %v341 = vunpack.c.l.bf16 %v245
      %v342 = vunpack.c.h.bf16 %v245
      %v343 = vunpack.c.l.bf16 %v246
      %v344 = vunpack.c.h.bf16 %v246
      %v345 = vunpack.c.l.bf16 %v247
      %v346 = vunpack.c.h.bf16 %v247
      %v347 = vunpack.c.l.bf16 %v248
      %v348 = vunpack.c.h.bf16 %v248
      %v349 = vunpack.c.l.bf16 %v249
      %v350 = vunpack.c.h.bf16 %v249
      %v351 = vunpack.c.l.bf16 %v250
      %v352 = vunpack.c.h.bf16 %v250
      %v353 = vunpack.c.l.bf16 %v251
      %v354 = vunpack.c.h.bf16 %v251
      %v355 = vunpack.c.l.bf16 %v252
      %v356 = vunpack.c.h.bf16 %v252
      %v357 = vunpack.c.l.bf16 %v253
      %v358 = vunpack.c.h.bf16 %v253
      %v359 = vunpack.c.l.bf16 %v254
      %v360 = vunpack.c.h.bf16 %v254
      %v361 = vunpack.c.l.bf16 %v255
      %v362 = vunpack.c.h.bf16 %v255
      %v363 = vunpack.c.l.bf16 %v256
      %v364 = vunpack.c.h.bf16 %v256
      %v365 = vunpack.c.l.bf16 %v257
      %v366 = vunpack.c.h.bf16 %v257
      %v367 = vunpack.c.l.bf16 %v258
      %v368 = vunpack.c.h.bf16 %v258
      %v369 = vunpack.c.l.bf16 %v259
      %v370 = vunpack.c.h.bf16 %v259
      %v371 = vunpack.c.l.bf16 %v260
      %v372 = vunpack.c.h.bf16 %v260
      %v373 = vunpack.c.l.bf16 %v261
      %v374 = vunpack.c.h.bf16 %v261
      %v375 = vunpack.c.l.bf16 %v262
      %v376 = vunpack.c.h.bf16 %v262
      %v377 = vunpack.c.l.bf16 %v263
      %v378 = vunpack.c.h.bf16 %v263
      %v379 = vunpack.c.l.bf16 %v264
      %v380 = vunpack.c.h.bf16 %v264
      %v381 = vunpack.c.l.bf16 %v265
      %v382 = vunpack.c.h.bf16 %v265
      %v383 = vunpack.c.l.bf16 %v266
      %v384 = vunpack.c.h.bf16 %v266
      %v385 = vunpack.c.l.bf16 %v267
      %v386 = vunpack.c.h.bf16 %v267
      %v387 = vunpack.c.l.bf16 %v268
      %v388 = vunpack.c.h.bf16 %v268
      %v389 = vunpack.c.l.bf16 %v269
      %v390 = vunpack.c.h.bf16 %v269
      %v391 = vunpack.c.l.bf16 %v270
      %v392 = vunpack.c.h.bf16 %v270
      %v393 = vunpack.c.l.bf16 %v271
      %v394 = vunpack.c.h.bf16 %v271
      %v395 = vunpack.c.l.bf16 %v272
      %v396 = vunpack.c.h.bf16 %v272
      %v397 = vunpack.c.l.bf16 %v273
      %v398 = vunpack.c.h.bf16 %v273
      %v399 = vunpack.c.l.bf16 %v274
      %v400 = vunpack.c.h.bf16 %v274
      %v401 = vunpack.c.l.bf16 %v275
      %v402 = vunpack.c.h.bf16 %v275
      %v403 = vunpack.c.l.bf16 %v276
      %v404 = vunpack.c.h.bf16 %v276
      %v405 = vld [vmem:[%s0] sm:$0xf]
      %v407 = vlaneseq
      %v408 = vshrl.u32 %v407, 7
      %v409 = vsub.s32 0, %v408
      %v410 = vrot.slane %v405, %v409
      %v411 = vlaneseq
      %v412 = vshrl.u32 %v411, 7
      %v413 = vsub.s32 1, %v412
      %v414 = vrot.slane %v405, %v413
      %v415 = vlaneseq
      %v416 = vshrl.u32 %v415, 7
      %v417 = vsub.s32 2, %v416
      %v418 = vrot.slane %v405, %v417
      %v419 = vlaneseq
      %v420 = vshrl.u32 %v419, 7
      %v421 = vsub.s32 3, %v420
      %v422 = vrot.slane %v405, %v421
      %v427 = vmul.f32 %v277, %v410
      %v428 = vmul.f32 %v278, %v414
      %v429 = vmul.f32 %v279, %v418
      %v430 = vmul.f32 %v280, %v422
      %v431 = vmul.f32 %v281, %v410
      %v432 = vmul.f32 %v282, %v414
      %v433 = vmul.f32 %v283, %v418
      %v434 = vmul.f32 %v284, %v422
      %v435 = vmul.f32 %v285, %v410
      %v436 = vmul.f32 %v286, %v414
      %v437 = vmul.f32 %v287, %v418
      %v438 = vmul.f32 %v288, %v422
      %v439 = vmul.f32 %v289, %v410
      %v440 = vmul.f32 %v290, %v414
      %v441 = vmul.f32 %v291, %v418
      %v442 = vmul.f32 %v292, %v422
      %v443 = vmul.f32 %v293, %v410
      %v444 = vmul.f32 %v294, %v414
      %v445 = vmul.f32 %v295, %v418
      %v446 = vmul.f32 %v296, %v422
      %v447 = vmul.f32 %v297, %v410
      %v448 = vmul.f32 %v298, %v414
      %v449 = vmul.f32 %v299, %v418
      %v450 = vmul.f32 %v300, %v422
      %v451 = vmul.f32 %v301, %v410
      %v452 = vmul.f32 %v302, %v414
      %v453 = vmul.f32 %v303, %v418
      %v454 = vmul.f32 %v304, %v422
      %v455 = vmul.f32 %v305, %v410
      %v456 = vmul.f32 %v306, %v414
      %v457 = vmul.f32 %v307, %v418
      %v458 = vmul.f32 %v308, %v422
      %v459 = vmul.f32 %v309, %v410
      %v460 = vmul.f32 %v310, %v414
      %v461 = vmul.f32 %v311, %v418
      %v462 = vmul.f32 %v312, %v422
      %v463 = vmul.f32 %v313, %v410
      %v464 = vmul.f32 %v314, %v414
      %v465 = vmul.f32 %v315, %v418
      %v466 = vmul.f32 %v316, %v422
      %v467 = vmul.f32 %v317, %v410
      %v468 = vmul.f32 %v318, %v414
      %v469 = vmul.f32 %v319, %v418
      %v470 = vmul.f32 %v320, %v422
      %v471 = vmul.f32 %v321, %v410
      %v472 = vmul.f32 %v322, %v414
      %v473 = vmul.f32 %v323, %v418
      %v474 = vmul.f32 %v324, %v422
      %v475 = vmul.f32 %v325, %v410
      %v476 = vmul.f32 %v326, %v414
      %v477 = vmul.f32 %v327, %v418
      %v478 = vmul.f32 %v328, %v422
      %v479 = vmul.f32 %v329, %v410
      %v480 = vmul.f32 %v330, %v414
      %v481 = vmul.f32 %v331, %v418
      %v482 = vmul.f32 %v332, %v422
      %v483 = vmul.f32 %v333, %v410
      %v484 = vmul.f32 %v334, %v414
      %v485 = vmul.f32 %v335, %v418
      %v486 = vmul.f32 %v336, %v422
      %v487 = vmul.f32 %v337, %v410
      %v488 = vmul.f32 %v338, %v414
      %v489 = vmul.f32 %v339, %v418
      %v490 = vmul.f32 %v340, %v422
      %v491 = vmul.f32 %v341, %v410
      %v492 = vmul.f32 %v342, %v414
      %v493 = vmul.f32 %v343, %v418
      %v494 = vmul.f32 %v344, %v422
      %v495 = vmul.f32 %v345, %v410
      %v496 = vmul.f32 %v346, %v414
      %v497 = vmul.f32 %v347, %v418
      %v498 = vmul.f32 %v348, %v422
      %v499 = vmul.f32 %v349, %v410
      %v500 = vmul.f32 %v350, %v414
      %v501 = vmul.f32 %v351, %v418
      %v502 = vmul.f32 %v352, %v422
      %v503 = vmul.f32 %v353, %v410
      %v504 = vmul.f32 %v354, %v414
      %v505 = vmul.f32 %v355, %v418
      %v506 = vmul.f32 %v356, %v422
      %v507 = vmul.f32 %v357, %v410
      %v508 = vmul.f32 %v358, %v414
      %v509 = vmul.f32 %v359, %v418
      %v510 = vmul.f32 %v360, %v422
      %v511 = vmul.f32 %v361, %v410
      %v512 = vmul.f32 %v362, %v414
      %v513 = vmul.f32 %v363, %v418
      %v514 = vmul.f32 %v364, %v422
      %v515 = vmul.f32 %v365, %v410
      %v516 = vmul.f32 %v366, %v414
      %v517 = vmul.f32 %v367, %v418
      %v518 = vmul.f32 %v368, %v422
      %v519 = vmul.f32 %v369, %v410
      %v520 = vmul.f32 %v370, %v414
      %v521 = vmul.f32 %v371, %v418
      %v522 = vmul.f32 %v372, %v422
      %v523 = vmul.f32 %v373, %v410
      %v524 = vmul.f32 %v374, %v414
      %v525 = vmul.f32 %v375, %v418
      %v526 = vmul.f32 %v376, %v422
      %v527 = vmul.f32 %v377, %v410
      %v528 = vmul.f32 %v378, %v414
      %v529 = vmul.f32 %v379, %v418
      %v530 = vmul.f32 %v380, %v422
      %v531 = vmul.f32 %v381, %v410
      %v532 = vmul.f32 %v382, %v414
      %v533 = vmul.f32 %v383, %v418
      %v534 = vmul.f32 %v384, %v422
      %v535 = vmul.f32 %v385, %v410
      %v536 = vmul.f32 %v386, %v414
      %v537 = vmul.f32 %v387, %v418
      %v538 = vmul.f32 %v388, %v422
      %v539 = vmul.f32 %v389, %v410
      %v540 = vmul.f32 %v390, %v414
      %v541 = vmul.f32 %v391, %v418
      %v542 = vmul.f32 %v392, %v422
      %v543 = vmul.f32 %v393, %v410
      %v544 = vmul.f32 %v394, %v414
      %v545 = vmul.f32 %v395, %v418
      %v546 = vmul.f32 %v396, %v422
      %v547 = vmul.f32 %v397, %v410
      %v548 = vmul.f32 %v398, %v414
      %v549 = vmul.f32 %v399, %v418
      %v550 = vmul.f32 %v400, %v422
      %v551 = vmul.f32 %v401, %v410
      %v552 = vmul.f32 %v402, %v414
      %v553 = vmul.f32 %v403, %v418
      %v554 = vmul.f32 %v404, %v422
      %v555 = vld [vmem:[%s1] sm:$0xf]
      %v557 = vlaneseq
      %v558 = vshrl.u32 %v557, 7
      %v559 = vsub.s32 0, %v558
      %v560 = vrot.slane %v555, %v559
      %v561 = vlaneseq
      %v562 = vshrl.u32 %v561, 7
      %v563 = vsub.s32 1, %v562
      %v564 = vrot.slane %v555, %v563
      %v565 = vlaneseq
      %v566 = vshrl.u32 %v565, 7
      %v567 = vsub.s32 2, %v566
      %v568 = vrot.slane %v555, %v567
      %v569 = vlaneseq
      %v570 = vshrl.u32 %v569, 7
      %v571 = vsub.s32 3, %v570
      %v572 = vrot.slane %v555, %v571
      %v577 = vadd.f32 %v427, %v560
      %v578 = vadd.f32 %v428, %v564
      %v579 = vadd.f32 %v429, %v568
      %v580 = vadd.f32 %v430, %v572
      %v581 = vadd.f32 %v431, %v560
      %v582 = vadd.f32 %v432, %v564
      %v583 = vadd.f32 %v433, %v568
      %v584 = vadd.f32 %v434, %v572
      %v585 = vadd.f32 %v435, %v560
      %v586 = vadd.f32 %v436, %v564
      %v587 = vadd.f32 %v437, %v568
      %v588 = vadd.f32 %v438, %v572
      %v589 = vadd.f32 %v439, %v560
      %v590 = vadd.f32 %v440, %v564
      %v591 = vadd.f32 %v441, %v568
      %v592 = vadd.f32 %v442, %v572
      %v593 = vadd.f32 %v443, %v560
      %v594 = vadd.f32 %v444, %v564
      %v595 = vadd.f32 %v445, %v568
      %v596 = vadd.f32 %v446, %v572
      %v597 = vadd.f32 %v447, %v560
      %v598 = vadd.f32 %v448, %v564
      %v599 = vadd.f32 %v449, %v568
      %v600 = vadd.f32 %v450, %v572
      %v601 = vadd.f32 %v451, %v560
      %v602 = vadd.f32 %v452, %v564
      %v603 = vadd.f32 %v453, %v568
      %v604 = vadd.f32 %v454, %v572
      %v605 = vadd.f32 %v455, %v560
      %v606 = vadd.f32 %v456, %v564
      %v607 = vadd.f32 %v457, %v568
      %v608 = vadd.f32 %v458, %v572
      %v609 = vadd.f32 %v459, %v560
      %v610 = vadd.f32 %v460, %v564
      %v611 = vadd.f32 %v461, %v568
      %v612 = vadd.f32 %v462, %v572
      %v613 = vadd.f32 %v463, %v560
      %v614 = vadd.f32 %v464, %v564
      %v615 = vadd.f32 %v465, %v568
      %v616 = vadd.f32 %v466, %v572
      %v617 = vadd.f32 %v467, %v560
      %v618 = vadd.f32 %v468, %v564
      %v619 = vadd.f32 %v469, %v568
      %v620 = vadd.f32 %v470, %v572
      %v621 = vadd.f32 %v471, %v560
      %v622 = vadd.f32 %v472, %v564
      %v623 = vadd.f32 %v473, %v568
      %v624 = vadd.f32 %v474, %v572
      %v625 = vadd.f32 %v475, %v560
      %v626 = vadd.f32 %v476, %v564
      %v627 = vadd.f32 %v477, %v568
      %v628 = vadd.f32 %v478, %v572
      %v629 = vadd.f32 %v479, %v560
      %v630 = vadd.f32 %v480, %v564
      %v631 = vadd.f32 %v481, %v568
      %v632 = vadd.f32 %v482, %v572
      %v633 = vadd.f32 %v483, %v560
      %v634 = vadd.f32 %v484, %v564
      %v635 = vadd.f32 %v485, %v568
      %v636 = vadd.f32 %v486, %v572
      %v637 = vadd.f32 %v487, %v560
      %v638 = vadd.f32 %v488, %v564
      %v639 = vadd.f32 %v489, %v568
      %v640 = vadd.f32 %v490, %v572
      %v641 = vadd.f32 %v491, %v560
      %v642 = vadd.f32 %v492, %v564
      %v643 = vadd.f32 %v493, %v568
      %v644 = vadd.f32 %v494, %v572
      %v645 = vadd.f32 %v495, %v560
      %v646 = vadd.f32 %v496, %v564
      %v647 = vadd.f32 %v497, %v568
      %v648 = vadd.f32 %v498, %v572
      %v649 = vadd.f32 %v499, %v560
      %v650 = vadd.f32 %v500, %v564
      %v651 = vadd.f32 %v501, %v568
      %v652 = vadd.f32 %v502, %v572
      %v653 = vadd.f32 %v503, %v560
      %v654 = vadd.f32 %v504, %v564
      %v655 = vadd.f32 %v505, %v568
      %v656 = vadd.f32 %v506, %v572
      %v657 = vadd.f32 %v507, %v560
      %v658 = vadd.f32 %v508, %v564
      %v659 = vadd.f32 %v509, %v568
      %v660 = vadd.f32 %v510, %v572
      %v661 = vadd.f32 %v511, %v560
      %v662 = vadd.f32 %v512, %v564
      %v663 = vadd.f32 %v513, %v568
      %v664 = vadd.f32 %v514, %v572
      %v665 = vadd.f32 %v515, %v560
      %v666 = vadd.f32 %v516, %v564
      %v667 = vadd.f32 %v517, %v568
      %v668 = vadd.f32 %v518, %v572
      %v669 = vadd.f32 %v519, %v560
      %v670 = vadd.f32 %v520, %v564
      %v671 = vadd.f32 %v521, %v568
      %v672 = vadd.f32 %v522, %v572
      %v673 = vadd.f32 %v523, %v560
      %v674 = vadd.f32 %v524, %v564
      %v675 = vadd.f32 %v525, %v568
      %v676 = vadd.f32 %v526, %v572
      %v677 = vadd.f32 %v527, %v560
      %v678 = vadd.f32 %v528, %v564
      %v679 = vadd.f32 %v529, %v568
      %v680 = vadd.f32 %v530, %v572
      %v681 = vadd.f32 %v531, %v560
      %v682 = vadd.f32 %v532, %v564
      %v683 = vadd.f32 %v533, %v568
      %v684 = vadd.f32 %v534, %v572
      %v685 = vadd.f32 %v535, %v560
      %v686 = vadd.f32 %v536, %v564
      %v687 = vadd.f32 %v537, %v568
      %v688 = vadd.f32 %v538, %v572
      %v689 = vadd.f32 %v539, %v560
      %v690 = vadd.f32 %v540, %v564
      %v691 = vadd.f32 %v541, %v568
      %v692 = vadd.f32 %v542, %v572
      %v693 = vadd.f32 %v543, %v560
      %v694 = vadd.f32 %v544, %v564
      %v695 = vadd.f32 %v545, %v568
      %v696 = vadd.f32 %v546, %v572
      %v697 = vadd.f32 %v547, %v560
      %v698 = vadd.f32 %v548, %v564
      %v699 = vadd.f32 %v549, %v568
      %v700 = vadd.f32 %v550, %v572
      %v701 = vadd.f32 %v551, %v560
      %v702 = vadd.f32 %v552, %v564
      %v703 = vadd.f32 %v553, %v568
      %v704 = vadd.f32 %v554, %v572
      %v705 = vmax.f32 %v577, 0.0
      %v706 = vmax.f32 %v578, 0.0
      %v707 = vmax.f32 %v579, 0.0
      %v708 = vmax.f32 %v580, 0.0
      %v709 = vmax.f32 %v581, 0.0
      %v710 = vmax.f32 %v582, 0.0
      %v711 = vmax.f32 %v583, 0.0
      %v712 = vmax.f32 %v584, 0.0
      %v713 = vmax.f32 %v585, 0.0
      %v714 = vmax.f32 %v586, 0.0
      %v715 = vmax.f32 %v587, 0.0
      %v716 = vmax.f32 %v588, 0.0
      %v717 = vmax.f32 %v589, 0.0
      %v718 = vmax.f32 %v590, 0.0
      %v719 = vmax.f32 %v591, 0.0
      %v720 = vmax.f32 %v592, 0.0
      %v721 = vmax.f32 %v593, 0.0
      %v722 = vmax.f32 %v594, 0.0
      %v723 = vmax.f32 %v595, 0.0
      %v724 = vmax.f32 %v596, 0.0
      %v725 = vmax.f32 %v597, 0.0
      %v726 = vmax.f32 %v598, 0.0
      %v727 = vmax.f32 %v599, 0.0
      %v728 = vmax.f32 %v600, 0.0
      %v729 = vmax.f32 %v601, 0.0
      %v730 = vmax.f32 %v602, 0.0
      %v731 = vmax.f32 %v603, 0.0
      %v732 = vmax.f32 %v604, 0.0
      %v733 = vmax.f32 %v605, 0.0
      %v734 = vmax.f32 %v606, 0.0
      %v735 = vmax.f32 %v607, 0.0
      %v736 = vmax.f32 %v608, 0.0
      %v737 = vmax.f32 %v609, 0.0
      %v738 = vmax.f32 %v610, 0.0
      %v739 = vmax.f32 %v611, 0.0
      %v740 = vmax.f32 %v612, 0.0
      %v741 = vmax.f32 %v613, 0.0
      %v742 = vmax.f32 %v614, 0.0
      %v743 = vmax.f32 %v615, 0.0
      %v744 = vmax.f32 %v616, 0.0
      %v745 = vmax.f32 %v617, 0.0
      %v746 = vmax.f32 %v618, 0.0
      %v747 = vmax.f32 %v619, 0.0
      %v748 = vmax.f32 %v620, 0.0
      %v749 = vmax.f32 %v621, 0.0
      %v750 = vmax.f32 %v622, 0.0
      %v751 = vmax.f32 %v623, 0.0
      %v752 = vmax.f32 %v624, 0.0
      %v753 = vmax.f32 %v625, 0.0
      %v754 = vmax.f32 %v626, 0.0
      %v755 = vmax.f32 %v627, 0.0
      %v756 = vmax.f32 %v628, 0.0
      %v757 = vmax.f32 %v629, 0.0
      %v758 = vmax.f32 %v630, 0.0
      %v759 = vmax.f32 %v631, 0.0
      %v760 = vmax.f32 %v632, 0.0
      %v761 = vmax.f32 %v633, 0.0
      %v762 = vmax.f32 %v634, 0.0
      %v763 = vmax.f32 %v635, 0.0
      %v764 = vmax.f32 %v636, 0.0
      %v765 = vmax.f32 %v637, 0.0
      %v766 = vmax.f32 %v638, 0.0
      %v767 = vmax.f32 %v639, 0.0
      %v768 = vmax.f32 %v640, 0.0
      %v769 = vmax.f32 %v641, 0.0
      %v770 = vmax.f32 %v642, 0.0
      %v771 = vmax.f32 %v643, 0.0
      %v772 = vmax.f32 %v644, 0.0
      %v773 = vmax.f32 %v645, 0.0
      %v774 = vmax.f32 %v646, 0.0
      %v775 = vmax.f32 %v647, 0.0
      %v776 = vmax.f32 %v648, 0.0
      %v777 = vmax.f32 %v649, 0.0
      %v778 = vmax.f32 %v650, 0.0
      %v779 = vmax.f32 %v651, 0.0
      %v780 = vmax.f32 %v652, 0.0
      %v781 = vmax.f32 %v653, 0.0
      %v782 = vmax.f32 %v654, 0.0
      %v783 = vmax.f32 %v655, 0.0
      %v784 = vmax.f32 %v656, 0.0
      %v785 = vmax.f32 %v657, 0.0
      %v786 = vmax.f32 %v658, 0.0
      %v787 = vmax.f32 %v659, 0.0
      %v788 = vmax.f32 %v660, 0.0
      %v789 = vmax.f32 %v661, 0.0
      %v790 = vmax.f32 %v662, 0.0
      %v791 = vmax.f32 %v663, 0.0
      %v792 = vmax.f32 %v664, 0.0
      %v793 = vmax.f32 %v665, 0.0
      %v794 = vmax.f32 %v666, 0.0
      %v795 = vmax.f32 %v667, 0.0
      %v796 = vmax.f32 %v668, 0.0
      %v797 = vmax.f32 %v669, 0.0
      %v798 = vmax.f32 %v670, 0.0
      %v799 = vmax.f32 %v671, 0.0
      %v800 = vmax.f32 %v672, 0.0
      %v801 = vmax.f32 %v673, 0.0
      %v802 = vmax.f32 %v674, 0.0
      %v803 = vmax.f32 %v675, 0.0
      %v804 = vmax.f32 %v676, 0.0
      %v805 = vmax.f32 %v677, 0.0
      %v806 = vmax.f32 %v678, 0.0
      %v807 = vmax.f32 %v679, 0.0
      %v808 = vmax.f32 %v680, 0.0
      %v809 = vmax.f32 %v681, 0.0
      %v810 = vmax.f32 %v682, 0.0
      %v811 = vmax.f32 %v683, 0.0
      %v812 = vmax.f32 %v684, 0.0
      %v813 = vmax.f32 %v685, 0.0
      %v814 = vmax.f32 %v686, 0.0
      %v815 = vmax.f32 %v687, 0.0
      %v816 = vmax.f32 %v688, 0.0
      %v817 = vmax.f32 %v689, 0.0
      %v818 = vmax.f32 %v690, 0.0
      %v819 = vmax.f32 %v691, 0.0
      %v820 = vmax.f32 %v692, 0.0
      %v821 = vmax.f32 %v693, 0.0
      %v822 = vmax.f32 %v694, 0.0
      %v823 = vmax.f32 %v695, 0.0
      %v824 = vmax.f32 %v696, 0.0
      %v825 = vmax.f32 %v697, 0.0
      %v826 = vmax.f32 %v698, 0.0
      %v827 = vmax.f32 %v699, 0.0
      %v828 = vmax.f32 %v700, 0.0
      %v829 = vmax.f32 %v701, 0.0
      %v830 = vmax.f32 %v702, 0.0
      %v831 = vmax.f32 %v703, 0.0
      %v832 = vmax.f32 %v704, 0.0
      %833 = vxpose.xlu0.b32.start [1/16] %v705, 128
      %834 = vxpose.xlu0.b32.cont [2/16] %v709, 128
      %835 = vxpose.xlu0.b32.cont [3/16] %v713, 128
      %836 = vxpose.xlu0.b32.cont [4/16] %v717, 128
      %837 = vxpose.xlu0.b32.cont [5/16] %v721, 128
      %838 = vxpose.xlu0.b32.cont [6/16] %v725, 128
      %839 = vxpose.xlu0.b32.cont [7/16] %v729, 128
      %840 = vxpose.xlu0.b32.cont [8/16] %v733, 128
      %841 = vxpose.xlu0.b32.cont [9/16] %v737, 128
      %842 = vxpose.xlu0.b32.cont [10/16] %v741, 128
      %843 = vxpose.xlu0.b32.cont [11/16] %v745, 128
      %844 = vxpose.xlu0.b32.cont [12/16] %v749, 128
      %845 = vxpose.xlu0.b32.cont [13/16] %v753, 128
      %846 = vxpose.xlu0.b32.cont [14/16] %v757, 128
      %847 = vxpose.xlu0.b32.cont [15/16] %v761, 128
      %848 = vxpose.xlu0.b32.end [16/16] %v765, 128
      %v849 = vpop.trf.xlu0
      %v850 = vpop.trf.xlu0
      %v851 = vpop.trf.xlu0
      %v852 = vpop.trf.xlu0
      %v853 = vpop.trf.xlu0
      %v854 = vpop.trf.xlu0
      %v855 = vpop.trf.xlu0
      %v856 = vpop.trf.xlu0
      %v857 = vpop.trf.xlu0
      %v858 = vpop.trf.xlu0
      %v859 = vpop.trf.xlu0
      %v860 = vpop.trf.xlu0
      %v861 = vpop.trf.xlu0
      %v862 = vpop.trf.xlu0
      %v863 = vpop.trf.xlu0
      %v864 = vpop.trf.xlu0
      %865 = vxpose.xlu0.b32.start [1/16] %v706, 128
      %866 = vxpose.xlu0.b32.cont [2/16] %v710, 128
      %867 = vxpose.xlu0.b32.cont [3/16] %v714, 128
      %868 = vxpose.xlu0.b32.cont [4/16] %v718, 128
      %869 = vxpose.xlu0.b32.cont [5/16] %v722, 128
      %870 = vxpose.xlu0.b32.cont [6/16] %v726, 128
      %871 = vxpose.xlu0.b32.cont [7/16] %v730, 128
      %872 = vxpose.xlu0.b32.cont [8/16] %v734, 128
      %873 = vxpose.xlu0.b32.cont [9/16] %v738, 128
      %874 = vxpose.xlu0.b32.cont [10/16] %v742, 128
      %875 = vxpose.xlu0.b32.cont [11/16] %v746, 128
      %876 = vxpose.xlu0.b32.cont [12/16] %v750, 128
      %877 = vxpose.xlu0.b32.cont [13/16] %v754, 128
      %878 = vxpose.xlu0.b32.cont [14/16] %v758, 128
      %879 = vxpose.xlu0.b32.cont [15/16] %v762, 128
      %880 = vxpose.xlu0.b32.end [16/16] %v766, 128
      %v881 = vpop.trf.xlu0
      %v882 = vpop.trf.xlu0
      %v883 = vpop.trf.xlu0
      %v884 = vpop.trf.xlu0
      %v885 = vpop.trf.xlu0
      %v886 = vpop.trf.xlu0
      %v887 = vpop.trf.xlu0
      %v888 = vpop.trf.xlu0
      %v889 = vpop.trf.xlu0
      %v890 = vpop.trf.xlu0
      %v891 = vpop.trf.xlu0
      %v892 = vpop.trf.xlu0
      %v893 = vpop.trf.xlu0
      %v894 = vpop.trf.xlu0
      %v895 = vpop.trf.xlu0
      %v896 = vpop.trf.xlu0
      %897 = vxpose.xlu0.b32.start [1/16] %v707, 128
      %898 = vxpose.xlu0.b32.cont [2/16] %v711, 128
      %899 = vxpose.xlu0.b32.cont [3/16] %v715, 128
      %900 = vxpose.xlu0.b32.cont [4/16] %v719, 128
      %901 = vxpose.xlu0.b32.cont [5/16] %v723, 128
      %902 = vxpose.xlu0.b32.cont [6/16] %v727, 128
      %903 = vxpose.xlu0.b32.cont [7/16] %v731, 128
      %904 = vxpose.xlu0.b32.cont [8/16] %v735, 128
      %905 = vxpose.xlu0.b32.cont [9/16] %v739, 128
      %906 = vxpose.xlu0.b32.cont [10/16] %v743, 128
      %907 = vxpose.xlu0.b32.cont [11/16] %v747, 128
      %908 = vxpose.xlu0.b32.cont [12/16] %v751, 128
      %909 = vxpose.xlu0.b32.cont [13/16] %v755, 128
      %910 = vxpose.xlu0.b32.cont [14/16] %v759, 128
      %911 = vxpose.xlu0.b32.cont [15/16] %v763, 128
      %912 = vxpose.xlu0.b32.end [16/16] %v767, 128
      %v913 = vpop.trf.xlu0
      %v914 = vpop.trf.xlu0
      %v915 = vpop.trf.xlu0
      %v916 = vpop.trf.xlu0
      %v917 = vpop.trf.xlu0
      %v918 = vpop.trf.xlu0
      %v919 = vpop.trf.xlu0
      %v920 = vpop.trf.xlu0
      %v921 = vpop.trf.xlu0
      %v922 = vpop.trf.xlu0
      %v923 = vpop.trf.xlu0
      %v924 = vpop.trf.xlu0
      %v925 = vpop.trf.xlu0
      %v926 = vpop.trf.xlu0
      %v927 = vpop.trf.xlu0
      %v928 = vpop.trf.xlu0
      %929 = vxpose.xlu0.b32.start [1/16] %v708, 128
      %930 = vxpose.xlu0.b32.cont [2/16] %v712, 128
      %931 = vxpose.xlu0.b32.cont [3/16] %v716, 128
      %932 = vxpose.xlu0.b32.cont [4/16] %v720, 128
      %933 = vxpose.xlu0.b32.cont [5/16] %v724, 128
      %934 = vxpose.xlu0.b32.cont [6/16] %v728, 128
      %935 = vxpose.xlu0.b32.cont [7/16] %v732, 128
      %936 = vxpose.xlu0.b32.cont [8/16] %v736, 128
      %937 = vxpose.xlu0.b32.cont [9/16] %v740, 128
      %938 = vxpose.xlu0.b32.cont [10/16] %v744, 128
      %939 = vxpose.xlu0.b32.cont [11/16] %v748, 128
      %940 = vxpose.xlu0.b32.cont [12/16] %v752, 128
      %941 = vxpose.xlu0.b32.cont [13/16] %v756, 128
      %942 = vxpose.xlu0.b32.cont [14/16] %v760, 128
      %943 = vxpose.xlu0.b32.cont [15/16] %v764, 128
      %944 = vxpose.xlu0.b32.end [16/16] %v768, 128
      %v945 = vpop.trf.xlu0
      %v946 = vpop.trf.xlu0
      %v947 = vpop.trf.xlu0
      %v948 = vpop.trf.xlu0
      %v949 = vpop.trf.xlu0
      %v950 = vpop.trf.xlu0
      %v951 = vpop.trf.xlu0
      %v952 = vpop.trf.xlu0
      %v953 = vpop.trf.xlu0
      %v954 = vpop.trf.xlu0
      %v955 = vpop.trf.xlu0
      %v956 = vpop.trf.xlu0
      %v957 = vpop.trf.xlu0
      %v958 = vpop.trf.xlu0
      %v959 = vpop.trf.xlu0
      %v960 = vpop.trf.xlu0
      %961 = vxpose.xlu0.b32.start [1/16] %v769, 128
      %962 = vxpose.xlu0.b32.cont [2/16] %v773, 128
      %963 = vxpose.xlu0.b32.cont [3/16] %v777, 128
      %964 = vxpose.xlu0.b32.cont [4/16] %v781, 128
      %965 = vxpose.xlu0.b32.cont [5/16] %v785, 128
      %966 = vxpose.xlu0.b32.cont [6/16] %v789, 128
      %967 = vxpose.xlu0.b32.cont [7/16] %v793, 128
      %968 = vxpose.xlu0.b32.cont [8/16] %v797, 128
      %969 = vxpose.xlu0.b32.cont [9/16] %v801, 128
      %970 = vxpose.xlu0.b32.cont [10/16] %v805, 128
      %971 = vxpose.xlu0.b32.cont [11/16] %v809, 128
      %972 = vxpose.xlu0.b32.cont [12/16] %v813, 128
      %973 = vxpose.xlu0.b32.cont [13/16] %v817, 128
      %974 = vxpose.xlu0.b32.cont [14/16] %v821, 128
      %975 = vxpose.xlu0.b32.cont [15/16] %v825, 128
      %976 = vxpose.xlu0.b32.end [16/16] %v829, 128
      %v977 = vpop.trf.xlu0
      %v978 = vpop.trf.xlu0
      %v979 = vpop.trf.xlu0
      %v980 = vpop.trf.xlu0
      %v981 = vpop.trf.xlu0
      %v982 = vpop.trf.xlu0
      %v983 = vpop.trf.xlu0
      %v984 = vpop.trf.xlu0
      %v985 = vpop.trf.xlu0
      %v986 = vpop.trf.xlu0
      %v987 = vpop.trf.xlu0
      %v988 = vpop.trf.xlu0
      %v989 = vpop.trf.xlu0
      %v990 = vpop.trf.xlu0
      %v991 = vpop.trf.xlu0
      %v992 = vpop.trf.xlu0
      %993 = vxpose.xlu0.b32.start [1/16] %v770, 128
      %994 = vxpose.xlu0.b32.cont [2/16] %v774, 128
      %995 = vxpose.xlu0.b32.cont [3/16] %v778, 128
      %996 = vxpose.xlu0.b32.cont [4/16] %v782, 128
      %997 = vxpose.xlu0.b32.cont [5/16] %v786, 128
      %998 = vxpose.xlu0.b32.cont [6/16] %v790, 128
      %999 = vxpose.xlu0.b32.cont [7/16] %v794, 128
      %1000 = vxpose.xlu0.b32.cont [8/16] %v798, 128
      %1001 = vxpose.xlu0.b32.cont [9/16] %v802, 128
      %1002 = vxpose.xlu0.b32.cont [10/16] %v806, 128
      %1003 = vxpose.xlu0.b32.cont [11/16] %v810, 128
      %1004 = vxpose.xlu0.b32.cont [12/16] %v814, 128
      %1005 = vxpose.xlu0.b32.cont [13/16] %v818, 128
      %1006 = vxpose.xlu0.b32.cont [14/16] %v822, 128
      %1007 = vxpose.xlu0.b32.cont [15/16] %v826, 128
      %1008 = vxpose.xlu0.b32.end [16/16] %v830, 128
      %v1009 = vpop.trf.xlu0
      %v1010 = vpop.trf.xlu0
      %v1011 = vpop.trf.xlu0
      %v1012 = vpop.trf.xlu0
      %v1013 = vpop.trf.xlu0
      %v1014 = vpop.trf.xlu0
      %v1015 = vpop.trf.xlu0
      %v1016 = vpop.trf.xlu0
      %v1017 = vpop.trf.xlu0
      %v1018 = vpop.trf.xlu0
      %v1019 = vpop.trf.xlu0
      %v1020 = vpop.trf.xlu0
      %v1021 = vpop.trf.xlu0
      %v1022 = vpop.trf.xlu0
      %v1023 = vpop.trf.xlu0
      %v1024 = vpop.trf.xlu0
      %1025 = vxpose.xlu0.b32.start [1/16] %v771, 128
      %1026 = vxpose.xlu0.b32.cont [2/16] %v775, 128
      %1027 = vxpose.xlu0.b32.cont [3/16] %v779, 128
      %1028 = vxpose.xlu0.b32.cont [4/16] %v783, 128
      %1029 = vxpose.xlu0.b32.cont [5/16] %v787, 128
      %1030 = vxpose.xlu0.b32.cont [6/16] %v791, 128
      %1031 = vxpose.xlu0.b32.cont [7/16] %v795, 128
      %1032 = vxpose.xlu0.b32.cont [8/16] %v799, 128
      %1033 = vxpose.xlu0.b32.cont [9/16] %v803, 128
      %1034 = vxpose.xlu0.b32.cont [10/16] %v807, 128
      %1035 = vxpose.xlu0.b32.cont [11/16] %v811, 128
      %1036 = vxpose.xlu0.b32.cont [12/16] %v815, 128
      %1037 = vxpose.xlu0.b32.cont [13/16] %v819, 128
      %1038 = vxpose.xlu0.b32.cont [14/16] %v823, 128
      %1039 = vxpose.xlu0.b32.cont [15/16] %v827, 128
      %1040 = vxpose.xlu0.b32.end [16/16] %v831, 128
      %v1041 = vpop.trf.xlu0
      %v1042 = vpop.trf.xlu0
      %v1043 = vpop.trf.xlu0
      %v1044 = vpop.trf.xlu0
      %v1045 = vpop.trf.xlu0
      %v1046 = vpop.trf.xlu0
      %v1047 = vpop.trf.xlu0
      %v1048 = vpop.trf.xlu0
      %v1049 = vpop.trf.xlu0
      %v1050 = vpop.trf.xlu0
      %v1051 = vpop.trf.xlu0
      %v1052 = vpop.trf.xlu0
      %v1053 = vpop.trf.xlu0
      %v1054 = vpop.trf.xlu0
      %v1055 = vpop.trf.xlu0
      %v1056 = vpop.trf.xlu0
      %1057 = vxpose.xlu0.b32.start [1/16] %v772, 128
      %1058 = vxpose.xlu0.b32.cont [2/16] %v776, 128
      %1059 = vxpose.xlu0.b32.cont [3/16] %v780, 128
      %1060 = vxpose.xlu0.b32.cont [4/16] %v784, 128
      %1061 = vxpose.xlu0.b32.cont [5/16] %v788, 128
      %1062 = vxpose.xlu0.b32.cont [6/16] %v792, 128
      %1063 = vxpose.xlu0.b32.cont [7/16] %v796, 128
      %1064 = vxpose.xlu0.b32.cont [8/16] %v800, 128
      %1065 = vxpose.xlu0.b32.cont [9/16] %v804, 128
      %1066 = vxpose.xlu0.b32.cont [10/16] %v808, 128
      %1067 = vxpose.xlu0.b32.cont [11/16] %v812, 128
      %1068 = vxpose.xlu0.b32.cont [12/16] %v816, 128
      %1069 = vxpose.xlu0.b32.cont [13/16] %v820, 128
      %1070 = vxpose.xlu0.b32.cont [14/16] %v824, 128
      %1071 = vxpose.xlu0.b32.cont [15/16] %v828, 128
      %1072 = vxpose.xlu0.b32.end [16/16] %v832, 128
      %v1073 = vpop.trf.xlu0
      %v1074 = vpop.trf.xlu0
      %v1075 = vpop.trf.xlu0
      %v1076 = vpop.trf.xlu0
      %v1077 = vpop.trf.xlu0
      %v1078 = vpop.trf.xlu0
      %v1079 = vpop.trf.xlu0
      %v1080 = vpop.trf.xlu0
      %v1081 = vpop.trf.xlu0
      %v1082 = vpop.trf.xlu0
      %v1083 = vpop.trf.xlu0
      %v1084 = vpop.trf.xlu0
      %v1085 = vpop.trf.xlu0
      %v1086 = vpop.trf.xlu0
      %v1087 = vpop.trf.xlu0
      %v1088 = vpop.trf.xlu0
      %1089 = vst [vmem:[%s211] sm:$0xff] %v849
      %1090 = vst [vmem:[%s211 + $0x8] sm:$0xff] %v977
      %1091 = vst [vmem:[%s211 + $0x10] sm:$0xff] %v850
      %1092 = vst [vmem:[%s211 + $0x18] sm:$0xff] %v978
      %1093 = vst [vmem:[%s211 + $0x20] sm:$0xff] %v851
      %1094 = vst [vmem:[%s211 + $0x28] sm:$0xff] %v979
      %1095 = vst [vmem:[%s211 + $0x30] sm:$0xff] %v852
      %1096 = vst [vmem:[%s211 + $0x38] sm:$0xff] %v980
      %1097 = vst [vmem:[%s211 + $0x40] sm:$0xff] %v853
      %1098 = vst [vmem:[%s211 + $0x48] sm:$0xff] %v981
      %1099 = vst [vmem:[%s211 + $0x50] sm:$0xff] %v854
      %1100 = vst [vmem:[%s211 + $0x58] sm:$0xff] %v982
      %1101 = vst [vmem:[%s211 + $0x60] sm:$0xff] %v855
      %1102 = vst [vmem:[%s211 + $0x68] sm:$0xff] %v983
      %1103 = vst [vmem:[%s211 + $0x70] sm:$0xff] %v856
      %1104 = vst [vmem:[%s211 + $0x78] sm:$0xff] %v984
      %1105 = vst [vmem:[%s211 + $0x80] sm:$0xff] %v857
      %1106 = vst [vmem:[%s211 + $0x88] sm:$0xff] %v985
      %1107 = vst [vmem:[%s211 + $0x90] sm:$0xff] %v858
      %1108 = vst [vmem:[%s211 + $0x98] sm:$0xff] %v986
      %1109 = vst [vmem:[%s211 + $0xa0] sm:$0xff] %v859
      %1110 = vst [vmem:[%s211 + $0xa8] sm:$0xff] %v987
      %1111 = vst [vmem:[%s211 + $0xb0] sm:$0xff] %v860
      %1112 = vst [vmem:[%s211 + $0xb8] sm:$0xff] %v988
      %1113 = vst [vmem:[%s211 + $0xc0] sm:$0xff] %v861
      %1114 = vst [vmem:[%s211 + $0xc8] sm:$0xff] %v989
      %1115 = vst [vmem:[%s211 + $0xd0] sm:$0xff] %v862
      %1116 = vst [vmem:[%s211 + $0xd8] sm:$0xff] %v990
      %1117 = vst [vmem:[%s211 + $0xe0] sm:$0xff] %v863
      %1118 = vst [vmem:[%s211 + $0xe8] sm:$0xff] %v991
      %1119 = vst [vmem:[%s211 + $0xf0] sm:$0xff] %v864
      %1120 = vst [vmem:[%s211 + $0xf8] sm:$0xff] %v992
      %1121 = vst [vmem:[%s211 + $0x100] sm:$0xff] %v881
      %1122 = vst [vmem:[%s211 + $0x108] sm:$0xff] %v1009
      %1123 = vst [vmem:[%s211 + $0x110] sm:$0xff] %v882
      %1124 = vst [vmem:[%s211 + $0x118] sm:$0xff] %v1010
      %1125 = vst [vmem:[%s211 + $0x120] sm:$0xff] %v883
      %1126 = vst [vmem:[%s211 + $0x128] sm:$0xff] %v1011
      %1127 = vst [vmem:[%s211 + $0x130] sm:$0xff] %v884
      %1128 = vst [vmem:[%s211 + $0x138] sm:$0xff] %v1012
      %1129 = vst [vmem:[%s211 + $0x140] sm:$0xff] %v885
      %1130 = vst [vmem:[%s211 + $0x148] sm:$0xff] %v1013
      %1131 = vst [vmem:[%s211 + $0x150] sm:$0xff] %v886
      %1132 = vst [vmem:[%s211 + $0x158] sm:$0xff] %v1014
      %1133 = vst [vmem:[%s211 + $0x160] sm:$0xff] %v887
      %1134 = vst [vmem:[%s211 + $0x168] sm:$0xff] %v1015
      %1135 = vst [vmem:[%s211 + $0x170] sm:$0xff] %v888
      %1136 = vst [vmem:[%s211 + $0x178] sm:$0xff] %v1016
      %1137 = vst [vmem:[%s211 + $0x180] sm:$0xff] %v889
      %1138 = vst [vmem:[%s211 + $0x188] sm:$0xff] %v1017
      %1139 = vst [vmem:[%s211 + $0x190] sm:$0xff] %v890
      %1140 = vst [vmem:[%s211 + $0x198] sm:$0xff] %v1018
      %1141 = vst [vmem:[%s211 + $0x1a0] sm:$0xff] %v891
      %1142 = vst [vmem:[%s211 + $0x1a8] sm:$0xff] %v1019
      %1143 = vst [vmem:[%s211 + $0x1b0] sm:$0xff] %v892
      %1144 = vst [vmem:[%s211 + $0x1b8] sm:$0xff] %v1020
      %1145 = vst [vmem:[%s211 + $0x1c0] sm:$0xff] %v893
      %1146 = vst [vmem:[%s211 + $0x1c8] sm:$0xff] %v1021
      %1147 = vst [vmem:[%s211 + $0x1d0] sm:$0xff] %v894
      %1148 = vst [vmem:[%s211 + $0x1d8] sm:$0xff] %v1022
      %1149 = vst [vmem:[%s211 + $0x1e0] sm:$0xff] %v895
      %1150 = vst [vmem:[%s211 + $0x1e8] sm:$0xff] %v1023
      %1151 = vst [vmem:[%s211 + $0x1f0] sm:$0xff] %v896
      %1152 = vst [vmem:[%s211 + $0x1f8] sm:$0xff] %v1024
      %1153 = vst [vmem:[%s211 + $0x200] sm:$0xff] %v913
      %1154 = vst [vmem:[%s211 + $0x208] sm:$0xff] %v1041
      %1155 = vst [vmem:[%s211 + $0x210] sm:$0xff] %v914
      %1156 = vst [vmem:[%s211 + $0x218] sm:$0xff] %v1042
      %1157 = vst [vmem:[%s211 + $0x220] sm:$0xff] %v915
      %1158 = vst [vmem:[%s211 + $0x228] sm:$0xff] %v1043
      %1159 = vst [vmem:[%s211 + $0x230] sm:$0xff] %v916
      %1160 = vst [vmem:[%s211 + $0x238] sm:$0xff] %v1044
      %1161 = vst [vmem:[%s211 + $0x240] sm:$0xff] %v917
      %1162 = vst [vmem:[%s211 + $0x248] sm:$0xff] %v1045
      %1163 = vst [vmem:[%s211 + $0x250] sm:$0xff] %v918
      %1164 = vst [vmem:[%s211 + $0x258] sm:$0xff] %v1046
      %1165 = vst [vmem:[%s211 + $0x260] sm:$0xff] %v919
      %1166 = vst [vmem:[%s211 + $0x268] sm:$0xff] %v1047
      %1167 = vst [vmem:[%s211 + $0x270] sm:$0xff] %v920
      %1168 = vst [vmem:[%s211 + $0x278] sm:$0xff] %v1048
      %1169 = vst [vmem:[%s211 + $0x280] sm:$0xff] %v921
      %1170 = vst [vmem:[%s211 + $0x288] sm:$0xff] %v1049
      %1171 = vst [vmem:[%s211 + $0x290] sm:$0xff] %v922
      %1172 = vst [vmem:[%s211 + $0x298] sm:$0xff] %v1050
      %1173 = vst [vmem:[%s211 + $0x2a0] sm:$0xff] %v923
      %1174 = vst [vmem:[%s211 + $0x2a8] sm:$0xff] %v1051
      %1175 = vst [vmem:[%s211 + $0x2b0] sm:$0xff] %v924
      %1176 = vst [vmem:[%s211 + $0x2b8] sm:$0xff] %v1052
      %1177 = vst [vmem:[%s211 + $0x2c0] sm:$0xff] %v925
      %1178 = vst [vmem:[%s211 + $0x2c8] sm:$0xff] %v1053
      %1179 = vst [vmem:[%s211 + $0x2d0] sm:$0xff] %v926
      %1180 = vst [vmem:[%s211 + $0x2d8] sm:$0xff] %v1054
      %1181 = vst [vmem:[%s211 + $0x2e0] sm:$0xff] %v927
      %1182 = vst [vmem:[%s211 + $0x2e8] sm:$0xff] %v1055
      %1183 = vst [vmem:[%s211 + $0x2f0] sm:$0xff] %v928
      %1184 = vst [vmem:[%s211 + $0x2f8] sm:$0xff] %v1056
      %1185 = vst [vmem:[%s211 + $0x300] sm:$0xff] %v945
      %1186 = vst [vmem:[%s211 + $0x308] sm:$0xff] %v1073
      %1187 = vst [vmem:[%s211 + $0x310] sm:$0xff] %v946
      %1188 = vst [vmem:[%s211 + $0x318] sm:$0xff] %v1074
      %1189 = vst [vmem:[%s211 + $0x320] sm:$0xff] %v947
      %1190 = vst [vmem:[%s211 + $0x328] sm:$0xff] %v1075
      %1191 = vst [vmem:[%s211 + $0x330] sm:$0xff] %v948
      %1192 = vst [vmem:[%s211 + $0x338] sm:$0xff] %v1076
      %1193 = vst [vmem:[%s211 + $0x340] sm:$0xff] %v949
      %1194 = vst [vmem:[%s211 + $0x348] sm:$0xff] %v1077
      %1195 = vst [vmem:[%s211 + $0x350] sm:$0xff] %v950
      %1196 = vst [vmem:[%s211 + $0x358] sm:$0xff] %v1078
      %1197 = vst [vmem:[%s211 + $0x360] sm:$0xff] %v951
      %1198 = vst [vmem:[%s211 + $0x368] sm:$0xff] %v1079
      %1199 = vst [vmem:[%s211 + $0x370] sm:$0xff] %v952
      %1200 = vst [vmem:[%s211 + $0x378] sm:$0xff] %v1080
      %1201 = vst [vmem:[%s211 + $0x380] sm:$0xff] %v953
      %1202 = vst [vmem:[%s211 + $0x388] sm:$0xff] %v1081
      %1203 = vst [vmem:[%s211 + $0x390] sm:$0xff] %v954
      %1204 = vst [vmem:[%s211 + $0x398] sm:$0xff] %v1082
      %1205 = vst [vmem:[%s211 + $0x3a0] sm:$0xff] %v955
      %1206 = vst [vmem:[%s211 + $0x3a8] sm:$0xff] %v1083
      %1207 = vst [vmem:[%s211 + $0x3b0] sm:$0xff] %v956
      %1208 = vst [vmem:[%s211 + $0x3b8] sm:$0xff] %v1084
      %1209 = vst [vmem:[%s211 + $0x3c0] sm:$0xff] %v957
      %1210 = vst [vmem:[%s211 + $0x3c8] sm:$0xff] %v1085
      %1211 = vst [vmem:[%s211 + $0x3d0] sm:$0xff] %v958
      %1212 = vst [vmem:[%s211 + $0x3d8] sm:$0xff] %v1086
      %1213 = vst [vmem:[%s211 + $0x3e0] sm:$0xff] %v959
      %1214 = vst [vmem:[%s211 + $0x3e8] sm:$0xff] %v1087
      %1215 = vst [vmem:[%s211 + $0x3f0] sm:$0xff] %v960
      %1216 = vst [vmem:[%s211 + $0x3f8] sm:$0xff] %v1088
      %s1217 = smul.u32 2, %s19
      %p1218 = scmp.lt.s32.totalorder %s18, 1
      %s1219 = scalar_select %p1218, %s18, 1
      %p1220 = scmp.lt.s32.totalorder %s1217, 1
      %s1221 = scalar_select %p1220, %s1217, 1
      %s1222 = smul.addr %s1219, 128
      %s1223 = sadd.s32 %s1221, %s1222
      %s1224 = smul.addr %s1223, 8
      %s1225 = scalar_lea.vmem %s3, %s1224
      // Predicated region
      $region33: #{mcm3_forward.3} parent=31 // pred_check
        %p1226 = pneg %p116
      $region34: #{mcm3_forward.3} parent=31 // pred_check_branch
        %1228 = sbr.rel (%p1226) target = $region36
      $region35: #{mcm3_forward.3} parent=31 // pred_region
        %s1229 = smul.u32 2, %s19
      $region36: #{mcm3_forward.3} parent=31 // pred_fallthru
        _
    $region32: #{mcm3_forward.3} parent=5 // pred_fallthru
      _
    %p1230 = scmp.le.s32.totalorder 2, %s9
    // Predicated region
    $region37: #{mcm3_forward.3} parent=5 // pred_check
      %p1231 = pneg %p1230
    $region38: #{mcm3_forward.3} parent=5 // pred_check_branch
      %1233 = sbr.rel (%p1231) target = $region40
    $region39: #{mcm3_forward.3} parent=5 // pred_region
      %s1234 = ssub.s32 %s9, 2
      // Predicated region
      $region41: #{mcm3_forward.3} parent=39 // pred_check
        %p1235 = pneg %p122
      $region42: #{mcm3_forward.3} parent=39 // pred_check_branch
        %1237 = sbr.rel (%p1235) target = $region44
      $region43: #{mcm3_forward.3} parent=39 // pred_region
        %s1238 = smul.u32 2, %s21
        %p1239 = scmp.lt.s32.totalorder %s20, 1
        %s1240 = scalar_select %p1239, %s20, 1
        %p1241 = scmp.lt.s32.totalorder %s1238, 1
        %s1242 = scalar_select %p1241, %s1238, 1
        %s1243 = smul.addr %s1240, 128
        %s1244 = sadd.s32 %s1242, %s1243
        %s1245 = smul.addr %s1244, 8
        %s1246 = scalar_lea.vmem %s3, %s1245
      $region44: #{mcm3_forward.3} parent=39 // pred_fallthru
        _
    $region40: #{mcm3_forward.3} parent=5 // pred_fallthru
      _
  $region6: #{mcm3_forward.3} parent=0 // loop_footer
    %s13 = sadd.s32 1, %s9
  $region7: #{mcm3_forward.3} parent=0 // loop_footer_branch
    %8 = sbr.rel target = $region3
  $region8: #{mcm3_forward.3} parent=0 // loop_exit
    _

// kernel: mcm3_forward.2
$region0: #{mcm3_forward.2}
  #allocation0 [shape = 'u32[]', space=smem, size = 0x4, offset = 0x4, fixed_abs, tag = 'smem constant byte address 0x4 - core index']
  #allocation1 [shape = 'u32[144,128]{1,0:T(1,128)}', space=vmem, size = 0x12000, scoped, tag = 'internal scratch']
  %s0 = inlined_call_operand.vmem [shape: f32[2,20,16,4], index: 0, kind: input, shape index: {}]
  %s1 = inlined_call_operand.vmem [shape: bf16[4,384], index: 1, kind: input, shape index: {}]
  %s2 = inlined_call_operand.vmem [shape: f32[1,384], index: 2, kind: input, shape index: {}]
  %s3 = inlined_call_operand.hbm [shape: bf16[1152,128], index: 3, kind: input, shape index: {}]
  %s4 = inlined_call_operand.vmem [shape: f32[1,128], index: 4, kind: input, shape index: {}]
  %s5 = inlined_call_operand.vmem [shape: bf16[3200,128], index: 5, kind: input, shape index: {}]
  %s6 = inlined_call_operand.vmem [shape: f32[1,128], index: 6, kind: input, shape index: {}]
  %s7 = inlined_call_operand.vmem [shape: bf16[4,128], index: 7, kind: input, shape index: {}]
  %s8 = inlined_call_operand.vmem [shape: f32[1,128], index: 8, kind: input, shape index: {}]
  %s9 = inlined_call_operand.vmem [shape: bf16[2,16,16,512], index: 9, kind: output, shape index: {0}]
  %s10 = inlined_call_operand.vmem [shape: f32[2,1,1,512], index: 10, kind: output, shape index: {1}]
  %s11 = inlined_call_operand.vmem [shape: f32[2,1,1,512], index: 11, kind: output, shape index: {2}]
  %12 = xla_tuple %s9, %s10, %s11
  %s13 = sld [smem:[#allocation0]]
  $region89: #{mcm3_forward.2} parent=0
    _
  %s15 = ssub.s32 1, %s13
  %s16 = scalar_select 0, %s15, %s13
  $region1: #{mcm3_forward.2} parent=0
    #allocation2 [shape = 'u8[294912]{0}', space=vmem, size = 0x48000, scoped, tag = 'input window, operand 3, single buffered']
    #allocation3 [shape = 's32[2]{0}', space=sflag, size = 0x8, scoped, tag = 'scoped memory for mcm3_forward.2']
    %17 = vsyncpa [#allocation3], 0
    loop: start=0, step=1, limit=4
    $region2: #{mcm3_forward.2} parent=1 // loop_pre_header
      _
    $region3: #{mcm3_forward.2} parent=1 // loop_header
      %s19 = sphi 0, %s23
      %p20 = scmp.ge.s32.totalorder %s19, 4
      %s26 = sphi 0, %s38
      %s27 = sphi 0, %s34
      %s28 = sphi 0, %s26
      %s29 = sphi 0, %s27
      %s30 = sphi 0, %s28
      %s31 = sphi 0, %s29
      %s41 = sphi 0, %s43
      %s44 = sphi 0, %s41
      %s45 = sphi 0, %s44
      %s61 = sphi 0, %s45
      %s65 = sphi 0, %s65
      %s67 = sphi 0, %s65
      %s68 = sphi 0, %s67
      %s82 = sphi 0, %s68
      %s86 = sphi 0, %s86
      %s88 = sphi 0, %s86
      %s89 = sphi 0, %s88
      %s103 = sphi 0, %s89
      %s107 = sphi 0, %s107
      %s109 = sphi 0, %s107
      %s110 = sphi 0, %s109
      %s124 = sphi 0, %s110
      %s128 = sphi 0, %s128
      %s130 = sphi 0, %s128
      %s131 = sphi 0, %s130
      %s145 = sphi 0, %s131
      %s149 = sphi 0, %s149
      %s151 = sphi 0, %s149
      %s152 = sphi 0, %s151
      %s166 = sphi 0, %s152
      %s170 = sphi 0, %s170
      %s172 = sphi 0, %s170
      %s173 = sphi 0, %s172
      %s187 = sphi 0, %s173
      %s191 = sphi 0, %s191
      %s193 = sphi 0, %s191
      %s194 = sphi 0, %s193
      %s208 = sphi 0, %s194
      %s212 = sphi 0, %s212
      %s214 = sphi 0, %s212
      %s215 = sphi 0, %s214
      %s229 = sphi 0, %s215
      %s237 = sphi 0, %s239
      %s240 = sphi 0, %s237
      %s241 = sphi 0, %s240
      %s257 = sphi 0, %s241
      %s265 = sphi 0, %s267
      %s268 = sphi 0, %s265
      %s269 = sphi 0, %s268
      %s285 = sphi 0, %s269
      %s293 = sphi 0, %s295
      %s296 = sphi 0, %s293
      %s297 = sphi 0, %s296
      %s313 = sphi 0, %s297
    $region4: #{mcm3_forward.2} parent=1 // loop_header_branch
      %22 = sbr.rel (%p20) target = $region8
    $region5: #{mcm3_forward.2} parent=1 // loop_body
      %s24 = ssub.s32 %s19, 1
      %s25 = ssub.s32 %s19, 2
      %s32 = sadd.s32 1, %s27
      %p33 = scmp.ge.s32.totalorder %s32, 1
      %s34 = scalar_select %p33, 0, %s32
      %s35 = sadd.s32 1, %s26
      %s36 = scalar_select %p33, %s35, %s26
      %p37 = scmp.ge.s32.totalorder %s36, 2
      %s38 = scalar_select %p37, 0, %s36
      %s39 = ssub.s32 %s26, %s38
      %p40 = scmp.eq.s32.totalorder %s39, 0
      %s42 = sadd.s32 %s41, 1
      %s43 = scalar_select %p40, %s41, %s42
      %p46 = pneg %p40
      %p47 = scmp.eq.s32.totalorder %s19, 1
      %p48 = por %p46, %p47
      %p49 = scmp.ne.s32.totalorder %s41, %s44
      %p50 = scmp.eq.s32.totalorder %s19, 0
      %p51 = por %p49, %p50
      %p52 = scmp.ne.s32.totalorder %s41, %s44
      %p53 = scmp.eq.s32.totalorder %s24, 1
      %p54 = por %p52, %p53
      %p55 = scmp.ne.s32.totalorder %s44, %s45
      %p56 = scmp.eq.s32.totalorder %s24, 0
      %p57 = por %p55, %p56
      %p58 = scmp.ne.s32.totalorder %s44, %s45
      %p59 = scmp.eq.s32.totalorder %s25, 1
      %p60 = por %p58, %p59
      %p62 = scmp.ne.s32.totalorder %s45, %s61
      %p63 = scmp.eq.s32.totalorder %s25, 0
      %p64 = por %p62, %p63
      %s66 = sadd.s32 %s65, 1
      %p69 = scmp.eq.s32.totalorder %s19, 1
      %p70 = scmp.ne.s32.totalorder %s65, %s67
      %p71 = scmp.eq.s32.totalorder %s19, 0
      %p72 = por %p70, %p71
      %p73 = scmp.ne.s32.totalorder %s65, %s67
      %p74 = scmp.eq.s32.totalorder %s24, 1
      %p75 = por %p73, %p74
      %p76 = scmp.ne.s32.totalorder %s67, %s68
      %p77 = scmp.eq.s32.totalorder %s24, 0
      %p78 = por %p76, %p77
      %p79 = scmp.ne.s32.totalorder %s67, %s68
      %p80 = scmp.eq.s32.totalorder %s25, 1
      %p81 = por %p79, %p80
      %p83 = scmp.ne.s32.totalorder %s68, %s82
      %p84 = scmp.eq.s32.totalorder %s25, 0
      %p85 = por %p83, %p84
      %s87 = sadd.s32 %s86, 1
      %p90 = scmp.eq.s32.totalorder %s19, 1
      %p91 = scmp.ne.s32.totalorder %s86, %s88
      %p92 = scmp.eq.s32.totalorder %s19, 0
      %p93 = por %p91, %p92
      %p94 = scmp.ne.s32.totalorder %s86, %s88
      %p95 = scmp.eq.s32.totalorder %s24, 1
      %p96 = por %p94, %p95
      %p97 = scmp.ne.s32.totalorder %s88, %s89
      %p98 = scmp.eq.s32.totalorder %s24, 0
      %p99 = por %p97, %p98
      %p100 = scmp.ne.s32.totalorder %s88, %s89
      %p101 = scmp.eq.s32.totalorder %s25, 1
      %p102 = por %p100, %p101
      %p104 = scmp.ne.s32.totalorder %s89, %s103
      %p105 = scmp.eq.s32.totalorder %s25, 0
      %p106 = por %p104, %p105
      %s108 = sadd.s32 %s107, 1
      %p111 = scmp.eq.s32.totalorder %s19, 1
      %p112 = scmp.ne.s32.totalorder %s107, %s109
      %p113 = scmp.eq.s32.totalorder %s19, 0
      %p114 = por %p112, %p113
      %p115 = scmp.ne.s32.totalorder %s107, %s109
      %p116 = scmp.eq.s32.totalorder %s24, 1
      %p117 = por %p115, %p116
      %p118 = scmp.ne.s32.totalorder %s109, %s110
      %p119 = scmp.eq.s32.totalorder %s24, 0
      %p120 = por %p118, %p119
      %p121 = scmp.ne.s32.totalorder %s109, %s110
      %p122 = scmp.eq.s32.totalorder %s25, 1
      %p123 = por %p121, %p122
      %p125 = scmp.ne.s32.totalorder %s110, %s124
      %p126 = scmp.eq.s32.totalorder %s25, 0
      %p127 = por %p125, %p126
      %s129 = sadd.s32 %s128, 1
      %p132 = scmp.eq.s32.totalorder %s19, 1
      %p133 = scmp.ne.s32.totalorder %s128, %s130
      %p134 = scmp.eq.s32.totalorder %s19, 0
      %p135 = por %p133, %p134
      %p136 = scmp.ne.s32.totalorder %s128, %s130
      %p137 = scmp.eq.s32.totalorder %s24, 1
      %p138 = por %p136, %p137
      %p139 = scmp.ne.s32.totalorder %s130, %s131
      %p140 = scmp.eq.s32.totalorder %s24, 0
      %p141 = por %p139, %p140
      %p142 = scmp.ne.s32.totalorder %s130, %s131
      %p143 = scmp.eq.s32.totalorder %s25, 1
      %p144 = por %p142, %p143
      %p146 = scmp.ne.s32.totalorder %s131, %s145
      %p147 = scmp.eq.s32.totalorder %s25, 0
      %p148 = por %p146, %p147
      %s150 = sadd.s32 %s149, 1
      %p153 = scmp.eq.s32.totalorder %s19, 1
      %p154 = scmp.ne.s32.totalorder %s149, %s151
      %p155 = scmp.eq.s32.totalorder %s19, 0
      %p156 = por %p154, %p155
      %p157 = scmp.ne.s32.totalorder %s149, %s151
      %p158 = scmp.eq.s32.totalorder %s24, 1
      %p159 = por %p157, %p158
      %p160 = scmp.ne.s32.totalorder %s151, %s152
      %p161 = scmp.eq.s32.totalorder %s24, 0
      %p162 = por %p160, %p161
      %p163 = scmp.ne.s32.totalorder %s151, %s152
      %p164 = scmp.eq.s32.totalorder %s25, 1
      %p165 = por %p163, %p164
      %p167 = scmp.ne.s32.totalorder %s152, %s166
      %p168 = scmp.eq.s32.totalorder %s25, 0
      %p169 = por %p167, %p168
      %s171 = sadd.s32 %s170, 1
      %p174 = scmp.eq.s32.totalorder %s19, 1
      %p175 = scmp.ne.s32.totalorder %s170, %s172
      %p176 = scmp.eq.s32.totalorder %s19, 0
      %p177 = por %p175, %p176
      %p178 = scmp.ne.s32.totalorder %s170, %s172
      %p179 = scmp.eq.s32.totalorder %s24, 1
      %p180 = por %p178, %p179
      %p181 = scmp.ne.s32.totalorder %s172, %s173
      %p182 = scmp.eq.s32.totalorder %s24, 0
      %p183 = por %p181, %p182
      %p184 = scmp.ne.s32.totalorder %s172, %s173
      %p185 = scmp.eq.s32.totalorder %s25, 1
      %p186 = por %p184, %p185
      %p188 = scmp.ne.s32.totalorder %s173, %s187
      %p189 = scmp.eq.s32.totalorder %s25, 0
      %p190 = por %p188, %p189
      %s192 = sadd.s32 %s191, 1
      %p195 = scmp.eq.s32.totalorder %s19, 1
      %p196 = scmp.ne.s32.totalorder %s191, %s193
      %p197 = scmp.eq.s32.totalorder %s19, 0
      %p198 = por %p196, %p197
      %p199 = scmp.ne.s32.totalorder %s191, %s193
      %p200 = scmp.eq.s32.totalorder %s24, 1
      %p201 = por %p199, %p200
      %p202 = scmp.ne.s32.totalorder %s193, %s194
      %p203 = scmp.eq.s32.totalorder %s24, 0
      %p204 = por %p202, %p203
      %p205 = scmp.ne.s32.totalorder %s193, %s194
      %p206 = scmp.eq.s32.totalorder %s25, 1
      %p207 = por %p205, %p206
      %p209 = scmp.ne.s32.totalorder %s194, %s208
      %p210 = scmp.eq.s32.totalorder %s25, 0
      %p211 = por %p209, %p210
      %s213 = sadd.s32 %s212, 1
      %p216 = scmp.eq.s32.totalorder %s19, 1
      %p217 = scmp.ne.s32.totalorder %s212, %s214
      %p218 = scmp.eq.s32.totalorder %s19, 0
      %p219 = por %p217, %p218
      %p220 = scmp.ne.s32.totalorder %s212, %s214
      %p221 = scmp.eq.s32.totalorder %s24, 1
      %p222 = por %p220, %p221
      %p223 = scmp.ne.s32.totalorder %s214, %s215
      %p224 = scmp.eq.s32.totalorder %s24, 0
      %p225 = por %p223, %p224
      %p226 = scmp.ne.s32.totalorder %s214, %s215
      %p227 = scmp.eq.s32.totalorder %s25, 1
      %p228 = por %p226, %p227
      %p230 = scmp.ne.s32.totalorder %s215, %s229
      %p231 = scmp.eq.s32.totalorder %s25, 0
      %p232 = por %p230, %p231
      %s233 = ssub.s32 %s26, %s38
      %s234 = ssub.s32 %s27, %s34
      %s235 = sor.u32 %s233, %s234
      %p236 = scmp.eq.s32.totalorder %s235, 0
      %s238 = sadd.s32 %s237, 1
      %s239 = scalar_select %p236, %s237, %s238
      %p242 = pneg %p236
      %p243 = scmp.eq.s32.totalorder %s19, 1
      %p244 = por %p242, %p243
      %p245 = scmp.ne.s32.totalorder %s237, %s240
      %p246 = scmp.eq.s32.totalorder %s19, 0
      %p247 = por %p245, %p246
      %p248 = scmp.ne.s32.totalorder %s237, %s240
      %p249 = scmp.eq.s32.totalorder %s24, 1
      %p250 = por %p248, %p249
      %p251 = scmp.ne.s32.totalorder %s240, %s241
      %p252 = scmp.eq.s32.totalorder %s24, 0
      %p253 = por %p251, %p252
      %p254 = scmp.ne.s32.totalorder %s240, %s241
      %p255 = scmp.eq.s32.totalorder %s25, 1
      %p256 = por %p254, %p255
      %p258 = scmp.ne.s32.totalorder %s241, %s257
      %p259 = scmp.eq.s32.totalorder %s25, 0
      %p260 = por %p258, %p259
      %s261 = ssub.s32 %s26, %s38
      %s262 = ssub.s32 %s27, %s34
      %s263 = sor.u32 %s261, %s262
      %p264 = scmp.eq.s32.totalorder %s263, 0
      %s266 = sadd.s32 %s265, 1
      %s267 = scalar_select %p264, %s265, %s266
      %p270 = pneg %p264
      %p271 = scmp.eq.s32.totalorder %s19, 1
      %p272 = por %p270, %p271
      %p273 = scmp.ne.s32.totalorder %s265, %s268
      %p274 = scmp.eq.s32.totalorder %s19, 0
      %p275 = por %p273, %p274
      %p276 = scmp.ne.s32.totalorder %s265, %s268
      %p277 = scmp.eq.s32.totalorder %s24, 1
      %p278 = por %p276, %p277
      %p279 = scmp.ne.s32.totalorder %s268, %s269
      %p280 = scmp.eq.s32.totalorder %s24, 0
      %p281 = por %p279, %p280
      %p282 = scmp.ne.s32.totalorder %s268, %s269
      %p283 = scmp.eq.s32.totalorder %s25, 1
      %p284 = por %p282, %p283
      %p286 = scmp.ne.s32.totalorder %s269, %s285
      %p287 = scmp.eq.s32.totalorder %s25, 0
      %p288 = por %p286, %p287
      %s289 = ssub.s32 %s26, %s38
      %s290 = ssub.s32 %s27, %s34
      %s291 = sor.u32 %s289, %s290
      %p292 = scmp.eq.s32.totalorder %s291, 0
      %s294 = sadd.s32 %s293, 1
      %s295 = scalar_select %p292, %s293, %s294
      %p298 = pneg %p292
      %p299 = scmp.eq.s32.totalorder %s19, 1
      %p300 = por %p298, %p299
      %p301 = scmp.ne.s32.totalorder %s293, %s296
      %p302 = scmp.eq.s32.totalorder %s19, 0
      %p303 = por %p301, %p302
      %p304 = scmp.ne.s32.totalorder %s293, %s296
      %p305 = scmp.eq.s32.totalorder %s24, 1
      %p306 = por %p304, %p305
      %p307 = scmp.ne.s32.totalorder %s296, %s297
      %p308 = scmp.eq.s32.totalorder %s24, 0
      %p309 = por %p307, %p308
      %p310 = scmp.ne.s32.totalorder %s296, %s297
      %p311 = scmp.eq.s32.totalorder %s25, 1
      %p312 = por %p310, %p311
      %p314 = scmp.ne.s32.totalorder %s297, %s313
      %p315 = scmp.eq.s32.totalorder %s25, 0
      %p316 = por %p314, %p315
      %p317 = scmp.le.s32.totalorder 1, %s19
      %p318 = scmp.lt.s32.totalorder %s19, 3
      %p319 = pnand %p317, %p318
      %p320 = pneg %p319
      // Predicated region
      $region9: #{mcm3_forward.2} parent=5 // pred_check
        _
      $region10: #{mcm3_forward.2} parent=5 // pred_check_branch
        %322 = sbr.rel (%p319) target = $region12
      $region11: #{mcm3_forward.2} parent=5 // pred_region
        %s323 = ssub.s32 %s19, 1
        // Predicated region
        $region13: #{mcm3_forward.2} parent=11 // pred_check
          %p324 = pneg %p78
        $region14: #{mcm3_forward.2} parent=11 // pred_check_branch
          %326 = sbr.rel (%p324) target = $region16
        $region15: #{mcm3_forward.2} parent=11 // pred_region
          _
        $region16: #{mcm3_forward.2} parent=11 // pred_fallthru
          _
        // Predicated region
        $region17: #{mcm3_forward.2} parent=11 // pred_check
          %p327 = pneg %p99
        $region18: #{mcm3_forward.2} parent=11 // pred_check_branch
          %329 = sbr.rel (%p327) target = $region20
        $region19: #{mcm3_forward.2} parent=11 // pred_region
          _
        $region20: #{mcm3_forward.2} parent=11 // pred_fallthru
          _
        // Predicated region
        $region21: #{mcm3_forward.2} parent=11 // pred_check
          %p330 = pneg %p120
        $region22: #{mcm3_forward.2} parent=11 // pred_check_branch
          %332 = sbr.rel (%p330) target = $region24
        $region23: #{mcm3_forward.2} parent=11 // pred_region
          %s334 = ssub.s32 9216, 9216
          %335 = vsyncadd [#allocation3], %s334
          %s336 = sshll.u32 [#allocation2], 4
          %s337 = int_to_ptr.vmem [resolvable:$true] %s336
          %342 = dma.hbm_to_vmem [thread:$0]  %s3, 9216, %s337, [#allocation3], 64, 64, 4
        $region24: #{mcm3_forward.2} parent=11 // pred_fallthru
          _
        // Predicated region
        $region25: #{mcm3_forward.2} parent=11 // pred_check
          %p343 = pneg %p141
        $region26: #{mcm3_forward.2} parent=11 // pred_check_branch
          %345 = sbr.rel (%p343) target = $region28
        $region27: #{mcm3_forward.2} parent=11 // pred_region
          _
        $region28: #{mcm3_forward.2} parent=11 // pred_fallthru
          _
        // Predicated region
        $region29: #{mcm3_forward.2} parent=11 // pred_check
          %p346 = pneg %p162
        $region30: #{mcm3_forward.2} parent=11 // pred_check_branch
          %348 = sbr.rel (%p346) target = $region32
        $region31: #{mcm3_forward.2} parent=11 // pred_region
          _
        $region32: #{mcm3_forward.2} parent=11 // pred_fallthru
          _
        // Predicated region
        $region33: #{mcm3_forward.2} parent=11 // pred_check
          %p349 = pneg %p183
        $region34: #{mcm3_forward.2} parent=11 // pred_check_branch
          %351 = sbr.rel (%p349) target = $region36
        $region35: #{mcm3_forward.2} parent=11 // pred_region
          _
        $region36: #{mcm3_forward.2} parent=11 // pred_fallthru
          _
        // Predicated region
        $region37: #{mcm3_forward.2} parent=11 // pred_check
          %p352 = pneg %p204
        $region38: #{mcm3_forward.2} parent=11 // pred_check_branch
          %354 = sbr.rel (%p352) target = $region40
        $region39: #{mcm3_forward.2} parent=11 // pred_region
          _
        $region40: #{mcm3_forward.2} parent=11 // pred_fallthru
          _
        // Predicated region
        $region41: #{mcm3_forward.2} parent=11 // pred_check
          %p355 = pneg %p225
        $region42: #{mcm3_forward.2} parent=11 // pred_check_branch
          %357 = sbr.rel (%p355) target = $region44
        $region43: #{mcm3_forward.2} parent=11 // pred_region
          _
        $region44: #{mcm3_forward.2} parent=11 // pred_fallthru
          _
      $region12: #{mcm3_forward.2} parent=5 // pred_fallthru
        _
      %p358 = scmp.lt.s32.totalorder %s19, 2
      // Predicated region
      $region45: #{mcm3_forward.2} parent=5 // pred_check
        %p359 = pneg %p358
      $region46: #{mcm3_forward.2} parent=5 // pred_check_branch
        %361 = sbr.rel (%p359) target = $region48
      $region47: #{mcm3_forward.2} parent=5 // pred_region
        // Predicated region
        $region49: #{mcm3_forward.2} parent=47 // pred_check
          %p362 = pneg %p51
        $region50: #{mcm3_forward.2} parent=47 // pred_check_branch
          %364 = sbr.rel (%p362) target = $region52
        $region51: #{mcm3_forward.2} parent=47 // pred_region
          %p365 = scmp.lt.s32.totalorder %s26, 1
          %s366 = scalar_select %p365, %s26, 1
          %s367 = smul.addr %s366, 40
          %s368 = smul.addr %s367, 8
          %s369 = scalar_lea.vmem %s0, %s368
        $region52: #{mcm3_forward.2} parent=47 // pred_fallthru
          _
      $region48: #{mcm3_forward.2} parent=5 // pred_fallthru
        _
      %p370 = scmp.le.s32.totalorder 1, %s19
      %p371 = scmp.lt.s32.totalorder %s19, 3
      %p372 = pnand %p370, %p371
      %p373 = pneg %p372
      // Predicated region
      $region53: #{mcm3_forward.2} parent=5 // pred_check
        _
      $region54: #{mcm3_forward.2} parent=5 // pred_check_branch
        %375 = sbr.rel (%p372) target = $region56
      $region55: #{mcm3_forward.2} parent=5 // pred_region
        %s376 = ssub.s32 %s19, 1
        // Predicated region
        $region57: #{mcm3_forward.2} parent=55 // pred_check
          %p377 = pneg %p120
        $region58: #{mcm3_forward.2} parent=55 // pred_check_branch
          %379 = sbr.rel (%p377) target = $region60
        $region59: #{mcm3_forward.2} parent=55 // pred_region
          %380 = dma.done [#allocation3], 9216
        $region60: #{mcm3_forward.2} parent=55 // pred_fallthru
          _
        %p381 = scmp.lt.s32.totalorder %s28, 1
        %s382 = scalar_select %p381, %s28, 1
        %s383 = smul.addr %s382, 40
        %s384 = smul.addr %s383, 8
        %s385 = scalar_lea.vmem %s0, %s384
        %p386 = pneg %p57
        %p387 = pneg %p54
        %p388 = pneg %p78
        %p389 = pneg %p75
        %p390 = pneg %p99
        %p391 = pneg %p96
        %p392 = pneg %p120
        %p393 = pneg %p117
        %p394 = pneg %p141
        %p395 = pneg %p138
        %p396 = pneg %p162
        %p397 = pneg %p159
        %p398 = pneg %p183
        %p399 = pneg %p180
        %p400 = pneg %p204
        %p401 = pneg %p201
        %p402 = pneg %p225
        %p403 = pneg %p222
        %p404 = pneg %p253
        %p405 = pneg %p250
        %s406 = smul.u32 16, %s29
        %p407 = scmp.lt.s32.totalorder %s28, 1
        %s408 = scalar_select %p407, %s28, 1
        %p409 = scmp.lt.s32.totalorder %s406, 15
        %s410 = scalar_select %p409, %s406, 15
        %s411 = smul.addr %s410, 8
        %s412 = smul.addr %s408, 128
        %s413 = sadd.s32 %s411, %s412
        %s414 = smul.addr %s413, 4
        %s415 = scalar_lea.vmem %s9, %s414
        %p416 = pneg %p281
        %p417 = pneg %p278
        %p418 = scmp.lt.s32.totalorder %s28, 1
        %s419 = scalar_select %p418, %s28, 1
        %p420 = scmp.lt.s32.totalorder %s29, 0
        %s421 = scalar_select %p420, %s29, 0
        %s422 = smul.addr %s421, 4
        %s423 = smul.addr %s419, 4
        %s424 = sadd.s32 %s422, %s423
        %s425 = scalar_lea.vmem %s10, %s424
        %p426 = pneg %p309
        %p427 = pneg %p306
        %p428 = scmp.lt.s32.totalorder %s28, 1
        %s429 = scalar_select %p428, %s28, 1
        %p430 = scmp.lt.s32.totalorder %s29, 0
        %s431 = scalar_select %p430, %s29, 0
        %s432 = smul.addr %s431, 4
        %s433 = smul.addr %s429, 4
        %s434 = sadd.s32 %s432, %s433
        %s435 = scalar_lea.vmem %s11, %s434
        %p436 = scmp.lt.s32.totalorder %s28, 1
        %s437 = scalar_select %p436, %s28, 1
        %s438 = smul.addr %s437, 40
        %s439 = smul.addr %s438, 8
        %s440 = scalar_lea.vmem %s0, %s439
        %s441 = smul.u32 16, %s29
        %p442 = scmp.lt.s32.totalorder %s28, 1
        %s443 = scalar_select %p442, %s28, 1
        %p444 = scmp.lt.s32.totalorder %s441, 15
        %s445 = scalar_select %p444, %s441, 15
        %s446 = smul.addr %s445, 8
        %s447 = smul.addr %s443, 128
        %s448 = sadd.s32 %s446, %s447
        %s449 = smul.addr %s448, 4
        %s450 = scalar_lea.vmem %s9, %s449
        %s451 = smul.u32 16, %s29
        %p452 = scmp.lt.s32.totalorder %s28, 1
        %s453 = scalar_select %p452, %s28, 1
        %p454 = scmp.lt.s32.totalorder %s29, 0
        %s455 = scalar_select %p454, %s29, 0
        %s456 = smul.addr %s455, 4
        %s457 = smul.addr %s453, 4
        %s458 = sadd.s32 %s456, %s457
        %s459 = scalar_lea.vmem %s10, %s458
        %p460 = scmp.lt.s32.totalorder %s28, 1
        %s461 = scalar_select %p460, %s28, 1
        %p462 = scmp.lt.s32.totalorder %s29, 0
        %s463 = scalar_select %p462, %s29, 0
        %s464 = smul.addr %s463, 4
        %s465 = smul.addr %s461, 4
        %s466 = sadd.s32 %s464, %s465
        %s467 = scalar_lea.vmem %s11, %s466
        %s469 = smul.u32 %s29, 16
        %s470 = smul.u32 %s469, 16
        %s471 = scalar_lea.vmem %s440, %s470
        %v472 = vld [vmem:[%s471] sm:$0xff]
        %v473 = vld [vmem:[%s471 + $0x8] sm:$0xff]
        %v474 = vld [vmem:[%s471 + $0x10] sm:$0xff]
        %v475 = vld [vmem:[%s471 + $0x18] sm:$0xff]
        %v476 = vld [vmem:[%s471 + $0x20] sm:$0xff]
        %v477 = vld [vmem:[%s471 + $0x28] sm:$0xff]
        %v478 = vld [vmem:[%s471 + $0x30] sm:$0xff]
        %v479 = vld [vmem:[%s471 + $0x38] sm:$0xff]
        %v480 = vld [vmem:[%s471 + $0x40] sm:$0xff]
        %v481 = vld [vmem:[%s471 + $0x48] sm:$0xff]
        %v482 = vld [vmem:[%s471 + $0x50] sm:$0xff]
        %v483 = vld [vmem:[%s471 + $0x58] sm:$0xff]
        %v484 = vld [vmem:[%s471 + $0x60] sm:$0xff]
        %v485 = vld [vmem:[%s471 + $0x68] sm:$0xff]
        %v486 = vld [vmem:[%s471 + $0x70] sm:$0xff]
        %v487 = vld [vmem:[%s471 + $0x78] sm:$0xff]
        %v488 = vld [vmem:[%s471 + $0x80] sm:$0xff]
        %v489 = vld [vmem:[%s471 + $0x88] sm:$0xff]
        %v490 = vld [vmem:[%s471 + $0x90] sm:$0xff]
        %v491 = vld [vmem:[%s471 + $0x98] sm:$0xff]
        %v492 = vld [vmem:[%s471 + $0xa0] sm:$0xff]
        %v493 = vld [vmem:[%s471 + $0xa8] sm:$0xff]
        %v494 = vld [vmem:[%s471 + $0xb0] sm:$0xff]
        %v495 = vld [vmem:[%s471 + $0xb8] sm:$0xff]
        %v496 = vld [vmem:[%s471 + $0xc0] sm:$0xff]
        %v497 = vld [vmem:[%s471 + $0xc8] sm:$0xff]
        %v498 = vld [vmem:[%s471 + $0xd0] sm:$0xff]
        %v499 = vld [vmem:[%s471 + $0xd8] sm:$0xff]
        %v500 = vld [vmem:[%s471 + $0xe0] sm:$0xff]
        %v501 = vld [vmem:[%s471 + $0xe8] sm:$0xff]
        %v502 = vld [vmem:[%s471 + $0xf0] sm:$0xff]
        %v503 = vld [vmem:[%s471 + $0xf8] sm:$0xff]
        %v504 = vld [vmem:[%s471 + $0x100] sm:$0xff]
        %v505 = vld [vmem:[%s471 + $0x108] sm:$0xff]
        %v506 = vld [vmem:[%s471 + $0x110] sm:$0xff]
        %v507 = vld [vmem:[%s471 + $0x118] sm:$0xff]
        %v508 = vld [vmem:[%s471 + $0x120] sm:$0xff]
        %v509 = vld [vmem:[%s471 + $0x128] sm:$0xff]
        %v510 = vld [vmem:[%s471 + $0x130] sm:$0xff]
        %v511 = vld [vmem:[%s471 + $0x138] sm:$0xff]
        %s512 = ssub.s32 %s469, 2
        %v513 = vstv %s512
        %v514 = vadd.s32 %v513, 1
        %v515 = vadd.s32 %v513, 2
        %v516 = vadd.s32 %v513, 3
        %v517 = vadd.s32 %v513, 4
        %v518 = vadd.s32 %v513, 5
        %v519 = vadd.s32 %v513, 6
        %v520 = vadd.s32 %v513, 7
        %v521 = vadd.s32 %v513, 8
        %v522 = vadd.s32 %v513, 9
        %v523 = vadd.s32 %v513, 10
        %v524 = vadd.s32 %v513, 11
        %v525 = vadd.s32 %v513, 12
        %v526 = vadd.s32 %v513, 13
        %v527 = vadd.s32 %v513, 14
        %v528 = vadd.s32 %v513, 15
        %v529 = vadd.s32 %v513, 16
        %v530 = vadd.s32 %v513, 17
        %v531 = vadd.s32 %v513, 18
        %v532 = vadd.s32 %v513, 19
        %vm533 = vcmp.ge.s32.totalorder %v513, 0
        %vm534 = vcmp.ge.s32.totalorder %v514, 0
        %vm535 = vcmp.ge.s32.totalorder %v515, 0
        %vm536 = vcmp.ge.s32.totalorder %v516, 0
        %vm537 = vcmp.ge.s32.totalorder %v517, 0
        %vm538 = vcmp.ge.s32.totalorder %v518, 0
        %vm539 = vcmp.ge.s32.totalorder %v519, 0
        %vm540 = vcmp.ge.s32.totalorder %v520, 0
        %vm541 = vcmp.ge.s32.totalorder %v521, 0
        %vm542 = vcmp.ge.s32.totalorder %v522, 0
        %vm543 = vcmp.ge.s32.totalorder %v523, 0
        %vm544 = vcmp.ge.s32.totalorder %v524, 0
        %vm545 = vcmp.ge.s32.totalorder %v525, 0
        %vm546 = vcmp.ge.s32.totalorder %v526, 0
        %vm547 = vcmp.ge.s32.totalorder %v527, 0
        %vm548 = vcmp.ge.s32.totalorder %v528, 0
        %vm549 = vcmp.ge.s32.totalorder %v529, 0
        %vm550 = vcmp.ge.s32.totalorder %v530, 0
        %vm551 = vcmp.ge.s32.totalorder %v531, 0
        %vm552 = vcmp.ge.s32.totalorder %v532, 0
        %vm553 = vcmp.lt.s32.totalorder %v513, 16
        %vm554 = vcmp.lt.s32.totalorder %v514, 16
        %vm555 = vcmp.lt.s32.totalorder %v515, 16
        %vm556 = vcmp.lt.s32.totalorder %v516, 16
        %vm557 = vcmp.lt.s32.totalorder %v517, 16
        %vm558 = vcmp.lt.s32.totalorder %v518, 16
        %vm559 = vcmp.lt.s32.totalorder %v519, 16
        %vm560 = vcmp.lt.s32.totalorder %v520, 16
        %vm561 = vcmp.lt.s32.totalorder %v521, 16
        %vm562 = vcmp.lt.s32.totalorder %v522, 16
        %vm563 = vcmp.lt.s32.totalorder %v523, 16
        %vm564 = vcmp.lt.s32.totalorder %v524, 16
        %vm565 = vcmp.lt.s32.totalorder %v525, 16
        %vm566 = vcmp.lt.s32.totalorder %v526, 16
        %vm567 = vcmp.lt.s32.totalorder %v527, 16
        %vm568 = vcmp.lt.s32.totalorder %v528, 16
        %vm569 = vcmp.lt.s32.totalorder %v529, 16
        %vm570 = vcmp.lt.s32.totalorder %v530, 16
        %vm571 = vcmp.lt.s32.totalorder %v531, 16
        %vm572 = vcmp.lt.s32.totalorder %v532, 16
        %vm573 = vmand %vm533, %vm553
        %vm574 = vmand %vm534, %vm554
        %vm575 = vmand %vm535, %vm555
        %vm576 = vmand %vm536, %vm556
        %vm577 = vmand %vm537, %vm557
        %vm578 = vmand %vm538, %vm558
        %vm579 = vmand %vm539, %vm559
        %vm580 = vmand %vm540, %vm560
        %vm581 = vmand %vm541, %vm561
        %vm582 = vmand %vm542, %vm562
        %vm583 = vmand %vm543, %vm563
        %vm584 = vmand %vm544, %vm564
        %vm585 = vmand %vm545, %vm565
        %vm586 = vmand %vm546, %vm566
        %vm587 = vmand %vm547, %vm567
        %vm588 = vmand %vm548, %vm568
        %vm589 = vmand %vm549, %vm569
        %vm590 = vmand %vm550, %vm570
        %vm591 = vmand %vm551, %vm571
        %vm592 = vmand %vm552, %vm572
        %v593 = vpack.c.bf16 %v473, %v472
        %v594 = vpack.c.bf16 %v475, %v474
        %v595 = vpack.c.bf16 %v477, %v476
        %v596 = vpack.c.bf16 %v479, %v478
        %v597 = vpack.c.bf16 %v481, %v480
        %v598 = vpack.c.bf16 %v483, %v482
        %v599 = vpack.c.bf16 %v485, %v484
        %v600 = vpack.c.bf16 %v487, %v486
        %v601 = vpack.c.bf16 %v489, %v488
        %v602 = vpack.c.bf16 %v491, %v490
        %v603 = vpack.c.bf16 %v493, %v492
        %v604 = vpack.c.bf16 %v495, %v494
        %v605 = vpack.c.bf16 %v497, %v496
        %v606 = vpack.c.bf16 %v499, %v498
        %v607 = vpack.c.bf16 %v501, %v500
        %v608 = vpack.c.bf16 %v503, %v502
        %v609 = vpack.c.bf16 %v505, %v504
        %v610 = vpack.c.bf16 %v507, %v506
        %v611 = vpack.c.bf16 %v509, %v508
        %v612 = vpack.c.bf16 %v511, %v510
        %v613 = vld [vmem:[%s1] sm:$0x3f]
        %v614 = vld [vmem:[%s2] sm:$0x7]
        %v616 = vlaneseq
        %v617 = vshrl.u32 %v616, 7
        %v618 = vsub.s32 0, %v617
        %v619 = vrot.slane %v614, %v618
        %v620 = vlaneseq
        %v621 = vshrl.u32 %v620, 7
        %v622 = vsub.s32 1, %v621
        %v623 = vrot.slane %v614, %v622
        %v624 = vlaneseq
        %v625 = vshrl.u32 %v624, 7
        %v626 = vsub.s32 2, %v625
        %v627 = vrot.slane %v614, %v626
        %v632 = vcombine.high %v613, %v613
        %v634 = vunpack.c.l.s4 1983009808
        %v635 = vunpack.c.0.s8 %v634
        %v636 = vlaneseq
        %v637 = vshrl.u32 %v636, 7
        %v638 = vsub.s32 %v635, %v637
        %v639 = vrot.slane %v613, %v638
        %v641 = vunpack.c.l.s4 1983009808
        %v642 = vunpack.c.0.s8 %v641
        %v643 = vlaneseq
        %v644 = vshrl.u32 %v643, 7
        %v645 = vsub.s32 %v642, %v644
        %v646 = vrot.slane %v632, %v645
        %v647 = vcombine.high %v639, %v639
        %vm648 = vcmask 31744
        %v650 = vsel %vm648, %v593, 0
        %v653 = vsel %vm648, %v594, 0
        %v656 = vsel %vm648, %v595, 0
        %v659 = vsel %vm648, %v596, 0
        %v662 = vsel %vm648, %v597, 0
        %v665 = vsel %vm648, %v598, 0
        %v668 = vsel %vm648, %v599, 0
        %v671 = vsel %vm648, %v600, 0
        %v674 = vsel %vm648, %v601, 0
        %v677 = vsel %vm648, %v602, 0
        %v680 = vsel %vm648, %v603, 0
        %v683 = vsel %vm648, %v604, 0
        %v686 = vsel %vm648, %v605, 0
        %v689 = vsel %vm648, %v606, 0
        %v692 = vsel %vm648, %v607, 0
        %v695 = vsel %vm648, %v608, 0
        %v698 = vsel %vm648, %v609, 0
        %v701 = vsel %vm648, %v610, 0
        %v704 = vsel %vm648, %v611, 0
        %v707 = vsel %vm648, %v612, 0
        %vm709 = vcmask 1041408
        %v711 = vsel %vm709, %v639, 0
        %v714 = vsel %vm709, %v647, 0
        %v717 = vsel %vm709, %v646, 0
        %719 = vmatprep.subr.bf16.mxu0 0
        %720 = vmatpush1.bf16.msra.mxu0 0
        %721 = vmatprep.subr.bf16.mxu0 0
        %722 = vmatpush1.bf16.msra.mxu0 0
        %723 = vmatprep.subr.bf16.mxu0 0
        %724 = vmatpush1.bf16.msra.mxu0 0
        %725 = vmatprep.subr.bf16.mxu0 0
        %726 = vmatpush1.bf16.msra.mxu0 0
        %727 = vmatprep.subr.bf16.mxu0 0
        %728 = vmatpush1.bf16.msra.mxu0 0
        %729 = vmatprep.subr.bf16.mxu0 0
        %730 = vmatpush1.bf16.msra.mxu0 0
        %731 = vmatprep.subr.bf16.mxu0 0
        %732 = vmatpush1.bf16.msra.mxu0 0
        %733 = vmatprep.subr.bf16.mxu0 %v714
        %734 = vmatpush1.bf16.msra.mxu0 %v711
        %735 = vmatprep.subr.bf16.mxu0 0
        %736 = vmatpush2.bf16.msra.mxu0 0
        %737 = vmatprep.subr.bf16.mxu0 0
        %738 = vmatpush2.bf16.msra.mxu0 0
        %739 = vmatprep.subr.bf16.mxu0 0
        %740 = vmatpush2.bf16.msra.mxu0 0
        %741 = vmatprep.subr.bf16.mxu0 0
        %742 = vmatpush2.bf16.msra.mxu0 0
        %743 = vmatprep.subr.bf16.mxu0 0
        %744 = vmatpush2.bf16.msra.mxu0 0
        %745 = vmatprep.subr.bf16.mxu0 0
        %746 = vmatpush2.bf16.msra.mxu0 0
        %747 = vmatprep.subr.bf16.mxu0 0
        %748 = vmatpush2.bf16.msra.mxu0 0
        %749 = vmatprep.subr.bf16.mxu0 0
        %750 = vmatpush2.bf16.msra.mxu0 0
        %751 = vmatprep.mubr.bf16.mxu0 0
        %752 = vmatmul.mubr.bf16.gmra.mxu0 %v650
        %v753 = vpop.f32.mrf.mxu0
        %v754 = vpop.f32.mrf.mxu0
        %v755 = vpop.f32.mrf.mxu0
        %v756 = vpop.f32.mrf.mxu0
        %757 = vmatprep.mubr.bf16.mxu0 0
        %758 = vmatmul.mubr.bf16.gmra.mxu0 %v653
        %v759 = vpop.f32.mrf.mxu0
        %v760 = vpop.f32.mrf.mxu0
        %v761 = vadd.f32 %v623, %v760
        %v762 = vpop.f32.mrf.mxu0
        %v763 = vpop.f32.mrf.mxu0
        %v764 = vadd.f32 %v623, %v763
        %765 = vmatprep.mubr.bf16.mxu0 0
        %766 = vmatmul.mubr.bf16.gmra.mxu0 %v656
        %v767 = vpop.f32.mrf.mxu0
        %v768 = vadd.f32 %v619, %v767
        %v769 = vpop.f32.mrf.mxu0
        %v770 = vadd.f32 %v623, %v769
        %v771 = vpop.f32.mrf.mxu0
        %v772 = vadd.f32 %v619, %v771
        %v773 = vpop.f32.mrf.mxu0
        %v774 = vadd.f32 %v623, %v773
        %775 = vmatprep.mubr.bf16.mxu0 0
        %776 = vmatmul.mubr.bf16.gmra.mxu0 %v659
        %v777 = vpop.f32.mrf.mxu0
        %v778 = vadd.f32 %v619, %v777
        %v779 = vpop.f32.mrf.mxu0
        %v780 = vadd.f32 %v623, %v779
        %v781 = vpop.f32.mrf.mxu0
        %v782 = vadd.f32 %v619, %v781
        %v783 = vpop.f32.mrf.mxu0
        %v784 = vadd.f32 %v623, %v783
        %785 = vmatprep.mubr.bf16.mxu0 0
        %786 = vmatmul.mubr.bf16.gmra.mxu0 %v662
        %v787 = vpop.f32.mrf.mxu0
        %v788 = vadd.f32 %v619, %v787
        %v789 = vpop.f32.mrf.mxu0
        %v790 = vadd.f32 %v623, %v789
        %v791 = vpop.f32.mrf.mxu0
        %v792 = vadd.f32 %v619, %v791
        %v793 = vpop.f32.mrf.mxu0
        %v794 = vadd.f32 %v623, %v793
        %795 = vmatprep.mubr.bf16.mxu0 0
        %796 = vmatmul.mubr.bf16.gmra.mxu0 %v665
        %v797 = vpop.f32.mrf.mxu0
        %v798 = vadd.f32 %v619, %v797
        %v799 = vpop.f32.mrf.mxu0
        %v800 = vadd.f32 %v623, %v799
        %v801 = vpop.f32.mrf.mxu0
        %v802 = vadd.f32 %v619, %v801
        %v803 = vpop.f32.mrf.mxu0
        %v804 = vadd.f32 %v623, %v803
        %805 = vmatprep.mubr.bf16.mxu0 0
        %806 = vmatmul.mubr.bf16.gmra.mxu0 %v668
        %v807 = vpop.f32.mrf.mxu0
        %v808 = vadd.f32 %v619, %v807
        %v809 = vpop.f32.mrf.mxu0
        %v810 = vadd.f32 %v623, %v809
        %v811 = vpop.f32.mrf.mxu0
        %v812 = vadd.f32 %v619, %v811
        %v813 = vpop.f32.mrf.mxu0
        %v814 = vadd.f32 %v623, %v813
        %815 = vmatprep.mubr.bf16.mxu0 0
        %816 = vmatmul.mubr.bf16.gmra.mxu0 %v671
        %v817 = vpop.f32.mrf.mxu0
        %v818 = vadd.f32 %v619, %v817
        %v819 = vpop.f32.mrf.mxu0
        %v820 = vadd.f32 %v623, %v819
        %v821 = vpop.f32.mrf.mxu0
        %v822 = vadd.f32 %v619, %v821
        %v823 = vpop.f32.mrf.mxu0
        %v824 = vadd.f32 %v623, %v823
        %825 = vmatprep.mubr.bf16.mxu0 0
        %826 = vmatmul.mubr.bf16.gmra.mxu0 %v674
        %v827 = vpop.f32.mrf.mxu0
        %v828 = vadd.f32 %v619, %v827
        %v829 = vpop.f32.mrf.mxu0
        %v830 = vadd.f32 %v623, %v829
        %v831 = vpop.f32.mrf.mxu0
        %v832 = vadd.f32 %v619, %v831
        %v833 = vpop.f32.mrf.mxu0
        %v834 = vadd.f32 %v623, %v833
        %835 = vmatprep.mubr.bf16.mxu0 0
        %836 = vmatmul.mubr.bf16.gmra.mxu0 %v677
        %v837 = vpop.f32.mrf.mxu0
        %v838 = vadd.f32 %v619, %v837
        %v839 = vpop.f32.mrf.mxu0
        %v840 = vadd.f32 %v623, %v839
        %v841 = vpop.f32.mrf.mxu0
        %v842 = vadd.f32 %v619, %v841
        %v843 = vpop.f32.mrf.mxu0
        %v844 = vadd.f32 %v623, %v843
        %845 = vmatprep.mubr.bf16.mxu0 0
        %846 = vmatmul.mubr.bf16.gmra.mxu0 %v680
        %v847 = vpop.f32.mrf.mxu0
        %v848 = vadd.f32 %v619, %v847
        %v849 = vpop.f32.mrf.mxu0
        %v850 = vadd.f32 %v623, %v849
        %v851 = vpop.f32.mrf.mxu0
        %v852 = vadd.f32 %v619, %v851
        %v853 = vpop.f32.mrf.mxu0
        %v854 = vadd.f32 %v623, %v853
        %855 = vmatprep.mubr.bf16.mxu0 0
        %856 = vmatmul.mubr.bf16.gmra.mxu0 %v683
        %v857 = vpop.f32.mrf.mxu0
        %v858 = vadd.f32 %v619, %v857
        %v859 = vpop.f32.mrf.mxu0
        %v860 = vadd.f32 %v623, %v859
        %v861 = vpop.f32.mrf.mxu0
        %v862 = vadd.f32 %v619, %v861
        %v863 = vpop.f32.mrf.mxu0
        %v864 = vadd.f32 %v623, %v863
        %865 = vmatprep.mubr.bf16.mxu0 0
        %866 = vmatmul.mubr.bf16.gmra.mxu0 %v686
        %v867 = vpop.f32.mrf.mxu0
        %v868 = vadd.f32 %v619, %v867
        %v869 = vpop.f32.mrf.mxu0
        %v870 = vadd.f32 %v623, %v869
        %v871 = vpop.f32.mrf.mxu0
        %v872 = vadd.f32 %v619, %v871
        %v873 = vpop.f32.mrf.mxu0
        %v874 = vadd.f32 %v623, %v873
        %875 = vmatprep.mubr.bf16.mxu0 0
        %876 = vmatmul.mubr.bf16.gmra.mxu0 %v689
        %v877 = vpop.f32.mrf.mxu0
        %v878 = vadd.f32 %v619, %v877
        %v879 = vpop.f32.mrf.mxu0
        %v880 = vadd.f32 %v623, %v879
        %v881 = vpop.f32.mrf.mxu0
        %v882 = vadd.f32 %v619, %v881
        %v883 = vpop.f32.mrf.mxu0
        %v884 = vadd.f32 %v623, %v883
        %885 = vmatprep.mubr.bf16.mxu0 0
        %886 = vmatmul.mubr.bf16.gmra.mxu0 %v692
        %v887 = vpop.f32.mrf.mxu0
        %v888 = vadd.f32 %v619, %v887
        %v889 = vpop.f32.mrf.mxu0
        %v890 = vadd.f32 %v623, %v889
        %v891 = vpop.f32.mrf.mxu0
        %v892 = vadd.f32 %v619, %v891
        %v893 = vpop.f32.mrf.mxu0
        %v894 = vadd.f32 %v623, %v893
        %895 = vmatprep.mubr.bf16.mxu0 0
        %896 = vmatmul.mubr.bf16.gmra.mxu0 %v695
        %v897 = vpop.f32.mrf.mxu0
        %v898 = vadd.f32 %v619, %v897
        %v899 = vpop.f32.mrf.mxu0
        %v900 = vadd.f32 %v623, %v899
        %v901 = vpop.f32.mrf.mxu0
        %v902 = vadd.f32 %v619, %v901
        %v903 = vpop.f32.mrf.mxu0
        %v904 = vadd.f32 %v623, %v903
        %905 = vmatprep.mubr.bf16.mxu0 0
        %906 = vmatmul.mubr.bf16.gmra.mxu0 %v698
        %v907 = vpop.f32.mrf.mxu0
        %v908 = vadd.f32 %v619, %v907
        %v909 = vpop.f32.mrf.mxu0
        %v910 = vadd.f32 %v623, %v909
        %v911 = vpop.f32.mrf.mxu0
        %v912 = vadd.f32 %v619, %v911
        %v913 = vpop.f32.mrf.mxu0
        %v914 = vadd.f32 %v623, %v913
        %915 = vmatprep.mubr.bf16.mxu0 0
        %916 = vmatmul.mubr.bf16.gmra.mxu0 %v701
        %v917 = vpop.f32.mrf.mxu0
        %v918 = vadd.f32 %v619, %v917
        %v919 = vpop.f32.mrf.mxu0
        %v920 = vadd.f32 %v623, %v919
        %v921 = vpop.f32.mrf.mxu0
        %v922 = vadd.f32 %v619, %v921
        %v923 = vpop.f32.mrf.mxu0
        %v924 = vadd.f32 %v623, %v923
        %925 = vmatprep.mubr.bf16.mxu0 0
        %926 = vmatmul.mubr.bf16.gmra.mxu0 %v704
        %v927 = vpop.f32.mrf.mxu0
        %v928 = vpop.f32.mrf.mxu0
        %v929 = vadd.f32 %v623, %v928
        %v930 = vpop.f32.mrf.mxu0
        %v931 = vpop.f32.mrf.mxu0
        %v932 = vadd.f32 %v623, %v931
        %933 = vmatprep.mubr.bf16.mxu0 0
        %934 = vmatmul.mubr.bf16.gmra.mxu0 %v707
        %v935 = vpop.f32.mrf.mxu0
        %v936 = vpop.f32.mrf.mxu0
        %v937 = vpop.f32.mrf.mxu0
        %v938 = vpop.f32.mrf.mxu0
        %939 = vdwg.mxu0
        %940 = vmatprep.subr.bf16.mxu0 0
        %941 = vmatpush1.bf16.msra.mxu0 0
        %942 = vmatprep.subr.bf16.mxu0 0
        %943 = vmatpush1.bf16.msra.mxu0 0
        %944 = vmatprep.subr.bf16.mxu0 0
        %945 = vmatpush1.bf16.msra.mxu0 0
        %946 = vmatprep.subr.bf16.mxu0 0
        %947 = vmatpush1.bf16.msra.mxu0 0
        %948 = vmatprep.subr.bf16.mxu0 0
        %949 = vmatpush1.bf16.msra.mxu0 0
        %950 = vmatprep.subr.bf16.mxu0 0
        %951 = vmatpush1.bf16.msra.mxu0 0
        %952 = vmatprep.subr.bf16.mxu0 0
        %953 = vmatpush1.bf16.msra.mxu0 0
        %954 = vmatprep.subr.bf16.mxu0 0
        %955 = vmatpush1.bf16.msra.mxu0 %v717
        %956 = vmatprep.subr.bf16.mxu0 0
        %957 = vmatpush2.bf16.msra.mxu0 0
        %958 = vmatprep.subr.bf16.mxu0 0
        %959 = vmatpush2.bf16.msra.mxu0 0
        %960 = vmatprep.subr.bf16.mxu0 0
        %961 = vmatpush2.bf16.msra.mxu0 0
        %962 = vmatprep.subr.bf16.mxu0 0
        %963 = vmatpush2.bf16.msra.mxu0 0
        %964 = vmatprep.subr.bf16.mxu0 0
        %965 = vmatpush2.bf16.msra.mxu0 0
        %966 = vmatprep.subr.bf16.mxu0 0
        %967 = vmatpush2.bf16.msra.mxu0 0
        %968 = vmatprep.subr.bf16.mxu0 0
        %969 = vmatpush2.bf16.msra.mxu0 0
        %970 = vmatprep.subr.bf16.mxu0 0
        %971 = vmatpush2.bf16.msra.mxu0 0
        %972 = vmatprep.mubr.bf16.mxu0 0
        %973 = vmatmul.mubr.bf16.gmra.mxu0 %v650
        %v974 = vpop.f32.mrf.mxu0
        %v975 = vadd.f32 %v627, %v974
        %v976 = vpop.f32.mrf.mxu0
        %v977 = vpop.f32.mrf.mxu0
        %v978 = vadd.f32 %v627, %v977
        %v979 = vpop.f32.mrf.mxu0
        %980 = vmatprep.mubr.bf16.mxu0 0
        %981 = vmatmul.mubr.bf16.gmra.mxu0 %v653
        %v982 = vpop.f32.mrf.mxu0
        %v983 = vadd.f32 %v627, %v982
        %v984 = vpop.f32.mrf.mxu0
        %v985 = vpop.f32.mrf.mxu0
        %v986 = vadd.f32 %v627, %v985
        %v987 = vpop.f32.mrf.mxu0
        %988 = vmatprep.mubr.bf16.mxu0 0
        %989 = vmatmul.mubr.bf16.gmra.mxu0 %v656
        %v990 = vpop.f32.mrf.mxu0
        %v991 = vadd.f32 %v627, %v990
        %v992 = vpop.f32.mrf.mxu0
        %v993 = vpop.f32.mrf.mxu0
        %v994 = vadd.f32 %v627, %v993
        %v995 = vpop.f32.mrf.mxu0
        %996 = vmatprep.mubr.bf16.mxu0 0
        %997 = vmatmul.mubr.bf16.gmra.mxu0 %v659
        %v998 = vpop.f32.mrf.mxu0
        %v999 = vadd.f32 %v627, %v998
        %v1000 = vpop.f32.mrf.mxu0
        %v1001 = vpop.f32.mrf.mxu0
        %v1002 = vadd.f32 %v627, %v1001
        %v1003 = vpop.f32.mrf.mxu0
        %1004 = vmatprep.mubr.bf16.mxu0 0
        %1005 = vmatmul.mubr.bf16.gmra.mxu0 %v662
        %v1006 = vpop.f32.mrf.mxu0
        %v1007 = vadd.f32 %v627, %v1006
        %v1008 = vpop.f32.mrf.mxu0
        %v1009 = vpop.f32.mrf.mxu0
        %v1010 = vadd.f32 %v627, %v1009
        %v1011 = vpop.f32.mrf.mxu0
        %1012 = vmatprep.mubr.bf16.mxu0 0
        %1013 = vmatmul.mubr.bf16.gmra.mxu0 %v665
        %v1014 = vpop.f32.mrf.mxu0
        %v1015 = vadd.f32 %v627, %v1014
        %v1016 = vpop.f32.mrf.mxu0
        %v1017 = vpop.f32.mrf.mxu0
        %v1018 = vadd.f32 %v627, %v1017
        %v1019 = vpop.f32.mrf.mxu0
        %1020 = vmatprep.mubr.bf16.mxu0 0
        %1021 = vmatmul.mubr.bf16.gmra.mxu0 %v668
        %v1022 = vpop.f32.mrf.mxu0
        %v1023 = vadd.f32 %v627, %v1022
        %v1024 = vpop.f32.mrf.mxu0
        %v1025 = vpop.f32.mrf.mxu0
        %v1026 = vadd.f32 %v627, %v1025
        %v1027 = vpop.f32.mrf.mxu0
        %1028 = vmatprep.mubr.bf16.mxu0 0
        %1029 = vmatmul.mubr.bf16.gmra.mxu0 %v671
        %v1030 = vpop.f32.mrf.mxu0
        %v1031 = vadd.f32 %v627, %v1030
        %v1032 = vpop.f32.mrf.mxu0
        %v1033 = vpop.f32.mrf.mxu0
        %v1034 = vadd.f32 %v627, %v1033
        %v1035 = vpop.f32.mrf.mxu0
        %1036 = vmatprep.mubr.bf16.mxu0 0
        %1037 = vmatmul.mubr.bf16.gmra.mxu0 %v674
        %v1038 = vpop.f32.mrf.mxu0
        %v1039 = vadd.f32 %v627, %v1038
        %v1040 = vpop.f32.mrf.mxu0
        %v1041 = vpop.f32.mrf.mxu0
        %v1042 = vadd.f32 %v627, %v1041
        %v1043 = vpop.f32.mrf.mxu0
        %1044 = vmatprep.mubr.bf16.mxu0 0
        %1045 = vmatmul.mubr.bf16.gmra.mxu0 %v677
        %v1046 = vpop.f32.mrf.mxu0
        %v1047 = vadd.f32 %v627, %v1046
        %v1048 = vpop.f32.mrf.mxu0
        %v1049 = vpop.f32.mrf.mxu0
        %v1050 = vadd.f32 %v627, %v1049
        %v1051 = vpop.f32.mrf.mxu0
        %1052 = vmatprep.mubr.bf16.mxu0 0
        %1053 = vmatmul.mubr.bf16.gmra.mxu0 %v680
        %v1054 = vpop.f32.mrf.mxu0
        %v1055 = vadd.f32 %v627, %v1054
        %v1056 = vpop.f32.mrf.mxu0
        %v1057 = vpop.f32.mrf.mxu0
        %v1058 = vadd.f32 %v627, %v1057
        %v1059 = vpop.f32.mrf.mxu0
        %1060 = vmatprep.mubr.bf16.mxu0 0
        %1061 = vmatmul.mubr.bf16.gmra.mxu0 %v683
        %v1062 = vpop.f32.mrf.mxu0
        %v1063 = vadd.f32 %v627, %v1062
        %v1064 = vpop.f32.mrf.mxu0
        %v1065 = vpop.f32.mrf.mxu0
        %v1066 = vadd.f32 %v627, %v1065
        %v1067 = vpop.f32.mrf.mxu0
        %1068 = vmatprep.mubr.bf16.mxu0 0
        %1069 = vmatmul.mubr.bf16.gmra.mxu0 %v686
        %v1070 = vpop.f32.mrf.mxu0
        %v1071 = vadd.f32 %v627, %v1070
        %v1072 = vpop.f32.mrf.mxu0
        %v1073 = vpop.f32.mrf.mxu0
        %v1074 = vadd.f32 %v627, %v1073
        %v1075 = vpop.f32.mrf.mxu0
        %1076 = vmatprep.mubr.bf16.mxu0 0
        %1077 = vmatmul.mubr.bf16.gmra.mxu0 %v689
        %v1078 = vpop.f32.mrf.mxu0
        %v1079 = vadd.f32 %v627, %v1078
        %v1080 = vpop.f32.mrf.mxu0
        %v1081 = vpop.f32.mrf.mxu0
        %v1082 = vadd.f32 %v627, %v1081
        %v1083 = vpop.f32.mrf.mxu0
        %1084 = vmatprep.mubr.bf16.mxu0 0
        %1085 = vmatmul.mubr.bf16.gmra.mxu0 %v692
        %v1086 = vpop.f32.mrf.mxu0
        %v1087 = vadd.f32 %v627, %v1086
        %v1088 = vpop.f32.mrf.mxu0
        %v1089 = vpop.f32.mrf.mxu0
        %v1090 = vadd.f32 %v627, %v1089
        %v1091 = vpop.f32.mrf.mxu0
        %1092 = vmatprep.mubr.bf16.mxu0 0
        %1093 = vmatmul.mubr.bf16.gmra.mxu0 %v695
        %v1094 = vpop.f32.mrf.mxu0
        %v1095 = vadd.f32 %v627, %v1094
        %v1096 = vpop.f32.mrf.mxu0
        %v1097 = vpop.f32.mrf.mxu0
        %v1098 = vadd.f32 %v627, %v1097
        %v1099 = vpop.f32.mrf.mxu0
        %1100 = vmatprep.mubr.bf16.mxu0 0
        %1101 = vmatmul.mubr.bf16.gmra.mxu0 %v698
        %v1102 = vpop.f32.mrf.mxu0
        %v1103 = vadd.f32 %v627, %v1102
        %v1104 = vpop.f32.mrf.mxu0
        %v1105 = vpop.f32.mrf.mxu0
        %v1106 = vadd.f32 %v627, %v1105
        %v1107 = vpop.f32.mrf.mxu0
        %1108 = vmatprep.mubr.bf16.mxu0 0
        %1109 = vmatmul.mubr.bf16.gmra.mxu0 %v701
        %v1110 = vpop.f32.mrf.mxu0
        %v1111 = vadd.f32 %v627, %v1110
        %v1112 = vpop.f32.mrf.mxu0
        %v1113 = vpop.f32.mrf.mxu0
        %v1114 = vadd.f32 %v627, %v1113
        %v1115 = vpop.f32.mrf.mxu0
        %1116 = vmatprep.mubr.bf16.mxu0 0
        %1117 = vmatmul.mubr.bf16.gmra.mxu0 %v704
        %v1118 = vpop.f32.mrf.mxu0
        %v1119 = vadd.f32 %v627, %v1118
        %v1120 = vpop.f32.mrf.mxu0
        %v1121 = vpop.f32.mrf.mxu0
        %v1122 = vadd.f32 %v627, %v1121
        %v1123 = vpop.f32.mrf.mxu0
        %1124 = vmatprep.mubr.bf16.mxu0 0
        %1125 = vmatmul.mubr.bf16.gmra.mxu0 %v707
        %v1126 = vpop.f32.mrf.mxu0
        %v1127 = vadd.f32 %v627, %v1126
        %v1128 = vpop.f32.mrf.mxu0
        %v1129 = vpop.f32.mrf.mxu0
        %v1130 = vadd.f32 %v627, %v1129
        %v1131 = vpop.f32.mrf.mxu0
        %1132 = vdwg.mxu0
        %v1133 = vsel %vm573, 1, 0
        %v1134 = vsel %vm574, 1, 0
        %v1135 = vsel %vm575, 1, 0
        %v1136 = vsel %vm576, 1, 0
        %v1137 = vsel %vm577, 1, 0
        %v1138 = vsel %vm578, 1, 0
        %v1139 = vsel %vm579, 1, 0
        %v1140 = vsel %vm580, 1, 0
        %v1141 = vsel %vm581, 1, 0
        %v1142 = vsel %vm582, 1, 0
        %v1143 = vsel %vm583, 1, 0
        %v1144 = vsel %vm584, 1, 0
        %v1145 = vsel %vm585, 1, 0
        %v1146 = vsel %vm586, 1, 0
        %v1147 = vsel %vm587, 1, 0
        %v1148 = vsel %vm588, 1, 0
        %v1149 = vsel %vm589, 1, 0
        %v1150 = vsel %vm590, 1, 0
        %v1151 = vsel %vm591, 1, 0
        %v1152 = vsel %vm592, 1, 0
        %vm1153 = vcmp.eq.s32.totalorder %v1133, 1
        %vm1154 = vcmp.eq.s32.totalorder %v1134, 1
        %vm1155 = vcmp.eq.s32.totalorder %v1135, 1
        %vm1156 = vcmp.eq.s32.totalorder %v1136, 1
        %vm1157 = vcmp.eq.s32.totalorder %v1137, 1
        %vm1158 = vcmp.eq.s32.totalorder %v1138, 1
        %vm1159 = vcmp.eq.s32.totalorder %v1139, 1
        %vm1160 = vcmp.eq.s32.totalorder %v1140, 1
        %vm1161 = vcmp.eq.s32.totalorder %v1141, 1
        %vm1162 = vcmp.eq.s32.totalorder %v1142, 1
        %vm1163 = vcmp.eq.s32.totalorder %v1143, 1
        %vm1164 = vcmp.eq.s32.totalorder %v1144, 1
        %vm1165 = vcmp.eq.s32.totalorder %v1145, 1
        %vm1166 = vcmp.eq.s32.totalorder %v1146, 1
        %vm1167 = vcmp.eq.s32.totalorder %v1147, 1
        %vm1168 = vcmp.eq.s32.totalorder %v1148, 1
        %vm1169 = vcmp.eq.s32.totalorder %v1149, 1
        %vm1170 = vcmp.eq.s32.totalorder %v1150, 1
        %vm1171 = vcmp.eq.s32.totalorder %v1151, 1
        %vm1172 = vcmp.eq.s32.totalorder %v1152, 1
        %v1173 = vsel %vm1153, %v975, 0.0
        %v1174 = vsel %vm1153, %v978, 0.0
        %v1175 = vsel %vm1154, %v761, 0.0
        %v1176 = vsel %vm1154, %v983, 0.0
        %v1177 = vsel %vm1154, %v764, 0.0
        %v1178 = vsel %vm1154, %v986, 0.0
        %v1179 = vsel %vm1155, %v768, 0.0
        %v1180 = vsel %vm1155, %v770, 0.0
        %v1181 = vsel %vm1155, %v991, 0.0
        %v1182 = vsel %vm1155, %v772, 0.0
        %v1183 = vsel %vm1155, %v774, 0.0
        %v1184 = vsel %vm1155, %v994, 0.0
        %v1185 = vsel %vm1156, %v778, 0.0
        %v1186 = vsel %vm1156, %v780, 0.0
        %v1187 = vsel %vm1156, %v999, 0.0
        %v1188 = vsel %vm1156, %v782, 0.0
        %v1189 = vsel %vm1156, %v784, 0.0
        %v1190 = vsel %vm1156, %v1002, 0.0
        %v1191 = vsel %vm1157, %v788, 0.0
        %v1192 = vsel %vm1157, %v790, 0.0
        %v1193 = vsel %vm1157, %v1007, 0.0
        %v1194 = vsel %vm1157, %v792, 0.0
        %v1195 = vsel %vm1157, %v794, 0.0
        %v1196 = vsel %vm1157, %v1010, 0.0
        %v1197 = vsel %vm1158, %v798, 0.0
        %v1198 = vsel %vm1158, %v800, 0.0
        %v1199 = vsel %vm1158, %v1015, 0.0
        %v1200 = vsel %vm1158, %v802, 0.0
        %v1201 = vsel %vm1158, %v804, 0.0
        %v1202 = vsel %vm1158, %v1018, 0.0
        %v1203 = vsel %vm1159, %v808, 0.0
        %v1204 = vsel %vm1159, %v810, 0.0
        %v1205 = vsel %vm1159, %v1023, 0.0
        %v1206 = vsel %vm1159, %v812, 0.0
        %v1207 = vsel %vm1159, %v814, 0.0
        %v1208 = vsel %vm1159, %v1026, 0.0
        %v1209 = vsel %vm1160, %v818, 0.0
        %v1210 = vsel %vm1160, %v820, 0.0
        %v1211 = vsel %vm1160, %v1031, 0.0
        %v1212 = vsel %vm1160, %v822, 0.0
        %v1213 = vsel %vm1160, %v824, 0.0
        %v1214 = vsel %vm1160, %v1034, 0.0
        %v1215 = vsel %vm1161, %v828, 0.0
        %v1216 = vsel %vm1161, %v830, 0.0
        %v1217 = vsel %vm1161, %v1039, 0.0
        %v1218 = vsel %vm1161, %v832, 0.0
        %v1219 = vsel %vm1161, %v834, 0.0
        %v1220 = vsel %vm1161, %v1042, 0.0
        %v1221 = vsel %vm1162, %v838, 0.0
        %v1222 = vsel %vm1162, %v840, 0.0
        %v1223 = vsel %vm1162, %v1047, 0.0
        %v1224 = vsel %vm1162, %v842, 0.0
        %v1225 = vsel %vm1162, %v844, 0.0
        %v1226 = vsel %vm1162, %v1050, 0.0
        %v1227 = vsel %vm1163, %v848, 0.0
        %v1228 = vsel %vm1163, %v850, 0.0
        %v1229 = vsel %vm1163, %v1055, 0.0
        %v1230 = vsel %vm1163, %v852, 0.0
        %v1231 = vsel %vm1163, %v854, 0.0
        %v1232 = vsel %vm1163, %v1058, 0.0
        %v1233 = vsel %vm1164, %v858, 0.0
        %v1234 = vsel %vm1164, %v860, 0.0
        %v1235 = vsel %vm1164, %v1063, 0.0
        %v1236 = vsel %vm1164, %v862, 0.0
        %v1237 = vsel %vm1164, %v864, 0.0
        %v1238 = vsel %vm1164, %v1066, 0.0
        %v1239 = vsel %vm1165, %v868, 0.0
        %v1240 = vsel %vm1165, %v870, 0.0
        %v1241 = vsel %vm1165, %v1071, 0.0
        %v1242 = vsel %vm1165, %v872, 0.0
        %v1243 = vsel %vm1165, %v874, 0.0
        %v1244 = vsel %vm1165, %v1074, 0.0
        %v1245 = vsel %vm1166, %v878, 0.0
        %v1246 = vsel %vm1166, %v880, 0.0
        %v1247 = vsel %vm1166, %v1079, 0.0
        %v1248 = vsel %vm1166, %v882, 0.0
        %v1249 = vsel %vm1166, %v884, 0.0
        %v1250 = vsel %vm1166, %v1082, 0.0
        %v1251 = vsel %vm1167, %v888, 0.0
        %v1252 = vsel %vm1167, %v890, 0.0
        %v1253 = vsel %vm1167, %v1087, 0.0
        %v1254 = vsel %vm1167, %v892, 0.0
        %v1255 = vsel %vm1167, %v894, 0.0
        %v1256 = vsel %vm1167, %v1090, 0.0
        %v1257 = vsel %vm1168, %v898, 0.0
        %v1258 = vsel %vm1168, %v900, 0.0
        %v1259 = vsel %vm1168, %v1095, 0.0
        %v1260 = vsel %vm1168, %v902, 0.0
        %v1261 = vsel %vm1168, %v904, 0.0
        %v1262 = vsel %vm1168, %v1098, 0.0
        %v1263 = vsel %vm1169, %v908, 0.0
        %v1264 = vsel %vm1169, %v910, 0.0
        %v1265 = vsel %vm1169, %v1103, 0.0
        %v1266 = vsel %vm1169, %v912, 0.0
        %v1267 = vsel %vm1169, %v914, 0.0
        %v1268 = vsel %vm1169, %v1106, 0.0
        %v1269 = vsel %vm1170, %v918, 0.0
        %v1270 = vsel %vm1170, %v920, 0.0
        %v1271 = vsel %vm1170, %v1111, 0.0
        %v1272 = vsel %vm1170, %v922, 0.0
        %v1273 = vsel %vm1170, %v924, 0.0
        %v1274 = vsel %vm1170, %v1114, 0.0
        %v1275 = vsel %vm1171, %v929, 0.0
        %v1276 = vsel %vm1171, %v1119, 0.0
        %v1277 = vsel %vm1171, %v932, 0.0
        %v1278 = vsel %vm1171, %v1122, 0.0
        %v1279 = vsel %vm1172, %v1127, 0.0
        %v1280 = vsel %vm1172, %v1130, 0.0
        %v1281 = vpack.c.bf16 %v1182, %v1179
        %v1282 = vpack.c.bf16 %v1188, %v1185
        %v1283 = vpack.c.bf16 %v1194, %v1191
        %v1284 = vpack.c.bf16 %v1200, %v1197
        %v1285 = vpack.c.bf16 %v1206, %v1203
        %v1286 = vpack.c.bf16 %v1212, %v1209
        %v1287 = vpack.c.bf16 %v1218, %v1215
        %v1288 = vpack.c.bf16 %v1224, %v1221
        %v1289 = vpack.c.bf16 %v1230, %v1227
        %v1290 = vpack.c.bf16 %v1236, %v1233
        %v1291 = vpack.c.bf16 %v1242, %v1239
        %v1292 = vpack.c.bf16 %v1248, %v1245
        %v1293 = vpack.c.bf16 %v1254, %v1251
        %v1294 = vpack.c.bf16 %v1260, %v1257
        %v1295 = vpack.c.bf16 %v1266, %v1263
        %v1296 = vpack.c.bf16 %v1272, %v1269
        %v1313 = vunpack.c.l.b16 %v1281
        %v1314 = vunpack.c.h.b16 %v1281
        %v1315 = vunpack.c.l.b16 %v1282
        %v1316 = vunpack.c.h.b16 %v1282
        %v1317 = vunpack.c.l.b16 %v1283
        %v1318 = vunpack.c.h.b16 %v1283
        %v1319 = vunpack.c.l.b16 %v1284
        %v1320 = vunpack.c.h.b16 %v1284
        %v1321 = vunpack.c.l.b16 %v1285
        %v1322 = vunpack.c.h.b16 %v1285
        %v1323 = vunpack.c.l.b16 %v1286
        %v1324 = vunpack.c.h.b16 %v1286
        %v1325 = vunpack.c.l.b16 %v1287
        %v1326 = vunpack.c.h.b16 %v1287
        %v1327 = vunpack.c.l.b16 %v1288
        %v1328 = vunpack.c.h.b16 %v1288
        %v1329 = vunpack.c.l.b16 %v1289
        %v1330 = vunpack.c.h.b16 %v1289
        %v1331 = vunpack.c.l.b16 %v1290
        %v1332 = vunpack.c.h.b16 %v1290
        %v1333 = vunpack.c.l.b16 %v1291
        %v1334 = vunpack.c.h.b16 %v1291
        %v1335 = vunpack.c.l.b16 %v1292
        %v1336 = vunpack.c.h.b16 %v1292
        %v1337 = vunpack.c.l.b16 %v1293
        %v1338 = vunpack.c.h.b16 %v1293
        %v1339 = vunpack.c.l.b16 %v1294
        %v1340 = vunpack.c.h.b16 %v1294
        %v1341 = vunpack.c.l.b16 %v1295
        %v1342 = vunpack.c.h.b16 %v1295
        %v1343 = vunpack.c.l.b16 %v1296
        %v1344 = vunpack.c.h.b16 %v1296
        %v1345 = vpack.c.b16 %v1313, %v1313
        %v1346 = vpack.c.b16 %v1314, %v1314
        %v1347 = vpack.c.b16 %v1315, %v1315
        %v1348 = vpack.c.b16 %v1316, %v1316
        %v1349 = vpack.c.b16 %v1317, %v1317
        %v1350 = vpack.c.b16 %v1318, %v1318
        %v1351 = vpack.c.b16 %v1319, %v1319
        %v1352 = vpack.c.b16 %v1320, %v1320
        %v1353 = vpack.c.b16 %v1321, %v1321
        %v1354 = vpack.c.b16 %v1322, %v1322
        %v1355 = vpack.c.b16 %v1323, %v1323
        %v1356 = vpack.c.b16 %v1324, %v1324
        %v1357 = vpack.c.b16 %v1325, %v1325
        %v1358 = vpack.c.b16 %v1326, %v1326
        %v1359 = vpack.c.b16 %v1327, %v1327
        %v1360 = vpack.c.b16 %v1328, %v1328
        %v1361 = vpack.c.b16 %v1329, %v1329
        %v1362 = vpack.c.b16 %v1330, %v1330
        %v1363 = vpack.c.b16 %v1331, %v1331
        %v1364 = vpack.c.b16 %v1332, %v1332
        %v1365 = vpack.c.b16 %v1333, %v1333
        %v1366 = vpack.c.b16 %v1334, %v1334
        %v1367 = vpack.c.b16 %v1335, %v1335
        %v1368 = vpack.c.b16 %v1336, %v1336
        %v1369 = vpack.c.b16 %v1337, %v1337
        %v1370 = vpack.c.b16 %v1338, %v1338
        %v1371 = vpack.c.b16 %v1339, %v1339
        %v1372 = vpack.c.b16 %v1340, %v1340
        %v1373 = vpack.c.b16 %v1341, %v1341
        %v1374 = vpack.c.b16 %v1342, %v1342
        %v1375 = vpack.c.b16 %v1343, %v1343
        %v1376 = vpack.c.b16 %v1344, %v1344
        %1409 = vst [vmem:[%s450] sm:$0xf] %v1345
        %1410 = vst [vmem:[%s450 + $0x10] sm:$0xf] %v1346
        %1411 = vst [vmem:[%s450 + $0x20] sm:$0xf] %v1347
        %1412 = vst [vmem:[%s450 + $0x30] sm:$0xf] %v1348
        %1413 = vst [vmem:[%s450 + $0x40] sm:$0xf] %v1349
        %1414 = vst [vmem:[%s450 + $0x50] sm:$0xf] %v1350
        %1415 = vst [vmem:[%s450 + $0x60] sm:$0xf] %v1351
        %1416 = vst [vmem:[%s450 + $0x70] sm:$0xf] %v1352
        %1417 = vst [vmem:[%s450 + $0x80] sm:$0xf] %v1353
        %1418 = vst [vmem:[%s450 + $0x90] sm:$0xf] %v1354
        %1419 = vst [vmem:[%s450 + $0xa0] sm:$0xf] %v1355
        %1420 = vst [vmem:[%s450 + $0xb0] sm:$0xf] %v1356
        %1421 = vst [vmem:[%s450 + $0xc0] sm:$0xf] %v1357
        %1422 = vst [vmem:[%s450 + $0xd0] sm:$0xf] %v1358
        %1423 = vst [vmem:[%s450 + $0xe0] sm:$0xf] %v1359
        %1424 = vst [vmem:[%s450 + $0xf0] sm:$0xf] %v1360
        %1425 = vst [vmem:[%s450 + $0x100] sm:$0xf] %v1361
        %1426 = vst [vmem:[%s450 + $0x110] sm:$0xf] %v1362
        %1427 = vst [vmem:[%s450 + $0x120] sm:$0xf] %v1363
        %1428 = vst [vmem:[%s450 + $0x130] sm:$0xf] %v1364
        %1429 = vst [vmem:[%s450 + $0x140] sm:$0xf] %v1365
        %1430 = vst [vmem:[%s450 + $0x150] sm:$0xf] %v1366
        %1431 = vst [vmem:[%s450 + $0x160] sm:$0xf] %v1367
        %1432 = vst [vmem:[%s450 + $0x170] sm:$0xf] %v1368
        %1433 = vst [vmem:[%s450 + $0x180] sm:$0xf] %v1369
        %1434 = vst [vmem:[%s450 + $0x190] sm:$0xf] %v1370
        %1435 = vst [vmem:[%s450 + $0x1a0] sm:$0xf] %v1371
        %1436 = vst [vmem:[%s450 + $0x1b0] sm:$0xf] %v1372
        %1437 = vst [vmem:[%s450 + $0x1c0] sm:$0xf] %v1373
        %1438 = vst [vmem:[%s450 + $0x1d0] sm:$0xf] %v1374
        %1439 = vst [vmem:[%s450 + $0x1e0] sm:$0xf] %v1375
        %1440 = vst [vmem:[%s450 + $0x1f0] sm:$0xf] %v1376
        %v1441 = vpack.c.bf16 %v1177, %v1175
        %v1442 = vpack.c.bf16 %v1183, %v1180
        %v1443 = vpack.c.bf16 %v1189, %v1186
        %v1444 = vpack.c.bf16 %v1195, %v1192
        %v1445 = vpack.c.bf16 %v1201, %v1198
        %v1446 = vpack.c.bf16 %v1207, %v1204
        %v1447 = vpack.c.bf16 %v1213, %v1210
        %v1448 = vpack.c.bf16 %v1219, %v1216
        %v1449 = vpack.c.bf16 %v1225, %v1222
        %v1450 = vpack.c.bf16 %v1231, %v1228
        %v1451 = vpack.c.bf16 %v1237, %v1234
        %v1452 = vpack.c.bf16 %v1243, %v1240
        %v1453 = vpack.c.bf16 %v1249, %v1246
        %v1454 = vpack.c.bf16 %v1255, %v1252
        %v1455 = vpack.c.bf16 %v1261, %v1258
        %v1456 = vpack.c.bf16 %v1267, %v1264
        %v1457 = vpack.c.bf16 %v1273, %v1270
        %v1458 = vpack.c.bf16 %v1277, %v1275
        %v1460 = vshrl.u32 %v1441, 16
        %v1462 = vrot.slane %v1460, 7
        %v1463 = vshll.u32 %v1441, 16
        %v1465 = vor.u32 %v1462, %v1463
        %v1467 = vshrl.u32 %v1442, 16
        %v1469 = vrot.slane %v1467, 7
        %v1470 = vshll.u32 %v1442, 16
        %v1472 = vor.u32 %v1469, %v1470
        %v1474 = vshrl.u32 %v1443, 16
        %v1476 = vrot.slane %v1474, 7
        %v1477 = vshll.u32 %v1443, 16
        %v1479 = vor.u32 %v1476, %v1477
        %v1481 = vshrl.u32 %v1444, 16
        %v1483 = vrot.slane %v1481, 7
        %v1484 = vshll.u32 %v1444, 16
        %v1486 = vor.u32 %v1483, %v1484
        %v1488 = vshrl.u32 %v1445, 16
        %v1490 = vrot.slane %v1488, 7
        %v1491 = vshll.u32 %v1445, 16
        %v1493 = vor.u32 %v1490, %v1491
        %v1495 = vshrl.u32 %v1446, 16
        %v1497 = vrot.slane %v1495, 7
        %v1498 = vshll.u32 %v1446, 16
        %v1500 = vor.u32 %v1497, %v1498
        %v1502 = vshrl.u32 %v1447, 16
        %v1504 = vrot.slane %v1502, 7
        %v1505 = vshll.u32 %v1447, 16
        %v1507 = vor.u32 %v1504, %v1505
        %v1509 = vshrl.u32 %v1448, 16
        %v1511 = vrot.slane %v1509, 7
        %v1512 = vshll.u32 %v1448, 16
        %v1514 = vor.u32 %v1511, %v1512
        %v1516 = vshrl.u32 %v1449, 16
        %v1518 = vrot.slane %v1516, 7
        %v1519 = vshll.u32 %v1449, 16
        %v1521 = vor.u32 %v1518, %v1519
        %v1523 = vshrl.u32 %v1450, 16
        %v1525 = vrot.slane %v1523, 7
        %v1526 = vshll.u32 %v1450, 16
        %v1528 = vor.u32 %v1525, %v1526
        %v1530 = vshrl.u32 %v1451, 16
        %v1532 = vrot.slane %v1530, 7
        %v1533 = vshll.u32 %v1451, 16
        %v1535 = vor.u32 %v1532, %v1533
        %v1537 = vshrl.u32 %v1452, 16
        %v1539 = vrot.slane %v1537, 7
        %v1540 = vshll.u32 %v1452, 16
        %v1542 = vor.u32 %v1539, %v1540
        %v1544 = vshrl.u32 %v1453, 16
        %v1546 = vrot.slane %v1544, 7
        %v1547 = vshll.u32 %v1453, 16
        %v1549 = vor.u32 %v1546, %v1547
        %v1551 = vshrl.u32 %v1454, 16
        %v1553 = vrot.slane %v1551, 7
        %v1554 = vshll.u32 %v1454, 16
        %v1556 = vor.u32 %v1553, %v1554
        %v1558 = vshrl.u32 %v1455, 16
        %v1560 = vrot.slane %v1558, 7
        %v1561 = vshll.u32 %v1455, 16
        %v1563 = vor.u32 %v1560, %v1561
        %v1565 = vshrl.u32 %v1456, 16
        %v1567 = vrot.slane %v1565, 7
        %v1568 = vshll.u32 %v1456, 16
        %v1570 = vor.u32 %v1567, %v1568
        %v1572 = vshrl.u32 %v1457, 16
        %v1574 = vrot.slane %v1572, 7
        %v1575 = vshll.u32 %v1457, 16
        %v1577 = vor.u32 %v1574, %v1575
        %v1579 = vshrl.u32 %v1458, 16
        %v1581 = vrot.slane %v1579, 7
        %v1582 = vshll.u32 %v1458, 16
        %v1584 = vor.u32 %v1581, %v1582
        %vm1621 = vcmask 1040384
        %vm1622 = vsmask.f32 256
        %vm1623 = vmand %vm1621, %vm1622
        %v1624 = vsel %vm1623, 0, %v1465
        %v1625 = vsel %vm1623, 0, %v1472
        %v1626 = vsel %vm1623, 0, %v1479
        %v1627 = vsel %vm1623, 0, %v1486
        %v1628 = vsel %vm1623, 0, %v1493
        %v1629 = vsel %vm1623, 0, %v1500
        %v1630 = vsel %vm1623, 0, %v1507
        %v1631 = vsel %vm1623, 0, %v1514
        %v1632 = vsel %vm1623, 0, %v1521
        %v1633 = vsel %vm1623, 0, %v1528
        %v1634 = vsel %vm1623, 0, %v1535
        %v1635 = vsel %vm1623, 0, %v1542
        %v1636 = vsel %vm1623, 0, %v1549
        %v1637 = vsel %vm1623, 0, %v1556
        %v1638 = vsel %vm1623, 0, %v1563
        %v1639 = vsel %vm1623, 0, %v1570
        %v1640 = vsel %vm1623, 0, %v1577
        %v1641 = vsel %vm1623, 0, %v1584
        %v1642 = vsel %vm1623, %v1462, 0
        %v1643 = vsel %vm1623, %v1469, 0
        %v1644 = vsel %vm1623, %v1476, 0
        %v1645 = vsel %vm1623, %v1483, 0
        %v1646 = vsel %vm1623, %v1490, 0
        %v1647 = vsel %vm1623, %v1497, 0
        %v1648 = vsel %vm1623, %v1504, 0
        %v1649 = vsel %vm1623, %v1511, 0
        %v1650 = vsel %vm1623, %v1518, 0
        %v1651 = vsel %vm1623, %v1525, 0
        %v1652 = vsel %vm1623, %v1532, 0
        %v1653 = vsel %vm1623, %v1539, 0
        %v1654 = vsel %vm1623, %v1546, 0
        %v1655 = vsel %vm1623, %v1553, 0
        %v1656 = vsel %vm1623, %v1560, 0
        %v1657 = vsel %vm1623, %v1567, 0
        %v1658 = vsel %vm1623, %v1574, 0
        %v1659 = vsel %vm1623, %v1581, 0
        %vm1660 = vsmask.f32 7424
        %v1662 = vshrl.u32 %v1624, 16
        %v1664 = vshll.u32 %v1624, 16
        %v1666 = vrot.slane %v1664, 1
        %v1667 = vor.u32 %v1662, %v1666
        %v1669 = vshll.u32 %v1642, 16
        %v1671 = vrot.slane %v1669, 1
        %v1672 = vsel %vm1660, %v1667, %v1671
        %v1674 = vshrl.u32 %v1625, 16
        %v1676 = vshll.u32 %v1625, 16
        %v1678 = vrot.slane %v1676, 1
        %v1679 = vor.u32 %v1674, %v1678
        %v1681 = vshll.u32 %v1643, 16
        %v1683 = vrot.slane %v1681, 1
        %v1684 = vsel %vm1660, %v1679, %v1683
        %v1686 = vshrl.u32 %v1626, 16
        %v1688 = vshll.u32 %v1626, 16
        %v1690 = vrot.slane %v1688, 1
        %v1691 = vor.u32 %v1686, %v1690
        %v1693 = vshll.u32 %v1644, 16
        %v1695 = vrot.slane %v1693, 1
        %v1696 = vsel %vm1660, %v1691, %v1695
        %v1698 = vshrl.u32 %v1627, 16
        %v1700 = vshll.u32 %v1627, 16
        %v1702 = vrot.slane %v1700, 1
        %v1703 = vor.u32 %v1698, %v1702
        %v1705 = vshll.u32 %v1645, 16
        %v1707 = vrot.slane %v1705, 1
        %v1708 = vsel %vm1660, %v1703, %v1707
        %v1710 = vshrl.u32 %v1628, 16
        %v1712 = vshll.u32 %v1628, 16
        %v1714 = vrot.slane %v1712, 1
        %v1715 = vor.u32 %v1710, %v1714
        %v1717 = vshll.u32 %v1646, 16
        %v1719 = vrot.slane %v1717, 1
        %v1720 = vsel %vm1660, %v1715, %v1719
        %v1722 = vshrl.u32 %v1629, 16
        %v1724 = vshll.u32 %v1629, 16
        %v1726 = vrot.slane %v1724, 1
        %v1727 = vor.u32 %v1722, %v1726
        %v1729 = vshll.u32 %v1647, 16
        %v1731 = vrot.slane %v1729, 1
        %v1732 = vsel %vm1660, %v1727, %v1731
        %v1734 = vshrl.u32 %v1630, 16
        %v1736 = vshll.u32 %v1630, 16
        %v1738 = vrot.slane %v1736, 1
        %v1739 = vor.u32 %v1734, %v1738
        %v1741 = vshll.u32 %v1648, 16
        %v1743 = vrot.slane %v1741, 1
        %v1744 = vsel %vm1660, %v1739, %v1743
        %v1746 = vshrl.u32 %v1631, 16
        %v1748 = vshll.u32 %v1631, 16
        %v1750 = vrot.slane %v1748, 1
        %v1751 = vor.u32 %v1746, %v1750
        %v1753 = vshll.u32 %v1649, 16
        %v1755 = vrot.slane %v1753, 1
        %v1756 = vsel %vm1660, %v1751, %v1755
        %v1758 = vshrl.u32 %v1632, 16
        %v1760 = vshll.u32 %v1632, 16
        %v1762 = vrot.slane %v1760, 1
        %v1763 = vor.u32 %v1758, %v1762
        %v1765 = vshll.u32 %v1650, 16
        %v1767 = vrot.slane %v1765, 1
        %v1768 = vsel %vm1660, %v1763, %v1767
        %v1770 = vshrl.u32 %v1633, 16
        %v1772 = vshll.u32 %v1633, 16
        %v1774 = vrot.slane %v1772, 1
        %v1775 = vor.u32 %v1770, %v1774
        %v1777 = vshll.u32 %v1651, 16
        %v1779 = vrot.slane %v1777, 1
        %v1780 = vsel %vm1660, %v1775, %v1779
        %v1782 = vshrl.u32 %v1634, 16
        %v1784 = vshll.u32 %v1634, 16
        %v1786 = vrot.slane %v1784, 1
        %v1787 = vor.u32 %v1782, %v1786
        %v1789 = vshll.u32 %v1652, 16
        %v1791 = vrot.slane %v1789, 1
        %v1792 = vsel %vm1660, %v1787, %v1791
        %v1794 = vshrl.u32 %v1635, 16
        %v1796 = vshll.u32 %v1635, 16
        %v1798 = vrot.slane %v1796, 1
        %v1799 = vor.u32 %v1794, %v1798
        %v1801 = vshll.u32 %v1653, 16
        %v1803 = vrot.slane %v1801, 1
        %v1804 = vsel %vm1660, %v1799, %v1803
        %v1806 = vshrl.u32 %v1636, 16
        %v1808 = vshll.u32 %v1636, 16
        %v1810 = vrot.slane %v1808, 1
        %v1811 = vor.u32 %v1806, %v1810
        %v1813 = vshll.u32 %v1654, 16
        %v1815 = vrot.slane %v1813, 1
        %v1816 = vsel %vm1660, %v1811, %v1815
        %v1818 = vshrl.u32 %v1637, 16
        %v1820 = vshll.u32 %v1637, 16
        %v1822 = vrot.slane %v1820, 1
        %v1823 = vor.u32 %v1818, %v1822
        %v1825 = vshll.u32 %v1655, 16
        %v1827 = vrot.slane %v1825, 1
        %v1828 = vsel %vm1660, %v1823, %v1827
        %v1830 = vshrl.u32 %v1638, 16
        %v1832 = vshll.u32 %v1638, 16
        %v1834 = vrot.slane %v1832, 1
        %v1835 = vor.u32 %v1830, %v1834
        %v1837 = vshll.u32 %v1656, 16
        %v1839 = vrot.slane %v1837, 1
        %v1840 = vsel %vm1660, %v1835, %v1839
        %v1842 = vshrl.u32 %v1639, 16
        %v1844 = vshll.u32 %v1639, 16
        %v1846 = vrot.slane %v1844, 1
        %v1847 = vor.u32 %v1842, %v1846
        %v1849 = vshll.u32 %v1657, 16
        %v1851 = vrot.slane %v1849, 1
        %v1852 = vsel %vm1660, %v1847, %v1851
        %v1854 = vshrl.u32 %v1640, 16
        %v1856 = vshll.u32 %v1640, 16
        %v1858 = vrot.slane %v1856, 1
        %v1859 = vor.u32 %v1854, %v1858
        %v1861 = vshll.u32 %v1658, 16
        %v1863 = vrot.slane %v1861, 1
        %v1864 = vsel %vm1660, %v1859, %v1863
        %v1866 = vshrl.u32 %v1641, 16
        %v1868 = vshll.u32 %v1641, 16
        %v1870 = vrot.slane %v1868, 1
        %v1871 = vor.u32 %v1866, %v1870
        %v1873 = vshll.u32 %v1659, 16
        %v1875 = vrot.slane %v1873, 1
        %v1876 = vsel %vm1660, %v1871, %v1875
        %vm1931 = vcmask 1046528
        %v1932 = vrot.slane %v1624, 1
        %v1933 = vrot.slane %v1642, 1
        %v1934 = vsel %vm1931, %v1932, %v1933
        %v1935 = vrot.slane %v1625, 1
        %v1936 = vrot.slane %v1643, 1
        %v1937 = vsel %vm1931, %v1935, %v1936
        %v1938 = vrot.slane %v1626, 1
        %v1939 = vrot.slane %v1644, 1
        %v1940 = vsel %vm1931, %v1938, %v1939
        %v1941 = vrot.slane %v1627, 1
        %v1942 = vrot.slane %v1645, 1
        %v1943 = vsel %vm1931, %v1941, %v1942
        %v1944 = vrot.slane %v1628, 1
        %v1945 = vrot.slane %v1646, 1
        %v1946 = vsel %vm1931, %v1944, %v1945
        %v1947 = vrot.slane %v1629, 1
        %v1948 = vrot.slane %v1647, 1
        %v1949 = vsel %vm1931, %v1947, %v1948
        %v1950 = vrot.slane %v1630, 1
        %v1951 = vrot.slane %v1648, 1
        %v1952 = vsel %vm1931, %v1950, %v1951
        %v1953 = vrot.slane %v1631, 1
        %v1954 = vrot.slane %v1649, 1
        %v1955 = vsel %vm1931, %v1953, %v1954
        %v1956 = vrot.slane %v1632, 1
        %v1957 = vrot.slane %v1650, 1
        %v1958 = vsel %vm1931, %v1956, %v1957
        %v1959 = vrot.slane %v1633, 1
        %v1960 = vrot.slane %v1651, 1
        %v1961 = vsel %vm1931, %v1959, %v1960
        %v1962 = vrot.slane %v1634, 1
        %v1963 = vrot.slane %v1652, 1
        %v1964 = vsel %vm1931, %v1962, %v1963
        %v1965 = vrot.slane %v1635, 1
        %v1966 = vrot.slane %v1653, 1
        %v1967 = vsel %vm1931, %v1965, %v1966
        %v1968 = vrot.slane %v1636, 1
        %v1969 = vrot.slane %v1654, 1
        %v1970 = vsel %vm1931, %v1968, %v1969
        %v1971 = vrot.slane %v1637, 1
        %v1972 = vrot.slane %v1655, 1
        %v1973 = vsel %vm1931, %v1971, %v1972
        %v1974 = vrot.slane %v1638, 1
        %v1975 = vrot.slane %v1656, 1
        %v1976 = vsel %vm1931, %v1974, %v1975
        %v1977 = vrot.slane %v1639, 1
        %v1978 = vrot.slane %v1657, 1
        %v1979 = vsel %vm1931, %v1977, %v1978
        %v1980 = vrot.slane %v1640, 1
        %v1981 = vrot.slane %v1658, 1
        %v1982 = vsel %vm1931, %v1980, %v1981
        %v1983 = vrot.slane %v1641, 1
        %v1984 = vrot.slane %v1659, 1
        %v1985 = vsel %vm1931, %v1983, %v1984
        %v2004 = vld [vmem:[#allocation2] sm:$0xf]
        %v2005 = vld [vmem:[#allocation2 + $0x4] sm:$0xf]
        %v2006 = vld [vmem:[#allocation2 + $0x8] sm:$0xf]
        %v2007 = vld [vmem:[#allocation2 + $0xc] sm:$0xf]
        %v2008 = vld [vmem:[#allocation2 + $0x10] sm:$0xf]
        %v2009 = vld [vmem:[#allocation2 + $0x14] sm:$0xf]
        %v2010 = vld [vmem:[#allocation2 + $0x18] sm:$0xf]
        %v2011 = vld [vmem:[#allocation2 + $0x1c] sm:$0xf]
        %v2012 = vld [vmem:[#allocation2 + $0x20] sm:$0xf]
        %v2013 = vld [vmem:[#allocation2 + $0x24] sm:$0xf]
        %v2014 = vld [vmem:[#allocation2 + $0x28] sm:$0xf]
        %v2015 = vld [vmem:[#allocation2 + $0x2c] sm:$0xf]
        %v2016 = vld [vmem:[#allocation2 + $0x30] sm:$0xf]
        %v2017 = vld [vmem:[#allocation2 + $0x34] sm:$0xf]
        %v2018 = vld [vmem:[#allocation2 + $0x38] sm:$0xf]
        %v2019 = vld [vmem:[#allocation2 + $0x3c] sm:$0xf]
        %v2020 = vld [vmem:[#allocation2 + $0x40] sm:$0xf]
        %v2021 = vld [vmem:[#allocation2 + $0x44] sm:$0xf]
        %v2022 = vld [vmem:[#allocation2 + $0x48] sm:$0xf]
        %v2023 = vld [vmem:[#allocation2 + $0x4c] sm:$0xf]
        %v2024 = vld [vmem:[#allocation2 + $0x50] sm:$0xf]
        %v2025 = vld [vmem:[#allocation2 + $0x54] sm:$0xf]
        %v2026 = vld [vmem:[#allocation2 + $0x58] sm:$0xf]
        %v2027 = vld [vmem:[#allocation2 + $0x5c] sm:$0xf]
        %v2028 = vld [vmem:[#allocation2 + $0x60] sm:$0xf]
        %v2029 = vld [vmem:[#allocation2 + $0x64] sm:$0xf]
        %v2030 = vld [vmem:[#allocation2 + $0x68] sm:$0xf]
        %v2031 = vld [vmem:[#allocation2 + $0x6c] sm:$0xf]
        %v2032 = vld [vmem:[#allocation2 + $0x70] sm:$0xf]
        %v2033 = vld [vmem:[#allocation2 + $0x74] sm:$0xf]
        %v2034 = vld [vmem:[#allocation2 + $0x78] sm:$0xf]
        %v2035 = vld [vmem:[#allocation2 + $0x7c] sm:$0xf]
        %v2036 = vld [vmem:[#allocation2 + $0x80] sm:$0xf]
        %v2037 = vld [vmem:[#allocation2 + $0x84] sm:$0xf]
        %v2038 = vld [vmem:[#allocation2 + $0x88] sm:$0xf]
        %v2039 = vld [vmem:[#allocation2 + $0x8c] sm:$0xf]
        %v2040 = vld [vmem:[#allocation2 + $0x90] sm:$0xf]
        %v2041 = vld [vmem:[#allocation2 + $0x94] sm:$0xf]
        %v2042 = vld [vmem:[#allocation2 + $0x98] sm:$0xf]
        %v2043 = vld [vmem:[#allocation2 + $0x9c] sm:$0xf]
        %v2044 = vld [vmem:[#allocation2 + $0xa0] sm:$0xf]
        %v2045 = vld [vmem:[#allocation2 + $0xa4] sm:$0xf]
        %v2046 = vld [vmem:[#allocation2 + $0xa8] sm:$0xf]
        %v2047 = vld [vmem:[#allocation2 + $0xac] sm:$0xf]
        %v2048 = vld [vmem:[#allocation2 + $0xb0] sm:$0xf]
        %v2049 = vld [vmem:[#allocation2 + $0xb4] sm:$0xf]
        %v2050 = vld [vmem:[#allocation2 + $0xb8] sm:$0xf]
        %v2051 = vld [vmem:[#allocation2 + $0xbc] sm:$0xf]
        %v2052 = vld [vmem:[#allocation2 + $0xc0] sm:$0xf]
        %v2053 = vld [vmem:[#allocation2 + $0xc4] sm:$0xf]
        %v2054 = vld [vmem:[#allocation2 + $0xc8] sm:$0xf]
        %v2055 = vld [vmem:[#allocation2 + $0xcc] sm:$0xf]
        %v2056 = vld [vmem:[#allocation2 + $0xd0] sm:$0xf]
        %v2057 = vld [vmem:[#allocation2 + $0xd4] sm:$0xf]
        %v2058 = vld [vmem:[#allocation2 + $0xd8] sm:$0xf]
        %v2059 = vld [vmem:[#allocation2 + $0xdc] sm:$0xf]
        %v2060 = vld [vmem:[#allocation2 + $0xe0] sm:$0xf]
        %v2061 = vld [vmem:[#allocation2 + $0xe4] sm:$0xf]
        %v2062 = vld [vmem:[#allocation2 + $0xe8] sm:$0xf]
        %v2063 = vld [vmem:[#allocation2 + $0xec] sm:$0xf]
        %v2064 = vld [vmem:[#allocation2 + $0xf0] sm:$0xf]
        %v2065 = vld [vmem:[#allocation2 + $0xf4] sm:$0xf]
        %v2066 = vld [vmem:[#allocation2 + $0xf8] sm:$0xf]
        %v2067 = vld [vmem:[#allocation2 + $0xfc] sm:$0xf]
        %v2068 = vld [vmem:[#allocation2 + $0x100] sm:$0xf]
        %v2069 = vld [vmem:[#allocation2 + $0x104] sm:$0xf]
        %v2070 = vld [vmem:[#allocation2 + $0x108] sm:$0xf]
        %v2071 = vld [vmem:[#allocation2 + $0x10c] sm:$0xf]
        %v2072 = vld [vmem:[#allocation2 + $0x110] sm:$0xf]
        %v2073 = vld [vmem:[#allocation2 + $0x114] sm:$0xf]
        %v2074 = vld [vmem:[#allocation2 + $0x118] sm:$0xf]
        %v2075 = vld [vmem:[#allocation2 + $0x11c] sm:$0xf]
        %v2076 = vld [vmem:[#allocation2 + $0x120] sm:$0xf]
        %v2077 = vld [vmem:[#allocation2 + $0x124] sm:$0xf]
        %v2078 = vld [vmem:[#allocation2 + $0x128] sm:$0xf]
        %v2079 = vld [vmem:[#allocation2 + $0x12c] sm:$0xf]
        %v2080 = vld [vmem:[#allocation2 + $0x130] sm:$0xf]
        %v2081 = vld [vmem:[#allocation2 + $0x134] sm:$0xf]
        %v2082 = vld [vmem:[#allocation2 + $0x138] sm:$0xf]
        %v2083 = vld [vmem:[#allocation2 + $0x13c] sm:$0xf]
        %v2084 = vld [vmem:[#allocation2 + $0x140] sm:$0xf]
        %v2085 = vld [vmem:[#allocation2 + $0x144] sm:$0xf]
        %v2086 = vld [vmem:[#allocation2 + $0x148] sm:$0xf]
        %v2087 = vld [vmem:[#allocation2 + $0x14c] sm:$0xf]
        %v2088 = vld [vmem:[#allocation2 + $0x150] sm:$0xf]
        %v2089 = vld [vmem:[#allocation2 + $0x154] sm:$0xf]
        %v2090 = vld [vmem:[#allocation2 + $0x158] sm:$0xf]
        %v2091 = vld [vmem:[#allocation2 + $0x15c] sm:$0xf]
        %v2092 = vld [vmem:[#allocation2 + $0x160] sm:$0xf]
        %v2093 = vld [vmem:[#allocation2 + $0x164] sm:$0xf]
        %v2094 = vld [vmem:[#allocation2 + $0x168] sm:$0xf]
        %v2095 = vld [vmem:[#allocation2 + $0x16c] sm:$0xf]
        %v2096 = vld [vmem:[#allocation2 + $0x170] sm:$0xf]
        %v2097 = vld [vmem:[#allocation2 + $0x174] sm:$0xf]
        %v2098 = vld [vmem:[#allocation2 + $0x178] sm:$0xf]
        %v2099 = vld [vmem:[#allocation2 + $0x17c] sm:$0xf]
        %v2100 = vld [vmem:[#allocation2 + $0x180] sm:$0xf]
        %v2101 = vld [vmem:[#allocation2 + $0x184] sm:$0xf]
        %v2102 = vld [vmem:[#allocation2 + $0x188] sm:$0xf]
        %v2103 = vld [vmem:[#allocation2 + $0x18c] sm:$0xf]
        %v2104 = vld [vmem:[#allocation2 + $0x190] sm:$0xf]
        %v2105 = vld [vmem:[#allocation2 + $0x194] sm:$0xf]
        %v2106 = vld [vmem:[#allocation2 + $0x198] sm:$0xf]
        %v2107 = vld [vmem:[#allocation2 + $0x19c] sm:$0xf]
        %v2108 = vld [vmem:[#allocation2 + $0x1a0] sm:$0xf]
        %v2109 = vld [vmem:[#allocation2 + $0x1a4] sm:$0xf]
        %v2110 = vld [vmem:[#allocation2 + $0x1a8] sm:$0xf]
        %v2111 = vld [vmem:[#allocation2 + $0x1ac] sm:$0xf]
        %v2112 = vld [vmem:[#allocation2 + $0x1b0] sm:$0xf]
        %v2113 = vld [vmem:[#allocation2 + $0x1b4] sm:$0xf]
        %v2114 = vld [vmem:[#allocation2 + $0x1b8] sm:$0xf]
        %v2115 = vld [vmem:[#allocation2 + $0x1bc] sm:$0xf]
        %v2116 = vld [vmem:[#allocation2 + $0x1c0] sm:$0xf]
        %v2117 = vld [vmem:[#allocation2 + $0x1c4] sm:$0xf]
        %v2118 = vld [vmem:[#allocation2 + $0x1c8] sm:$0xf]
        %v2119 = vld [vmem:[#allocation2 + $0x1cc] sm:$0xf]
        %v2120 = vld [vmem:[#allocation2 + $0x1d0] sm:$0xf]
        %v2121 = vld [vmem:[#allocation2 + $0x1d4] sm:$0xf]
        %v2122 = vld [vmem:[#allocation2 + $0x1d8] sm:$0xf]
        %v2123 = vld [vmem:[#allocation2 + $0x1dc] sm:$0xf]
        %v2124 = vld [vmem:[#allocation2 + $0x1e0] sm:$0xf]
        %v2125 = vld [vmem:[#allocation2 + $0x1e4] sm:$0xf]
        %v2126 = vld [vmem:[#allocation2 + $0x1e8] sm:$0xf]
        %v2127 = vld [vmem:[#allocation2 + $0x1ec] sm:$0xf]
        %v2128 = vld [vmem:[#allocation2 + $0x1f0] sm:$0xf]
        %v2129 = vld [vmem:[#allocation2 + $0x1f4] sm:$0xf]
        %v2130 = vld [vmem:[#allocation2 + $0x1f8] sm:$0xf]
        %v2131 = vld [vmem:[#allocation2 + $0x1fc] sm:$0xf]
        %v2132 = vld [vmem:[#allocation2 + $0x200] sm:$0xf]
        %v2133 = vld [vmem:[#allocation2 + $0x204] sm:$0xf]
        %v2134 = vld [vmem:[#allocation2 + $0x208] sm:$0xf]
        %v2135 = vld [vmem:[#allocation2 + $0x20c] sm:$0xf]
        %v2136 = vld [vmem:[#allocation2 + $0x210] sm:$0xf]
        %v2137 = vld [vmem:[#allocation2 + $0x214] sm:$0xf]
        %v2138 = vld [vmem:[#allocation2 + $0x218] sm:$0xf]
        %v2139 = vld [vmem:[#allocation2 + $0x21c] sm:$0xf]
        %v2140 = vld [vmem:[#allocation2 + $0x220] sm:$0xf]
        %v2141 = vld [vmem:[#allocation2 + $0x224] sm:$0xf]
        %v2142 = vld [vmem:[#allocation2 + $0x228] sm:$0xf]
        %v2143 = vld [vmem:[#allocation2 + $0x22c] sm:$0xf]
        %v2144 = vld [vmem:[#allocation2 + $0x230] sm:$0xf]
        %v2145 = vld [vmem:[#allocation2 + $0x234] sm:$0xf]
        %v2146 = vld [vmem:[#allocation2 + $0x238] sm:$0xf]
        %v2147 = vld [vmem:[#allocation2 + $0x23c] sm:$0xf]
        %v2148 = vld [vmem:[%s4] sm:$0x1]
        %v2150 = vlaneseq
        %v2151 = vshrl.u32 %v2150, 7
        %v2152 = vsub.s32 0, %v2151
        %v2153 = vrot.slane %v2148, %v2152
        %v2299 = vunpack.c.l.b16 %v2004
        %v2300 = vunpack.c.l.b16 %v2005
        %v2301 = vunpack.c.l.b16 %v2006
        %v2302 = vunpack.c.l.b16 %v2007
        %v2303 = vunpack.c.l.b16 %v2008
        %v2304 = vunpack.c.l.b16 %v2009
        %v2305 = vunpack.c.l.b16 %v2010
        %v2306 = vunpack.c.l.b16 %v2011
        %v2307 = vunpack.c.l.b16 %v2012
        %v2308 = vunpack.c.l.b16 %v2013
        %v2309 = vunpack.c.l.b16 %v2014
        %v2310 = vunpack.c.l.b16 %v2015
        %v2311 = vunpack.c.l.b16 %v2016
        %v2312 = vunpack.c.l.b16 %v2017
        %v2313 = vunpack.c.l.b16 %v2018
        %v2314 = vunpack.c.l.b16 %v2019
        %v2315 = vunpack.c.l.b16 %v2020
        %v2316 = vunpack.c.l.b16 %v2021
        %v2317 = vunpack.c.l.b16 %v2022
        %v2318 = vunpack.c.l.b16 %v2023
        %v2319 = vunpack.c.l.b16 %v2024
        %v2320 = vunpack.c.l.b16 %v2025
        %v2321 = vunpack.c.l.b16 %v2026
        %v2322 = vunpack.c.l.b16 %v2027
        %v2323 = vunpack.c.l.b16 %v2028
        %v2324 = vunpack.c.l.b16 %v2029
        %v2325 = vunpack.c.l.b16 %v2030
        %v2326 = vunpack.c.l.b16 %v2031
        %v2327 = vunpack.c.l.b16 %v2032
        %v2328 = vunpack.c.l.b16 %v2033
        %v2329 = vunpack.c.l.b16 %v2034
        %v2330 = vunpack.c.l.b16 %v2035
        %v2331 = vunpack.c.l.b16 %v2036
        %v2332 = vunpack.c.l.b16 %v2037
        %v2333 = vunpack.c.l.b16 %v2038
        %v2334 = vunpack.c.l.b16 %v2039
        %v2335 = vunpack.c.l.b16 %v2040
        %v2336 = vunpack.c.l.b16 %v2041
        %v2337 = vunpack.c.l.b16 %v2042
        %v2338 = vunpack.c.l.b16 %v2043
        %v2339 = vunpack.c.l.b16 %v2044
        %v2340 = vunpack.c.l.b16 %v2045
        %v2341 = vunpack.c.l.b16 %v2046
        %v2342 = vunpack.c.l.b16 %v2047
        %v2343 = vunpack.c.l.b16 %v2048
        %v2344 = vunpack.c.l.b16 %v2049
        %v2345 = vunpack.c.l.b16 %v2050
        %v2346 = vunpack.c.l.b16 %v2051
        %v2347 = vunpack.c.l.b16 %v2052
        %v2348 = vunpack.c.l.b16 %v2053
        %v2349 = vunpack.c.l.b16 %v2054
        %v2350 = vunpack.c.l.b16 %v2055
        %v2351 = vunpack.c.l.b16 %v2056
        %v2352 = vunpack.c.l.b16 %v2057
        %v2353 = vunpack.c.l.b16 %v2058
        %v2354 = vunpack.c.l.b16 %v2059
        %v2355 = vunpack.c.l.b16 %v2060
        %v2356 = vunpack.c.l.b16 %v2061
        %v2357 = vunpack.c.l.b16 %v2062
        %v2358 = vunpack.c.l.b16 %v2063
        %v2359 = vunpack.c.l.b16 %v2064
        %v2360 = vunpack.c.l.b16 %v2065
        %v2361 = vunpack.c.l.b16 %v2066
        %v2362 = vunpack.c.l.b16 %v2067
        %v2363 = vunpack.c.l.b16 %v2068
        %v2364 = vunpack.c.l.b16 %v2069
        %v2365 = vunpack.c.l.b16 %v2070
        %v2366 = vunpack.c.l.b16 %v2071
        %v2367 = vunpack.c.l.b16 %v2072
        %v2368 = vunpack.c.l.b16 %v2073
        %v2369 = vunpack.c.l.b16 %v2074
        %v2370 = vunpack.c.l.b16 %v2075
        %v2371 = vunpack.c.l.b16 %v2076
        %v2372 = vunpack.c.l.b16 %v2077
        %v2373 = vunpack.c.l.b16 %v2078
        %v2374 = vunpack.c.l.b16 %v2079
        %v2375 = vunpack.c.l.b16 %v2080
        %v2376 = vunpack.c.l.b16 %v2081
        %v2377 = vunpack.c.l.b16 %v2082
        %v2378 = vunpack.c.l.b16 %v2083
        %v2379 = vunpack.c.l.b16 %v2084
        %v2380 = vunpack.c.l.b16 %v2085
        %v2381 = vunpack.c.l.b16 %v2086
        %v2382 = vunpack.c.l.b16 %v2087
        %v2383 = vunpack.c.l.b16 %v2088
        %v2384 = vunpack.c.l.b16 %v2089
        %v2385 = vunpack.c.l.b16 %v2090
        %v2386 = vunpack.c.l.b16 %v2091
        %v2387 = vunpack.c.l.b16 %v2092
        %v2388 = vunpack.c.l.b16 %v2093
        %v2389 = vunpack.c.l.b16 %v2094
        %v2390 = vunpack.c.l.b16 %v2095
        %v2391 = vunpack.c.l.b16 %v2096
        %v2392 = vunpack.c.l.b16 %v2097
        %v2393 = vunpack.c.l.b16 %v2098
        %v2394 = vunpack.c.l.b16 %v2099
        %v2395 = vunpack.c.l.b16 %v2100
        %v2396 = vunpack.c.l.b16 %v2101
        %v2397 = vunpack.c.l.b16 %v2102
        %v2398 = vunpack.c.l.b16 %v2103
        %v2399 = vunpack.c.l.b16 %v2104
        %v2400 = vunpack.c.l.b16 %v2105
        %v2401 = vunpack.c.l.b16 %v2106
        %v2402 = vunpack.c.l.b16 %v2107
        %v2403 = vunpack.c.l.b16 %v2108
        %v2404 = vunpack.c.l.b16 %v2109
        %v2405 = vunpack.c.l.b16 %v2110
        %v2406 = vunpack.c.l.b16 %v2111
        %v2407 = vunpack.c.l.b16 %v2112
        %v2408 = vunpack.c.l.b16 %v2113
        %v2409 = vunpack.c.l.b16 %v2114
        %v2410 = vunpack.c.l.b16 %v2115
        %v2411 = vunpack.c.l.b16 %v2116
        %v2412 = vunpack.c.l.b16 %v2117
        %v2413 = vunpack.c.l.b16 %v2118
        %v2414 = vunpack.c.l.b16 %v2119
        %v2415 = vunpack.c.l.b16 %v2120
        %v2416 = vunpack.c.l.b16 %v2121
        %v2417 = vunpack.c.l.b16 %v2122
        %v2418 = vunpack.c.l.b16 %v2123
        %v2419 = vunpack.c.l.b16 %v2124
        %v2420 = vunpack.c.l.b16 %v2125
        %v2421 = vunpack.c.l.b16 %v2126
        %v2422 = vunpack.c.l.b16 %v2127
        %v2423 = vunpack.c.l.b16 %v2128
        %v2424 = vunpack.c.l.b16 %v2129
        %v2425 = vunpack.c.l.b16 %v2130
        %v2426 = vunpack.c.l.b16 %v2131
        %v2427 = vunpack.c.l.b16 %v2132
        %v2428 = vunpack.c.l.b16 %v2133
        %v2429 = vunpack.c.l.b16 %v2134
        %v2430 = vunpack.c.l.b16 %v2135
        %v2431 = vunpack.c.l.b16 %v2136
        %v2432 = vunpack.c.l.b16 %v2137
        %v2433 = vunpack.c.l.b16 %v2138
        %v2434 = vunpack.c.l.b16 %v2139
        %v2435 = vunpack.c.l.b16 %v2140
        %v2436 = vunpack.c.l.b16 %v2141
        %v2437 = vunpack.c.l.b16 %v2142
        %v2438 = vunpack.c.l.b16 %v2143
        %v2439 = vunpack.c.l.b16 %v2144
        %v2440 = vunpack.c.l.b16 %v2145
        %v2441 = vunpack.c.l.b16 %v2146
        %v2442 = vunpack.c.l.b16 %v2147
        %v2443 = vpack.c.b16 %v2300, %v2299
        %v2444 = vpack.c.b16 %v2302, %v2301
        %v2445 = vpack.c.b16 %v2304, %v2303
        %v2446 = vpack.c.b16 %v2306, %v2305
        %v2447 = vpack.c.b16 %v2308, %v2307
        %v2448 = vpack.c.b16 %v2310, %v2309
        %v2449 = vpack.c.b16 %v2312, %v2311
        %v2450 = vpack.c.b16 %v2314, %v2313
        %v2451 = vpack.c.b16 %v2316, %v2315
        %v2452 = vpack.c.b16 %v2318, %v2317
        %v2453 = vpack.c.b16 %v2320, %v2319
        %v2454 = vpack.c.b16 %v2322, %v2321
        %v2455 = vpack.c.b16 %v2324, %v2323
        %v2456 = vpack.c.b16 %v2326, %v2325
        %v2457 = vpack.c.b16 %v2328, %v2327
        %v2458 = vpack.c.b16 %v2330, %v2329
        %v2459 = vpack.c.b16 %v2332, %v2331
        %v2460 = vpack.c.b16 %v2334, %v2333
        %v2461 = vpack.c.b16 %v2336, %v2335
        %v2462 = vpack.c.b16 %v2338, %v2337
        %v2463 = vpack.c.b16 %v2340, %v2339
        %v2464 = vpack.c.b16 %v2342, %v2341
        %v2465 = vpack.c.b16 %v2344, %v2343
        %v2466 = vpack.c.b16 %v2346, %v2345
        %v2467 = vpack.c.b16 %v2348, %v2347
        %v2468 = vpack.c.b16 %v2350, %v2349
        %v2469 = vpack.c.b16 %v2352, %v2351
        %v2470 = vpack.c.b16 %v2354, %v2353
        %v2471 = vpack.c.b16 %v2356, %v2355
        %v2472 = vpack.c.b16 %v2358, %v2357
        %v2473 = vpack.c.b16 %v2360, %v2359
        %v2474 = vpack.c.b16 %v2362, %v2361
        %v2475 = vpack.c.b16 %v2364, %v2363
        %v2476 = vpack.c.b16 %v2366, %v2365
        %v2477 = vpack.c.b16 %v2368, %v2367
        %v2478 = vpack.c.b16 %v2370, %v2369
        %v2479 = vpack.c.b16 %v2372, %v2371
        %v2480 = vpack.c.b16 %v2374, %v2373
        %v2481 = vpack.c.b16 %v2376, %v2375
        %v2482 = vpack.c.b16 %v2378, %v2377
        %v2483 = vpack.c.b16 %v2380, %v2379
        %v2484 = vpack.c.b16 %v2382, %v2381
        %v2485 = vpack.c.b16 %v2384, %v2383
        %v2486 = vpack.c.b16 %v2386, %v2385
        %v2487 = vpack.c.b16 %v2388, %v2387
        %v2488 = vpack.c.b16 %v2390, %v2389
        %v2489 = vpack.c.b16 %v2392, %v2391
        %v2490 = vpack.c.b16 %v2394, %v2393
        %v2491 = vpack.c.b16 %v2396, %v2395
        %v2492 = vpack.c.b16 %v2398, %v2397
        %v2493 = vpack.c.b16 %v2400, %v2399
        %v2494 = vpack.c.b16 %v2402, %v2401
        %v2495 = vpack.c.b16 %v2404, %v2403
        %v2496 = vpack.c.b16 %v2406, %v2405
        %v2497 = vpack.c.b16 %v2408, %v2407
        %v2498 = vpack.c.b16 %v2410, %v2409
        %v2499 = vpack.c.b16 %v2412, %v2411
        %v2500 = vpack.c.b16 %v2414, %v2413
        %v2501 = vpack.c.b16 %v2416, %v2415
        %v2502 = vpack.c.b16 %v2418, %v2417
        %v2503 = vpack.c.b16 %v2420, %v2419
        %v2504 = vpack.c.b16 %v2422, %v2421
        %v2505 = vpack.c.b16 %v2424, %v2423
        %v2506 = vpack.c.b16 %v2426, %v2425
        %v2507 = vpack.c.b16 %v2428, %v2427
        %v2508 = vpack.c.b16 %v2430, %v2429
        %v2509 = vpack.c.b16 %v2432, %v2431
        %v2510 = vpack.c.b16 %v2434, %v2433
        %v2511 = vpack.c.b16 %v2436, %v2435
        %v2512 = vpack.c.b16 %v2438, %v2437
        %v2513 = vpack.c.b16 %v2440, %v2439
        %v2514 = vpack.c.b16 %v2442, %v2441
        %2587 = vmatprep.subr.bf16.mxu0 0
        %2588 = vmatpush1.bf16.msra.mxu0 %v2450
        %2589 = vmatprep.subr.bf16.mxu0 0
        %2590 = vmatpush1.bf16.msra.mxu0 %v2449
        %2591 = vmatprep.subr.bf16.mxu0 0
        %2592 = vmatpush1.bf16.msra.mxu0 %v2448
        %2593 = vmatprep.subr.bf16.mxu0 0
        %2594 = vmatpush1.bf16.msra.mxu0 %v2447
        %2595 = vmatprep.subr.bf16.mxu0 0
        %2596 = vmatpush1.bf16.msra.mxu0 %v2446
        %2597 = vmatprep.subr.bf16.mxu0 0
        %2598 = vmatpush1.bf16.msra.mxu0 %v2445
        %2599 = vmatprep.subr.bf16.mxu0 0
        %2600 = vmatpush1.bf16.msra.mxu0 %v2444
        %2601 = vmatprep.subr.bf16.mxu0 0
        %2602 = vmatpush1.bf16.msra.mxu0 %v2443
        %2603 = vmatprep.subr.bf16.mxu0 0
        %2604 = vmatpush2.bf16.msra.mxu0 %v2458
        %2605 = vmatprep.subr.bf16.mxu0 0
        %2606 = vmatpush2.bf16.msra.mxu0 %v2457
        %2607 = vmatprep.subr.bf16.mxu0 0
        %2608 = vmatpush2.bf16.msra.mxu0 %v2456
        %2609 = vmatprep.subr.bf16.mxu0 0
        %2610 = vmatpush2.bf16.msra.mxu0 %v2455
        %2611 = vmatprep.subr.bf16.mxu0 0
        %2612 = vmatpush2.bf16.msra.mxu0 %v2454
        %2613 = vmatprep.subr.bf16.mxu0 0
        %2614 = vmatpush2.bf16.msra.mxu0 %v2453
        %2615 = vmatprep.subr.bf16.mxu0 0
        %2616 = vmatpush2.bf16.msra.mxu0 %v2452
        %2617 = vmatprep.subr.bf16.mxu0 0
        %2618 = vmatpush2.bf16.msra.mxu0 %v2451
        %2619 = vmatprep.mubr.bf16.mxu0 %v1672
        %2620 = vmatmul.mubr.bf16.gmra.mxu0 %v1624
        %v2621 = vpop.f32.mrf.mxu0
        %v2622 = vadd.f32 %v2153, %v2621
        %v2623 = vpop.f32.mrf.mxu0
        %v2624 = vpop.f32.mrf.mxu0
        %v2625 = vadd.f32 %v2153, %v2624
        %v2626 = vpop.f32.mrf.mxu0
        %2627 = vmatprep.mubr.bf16.mxu0 %v1684
        %2628 = vmatmul.mubr.bf16.gmra.mxu0 %v1625
        %v2629 = vpop.f32.mrf.mxu0
        %v2630 = vadd.f32 %v2153, %v2629
        %v2631 = vpop.f32.mrf.mxu0
        %v2632 = vpop.f32.mrf.mxu0
        %v2633 = vadd.f32 %v2153, %v2632
        %v2634 = vpop.f32.mrf.mxu0
        %2635 = vmatprep.mubr.bf16.mxu0 %v1696
        %2636 = vmatmul.mubr.bf16.gmra.mxu0 %v1626
        %v2637 = vpop.f32.mrf.mxu0
        %v2638 = vadd.f32 %v2153, %v2637
        %v2639 = vpop.f32.mrf.mxu0
        %v2640 = vpop.f32.mrf.mxu0
        %v2641 = vadd.f32 %v2153, %v2640
        %v2642 = vpop.f32.mrf.mxu0
        %2643 = vmatprep.mubr.bf16.mxu0 %v1708
        %2644 = vmatmul.mubr.bf16.gmra.mxu0 %v1627
        %v2645 = vpop.f32.mrf.mxu0
        %v2646 = vadd.f32 %v2153, %v2645
        %v2647 = vpop.f32.mrf.mxu0
        %v2648 = vpop.f32.mrf.mxu0
        %v2649 = vadd.f32 %v2153, %v2648
        %v2650 = vpop.f32.mrf.mxu0
        %2651 = vmatprep.mubr.bf16.mxu0 %v1720
        %2652 = vmatmul.mubr.bf16.gmra.mxu0 %v1628
        %v2653 = vpop.f32.mrf.mxu0
        %v2654 = vadd.f32 %v2153, %v2653
        %v2655 = vpop.f32.mrf.mxu0
        %v2656 = vpop.f32.mrf.mxu0
        %v2657 = vadd.f32 %v2153, %v2656
        %v2658 = vpop.f32.mrf.mxu0
        %2659 = vmatprep.mubr.bf16.mxu0 %v1732
        %2660 = vmatmul.mubr.bf16.gmra.mxu0 %v1629
        %v2661 = vpop.f32.mrf.mxu0
        %v2662 = vadd.f32 %v2153, %v2661
        %v2663 = vpop.f32.mrf.mxu0
        %v2664 = vpop.f32.mrf.mxu0
        %v2665 = vadd.f32 %v2153, %v2664
        %v2666 = vpop.f32.mrf.mxu0
        %2667 = vmatprep.mubr.bf16.mxu0 %v1744
        %2668 = vmatmul.mubr.bf16.gmra.mxu0 %v1630
        %v2669 = vpop.f32.mrf.mxu0
        %v2670 = vadd.f32 %v2153, %v2669
        %v2671 = vpop.f32.mrf.mxu0
        %v2672 = vpop.f32.mrf.mxu0
        %v2673 = vadd.f32 %v2153, %v2672
        %v2674 = vpop.f32.mrf.mxu0
        %2675 = vmatprep.mubr.bf16.mxu0 %v1756
        %2676 = vmatmul.mubr.bf16.gmra.mxu0 %v1631
        %v2677 = vpop.f32.mrf.mxu0
        %v2678 = vadd.f32 %v2153, %v2677
        %v2679 = vpop.f32.mrf.mxu0
        %v2680 = vpop.f32.mrf.mxu0
        %v2681 = vadd.f32 %v2153, %v2680
        %v2682 = vpop.f32.mrf.mxu0
        %2683 = vmatprep.mubr.bf16.mxu0 %v1768
        %2684 = vmatmul.mubr.bf16.gmra.mxu0 %v1632
        %v2685 = vpop.f32.mrf.mxu0
        %v2686 = vadd.f32 %v2153, %v2685
        %v2687 = vpop.f32.mrf.mxu0
        %v2688 = vpop.f32.mrf.mxu0
        %v2689 = vadd.f32 %v2153, %v2688
        %v2690 = vpop.f32.mrf.mxu0
        %2691 = vmatprep.mubr.bf16.mxu0 %v1780
        %2692 = vmatmul.mubr.bf16.gmra.mxu0 %v1633
        %v2693 = vpop.f32.mrf.mxu0
        %v2694 = vadd.f32 %v2153, %v2693
        %v2695 = vpop.f32.mrf.mxu0
        %v2696 = vpop.f32.mrf.mxu0
        %v2697 = vadd.f32 %v2153, %v2696
        %v2698 = vpop.f32.mrf.mxu0
        %2699 = vmatprep.mubr.bf16.mxu0 %v1792
        %2700 = vmatmul.mubr.bf16.gmra.mxu0 %v1634
        %v2701 = vpop.f32.mrf.mxu0
        %v2702 = vadd.f32 %v2153, %v2701
        %v2703 = vpop.f32.mrf.mxu0
        %v2704 = vpop.f32.mrf.mxu0
        %v2705 = vadd.f32 %v2153, %v2704
        %v2706 = vpop.f32.mrf.mxu0
        %2707 = vmatprep.mubr.bf16.mxu0 %v1804
        %2708 = vmatmul.mubr.bf16.gmra.mxu0 %v1635
        %v2709 = vpop.f32.mrf.mxu0
        %v2710 = vadd.f32 %v2153, %v2709
        %v2711 = vpop.f32.mrf.mxu0
        %v2712 = vpop.f32.mrf.mxu0
        %v2713 = vadd.f32 %v2153, %v2712
        %v2714 = vpop.f32.mrf.mxu0
        %2715 = vmatprep.mubr.bf16.mxu0 %v1816
        %2716 = vmatmul.mubr.bf16.gmra.mxu0 %v1636
        %v2717 = vpop.f32.mrf.mxu0
        %v2718 = vadd.f32 %v2153, %v2717
        %v2719 = vpop.f32.mrf.mxu0
        %v2720 = vpop.f32.mrf.mxu0
        %v2721 = vadd.f32 %v2153, %v2720
        %v2722 = vpop.f32.mrf.mxu0
        %2723 = vmatprep.mubr.bf16.mxu0 %v1828
        %2724 = vmatmul.mubr.bf16.gmra.mxu0 %v1637
        %v2725 = vpop.f32.mrf.mxu0
        %v2726 = vadd.f32 %v2153, %v2725
        %v2727 = vpop.f32.mrf.mxu0
        %v2728 = vpop.f32.mrf.mxu0
        %v2729 = vadd.f32 %v2153, %v2728
        %v2730 = vpop.f32.mrf.mxu0
        %2731 = vmatprep.mubr.bf16.mxu0 %v1840
        %2732 = vmatmul.mubr.bf16.gmra.mxu0 %v1638
        %v2733 = vpop.f32.mrf.mxu0
        %v2734 = vadd.f32 %v2153, %v2733
        %v2735 = vpop.f32.mrf.mxu0
        %v2736 = vpop.f32.mrf.mxu0
        %v2737 = vadd.f32 %v2153, %v2736
        %v2738 = vpop.f32.mrf.mxu0
        %2739 = vmatprep.mubr.bf16.mxu0 %v1852
        %2740 = vmatmul.mubr.bf16.gmra.mxu0 %v1639
        %v2741 = vpop.f32.mrf.mxu0
        %v2742 = vadd.f32 %v2153, %v2741
        %v2743 = vpop.f32.mrf.mxu0
        %v2744 = vpop.f32.mrf.mxu0
        %v2745 = vadd.f32 %v2153, %v2744
        %v2746 = vpop.f32.mrf.mxu0
        %2747 = vdwg.mxu0
        %2748 = vmatprep.subr.bf16.mxu0 0
        %2749 = vmatpush1.bf16.msra.mxu0 %v2466
        %2750 = vmatprep.subr.bf16.mxu0 0
        %2751 = vmatpush1.bf16.msra.mxu0 %v2465
        %2752 = vmatprep.subr.bf16.mxu0 0
        %2753 = vmatpush1.bf16.msra.mxu0 %v2464
        %2754 = vmatprep.subr.bf16.mxu0 0
        %2755 = vmatpush1.bf16.msra.mxu0 %v2463
        %2756 = vmatprep.subr.bf16.mxu0 0
        %2757 = vmatpush1.bf16.msra.mxu0 %v2462
        %2758 = vmatprep.subr.bf16.mxu0 0
        %2759 = vmatpush1.bf16.msra.mxu0 %v2461
        %2760 = vmatprep.subr.bf16.mxu0 0
        %2761 = vmatpush1.bf16.msra.mxu0 %v2460
        %2762 = vmatprep.subr.bf16.mxu0 0
        %2763 = vmatpush1.bf16.msra.mxu0 %v2459
        %2764 = vmatprep.subr.bf16.mxu0 0
        %2765 = vmatpush2.bf16.msra.mxu0 %v2474
        %2766 = vmatprep.subr.bf16.mxu0 0
        %2767 = vmatpush2.bf16.msra.mxu0 %v2473
        %2768 = vmatprep.subr.bf16.mxu0 0
        %2769 = vmatpush2.bf16.msra.mxu0 %v2472
        %2770 = vmatprep.subr.bf16.mxu0 0
        %2771 = vmatpush2.bf16.msra.mxu0 %v2471
        %2772 = vmatprep.subr.bf16.mxu0 0
        %2773 = vmatpush2.bf16.msra.mxu0 %v2470
        %2774 = vmatprep.subr.bf16.mxu0 0
        %2775 = vmatpush2.bf16.msra.mxu0 %v2469
        %2776 = vmatprep.subr.bf16.mxu0 0
        %2777 = vmatpush2.bf16.msra.mxu0 %v2468
        %2778 = vmatprep.subr.bf16.mxu0 0
        %2779 = vmatpush2.bf16.msra.mxu0 %v2467
        %2780 = vmatprep.mubr.bf16.mxu0 %v1625
        %2781 = vmatmul.mubr.bf16.gmra.mxu0 %v1934
        %v2782 = vpop.f32.mrf.mxu0
        %v2783 = vadd.f32 %v2622, %v2782
        %v2784 = vpop.f32.mrf.mxu0
        %v2785 = vpop.f32.mrf.mxu0
        %v2786 = vadd.f32 %v2625, %v2785
        %v2787 = vpop.f32.mrf.mxu0
        %2788 = vmatprep.mubr.bf16.mxu0 %v1626
        %2789 = vmatmul.mubr.bf16.gmra.mxu0 %v1937
        %v2790 = vpop.f32.mrf.mxu0
        %v2791 = vadd.f32 %v2630, %v2790
        %v2792 = vpop.f32.mrf.mxu0
        %v2793 = vpop.f32.mrf.mxu0
        %v2794 = vadd.f32 %v2633, %v2793
        %v2795 = vpop.f32.mrf.mxu0
        %2796 = vmatprep.mubr.bf16.mxu0 %v1627
        %2797 = vmatmul.mubr.bf16.gmra.mxu0 %v1940
        %v2798 = vpop.f32.mrf.mxu0
        %v2799 = vadd.f32 %v2638, %v2798
        %v2800 = vpop.f32.mrf.mxu0
        %v2801 = vpop.f32.mrf.mxu0
        %v2802 = vadd.f32 %v2641, %v2801
        %v2803 = vpop.f32.mrf.mxu0
        %2804 = vmatprep.mubr.bf16.mxu0 %v1628
        %2805 = vmatmul.mubr.bf16.gmra.mxu0 %v1943
        %v2806 = vpop.f32.mrf.mxu0
        %v2807 = vadd.f32 %v2646, %v2806
        %v2808 = vpop.f32.mrf.mxu0
        %v2809 = vpop.f32.mrf.mxu0
        %v2810 = vadd.f32 %v2649, %v2809
        %v2811 = vpop.f32.mrf.mxu0
        %2812 = vmatprep.mubr.bf16.mxu0 %v1629
        %2813 = vmatmul.mubr.bf16.gmra.mxu0 %v1946
        %v2814 = vpop.f32.mrf.mxu0
        %v2815 = vadd.f32 %v2654, %v2814
        %v2816 = vpop.f32.mrf.mxu0
        %v2817 = vpop.f32.mrf.mxu0
        %v2818 = vadd.f32 %v2657, %v2817
        %v2819 = vpop.f32.mrf.mxu0
        %2820 = vmatprep.mubr.bf16.mxu0 %v1630
        %2821 = vmatmul.mubr.bf16.gmra.mxu0 %v1949
        %v2822 = vpop.f32.mrf.mxu0
        %v2823 = vadd.f32 %v2662, %v2822
        %v2824 = vpop.f32.mrf.mxu0
        %v2825 = vpop.f32.mrf.mxu0
        %v2826 = vadd.f32 %v2665, %v2825
        %v2827 = vpop.f32.mrf.mxu0
        %2828 = vmatprep.mubr.bf16.mxu0 %v1631
        %2829 = vmatmul.mubr.bf16.gmra.mxu0 %v1952
        %v2830 = vpop.f32.mrf.mxu0
        %v2831 = vadd.f32 %v2670, %v2830
        %v2832 = vpop.f32.mrf.mxu0
        %v2833 = vpop.f32.mrf.mxu0
        %v2834 = vadd.f32 %v2673, %v2833
        %v2835 = vpop.f32.mrf.mxu0
        %2836 = vmatprep.mubr.bf16.mxu0 %v1632
        %2837 = vmatmul.mubr.bf16.gmra.mxu0 %v1955
        %v2838 = vpop.f32.mrf.mxu0
        %v2839 = vadd.f32 %v2678, %v2838
        %v2840 = vpop.f32.mrf.mxu0
        %v2841 = vpop.f32.mrf.mxu0
        %v2842 = vadd.f32 %v2681, %v2841
        %v2843 = vpop.f32.mrf.mxu0
        %2844 = vmatprep.mubr.bf16.mxu0 %v1633
        %2845 = vmatmul.mubr.bf16.gmra.mxu0 %v1958
        %v2846 = vpop.f32.mrf.mxu0
        %v2847 = vadd.f32 %v2686, %v2846
        %v2848 = vpop.f32.mrf.mxu0
        %v2849 = vpop.f32.mrf.mxu0
        %v2850 = vadd.f32 %v2689, %v2849
        %v2851 = vpop.f32.mrf.mxu0
        %2852 = vmatprep.mubr.bf16.mxu0 %v1634
        %2853 = vmatmul.mubr.bf16.gmra.mxu0 %v1961
        %v2854 = vpop.f32.mrf.mxu0
        %v2855 = vadd.f32 %v2694, %v2854
        %v2856 = vpop.f32.mrf.mxu0
        %v2857 = vpop.f32.mrf.mxu0
        %v2858 = vadd.f32 %v2697, %v2857
        %v2859 = vpop.f32.mrf.mxu0
        %2860 = vmatprep.mubr.bf16.mxu0 %v1635
        %2861 = vmatmul.mubr.bf16.gmra.mxu0 %v1964
        %v2862 = vpop.f32.mrf.mxu0
        %v2863 = vadd.f32 %v2702, %v2862
        %v2864 = vpop.f32.mrf.mxu0
        %v2865 = vpop.f32.mrf.mxu0
        %v2866 = vadd.f32 %v2705, %v2865
        %v2867 = vpop.f32.mrf.mxu0
        %2868 = vmatprep.mubr.bf16.mxu0 %v1636
        %2869 = vmatmul.mubr.bf16.gmra.mxu0 %v1967
        %v2870 = vpop.f32.mrf.mxu0
        %v2871 = vadd.f32 %v2710, %v2870
        %v2872 = vpop.f32.mrf.mxu0
        %v2873 = vpop.f32.mrf.mxu0
        %v2874 = vadd.f32 %v2713, %v2873
        %v2875 = vpop.f32.mrf.mxu0
        %2876 = vmatprep.mubr.bf16.mxu0 %v1637
        %2877 = vmatmul.mubr.bf16.gmra.mxu0 %v1970
        %v2878 = vpop.f32.mrf.mxu0
        %v2879 = vadd.f32 %v2718, %v2878
        %v2880 = vpop.f32.mrf.mxu0
        %v2881 = vpop.f32.mrf.mxu0
        %v2882 = vadd.f32 %v2721, %v2881
        %v2883 = vpop.f32.mrf.mxu0
        %2884 = vmatprep.mubr.bf16.mxu0 %v1638
        %2885 = vmatmul.mubr.bf16.gmra.mxu0 %v1973
        %v2886 = vpop.f32.mrf.mxu0
        %v2887 = vadd.f32 %v2726, %v2886
        %v2888 = vpop.f32.mrf.mxu0
        %v2889 = vpop.f32.mrf.mxu0
        %v2890 = vadd.f32 %v2729, %v2889
        %v2891 = vpop.f32.mrf.mxu0
        %2892 = vmatprep.mubr.bf16.mxu0 %v1639
        %2893 = vmatmul.mubr.bf16.gmra.mxu0 %v1976
        %v2894 = vpop.f32.mrf.mxu0
        %v2895 = vadd.f32 %v2734, %v2894
        %v2896 = vpop.f32.mrf.mxu0
        %v2897 = vpop.f32.mrf.mxu0
        %v2898 = vadd.f32 %v2737, %v2897
        %v2899 = vpop.f32.mrf.mxu0
        %2900 = vmatprep.mubr.bf16.mxu0 %v1640
        %2901 = vmatmul.mubr.bf16.gmra.mxu0 %v1979
        %v2902 = vpop.f32.mrf.mxu0
        %v2903 = vadd.f32 %v2742, %v2902
        %v2904 = vpop.f32.mrf.mxu0
        %v2905 = vpop.f32.mrf.mxu0
        %v2906 = vadd.f32 %v2745, %v2905
        %v2907 = vpop.f32.mrf.mxu0
        %2908 = vdwg.mxu0
        %2909 = vmatprep.subr.bf16.mxu0 0
        %2910 = vmatpush1.bf16.msra.mxu0 %v2482
        %2911 = vmatprep.subr.bf16.mxu0 0
        %2912 = vmatpush1.bf16.msra.mxu0 %v2481
        %2913 = vmatprep.subr.bf16.mxu0 0
        %2914 = vmatpush1.bf16.msra.mxu0 %v2480
        %2915 = vmatprep.subr.bf16.mxu0 0
        %2916 = vmatpush1.bf16.msra.mxu0 %v2479
        %2917 = vmatprep.subr.bf16.mxu0 0
        %2918 = vmatpush1.bf16.msra.mxu0 %v2478
        %2919 = vmatprep.subr.bf16.mxu0 0
        %2920 = vmatpush1.bf16.msra.mxu0 %v2477
        %2921 = vmatprep.subr.bf16.mxu0 0
        %2922 = vmatpush1.bf16.msra.mxu0 %v2476
        %2923 = vmatprep.subr.bf16.mxu0 0
        %2924 = vmatpush1.bf16.msra.mxu0 %v2475
        %2925 = vmatprep.subr.bf16.mxu0 0
        %2926 = vmatpush2.bf16.msra.mxu0 %v2490
        %2927 = vmatprep.subr.bf16.mxu0 0
        %2928 = vmatpush2.bf16.msra.mxu0 %v2489
        %2929 = vmatprep.subr.bf16.mxu0 0
        %2930 = vmatpush2.bf16.msra.mxu0 %v2488
        %2931 = vmatprep.subr.bf16.mxu0 0
        %2932 = vmatpush2.bf16.msra.mxu0 %v2487
        %2933 = vmatprep.subr.bf16.mxu0 0
        %2934 = vmatpush2.bf16.msra.mxu0 %v2486
        %2935 = vmatprep.subr.bf16.mxu0 0
        %2936 = vmatpush2.bf16.msra.mxu0 %v2485
        %2937 = vmatprep.subr.bf16.mxu0 0
        %2938 = vmatpush2.bf16.msra.mxu0 %v2484
        %2939 = vmatprep.subr.bf16.mxu0 0
        %2940 = vmatpush2.bf16.msra.mxu0 %v2483
        %2941 = vmatprep.mubr.bf16.mxu0 %v1937
        %2942 = vmatmul.mubr.bf16.gmra.mxu0 %v1684
        %v2943 = vpop.f32.mrf.mxu0
        %v2944 = vadd.f32 %v2783, %v2943
        %v2945 = vpop.f32.mrf.mxu0
        %v2946 = vpop.f32.mrf.mxu0
        %v2947 = vadd.f32 %v2786, %v2946
        %v2948 = vpop.f32.mrf.mxu0
        %2949 = vmatprep.mubr.bf16.mxu0 %v1940
        %2950 = vmatmul.mubr.bf16.gmra.mxu0 %v1696
        %v2951 = vpop.f32.mrf.mxu0
        %v2952 = vadd.f32 %v2791, %v2951
        %v2953 = vpop.f32.mrf.mxu0
        %v2954 = vpop.f32.mrf.mxu0
        %v2955 = vadd.f32 %v2794, %v2954
        %v2956 = vpop.f32.mrf.mxu0
        %2957 = vmatprep.mubr.bf16.mxu0 %v1943
        %2958 = vmatmul.mubr.bf16.gmra.mxu0 %v1708
        %v2959 = vpop.f32.mrf.mxu0
        %v2960 = vadd.f32 %v2799, %v2959
        %v2961 = vpop.f32.mrf.mxu0
        %v2962 = vpop.f32.mrf.mxu0
        %v2963 = vadd.f32 %v2802, %v2962
        %v2964 = vpop.f32.mrf.mxu0
        %2965 = vmatprep.mubr.bf16.mxu0 %v1946
        %2966 = vmatmul.mubr.bf16.gmra.mxu0 %v1720
        %v2967 = vpop.f32.mrf.mxu0
        %v2968 = vadd.f32 %v2807, %v2967
        %v2969 = vpop.f32.mrf.mxu0
        %v2970 = vpop.f32.mrf.mxu0
        %v2971 = vadd.f32 %v2810, %v2970
        %v2972 = vpop.f32.mrf.mxu0
        %2973 = vmatprep.mubr.bf16.mxu0 %v1949
        %2974 = vmatmul.mubr.bf16.gmra.mxu0 %v1732
        %v2975 = vpop.f32.mrf.mxu0
        %v2976 = vadd.f32 %v2815, %v2975
        %v2977 = vpop.f32.mrf.mxu0
        %v2978 = vpop.f32.mrf.mxu0
        %v2979 = vadd.f32 %v2818, %v2978
        %v2980 = vpop.f32.mrf.mxu0
        %2981 = vmatprep.mubr.bf16.mxu0 %v1952
        %2982 = vmatmul.mubr.bf16.gmra.mxu0 %v1744
        %v2983 = vpop.f32.mrf.mxu0
        %v2984 = vadd.f32 %v2823, %v2983
        %v2985 = vpop.f32.mrf.mxu0
        %v2986 = vpop.f32.mrf.mxu0
        %v2987 = vadd.f32 %v2826, %v2986
        %v2988 = vpop.f32.mrf.mxu0
        %2989 = vmatprep.mubr.bf16.mxu0 %v1955
        %2990 = vmatmul.mubr.bf16.gmra.mxu0 %v1756
        %v2991 = vpop.f32.mrf.mxu0
        %v2992 = vadd.f32 %v2831, %v2991
        %v2993 = vpop.f32.mrf.mxu0
        %v2994 = vpop.f32.mrf.mxu0
        %v2995 = vadd.f32 %v2834, %v2994
        %v2996 = vpop.f32.mrf.mxu0
        %2997 = vmatprep.mubr.bf16.mxu0 %v1958
        %2998 = vmatmul.mubr.bf16.gmra.mxu0 %v1768
        %v2999 = vpop.f32.mrf.mxu0
        %v3000 = vadd.f32 %v2839, %v2999
        %v3001 = vpop.f32.mrf.mxu0
        %v3002 = vpop.f32.mrf.mxu0
        %v3003 = vadd.f32 %v2842, %v3002
        %v3004 = vpop.f32.mrf.mxu0
        %3005 = vmatprep.mubr.bf16.mxu0 %v1961
        %3006 = vmatmul.mubr.bf16.gmra.mxu0 %v1780
        %v3007 = vpop.f32.mrf.mxu0
        %v3008 = vadd.f32 %v2847, %v3007
        %v3009 = vpop.f32.mrf.mxu0
        %v3010 = vpop.f32.mrf.mxu0
        %v3011 = vadd.f32 %v2850, %v3010
        %v3012 = vpop.f32.mrf.mxu0
        %3013 = vmatprep.mubr.bf16.mxu0 %v1964
        %3014 = vmatmul.mubr.bf16.gmra.mxu0 %v1792
        %v3015 = vpop.f32.mrf.mxu0
        %v3016 = vadd.f32 %v2855, %v3015
        %v3017 = vpop.f32.mrf.mxu0
        %v3018 = vpop.f32.mrf.mxu0
        %v3019 = vadd.f32 %v2858, %v3018
        %v3020 = vpop.f32.mrf.mxu0
        %3021 = vmatprep.mubr.bf16.mxu0 %v1967
        %3022 = vmatmul.mubr.bf16.gmra.mxu0 %v1804
        %v3023 = vpop.f32.mrf.mxu0
        %v3024 = vadd.f32 %v2863, %v3023
        %v3025 = vpop.f32.mrf.mxu0
        %v3026 = vpop.f32.mrf.mxu0
        %v3027 = vadd.f32 %v2866, %v3026
        %v3028 = vpop.f32.mrf.mxu0
        %3029 = vmatprep.mubr.bf16.mxu0 %v1970
        %3030 = vmatmul.mubr.bf16.gmra.mxu0 %v1816
        %v3031 = vpop.f32.mrf.mxu0
        %v3032 = vadd.f32 %v2871, %v3031
        %v3033 = vpop.f32.mrf.mxu0
        %v3034 = vpop.f32.mrf.mxu0
        %v3035 = vadd.f32 %v2874, %v3034
        %v3036 = vpop.f32.mrf.mxu0
        %3037 = vmatprep.mubr.bf16.mxu0 %v1973
        %3038 = vmatmul.mubr.bf16.gmra.mxu0 %v1828
        %v3039 = vpop.f32.mrf.mxu0
        %v3040 = vadd.f32 %v2879, %v3039
        %v3041 = vpop.f32.mrf.mxu0
        %v3042 = vpop.f32.mrf.mxu0
        %v3043 = vadd.f32 %v2882, %v3042
        %v3044 = vpop.f32.mrf.mxu0
        %3045 = vmatprep.mubr.bf16.mxu0 %v1976
        %3046 = vmatmul.mubr.bf16.gmra.mxu0 %v1840
        %v3047 = vpop.f32.mrf.mxu0
        %v3048 = vadd.f32 %v2887, %v3047
        %v3049 = vpop.f32.mrf.mxu0
        %v3050 = vpop.f32.mrf.mxu0
        %v3051 = vadd.f32 %v2890, %v3050
        %v3052 = vpop.f32.mrf.mxu0
        %3053 = vmatprep.mubr.bf16.mxu0 %v1979
        %3054 = vmatmul.mubr.bf16.gmra.mxu0 %v1852
        %v3055 = vpop.f32.mrf.mxu0
        %v3056 = vadd.f32 %v2895, %v3055
        %v3057 = vpop.f32.mrf.mxu0
        %v3058 = vpop.f32.mrf.mxu0
        %v3059 = vadd.f32 %v2898, %v3058
        %v3060 = vpop.f32.mrf.mxu0
        %3061 = vmatprep.mubr.bf16.mxu0 %v1982
        %3062 = vmatmul.mubr.bf16.gmra.mxu0 %v1864
        %v3063 = vpop.f32.mrf.mxu0
        %v3064 = vadd.f32 %v2903, %v3063
        %v3065 = vpop.f32.mrf.mxu0
        %v3066 = vpop.f32.mrf.mxu0
        %v3067 = vadd.f32 %v2906, %v3066
        %v3068 = vpop.f32.mrf.mxu0
        %3069 = vdwg.mxu0
        %3070 = vmatprep.subr.bf16.mxu0 0
        %3071 = vmatpush1.bf16.msra.mxu0 %v2498
        %3072 = vmatprep.subr.bf16.mxu0 0
        %3073 = vmatpush1.bf16.msra.mxu0 %v2497
        %3074 = vmatprep.subr.bf16.mxu0 0
        %3075 = vmatpush1.bf16.msra.mxu0 %v2496
        %3076 = vmatprep.subr.bf16.mxu0 0
        %3077 = vmatpush1.bf16.msra.mxu0 %v2495
        %3078 = vmatprep.subr.bf16.mxu0 0
        %3079 = vmatpush1.bf16.msra.mxu0 %v2494
        %3080 = vmatprep.subr.bf16.mxu0 0
        %3081 = vmatpush1.bf16.msra.mxu0 %v2493
        %3082 = vmatprep.subr.bf16.mxu0 0
        %3083 = vmatpush1.bf16.msra.mxu0 %v2492
        %3084 = vmatprep.subr.bf16.mxu0 0
        %3085 = vmatpush1.bf16.msra.mxu0 %v2491
        %3086 = vmatprep.subr.bf16.mxu0 0
        %3087 = vmatpush2.bf16.msra.mxu0 %v2506
        %3088 = vmatprep.subr.bf16.mxu0 0
        %3089 = vmatpush2.bf16.msra.mxu0 %v2505
        %3090 = vmatprep.subr.bf16.mxu0 0
        %3091 = vmatpush2.bf16.msra.mxu0 %v2504
        %3092 = vmatprep.subr.bf16.mxu0 0
        %3093 = vmatpush2.bf16.msra.mxu0 %v2503
        %3094 = vmatprep.subr.bf16.mxu0 0
        %3095 = vmatpush2.bf16.msra.mxu0 %v2502
        %3096 = vmatprep.subr.bf16.mxu0 0
        %3097 = vmatpush2.bf16.msra.mxu0 %v2501
        %3098 = vmatprep.subr.bf16.mxu0 0
        %3099 = vmatpush2.bf16.msra.mxu0 %v2500
        %3100 = vmatprep.subr.bf16.mxu0 0
        %3101 = vmatpush2.bf16.msra.mxu0 %v2499
        %3102 = vmatprep.mubr.bf16.mxu0 %v1696
        %3103 = vmatmul.mubr.bf16.gmra.mxu0 %v1626
        %v3104 = vpop.f32.mrf.mxu0
        %v3105 = vadd.f32 %v2944, %v3104
        %v3106 = vpop.f32.mrf.mxu0
        %v3107 = vpop.f32.mrf.mxu0
        %v3108 = vadd.f32 %v2947, %v3107
        %v3109 = vpop.f32.mrf.mxu0
        %3110 = vmatprep.mubr.bf16.mxu0 %v1708
        %3111 = vmatmul.mubr.bf16.gmra.mxu0 %v1627
        %v3112 = vpop.f32.mrf.mxu0
        %v3113 = vadd.f32 %v2952, %v3112
        %v3114 = vpop.f32.mrf.mxu0
        %v3115 = vpop.f32.mrf.mxu0
        %v3116 = vadd.f32 %v2955, %v3115
        %v3117 = vpop.f32.mrf.mxu0
        %3118 = vmatprep.mubr.bf16.mxu0 %v1720
        %3119 = vmatmul.mubr.bf16.gmra.mxu0 %v1628
        %v3120 = vpop.f32.mrf.mxu0
        %v3121 = vadd.f32 %v2960, %v3120
        %v3122 = vpop.f32.mrf.mxu0
        %v3123 = vpop.f32.mrf.mxu0
        %v3124 = vadd.f32 %v2963, %v3123
        %v3125 = vpop.f32.mrf.mxu0
        %3126 = vmatprep.mubr.bf16.mxu0 %v1732
        %3127 = vmatmul.mubr.bf16.gmra.mxu0 %v1629
        %v3128 = vpop.f32.mrf.mxu0
        %v3129 = vadd.f32 %v2968, %v3128
        %v3130 = vpop.f32.mrf.mxu0
        %v3131 = vpop.f32.mrf.mxu0
        %v3132 = vadd.f32 %v2971, %v3131
        %v3133 = vpop.f32.mrf.mxu0
        %3134 = vmatprep.mubr.bf16.mxu0 %v1744
        %3135 = vmatmul.mubr.bf16.gmra.mxu0 %v1630
        %v3136 = vpop.f32.mrf.mxu0
        %v3137 = vadd.f32 %v2976, %v3136
        %v3138 = vpop.f32.mrf.mxu0
        %v3139 = vpop.f32.mrf.mxu0
        %v3140 = vadd.f32 %v2979, %v3139
        %v3141 = vpop.f32.mrf.mxu0
        %3142 = vmatprep.mubr.bf16.mxu0 %v1756
        %3143 = vmatmul.mubr.bf16.gmra.mxu0 %v1631
        %v3144 = vpop.f32.mrf.mxu0
        %v3145 = vadd.f32 %v2984, %v3144
        %v3146 = vpop.f32.mrf.mxu0
        %v3147 = vpop.f32.mrf.mxu0
        %v3148 = vadd.f32 %v2987, %v3147
        %v3149 = vpop.f32.mrf.mxu0
        %3150 = vmatprep.mubr.bf16.mxu0 %v1768
        %3151 = vmatmul.mubr.bf16.gmra.mxu0 %v1632
        %v3152 = vpop.f32.mrf.mxu0
        %v3153 = vadd.f32 %v2992, %v3152
        %v3154 = vpop.f32.mrf.mxu0
        %v3155 = vpop.f32.mrf.mxu0
        %v3156 = vadd.f32 %v2995, %v3155
        %v3157 = vpop.f32.mrf.mxu0
        %3158 = vmatprep.mubr.bf16.mxu0 %v1780
        %3159 = vmatmul.mubr.bf16.gmra.mxu0 %v1633
        %v3160 = vpop.f32.mrf.mxu0
        %v3161 = vadd.f32 %v3000, %v3160
        %v3162 = vpop.f32.mrf.mxu0
        %v3163 = vpop.f32.mrf.mxu0
        %v3164 = vadd.f32 %v3003, %v3163
        %v3165 = vpop.f32.mrf.mxu0
        %3166 = vmatprep.mubr.bf16.mxu0 %v1792
        %3167 = vmatmul.mubr.bf16.gmra.mxu0 %v1634
        %v3168 = vpop.f32.mrf.mxu0
        %v3169 = vadd.f32 %v3008, %v3168
        %v3170 = vpop.f32.mrf.mxu0
        %v3171 = vpop.f32.mrf.mxu0
        %v3172 = vadd.f32 %v3011, %v3171
        %v3173 = vpop.f32.mrf.mxu0
        %3174 = vmatprep.mubr.bf16.mxu0 %v1804
        %3175 = vmatmul.mubr.bf16.gmra.mxu0 %v1635
        %v3176 = vpop.f32.mrf.mxu0
        %v3177 = vadd.f32 %v3016, %v3176
        %v3178 = vpop.f32.mrf.mxu0
        %v3179 = vpop.f32.mrf.mxu0
        %v3180 = vadd.f32 %v3019, %v3179
        %v3181 = vpop.f32.mrf.mxu0
        %3182 = vmatprep.mubr.bf16.mxu0 %v1816
        %3183 = vmatmul.mubr.bf16.gmra.mxu0 %v1636
        %v3184 = vpop.f32.mrf.mxu0
        %v3185 = vadd.f32 %v3024, %v3184
        %v3186 = vpop.f32.mrf.mxu0
        %v3187 = vpop.f32.mrf.mxu0
        %v3188 = vadd.f32 %v3027, %v3187
        %v3189 = vpop.f32.mrf.mxu0
        %3190 = vmatprep.mubr.bf16.mxu0 %v1828
        %3191 = vmatmul.mubr.bf16.gmra.mxu0 %v1637
        %v3192 = vpop.f32.mrf.mxu0
        %v3193 = vadd.f32 %v3032, %v3192
        %v3194 = vpop.f32.mrf.mxu0
        %v3195 = vpop.f32.mrf.mxu0
        %v3196 = vadd.f32 %v3035, %v3195
        %v3197 = vpop.f32.mrf.mxu0
        %3198 = vmatprep.mubr.bf16.mxu0 %v1840
        %3199 = vmatmul.mubr.bf16.gmra.mxu0 %v1638
        %v3200 = vpop.f32.mrf.mxu0
        %v3201 = vadd.f32 %v3040, %v3200
        %v3202 = vpop.f32.mrf.mxu0
        %v3203 = vpop.f32.mrf.mxu0
        %v3204 = vadd.f32 %v3043, %v3203
        %v3205 = vpop.f32.mrf.mxu0
        %3206 = vmatprep.mubr.bf16.mxu0 %v1852
        %3207 = vmatmul.mubr.bf16.gmra.mxu0 %v1639
        %v3208 = vpop.f32.mrf.mxu0
        %v3209 = vadd.f32 %v3048, %v3208
        %v3210 = vpop.f32.mrf.mxu0
        %v3211 = vpop.f32.mrf.mxu0
        %v3212 = vadd.f32 %v3051, %v3211
        %v3213 = vpop.f32.mrf.mxu0
        %3214 = vmatprep.mubr.bf16.mxu0 %v1864
        %3215 = vmatmul.mubr.bf16.gmra.mxu0 %v1640
        %v3216 = vpop.f32.mrf.mxu0
        %v3217 = vadd.f32 %v3056, %v3216
        %v3218 = vpop.f32.mrf.mxu0
        %v3219 = vpop.f32.mrf.mxu0
        %v3220 = vadd.f32 %v3059, %v3219
        %v3221 = vpop.f32.mrf.mxu0
        %3222 = vmatprep.mubr.bf16.mxu0 %v1876
        %3223 = vmatmul.mubr.bf16.gmra.mxu0 %v1641
        %v3224 = vpop.f32.mrf.mxu0
        %v3225 = vadd.f32 %v3064, %v3224
        %v3226 = vpop.f32.mrf.mxu0
        %v3227 = vpop.f32.mrf.mxu0
        %v3228 = vadd.f32 %v3067, %v3227
        %v3229 = vpop.f32.mrf.mxu0
        %3230 = vdwg.mxu0
        %3231 = vmatprep.subr.bf16.mxu0 0
        %3232 = vmatpush1.bf16.msra.mxu0 %v2514
        %3233 = vmatprep.subr.bf16.mxu0 0
        %3234 = vmatpush1.bf16.msra.mxu0 %v2513
        %3235 = vmatprep.subr.bf16.mxu0 0
        %3236 = vmatpush1.bf16.msra.mxu0 %v2512
        %3237 = vmatprep.subr.bf16.mxu0 0
        %3238 = vmatpush1.bf16.msra.mxu0 %v2511
        %3239 = vmatprep.subr.bf16.mxu0 0
        %3240 = vmatpush1.bf16.msra.mxu0 %v2510
        %3241 = vmatprep.subr.bf16.mxu0 0
        %3242 = vmatpush1.bf16.msra.mxu0 %v2509
        %3243 = vmatprep.subr.bf16.mxu0 0
        %3244 = vmatpush1.bf16.msra.mxu0 %v2508
        %3245 = vmatprep.subr.bf16.mxu0 0
        %3246 = vmatpush1.bf16.msra.mxu0 %v2507
        %3247 = vmatprep.subr.bf16.mxu0 0
        %3248 = vmatpush2.bf16.msra.mxu0 0
        %3249 = vmatprep.subr.bf16.mxu0 0
        %3250 = vmatpush2.bf16.msra.mxu0 0
        %3251 = vmatprep.subr.bf16.mxu0 0
        %3252 = vmatpush2.bf16.msra.mxu0 0
        %3253 = vmatprep.subr.bf16.mxu0 0
        %3254 = vmatpush2.bf16.msra.mxu0 0
        %3255 = vmatprep.subr.bf16.mxu0 0
        %3256 = vmatpush2.bf16.msra.mxu0 0
        %3257 = vmatprep.subr.bf16.mxu0 0
        %3258 = vmatpush2.bf16.msra.mxu0 0
        %3259 = vmatprep.subr.bf16.mxu0 0
        %3260 = vmatpush2.bf16.msra.mxu0 0
        %3261 = vmatprep.subr.bf16.mxu0 0
        %3262 = vmatpush2.bf16.msra.mxu0 0
        %3263 = vmatprep.mubr.bf16.mxu0 0
        %3264 = vmatmul.mubr.bf16.gmra.mxu0 %v1940
        %v3265 = vpop.f32.mrf.mxu0
        %v3266 = vadd.f32 %v3105, %v3265
        %v3267 = vpop.f32.mrf.mxu0
        %v3268 = vpop.f32.mrf.mxu0
        %v3269 = vadd.f32 %v3108, %v3268
        %v3270 = vpop.f32.mrf.mxu0
        %3271 = vmatprep.mubr.bf16.mxu0 0
        %3272 = vmatmul.mubr.bf16.gmra.mxu0 %v1943
        %v3273 = vpop.f32.mrf.mxu0
        %v3274 = vadd.f32 %v3113, %v3273
        %v3275 = vpop.f32.mrf.mxu0
        %v3276 = vpop.f32.mrf.mxu0
        %v3277 = vadd.f32 %v3116, %v3276
        %v3278 = vpop.f32.mrf.mxu0
        %3279 = vmatprep.mubr.bf16.mxu0 0
        %3280 = vmatmul.mubr.bf16.gmra.mxu0 %v1946
        %v3281 = vpop.f32.mrf.mxu0
        %v3282 = vadd.f32 %v3121, %v3281
        %v3283 = vpop.f32.mrf.mxu0
        %v3284 = vpop.f32.mrf.mxu0
        %v3285 = vadd.f32 %v3124, %v3284
        %v3286 = vpop.f32.mrf.mxu0
        %3287 = vmatprep.mubr.bf16.mxu0 0
        %3288 = vmatmul.mubr.bf16.gmra.mxu0 %v1949
        %v3289 = vpop.f32.mrf.mxu0
        %v3290 = vadd.f32 %v3129, %v3289
        %v3291 = vpop.f32.mrf.mxu0
        %v3292 = vpop.f32.mrf.mxu0
        %v3293 = vadd.f32 %v3132, %v3292
        %v3294 = vpop.f32.mrf.mxu0
        %3295 = vmatprep.mubr.bf16.mxu0 0
        %3296 = vmatmul.mubr.bf16.gmra.mxu0 %v1952
        %v3297 = vpop.f32.mrf.mxu0
        %v3298 = vadd.f32 %v3137, %v3297
        %v3299 = vpop.f32.mrf.mxu0
        %v3300 = vpop.f32.mrf.mxu0
        %v3301 = vadd.f32 %v3140, %v3300
        %v3302 = vpop.f32.mrf.mxu0
        %3303 = vmatprep.mubr.bf16.mxu0 0
        %3304 = vmatmul.mubr.bf16.gmra.mxu0 %v1955
        %v3305 = vpop.f32.mrf.mxu0
        %v3306 = vadd.f32 %v3145, %v3305
        %v3307 = vpop.f32.mrf.mxu0
        %v3308 = vpop.f32.mrf.mxu0
        %v3309 = vadd.f32 %v3148, %v3308
        %v3310 = vpop.f32.mrf.mxu0
        %3311 = vmatprep.mubr.bf16.mxu0 0
        %3312 = vmatmul.mubr.bf16.gmra.mxu0 %v1958
        %v3313 = vpop.f32.mrf.mxu0
        %v3314 = vadd.f32 %v3153, %v3313
        %v3315 = vpop.f32.mrf.mxu0
        %v3316 = vpop.f32.mrf.mxu0
        %v3317 = vadd.f32 %v3156, %v3316
        %v3318 = vpop.f32.mrf.mxu0
        %3319 = vmatprep.mubr.bf16.mxu0 0
        %3320 = vmatmul.mubr.bf16.gmra.mxu0 %v1961
        %v3321 = vpop.f32.mrf.mxu0
        %v3322 = vadd.f32 %v3161, %v3321
        %v3323 = vpop.f32.mrf.mxu0
        %v3324 = vpop.f32.mrf.mxu0
        %v3325 = vadd.f32 %v3164, %v3324
        %v3326 = vpop.f32.mrf.mxu0
        %3327 = vmatprep.mubr.bf16.mxu0 0
        %3328 = vmatmul.mubr.bf16.gmra.mxu0 %v1964
        %v3329 = vpop.f32.mrf.mxu0
        %v3330 = vadd.f32 %v3169, %v3329
        %v3331 = vpop.f32.mrf.mxu0
        %v3332 = vpop.f32.mrf.mxu0
        %v3333 = vadd.f32 %v3172, %v3332
        %v3334 = vpop.f32.mrf.mxu0
        %3335 = vmatprep.mubr.bf16.mxu0 0
        %3336 = vmatmul.mubr.bf16.gmra.mxu0 %v1967
        %v3337 = vpop.f32.mrf.mxu0
        %v3338 = vadd.f32 %v3177, %v3337
        %v3339 = vpop.f32.mrf.mxu0
        %v3340 = vpop.f32.mrf.mxu0
        %v3341 = vadd.f32 %v3180, %v3340
        %v3342 = vpop.f32.mrf.mxu0
        %3343 = vmatprep.mubr.bf16.mxu0 0
        %3344 = vmatmul.mubr.bf16.gmra.mxu0 %v1970
        %v3345 = vpop.f32.mrf.mxu0
        %v3346 = vadd.f32 %v3185, %v3345
        %v3347 = vpop.f32.mrf.mxu0
        %v3348 = vpop.f32.mrf.mxu0
        %v3349 = vadd.f32 %v3188, %v3348
        %v3350 = vpop.f32.mrf.mxu0
        %3351 = vmatprep.mubr.bf16.mxu0 0
        %3352 = vmatmul.mubr.bf16.gmra.mxu0 %v1973
        %v3353 = vpop.f32.mrf.mxu0
        %v3354 = vadd.f32 %v3193, %v3353
        %v3355 = vpop.f32.mrf.mxu0
        %v3356 = vpop.f32.mrf.mxu0
        %v3357 = vadd.f32 %v3196, %v3356
        %v3358 = vpop.f32.mrf.mxu0
        %3359 = vmatprep.mubr.bf16.mxu0 0
        %3360 = vmatmul.mubr.bf16.gmra.mxu0 %v1976
        %v3361 = vpop.f32.mrf.mxu0
        %v3362 = vadd.f32 %v3201, %v3361
        %v3363 = vpop.f32.mrf.mxu0
        %v3364 = vpop.f32.mrf.mxu0
        %v3365 = vadd.f32 %v3204, %v3364
        %v3366 = vpop.f32.mrf.mxu0
        %3367 = vmatprep.mubr.bf16.mxu0 0
        %3368 = vmatmul.mubr.bf16.gmra.mxu0 %v1979
        %v3369 = vpop.f32.mrf.mxu0
        %v3370 = vadd.f32 %v3209, %v3369
        %v3371 = vpop.f32.mrf.mxu0
        %v3372 = vpop.f32.mrf.mxu0
        %v3373 = vadd.f32 %v3212, %v3372
        %v3374 = vpop.f32.mrf.mxu0
        %3375 = vmatprep.mubr.bf16.mxu0 0
        %3376 = vmatmul.mubr.bf16.gmra.mxu0 %v1982
        %v3377 = vpop.f32.mrf.mxu0
        %v3378 = vadd.f32 %v3217, %v3377
        %v3379 = vpop.f32.mrf.mxu0
        %v3380 = vpop.f32.mrf.mxu0
        %v3381 = vadd.f32 %v3220, %v3380
        %v3382 = vpop.f32.mrf.mxu0
        %3383 = vmatprep.mubr.bf16.mxu0 0
        %3384 = vmatmul.mubr.bf16.gmra.mxu0 %v1985
        %v3385 = vpop.f32.mrf.mxu0
        %v3386 = vadd.f32 %v3225, %v3385
        %v3387 = vpop.f32.mrf.mxu0
        %v3388 = vpop.f32.mrf.mxu0
        %v3389 = vadd.f32 %v3228, %v3388
        %v3390 = vpop.f32.mrf.mxu0
        %3391 = vdwg.mxu0
        %v3392 = vpack.c.bf16 %v3269, %v3266
        %v3393 = vpack.c.bf16 %v3277, %v3274
        %v3394 = vpack.c.bf16 %v3285, %v3282
        %v3395 = vpack.c.bf16 %v3293, %v3290
        %v3396 = vpack.c.bf16 %v3301, %v3298
        %v3397 = vpack.c.bf16 %v3309, %v3306
        %v3398 = vpack.c.bf16 %v3317, %v3314
        %v3399 = vpack.c.bf16 %v3325, %v3322
        %v3400 = vpack.c.bf16 %v3333, %v3330
        %v3401 = vpack.c.bf16 %v3341, %v3338
        %v3402 = vpack.c.bf16 %v3349, %v3346
        %v3403 = vpack.c.bf16 %v3357, %v3354
        %v3404 = vpack.c.bf16 %v3365, %v3362
        %v3405 = vpack.c.bf16 %v3373, %v3370
        %v3406 = vpack.c.bf16 %v3381, %v3378
        %v3407 = vpack.c.bf16 %v3389, %v3386
        %v3424 = vunpack.c.l.b16 %v3392
        %v3425 = vunpack.c.h.b16 %v3392
        %v3426 = vunpack.c.l.b16 %v3393
        %v3427 = vunpack.c.h.b16 %v3393
        %v3428 = vunpack.c.l.b16 %v3394
        %v3429 = vunpack.c.h.b16 %v3394
        %v3430 = vunpack.c.l.b16 %v3395
        %v3431 = vunpack.c.h.b16 %v3395
        %v3432 = vunpack.c.l.b16 %v3396
        %v3433 = vunpack.c.h.b16 %v3396
        %v3434 = vunpack.c.l.b16 %v3397
        %v3435 = vunpack.c.h.b16 %v3397
        %v3436 = vunpack.c.l.b16 %v3398
        %v3437 = vunpack.c.h.b16 %v3398
        %v3438 = vunpack.c.l.b16 %v3399
        %v3439 = vunpack.c.h.b16 %v3399
        %v3440 = vunpack.c.l.b16 %v3400
        %v3441 = vunpack.c.h.b16 %v3400
        %v3442 = vunpack.c.l.b16 %v3401
        %v3443 = vunpack.c.h.b16 %v3401
        %v3444 = vunpack.c.l.b16 %v3402
        %v3445 = vunpack.c.h.b16 %v3402
        %v3446 = vunpack.c.l.b16 %v3403
        %v3447 = vunpack.c.h.b16 %v3403
        %v3448 = vunpack.c.l.b16 %v3404
        %v3449 = vunpack.c.h.b16 %v3404
        %v3450 = vunpack.c.l.b16 %v3405
        %v3451 = vunpack.c.h.b16 %v3405
        %v3452 = vunpack.c.l.b16 %v3406
        %v3453 = vunpack.c.h.b16 %v3406
        %v3454 = vunpack.c.l.b16 %v3407
        %v3455 = vunpack.c.h.b16 %v3407
        %v3456 = vpack.c.b16 %v3424, %v3424
        %v3457 = vpack.c.b16 %v3425, %v3425
        %v3458 = vpack.c.b16 %v3426, %v3426
        %v3459 = vpack.c.b16 %v3427, %v3427
        %v3460 = vpack.c.b16 %v3428, %v3428
        %v3461 = vpack.c.b16 %v3429, %v3429
        %v3462 = vpack.c.b16 %v3430, %v3430
        %v3463 = vpack.c.b16 %v3431, %v3431
        %v3464 = vpack.c.b16 %v3432, %v3432
        %v3465 = vpack.c.b16 %v3433, %v3433
        %v3466 = vpack.c.b16 %v3434, %v3434
        %v3467 = vpack.c.b16 %v3435, %v3435
        %v3468 = vpack.c.b16 %v3436, %v3436
        %v3469 = vpack.c.b16 %v3437, %v3437
        %v3470 = vpack.c.b16 %v3438, %v3438
        %v3471 = vpack.c.b16 %v3439, %v3439
        %v3472 = vpack.c.b16 %v3440, %v3440
        %v3473 = vpack.c.b16 %v3441, %v3441
        %v3474 = vpack.c.b16 %v3442, %v3442
        %v3475 = vpack.c.b16 %v3443, %v3443
        %v3476 = vpack.c.b16 %v3444, %v3444
        %v3477 = vpack.c.b16 %v3445, %v3445
        %v3478 = vpack.c.b16 %v3446, %v3446
        %v3479 = vpack.c.b16 %v3447, %v3447
        %v3480 = vpack.c.b16 %v3448, %v3448
        %v3481 = vpack.c.b16 %v3449, %v3449
        %v3482 = vpack.c.b16 %v3450, %v3450
        %v3483 = vpack.c.b16 %v3451, %v3451
        %v3484 = vpack.c.b16 %v3452, %v3452
        %v3485 = vpack.c.b16 %v3453, %v3453
        %v3486 = vpack.c.b16 %v3454, %v3454
        %v3487 = vpack.c.b16 %v3455, %v3455
        %3520 = vst [vmem:[%s450 + $0x4] sm:$0xf] %v3456
        %3521 = vst [vmem:[%s450 + $0x14] sm:$0xf] %v3457
        %3522 = vst [vmem:[%s450 + $0x24] sm:$0xf] %v3458
        %3523 = vst [vmem:[%s450 + $0x34] sm:$0xf] %v3459
        %3524 = vst [vmem:[%s450 + $0x44] sm:$0xf] %v3460
        %3525 = vst [vmem:[%s450 + $0x54] sm:$0xf] %v3461
        %3526 = vst [vmem:[%s450 + $0x64] sm:$0xf] %v3462
        %3527 = vst [vmem:[%s450 + $0x74] sm:$0xf] %v3463
        %3528 = vst [vmem:[%s450 + $0x84] sm:$0xf] %v3464
        %3529 = vst [vmem:[%s450 + $0x94] sm:$0xf] %v3465
        %3530 = vst [vmem:[%s450 + $0xa4] sm:$0xf] %v3466
        %3531 = vst [vmem:[%s450 + $0xb4] sm:$0xf] %v3467
        %3532 = vst [vmem:[%s450 + $0xc4] sm:$0xf] %v3468
        %3533 = vst [vmem:[%s450 + $0xd4] sm:$0xf] %v3469
        %3534 = vst [vmem:[%s450 + $0xe4] sm:$0xf] %v3470
        %3535 = vst [vmem:[%s450 + $0xf4] sm:$0xf] %v3471
        %3536 = vst [vmem:[%s450 + $0x104] sm:$0xf] %v3472
        %3537 = vst [vmem:[%s450 + $0x114] sm:$0xf] %v3473
        %3538 = vst [vmem:[%s450 + $0x124] sm:$0xf] %v3474
        %3539 = vst [vmem:[%s450 + $0x134] sm:$0xf] %v3475
        %3540 = vst [vmem:[%s450 + $0x144] sm:$0xf] %v3476
        %3541 = vst [vmem:[%s450 + $0x154] sm:$0xf] %v3477
        %3542 = vst [vmem:[%s450 + $0x164] sm:$0xf] %v3478
        %3543 = vst [vmem:[%s450 + $0x174] sm:$0xf] %v3479
        %3544 = vst [vmem:[%s450 + $0x184] sm:$0xf] %v3480
        %3545 = vst [vmem:[%s450 + $0x194] sm:$0xf] %v3481
        %3546 = vst [vmem:[%s450 + $0x1a4] sm:$0xf] %v3482
        %3547 = vst [vmem:[%s450 + $0x1b4] sm:$0xf] %v3483
        %3548 = vst [vmem:[%s450 + $0x1c4] sm:$0xf] %v3484
        %3549 = vst [vmem:[%s450 + $0x1d4] sm:$0xf] %v3485
        %3550 = vst [vmem:[%s450 + $0x1e4] sm:$0xf] %v3486
        %3551 = vst [vmem:[%s450 + $0x1f4] sm:$0xf] %v3487
        %v3552 = vpack.c.bf16 %v1174, %v1173
        %v3553 = vpack.c.bf16 %v1178, %v1176
        %v3554 = vpack.c.bf16 %v1184, %v1181
        %v3555 = vpack.c.bf16 %v1190, %v1187
        %v3556 = vpack.c.bf16 %v1196, %v1193
        %v3557 = vpack.c.bf16 %v1202, %v1199
        %v3558 = vpack.c.bf16 %v1208, %v1205
        %v3559 = vpack.c.bf16 %v1214, %v1211
        %v3560 = vpack.c.bf16 %v1220, %v1217
        %v3561 = vpack.c.bf16 %v1226, %v1223
        %v3562 = vpack.c.bf16 %v1232, %v1229
        %v3563 = vpack.c.bf16 %v1238, %v1235
        %v3564 = vpack.c.bf16 %v1244, %v1241
        %v3565 = vpack.c.bf16 %v1250, %v1247
        %v3566 = vpack.c.bf16 %v1256, %v1253
        %v3567 = vpack.c.bf16 %v1262, %v1259
        %v3568 = vpack.c.bf16 %v1268, %v1265
        %v3569 = vpack.c.bf16 %v1274, %v1271
        %v3570 = vpack.c.bf16 %v1278, %v1276
        %v3571 = vpack.c.bf16 %v1280, %v1279
        %v3592 = vrot.slane %v3552, 7
        %v3593 = vrot.slane %v3553, 7
        %v3594 = vrot.slane %v3554, 7
        %v3595 = vrot.slane %v3555, 7
        %v3596 = vrot.slane %v3556, 7
        %v3597 = vrot.slane %v3557, 7
        %v3598 = vrot.slane %v3558, 7
        %v3599 = vrot.slane %v3559, 7
        %v3600 = vrot.slane %v3560, 7
        %v3601 = vrot.slane %v3561, 7
        %v3602 = vrot.slane %v3562, 7
        %v3603 = vrot.slane %v3563, 7
        %v3604 = vrot.slane %v3564, 7
        %v3605 = vrot.slane %v3565, 7
        %v3606 = vrot.slane %v3566, 7
        %v3607 = vrot.slane %v3567, 7
        %v3608 = vrot.slane %v3568, 7
        %v3609 = vrot.slane %v3569, 7
        %v3610 = vrot.slane %v3570, 7
        %v3611 = vrot.slane %v3571, 7
        %vm3612 = vcmask 1040384
        %v3615 = vsel %vm3612, 0, %v3592
        %v3618 = vsel %vm3612, 0, %v3593
        %v3621 = vsel %vm3612, 0, %v3594
        %v3624 = vsel %vm3612, 0, %v3595
        %v3627 = vsel %vm3612, 0, %v3596
        %v3630 = vsel %vm3612, 0, %v3597
        %v3633 = vsel %vm3612, 0, %v3598
        %v3636 = vsel %vm3612, 0, %v3599
        %v3639 = vsel %vm3612, 0, %v3600
        %v3642 = vsel %vm3612, 0, %v3601
        %v3645 = vsel %vm3612, 0, %v3602
        %v3648 = vsel %vm3612, 0, %v3603
        %v3651 = vsel %vm3612, 0, %v3604
        %v3654 = vsel %vm3612, 0, %v3605
        %v3657 = vsel %vm3612, 0, %v3606
        %v3660 = vsel %vm3612, 0, %v3607
        %v3663 = vsel %vm3612, 0, %v3608
        %v3666 = vsel %vm3612, 0, %v3609
        %v3669 = vsel %vm3612, 0, %v3610
        %v3672 = vsel %vm3612, 0, %v3611
        %v3674 = vsel %vm3612, %v3592, 0
        %v3675 = vsel %vm3612, %v3593, 0
        %v3676 = vsel %vm3612, %v3594, 0
        %v3677 = vsel %vm3612, %v3595, 0
        %v3678 = vsel %vm3612, %v3596, 0
        %v3679 = vsel %vm3612, %v3597, 0
        %v3680 = vsel %vm3612, %v3598, 0
        %v3681 = vsel %vm3612, %v3599, 0
        %v3682 = vsel %vm3612, %v3600, 0
        %v3683 = vsel %vm3612, %v3601, 0
        %v3684 = vsel %vm3612, %v3602, 0
        %v3685 = vsel %vm3612, %v3603, 0
        %v3686 = vsel %vm3612, %v3604, 0
        %v3687 = vsel %vm3612, %v3605, 0
        %v3688 = vsel %vm3612, %v3606, 0
        %v3689 = vsel %vm3612, %v3607, 0
        %v3690 = vsel %vm3612, %v3608, 0
        %v3691 = vsel %vm3612, %v3609, 0
        %v3692 = vsel %vm3612, %v3610, 0
        %v3693 = vsel %vm3612, %v3611, 0
        %v3694 = vshrl.u32 %v3615, 16
        %v3696 = vshll.u32 %v3615, 16
        %v3698 = vrot.slane %v3696, 1
        %v3699 = vor.u32 %v3694, %v3698
        %v3700 = vshll.u32 %v3674, 16
        %v3702 = vrot.slane %v3700, 1
        %v3703 = vsel %vm1660, %v3699, %v3702
        %v3704 = vshrl.u32 %v3618, 16
        %v3706 = vshll.u32 %v3618, 16
        %v3708 = vrot.slane %v3706, 1
        %v3709 = vor.u32 %v3704, %v3708
        %v3710 = vshll.u32 %v3675, 16
        %v3712 = vrot.slane %v3710, 1
        %v3713 = vsel %vm1660, %v3709, %v3712
        %v3714 = vshrl.u32 %v3621, 16
        %v3716 = vshll.u32 %v3621, 16
        %v3718 = vrot.slane %v3716, 1
        %v3719 = vor.u32 %v3714, %v3718
        %v3720 = vshll.u32 %v3676, 16
        %v3722 = vrot.slane %v3720, 1
        %v3723 = vsel %vm1660, %v3719, %v3722
        %v3724 = vshrl.u32 %v3624, 16
        %v3726 = vshll.u32 %v3624, 16
        %v3728 = vrot.slane %v3726, 1
        %v3729 = vor.u32 %v3724, %v3728
        %v3730 = vshll.u32 %v3677, 16
        %v3732 = vrot.slane %v3730, 1
        %v3733 = vsel %vm1660, %v3729, %v3732
        %v3734 = vshrl.u32 %v3627, 16
        %v3736 = vshll.u32 %v3627, 16
        %v3738 = vrot.slane %v3736, 1
        %v3739 = vor.u32 %v3734, %v3738
        %v3740 = vshll.u32 %v3678, 16
        %v3742 = vrot.slane %v3740, 1
        %v3743 = vsel %vm1660, %v3739, %v3742
        %v3744 = vshrl.u32 %v3630, 16
        %v3746 = vshll.u32 %v3630, 16
        %v3748 = vrot.slane %v3746, 1
        %v3749 = vor.u32 %v3744, %v3748
        %v3750 = vshll.u32 %v3679, 16
        %v3752 = vrot.slane %v3750, 1
        %v3753 = vsel %vm1660, %v3749, %v3752
        %v3754 = vshrl.u32 %v3633, 16
        %v3756 = vshll.u32 %v3633, 16
        %v3758 = vrot.slane %v3756, 1
        %v3759 = vor.u32 %v3754, %v3758
        %v3760 = vshll.u32 %v3680, 16
        %v3762 = vrot.slane %v3760, 1
        %v3763 = vsel %vm1660, %v3759, %v3762
        %v3764 = vshrl.u32 %v3636, 16
        %v3766 = vshll.u32 %v3636, 16
        %v3768 = vrot.slane %v3766, 1
        %v3769 = vor.u32 %v3764, %v3768
        %v3770 = vshll.u32 %v3681, 16
        %v3772 = vrot.slane %v3770, 1
        %v3773 = vsel %vm1660, %v3769, %v3772
        %v3774 = vshrl.u32 %v3639, 16
        %v3776 = vshll.u32 %v3639, 16
        %v3778 = vrot.slane %v3776, 1
        %v3779 = vor.u32 %v3774, %v3778
        %v3780 = vshll.u32 %v3682, 16
        %v3782 = vrot.slane %v3780, 1
        %v3783 = vsel %vm1660, %v3779, %v3782
        %v3784 = vshrl.u32 %v3642, 16
        %v3786 = vshll.u32 %v3642, 16
        %v3788 = vrot.slane %v3786, 1
        %v3789 = vor.u32 %v3784, %v3788
        %v3790 = vshll.u32 %v3683, 16
        %v3792 = vrot.slane %v3790, 1
        %v3793 = vsel %vm1660, %v3789, %v3792
        %v3794 = vshrl.u32 %v3645, 16
        %v3796 = vshll.u32 %v3645, 16
        %v3798 = vrot.slane %v3796, 1
        %v3799 = vor.u32 %v3794, %v3798
        %v3800 = vshll.u32 %v3684, 16
        %v3802 = vrot.slane %v3800, 1
        %v3803 = vsel %vm1660, %v3799, %v3802
        %v3804 = vshrl.u32 %v3648, 16
        %v3806 = vshll.u32 %v3648, 16
        %v3808 = vrot.slane %v3806, 1
        %v3809 = vor.u32 %v3804, %v3808
        %v3810 = vshll.u32 %v3685, 16
        %v3812 = vrot.slane %v3810, 1
        %v3813 = vsel %vm1660, %v3809, %v3812
        %v3814 = vshrl.u32 %v3651, 16
        %v3816 = vshll.u32 %v3651, 16
        %v3818 = vrot.slane %v3816, 1
        %v3819 = vor.u32 %v3814, %v3818
        %v3820 = vshll.u32 %v3686, 16
        %v3822 = vrot.slane %v3820, 1
        %v3823 = vsel %vm1660, %v3819, %v3822
        %v3824 = vshrl.u32 %v3654, 16
        %v3826 = vshll.u32 %v3654, 16
        %v3828 = vrot.slane %v3826, 1
        %v3829 = vor.u32 %v3824, %v3828
        %v3830 = vshll.u32 %v3687, 16
        %v3832 = vrot.slane %v3830, 1
        %v3833 = vsel %vm1660, %v3829, %v3832
        %v3834 = vshrl.u32 %v3657, 16
        %v3836 = vshll.u32 %v3657, 16
        %v3838 = vrot.slane %v3836, 1
        %v3839 = vor.u32 %v3834, %v3838
        %v3840 = vshll.u32 %v3688, 16
        %v3842 = vrot.slane %v3840, 1
        %v3843 = vsel %vm1660, %v3839, %v3842
        %v3844 = vshrl.u32 %v3660, 16
        %v3846 = vshll.u32 %v3660, 16
        %v3848 = vrot.slane %v3846, 1
        %v3849 = vor.u32 %v3844, %v3848
        %v3850 = vshll.u32 %v3689, 16
        %v3852 = vrot.slane %v3850, 1
        %v3853 = vsel %vm1660, %v3849, %v3852
        %v3854 = vshrl.u32 %v3663, 16
        %v3856 = vshll.u32 %v3663, 16
        %v3858 = vrot.slane %v3856, 1
        %v3859 = vor.u32 %v3854, %v3858
        %v3860 = vshll.u32 %v3690, 16
        %v3862 = vrot.slane %v3860, 1
        %v3863 = vsel %vm1660, %v3859, %v3862
        %v3864 = vshrl.u32 %v3666, 16
        %v3866 = vshll.u32 %v3666, 16
        %v3868 = vrot.slane %v3866, 1
        %v3869 = vor.u32 %v3864, %v3868
        %v3870 = vshll.u32 %v3691, 16
        %v3872 = vrot.slane %v3870, 1
        %v3873 = vsel %vm1660, %v3869, %v3872
        %v3874 = vshrl.u32 %v3669, 16
        %v3876 = vshll.u32 %v3669, 16
        %v3878 = vrot.slane %v3876, 1
        %v3879 = vor.u32 %v3874, %v3878
        %v3880 = vshll.u32 %v3692, 16
        %v3882 = vrot.slane %v3880, 1
        %v3883 = vsel %vm1660, %v3879, %v3882
        %v3884 = vshrl.u32 %v3672, 16
        %v3886 = vshll.u32 %v3672, 16
        %v3888 = vrot.slane %v3886, 1
        %v3889 = vor.u32 %v3884, %v3888
        %v3890 = vshll.u32 %v3693, 16
        %v3892 = vrot.slane %v3890, 1
        %v3893 = vsel %vm1660, %v3889, %v3892
        %v3954 = vrot.slane %v3615, 1
        %v3955 = vrot.slane %v3674, 1
        %v3956 = vsel %vm1931, %v3954, %v3955
        %v3957 = vrot.slane %v3618, 1
        %v3958 = vrot.slane %v3675, 1
        %v3959 = vsel %vm1931, %v3957, %v3958
        %v3960 = vrot.slane %v3621, 1
        %v3961 = vrot.slane %v3676, 1
        %v3962 = vsel %vm1931, %v3960, %v3961
        %v3963 = vrot.slane %v3624, 1
        %v3964 = vrot.slane %v3677, 1
        %v3965 = vsel %vm1931, %v3963, %v3964
        %v3966 = vrot.slane %v3627, 1
        %v3967 = vrot.slane %v3678, 1
        %v3968 = vsel %vm1931, %v3966, %v3967
        %v3969 = vrot.slane %v3630, 1
        %v3970 = vrot.slane %v3679, 1
        %v3971 = vsel %vm1931, %v3969, %v3970
        %v3972 = vrot.slane %v3633, 1
        %v3973 = vrot.slane %v3680, 1
        %v3974 = vsel %vm1931, %v3972, %v3973
        %v3975 = vrot.slane %v3636, 1
        %v3976 = vrot.slane %v3681, 1
        %v3977 = vsel %vm1931, %v3975, %v3976
        %v3978 = vrot.slane %v3639, 1
        %v3979 = vrot.slane %v3682, 1
        %v3980 = vsel %vm1931, %v3978, %v3979
        %v3981 = vrot.slane %v3642, 1
        %v3982 = vrot.slane %v3683, 1
        %v3983 = vsel %vm1931, %v3981, %v3982
        %v3984 = vrot.slane %v3645, 1
        %v3985 = vrot.slane %v3684, 1
        %v3986 = vsel %vm1931, %v3984, %v3985
        %v3987 = vrot.slane %v3648, 1
        %v3988 = vrot.slane %v3685, 1
        %v3989 = vsel %vm1931, %v3987, %v3988
        %v3990 = vrot.slane %v3651, 1
        %v3991 = vrot.slane %v3686, 1
        %v3992 = vsel %vm1931, %v3990, %v3991
        %v3993 = vrot.slane %v3654, 1
        %v3994 = vrot.slane %v3687, 1
        %v3995 = vsel %vm1931, %v3993, %v3994
        %v3996 = vrot.slane %v3657, 1
        %v3997 = vrot.slane %v3688, 1
        %v3998 = vsel %vm1931, %v3996, %v3997
        %v3999 = vrot.slane %v3660, 1
        %v4000 = vrot.slane %v3689, 1
        %v4001 = vsel %vm1931, %v3999, %v4000
        %v4002 = vrot.slane %v3663, 1
        %v4003 = vrot.slane %v3690, 1
        %v4004 = vsel %vm1931, %v4002, %v4003
        %v4005 = vrot.slane %v3666, 1
        %v4006 = vrot.slane %v3691, 1
        %v4007 = vsel %vm1931, %v4005, %v4006
        %v4008 = vrot.slane %v3669, 1
        %v4009 = vrot.slane %v3692, 1
        %v4010 = vsel %vm1931, %v4008, %v4009
        %v4011 = vrot.slane %v3672, 1
        %v4012 = vrot.slane %v3693, 1
        %v4013 = vsel %vm1931, %v4011, %v4012
        %vm4034 = vsmask.f32 6400
        %v4035 = vrot.slane %v3694, 1
        %v4036 = vrot.slane %v3696, 2
        %v4037 = vor.u32 %v4035, %v4036
        %v4038 = vshrl.u32 %v3674, 16
        %v4040 = vrot.slane %v4038, 1
        %v4041 = vrot.slane %v3700, 2
        %v4042 = vor.u32 %v4040, %v4041
        %v4043 = vsel %vm4034, %v4037, %v4042
        %v4044 = vrot.slane %v3704, 1
        %v4045 = vrot.slane %v3706, 2
        %v4046 = vor.u32 %v4044, %v4045
        %v4047 = vshrl.u32 %v3675, 16
        %v4049 = vrot.slane %v4047, 1
        %v4050 = vrot.slane %v3710, 2
        %v4051 = vor.u32 %v4049, %v4050
        %v4052 = vsel %vm4034, %v4046, %v4051
        %v4053 = vrot.slane %v3714, 1
        %v4054 = vrot.slane %v3716, 2
        %v4055 = vor.u32 %v4053, %v4054
        %v4056 = vshrl.u32 %v3676, 16
        %v4058 = vrot.slane %v4056, 1
        %v4059 = vrot.slane %v3720, 2
        %v4060 = vor.u32 %v4058, %v4059
        %v4061 = vsel %vm4034, %v4055, %v4060
        %v4062 = vrot.slane %v3724, 1
        %v4063 = vrot.slane %v3726, 2
        %v4064 = vor.u32 %v4062, %v4063
        %v4065 = vshrl.u32 %v3677, 16
        %v4067 = vrot.slane %v4065, 1
        %v4068 = vrot.slane %v3730, 2
        %v4069 = vor.u32 %v4067, %v4068
        %v4070 = vsel %vm4034, %v4064, %v4069
        %v4071 = vrot.slane %v3734, 1
        %v4072 = vrot.slane %v3736, 2
        %v4073 = vor.u32 %v4071, %v4072
        %v4074 = vshrl.u32 %v3678, 16
        %v4076 = vrot.slane %v4074, 1
        %v4077 = vrot.slane %v3740, 2
        %v4078 = vor.u32 %v4076, %v4077
        %v4079 = vsel %vm4034, %v4073, %v4078
        %v4080 = vrot.slane %v3744, 1
        %v4081 = vrot.slane %v3746, 2
        %v4082 = vor.u32 %v4080, %v4081
        %v4083 = vshrl.u32 %v3679, 16
        %v4085 = vrot.slane %v4083, 1
        %v4086 = vrot.slane %v3750, 2
        %v4087 = vor.u32 %v4085, %v4086
        %v4088 = vsel %vm4034, %v4082, %v4087
        %v4089 = vrot.slane %v3754, 1
        %v4090 = vrot.slane %v3756, 2
        %v4091 = vor.u32 %v4089, %v4090
        %v4092 = vshrl.u32 %v3680, 16
        %v4094 = vrot.slane %v4092, 1
        %v4095 = vrot.slane %v3760, 2
        %v4096 = vor.u32 %v4094, %v4095
        %v4097 = vsel %vm4034, %v4091, %v4096
        %v4098 = vrot.slane %v3764, 1
        %v4099 = vrot.slane %v3766, 2
        %v4100 = vor.u32 %v4098, %v4099
        %v4101 = vshrl.u32 %v3681, 16
        %v4103 = vrot.slane %v4101, 1
        %v4104 = vrot.slane %v3770, 2
        %v4105 = vor.u32 %v4103, %v4104
        %v4106 = vsel %vm4034, %v4100, %v4105
        %v4107 = vrot.slane %v3774, 1
        %v4108 = vrot.slane %v3776, 2
        %v4109 = vor.u32 %v4107, %v4108
        %v4110 = vshrl.u32 %v3682, 16
        %v4112 = vrot.slane %v4110, 1
        %v4113 = vrot.slane %v3780, 2
        %v4114 = vor.u32 %v4112, %v4113
        %v4115 = vsel %vm4034, %v4109, %v4114
        %v4116 = vrot.slane %v3784, 1
        %v4117 = vrot.slane %v3786, 2
        %v4118 = vor.u32 %v4116, %v4117
        %v4119 = vshrl.u32 %v3683, 16
        %v4121 = vrot.slane %v4119, 1
        %v4122 = vrot.slane %v3790, 2
        %v4123 = vor.u32 %v4121, %v4122
        %v4124 = vsel %vm4034, %v4118, %v4123
        %v4125 = vrot.slane %v3794, 1
        %v4126 = vrot.slane %v3796, 2
        %v4127 = vor.u32 %v4125, %v4126
        %v4128 = vshrl.u32 %v3684, 16
        %v4130 = vrot.slane %v4128, 1
        %v4131 = vrot.slane %v3800, 2
        %v4132 = vor.u32 %v4130, %v4131
        %v4133 = vsel %vm4034, %v4127, %v4132
        %v4134 = vrot.slane %v3804, 1
        %v4135 = vrot.slane %v3806, 2
        %v4136 = vor.u32 %v4134, %v4135
        %v4137 = vshrl.u32 %v3685, 16
        %v4139 = vrot.slane %v4137, 1
        %v4140 = vrot.slane %v3810, 2
        %v4141 = vor.u32 %v4139, %v4140
        %v4142 = vsel %vm4034, %v4136, %v4141
        %v4143 = vrot.slane %v3814, 1
        %v4144 = vrot.slane %v3816, 2
        %v4145 = vor.u32 %v4143, %v4144
        %v4146 = vshrl.u32 %v3686, 16
        %v4148 = vrot.slane %v4146, 1
        %v4149 = vrot.slane %v3820, 2
        %v4150 = vor.u32 %v4148, %v4149
        %v4151 = vsel %vm4034, %v4145, %v4150
        %v4152 = vrot.slane %v3824, 1
        %v4153 = vrot.slane %v3826, 2
        %v4154 = vor.u32 %v4152, %v4153
        %v4155 = vshrl.u32 %v3687, 16
        %v4157 = vrot.slane %v4155, 1
        %v4158 = vrot.slane %v3830, 2
        %v4159 = vor.u32 %v4157, %v4158
        %v4160 = vsel %vm4034, %v4154, %v4159
        %v4161 = vrot.slane %v3834, 1
        %v4162 = vrot.slane %v3836, 2
        %v4163 = vor.u32 %v4161, %v4162
        %v4164 = vshrl.u32 %v3688, 16
        %v4166 = vrot.slane %v4164, 1
        %v4167 = vrot.slane %v3840, 2
        %v4168 = vor.u32 %v4166, %v4167
        %v4169 = vsel %vm4034, %v4163, %v4168
        %v4170 = vrot.slane %v3844, 1
        %v4171 = vrot.slane %v3846, 2
        %v4172 = vor.u32 %v4170, %v4171
        %v4173 = vshrl.u32 %v3689, 16
        %v4175 = vrot.slane %v4173, 1
        %v4176 = vrot.slane %v3850, 2
        %v4177 = vor.u32 %v4175, %v4176
        %v4178 = vsel %vm4034, %v4172, %v4177
        %v4179 = vrot.slane %v3854, 1
        %v4180 = vrot.slane %v3856, 2
        %v4181 = vor.u32 %v4179, %v4180
        %v4182 = vshrl.u32 %v3690, 16
        %v4184 = vrot.slane %v4182, 1
        %v4185 = vrot.slane %v3860, 2
        %v4186 = vor.u32 %v4184, %v4185
        %v4187 = vsel %vm4034, %v4181, %v4186
        %v4188 = vrot.slane %v3864, 1
        %v4189 = vrot.slane %v3866, 2
        %v4190 = vor.u32 %v4188, %v4189
        %v4191 = vshrl.u32 %v3691, 16
        %v4193 = vrot.slane %v4191, 1
        %v4194 = vrot.slane %v3870, 2
        %v4195 = vor.u32 %v4193, %v4194
        %v4196 = vsel %vm4034, %v4190, %v4195
        %v4197 = vrot.slane %v3874, 1
        %v4198 = vrot.slane %v3876, 2
        %v4199 = vor.u32 %v4197, %v4198
        %v4200 = vshrl.u32 %v3692, 16
        %v4202 = vrot.slane %v4200, 1
        %v4203 = vrot.slane %v3880, 2
        %v4204 = vor.u32 %v4202, %v4203
        %v4205 = vsel %vm4034, %v4199, %v4204
        %v4206 = vrot.slane %v3884, 1
        %v4207 = vrot.slane %v3886, 2
        %v4208 = vor.u32 %v4206, %v4207
        %v4209 = vshrl.u32 %v3693, 16
        %v4211 = vrot.slane %v4209, 1
        %v4212 = vrot.slane %v3890, 2
        %v4213 = vor.u32 %v4211, %v4212
        %v4214 = vsel %vm4034, %v4208, %v4213
        %vm4235 = vcmask 1045504
        %v4236 = vrot.slane %v3615, 2
        %v4237 = vrot.slane %v3674, 2
        %v4238 = vsel %vm4235, %v4236, %v4237
        %v4239 = vrot.slane %v3618, 2
        %v4240 = vrot.slane %v3675, 2
        %v4241 = vsel %vm4235, %v4239, %v4240
        %v4242 = vrot.slane %v3621, 2
        %v4243 = vrot.slane %v3676, 2
        %v4244 = vsel %vm4235, %v4242, %v4243
        %v4245 = vrot.slane %v3624, 2
        %v4246 = vrot.slane %v3677, 2
        %v4247 = vsel %vm4235, %v4245, %v4246
        %v4248 = vrot.slane %v3627, 2
        %v4249 = vrot.slane %v3678, 2
        %v4250 = vsel %vm4235, %v4248, %v4249
        %v4251 = vrot.slane %v3630, 2
        %v4252 = vrot.slane %v3679, 2
        %v4253 = vsel %vm4235, %v4251, %v4252
        %v4254 = vrot.slane %v3633, 2
        %v4255 = vrot.slane %v3680, 2
        %v4256 = vsel %vm4235, %v4254, %v4255
        %v4257 = vrot.slane %v3636, 2
        %v4258 = vrot.slane %v3681, 2
        %v4259 = vsel %vm4235, %v4257, %v4258
        %v4260 = vrot.slane %v3639, 2
        %v4261 = vrot.slane %v3682, 2
        %v4262 = vsel %vm4235, %v4260, %v4261
        %v4263 = vrot.slane %v3642, 2
        %v4264 = vrot.slane %v3683, 2
        %v4265 = vsel %vm4235, %v4263, %v4264
        %v4266 = vrot.slane %v3645, 2
        %v4267 = vrot.slane %v3684, 2
        %v4268 = vsel %vm4235, %v4266, %v4267
        %v4269 = vrot.slane %v3648, 2
        %v4270 = vrot.slane %v3685, 2
        %v4271 = vsel %vm4235, %v4269, %v4270
        %v4272 = vrot.slane %v3651, 2
        %v4273 = vrot.slane %v3686, 2
        %v4274 = vsel %vm4235, %v4272, %v4273
        %v4275 = vrot.slane %v3654, 2
        %v4276 = vrot.slane %v3687, 2
        %v4277 = vsel %vm4235, %v4275, %v4276
        %v4278 = vrot.slane %v3657, 2
        %v4279 = vrot.slane %v3688, 2
        %v4280 = vsel %vm4235, %v4278, %v4279
        %v4281 = vrot.slane %v3660, 2
        %v4282 = vrot.slane %v3689, 2
        %v4283 = vsel %vm4235, %v4281, %v4282
        %v4284 = vrot.slane %v3663, 2
        %v4285 = vrot.slane %v3690, 2
        %v4286 = vsel %vm4235, %v4284, %v4285
        %v4287 = vrot.slane %v3666, 2
        %v4288 = vrot.slane %v3691, 2
        %v4289 = vsel %vm4235, %v4287, %v4288
        %v4290 = vrot.slane %v3669, 2
        %v4291 = vrot.slane %v3692, 2
        %v4292 = vsel %vm4235, %v4290, %v4291
        %v4293 = vrot.slane %v3672, 2
        %v4294 = vrot.slane %v3693, 2
        %v4295 = vsel %vm4235, %v4293, %v4294
        %v4316 = vld [vmem:[%s5] sm:$0xf]
        %v4317 = vld [vmem:[%s5 + $0x4] sm:$0xf]
        %v4318 = vld [vmem:[%s5 + $0x8] sm:$0xf]
        %v4319 = vld [vmem:[%s5 + $0xc] sm:$0xf]
        %v4320 = vld [vmem:[%s5 + $0x10] sm:$0xf]
        %v4321 = vld [vmem:[%s5 + $0x14] sm:$0xf]
        %v4322 = vld [vmem:[%s5 + $0x18] sm:$0xf]
        %v4323 = vld [vmem:[%s5 + $0x1c] sm:$0xf]
        %v4324 = vld [vmem:[%s5 + $0x20] sm:$0xf]
        %v4325 = vld [vmem:[%s5 + $0x24] sm:$0xf]
        %v4326 = vld [vmem:[%s5 + $0x28] sm:$0xf]
        %v4327 = vld [vmem:[%s5 + $0x2c] sm:$0xf]
        %v4328 = vld [vmem:[%s5 + $0x30] sm:$0xf]
        %v4329 = vld [vmem:[%s5 + $0x34] sm:$0xf]
        %v4330 = vld [vmem:[%s5 + $0x38] sm:$0xf]
        %v4331 = vld [vmem:[%s5 + $0x3c] sm:$0xf]
        %v4332 = vld [vmem:[%s5 + $0x40] sm:$0xf]
        %v4333 = vld [vmem:[%s5 + $0x44] sm:$0xf]
        %v4334 = vld [vmem:[%s5 + $0x48] sm:$0xf]
        %v4335 = vld [vmem:[%s5 + $0x4c] sm:$0xf]
        %v4336 = vld [vmem:[%s5 + $0x50] sm:$0xf]
        %v4337 = vld [vmem:[%s5 + $0x54] sm:$0xf]
        %v4338 = vld [vmem:[%s5 + $0x58] sm:$0xf]
        %v4339 = vld [vmem:[%s5 + $0x5c] sm:$0xf]
        %v4340 = vld [vmem:[%s5 + $0x60] sm:$0xf]
        %v4341 = vld [vmem:[%s5 + $0x64] sm:$0xf]
        %v4342 = vld [vmem:[%s5 + $0x68] sm:$0xf]
        %v4343 = vld [vmem:[%s5 + $0x6c] sm:$0xf]
        %v4344 = vld [vmem:[%s5 + $0x70] sm:$0xf]
        %v4345 = vld [vmem:[%s5 + $0x74] sm:$0xf]
        %v4346 = vld [vmem:[%s5 + $0x78] sm:$0xf]
        %v4347 = vld [vmem:[%s5 + $0x7c] sm:$0xf]
        %v4348 = vld [vmem:[%s5 + $0x80] sm:$0xf]
        %v4349 = vld [vmem:[%s5 + $0x84] sm:$0xf]
        %v4350 = vld [vmem:[%s5 + $0x88] sm:$0xf]
        %v4351 = vld [vmem:[%s5 + $0x8c] sm:$0xf]
        %v4352 = vld [vmem:[%s5 + $0x90] sm:$0xf]
        %v4353 = vld [vmem:[%s5 + $0x94] sm:$0xf]
        %v4354 = vld [vmem:[%s5 + $0x98] sm:$0xf]
        %v4355 = vld [vmem:[%s5 + $0x9c] sm:$0xf]
        %v4356 = vld [vmem:[%s5 + $0xa0] sm:$0xf]
        %v4357 = vld [vmem:[%s5 + $0xa4] sm:$0xf]
        %v4358 = vld [vmem:[%s5 + $0xa8] sm:$0xf]
        %v4359 = vld [vmem:[%s5 + $0xac] sm:$0xf]
        %v4360 = vld [vmem:[%s5 + $0xb0] sm:$0xf]
        %v4361 = vld [vmem:[%s5 + $0xb4] sm:$0xf]
        %v4362 = vld [vmem:[%s5 + $0xb8] sm:$0xf]
        %v4363 = vld [vmem:[%s5 + $0xbc] sm:$0xf]
        %v4364 = vld [vmem:[%s5 + $0xc0] sm:$0xf]
        %v4365 = vld [vmem:[%s5 + $0xc4] sm:$0xf]
        %v4366 = vld [vmem:[%s5 + $0xc8] sm:$0xf]
        %v4367 = vld [vmem:[%s5 + $0xcc] sm:$0xf]
        %v4368 = vld [vmem:[%s5 + $0xd0] sm:$0xf]
        %v4369 = vld [vmem:[%s5 + $0xd4] sm:$0xf]
        %v4370 = vld [vmem:[%s5 + $0xd8] sm:$0xf]
        %v4371 = vld [vmem:[%s5 + $0xdc] sm:$0xf]
        %v4372 = vld [vmem:[%s5 + $0xe0] sm:$0xf]
        %v4373 = vld [vmem:[%s5 + $0xe4] sm:$0xf]
        %v4374 = vld [vmem:[%s5 + $0xe8] sm:$0xf]
        %v4375 = vld [vmem:[%s5 + $0xec] sm:$0xf]
        %v4376 = vld [vmem:[%s5 + $0xf0] sm:$0xf]
        %v4377 = vld [vmem:[%s5 + $0xf4] sm:$0xf]
        %v4378 = vld [vmem:[%s5 + $0xf8] sm:$0xf]
        %v4379 = vld [vmem:[%s5 + $0xfc] sm:$0xf]
        %v4380 = vld [vmem:[%s5 + $0x100] sm:$0xf]
        %v4381 = vld [vmem:[%s5 + $0x104] sm:$0xf]
        %v4382 = vld [vmem:[%s5 + $0x108] sm:$0xf]
        %v4383 = vld [vmem:[%s5 + $0x10c] sm:$0xf]
        %v4384 = vld [vmem:[%s5 + $0x110] sm:$0xf]
        %v4385 = vld [vmem:[%s5 + $0x114] sm:$0xf]
        %v4386 = vld [vmem:[%s5 + $0x118] sm:$0xf]
        %v4387 = vld [vmem:[%s5 + $0x11c] sm:$0xf]
        %v4388 = vld [vmem:[%s5 + $0x120] sm:$0xf]
        %v4389 = vld [vmem:[%s5 + $0x124] sm:$0xf]
        %v4390 = vld [vmem:[%s5 + $0x128] sm:$0xf]
        %v4391 = vld [vmem:[%s5 + $0x12c] sm:$0xf]
        %v4392 = vld [vmem:[%s5 + $0x130] sm:$0xf]
        %v4393 = vld [vmem:[%s5 + $0x134] sm:$0xf]
        %v4394 = vld [vmem:[%s5 + $0x138] sm:$0xf]
        %v4395 = vld [vmem:[%s5 + $0x13c] sm:$0xf]
        %v4396 = vld [vmem:[%s5 + $0x140] sm:$0xf]
        %v4397 = vld [vmem:[%s5 + $0x144] sm:$0xf]
        %v4398 = vld [vmem:[%s5 + $0x148] sm:$0xf]
        %v4399 = vld [vmem:[%s5 + $0x14c] sm:$0xf]
        %v4400 = vld [vmem:[%s5 + $0x150] sm:$0xf]
        %v4401 = vld [vmem:[%s5 + $0x154] sm:$0xf]
        %v4402 = vld [vmem:[%s5 + $0x158] sm:$0xf]
        %v4403 = vld [vmem:[%s5 + $0x15c] sm:$0xf]
        %v4404 = vld [vmem:[%s5 + $0x160] sm:$0xf]
        %v4405 = vld [vmem:[%s5 + $0x164] sm:$0xf]
        %v4406 = vld [vmem:[%s5 + $0x168] sm:$0xf]
        %v4407 = vld [vmem:[%s5 + $0x16c] sm:$0xf]
        %v4408 = vld [vmem:[%s5 + $0x170] sm:$0xf]
        %v4409 = vld [vmem:[%s5 + $0x174] sm:$0xf]
        %v4410 = vld [vmem:[%s5 + $0x178] sm:$0xf]
        %v4411 = vld [vmem:[%s5 + $0x17c] sm:$0xf]
        %v4412 = vld [vmem:[%s5 + $0x180] sm:$0xf]
        %v4413 = vld [vmem:[%s5 + $0x184] sm:$0xf]
        %v4414 = vld [vmem:[%s5 + $0x188] sm:$0xf]
        %v4415 = vld [vmem:[%s5 + $0x18c] sm:$0xf]
        %v4416 = vld [vmem:[%s5 + $0x190] sm:$0xf]
        %v4417 = vld [vmem:[%s5 + $0x194] sm:$0xf]
        %v4418 = vld [vmem:[%s5 + $0x198] sm:$0xf]
        %v4419 = vld [vmem:[%s5 + $0x19c] sm:$0xf]
        %v4420 = vld [vmem:[%s5 + $0x1a0] sm:$0xf]
        %v4421 = vld [vmem:[%s5 + $0x1a4] sm:$0xf]
        %v4422 = vld [vmem:[%s5 + $0x1a8] sm:$0xf]
        %v4423 = vld [vmem:[%s5 + $0x1ac] sm:$0xf]
        %v4424 = vld [vmem:[%s5 + $0x1b0] sm:$0xf]
        %v4425 = vld [vmem:[%s5 + $0x1b4] sm:$0xf]
        %v4426 = vld [vmem:[%s5 + $0x1b8] sm:$0xf]
        %v4427 = vld [vmem:[%s5 + $0x1bc] sm:$0xf]
        %v4428 = vld [vmem:[%s5 + $0x1c0] sm:$0xf]
        %v4429 = vld [vmem:[%s5 + $0x1c4] sm:$0xf]
        %v4430 = vld [vmem:[%s5 + $0x1c8] sm:$0xf]
        %v4431 = vld [vmem:[%s5 + $0x1cc] sm:$0xf]
        %v4432 = vld [vmem:[%s5 + $0x1d0] sm:$0xf]
        %v4433 = vld [vmem:[%s5 + $0x1d4] sm:$0xf]
        %v4434 = vld [vmem:[%s5 + $0x1d8] sm:$0xf]
        %v4435 = vld [vmem:[%s5 + $0x1dc] sm:$0xf]
        %v4436 = vld [vmem:[%s5 + $0x1e0] sm:$0xf]
        %v4437 = vld [vmem:[%s5 + $0x1e4] sm:$0xf]
        %v4438 = vld [vmem:[%s5 + $0x1e8] sm:$0xf]
        %v4439 = vld [vmem:[%s5 + $0x1ec] sm:$0xf]
        %v4440 = vld [vmem:[%s5 + $0x1f0] sm:$0xf]
        %v4441 = vld [vmem:[%s5 + $0x1f4] sm:$0xf]
        %v4442 = vld [vmem:[%s5 + $0x1f8] sm:$0xf]
        %v4443 = vld [vmem:[%s5 + $0x1fc] sm:$0xf]
        %v4444 = vld [vmem:[%s5 + $0x200] sm:$0xf]
        %v4445 = vld [vmem:[%s5 + $0x204] sm:$0xf]
        %v4446 = vld [vmem:[%s5 + $0x208] sm:$0xf]
        %v4447 = vld [vmem:[%s5 + $0x20c] sm:$0xf]
        %v4448 = vld [vmem:[%s5 + $0x210] sm:$0xf]
        %v4449 = vld [vmem:[%s5 + $0x214] sm:$0xf]
        %v4450 = vld [vmem:[%s5 + $0x218] sm:$0xf]
        %v4451 = vld [vmem:[%s5 + $0x21c] sm:$0xf]
        %v4452 = vld [vmem:[%s5 + $0x220] sm:$0xf]
        %v4453 = vld [vmem:[%s5 + $0x224] sm:$0xf]
        %v4454 = vld [vmem:[%s5 + $0x228] sm:$0xf]
        %v4455 = vld [vmem:[%s5 + $0x22c] sm:$0xf]
        %v4456 = vld [vmem:[%s5 + $0x230] sm:$0xf]
        %v4457 = vld [vmem:[%s5 + $0x234] sm:$0xf]
        %v4458 = vld [vmem:[%s5 + $0x238] sm:$0xf]
        %v4459 = vld [vmem:[%s5 + $0x23c] sm:$0xf]
        %v4460 = vld [vmem:[%s5 + $0x240] sm:$0xf]
        %v4461 = vld [vmem:[%s5 + $0x244] sm:$0xf]
        %v4462 = vld [vmem:[%s5 + $0x248] sm:$0xf]
        %v4463 = vld [vmem:[%s5 + $0x24c] sm:$0xf]
        %v4464 = vld [vmem:[%s5 + $0x250] sm:$0xf]
        %v4465 = vld [vmem:[%s5 + $0x254] sm:$0xf]
        %v4466 = vld [vmem:[%s5 + $0x258] sm:$0xf]
        %v4467 = vld [vmem:[%s5 + $0x25c] sm:$0xf]
        %v4468 = vld [vmem:[%s5 + $0x260] sm:$0xf]
        %v4469 = vld [vmem:[%s5 + $0x264] sm:$0xf]
        %v4470 = vld [vmem:[%s5 + $0x268] sm:$0xf]
        %v4471 = vld [vmem:[%s5 + $0x26c] sm:$0xf]
        %v4472 = vld [vmem:[%s5 + $0x270] sm:$0xf]
        %v4473 = vld [vmem:[%s5 + $0x274] sm:$0xf]
        %v4474 = vld [vmem:[%s5 + $0x278] sm:$0xf]
        %v4475 = vld [vmem:[%s5 + $0x27c] sm:$0xf]
        %v4476 = vld [vmem:[%s5 + $0x280] sm:$0xf]
        %v4477 = vld [vmem:[%s5 + $0x284] sm:$0xf]
        %v4478 = vld [vmem:[%s5 + $0x288] sm:$0xf]
        %v4479 = vld [vmem:[%s5 + $0x28c] sm:$0xf]
        %v4480 = vld [vmem:[%s5 + $0x290] sm:$0xf]
        %v4481 = vld [vmem:[%s5 + $0x294] sm:$0xf]
        %v4482 = vld [vmem:[%s5 + $0x298] sm:$0xf]
        %v4483 = vld [vmem:[%s5 + $0x29c] sm:$0xf]
        %v4484 = vld [vmem:[%s5 + $0x2a0] sm:$0xf]
        %v4485 = vld [vmem:[%s5 + $0x2a4] sm:$0xf]
        %v4486 = vld [vmem:[%s5 + $0x2a8] sm:$0xf]
        %v4487 = vld [vmem:[%s5 + $0x2ac] sm:$0xf]
        %v4488 = vld [vmem:[%s5 + $0x2b0] sm:$0xf]
        %v4489 = vld [vmem:[%s5 + $0x2b4] sm:$0xf]
        %v4490 = vld [vmem:[%s5 + $0x2b8] sm:$0xf]
        %v4491 = vld [vmem:[%s5 + $0x2bc] sm:$0xf]
        %v4492 = vld [vmem:[%s5 + $0x2c0] sm:$0xf]
        %v4493 = vld [vmem:[%s5 + $0x2c4] sm:$0xf]
        %v4494 = vld [vmem:[%s5 + $0x2c8] sm:$0xf]
        %v4495 = vld [vmem:[%s5 + $0x2cc] sm:$0xf]
        %v4496 = vld [vmem:[%s5 + $0x2d0] sm:$0xf]
        %v4497 = vld [vmem:[%s5 + $0x2d4] sm:$0xf]
        %v4498 = vld [vmem:[%s5 + $0x2d8] sm:$0xf]
        %v4499 = vld [vmem:[%s5 + $0x2dc] sm:$0xf]
        %v4500 = vld [vmem:[%s5 + $0x2e0] sm:$0xf]
        %v4501 = vld [vmem:[%s5 + $0x2e4] sm:$0xf]
        %v4502 = vld [vmem:[%s5 + $0x2e8] sm:$0xf]
        %v4503 = vld [vmem:[%s5 + $0x2ec] sm:$0xf]
        %v4504 = vld [vmem:[%s5 + $0x2f0] sm:$0xf]
        %v4505 = vld [vmem:[%s5 + $0x2f4] sm:$0xf]
        %v4506 = vld [vmem:[%s5 + $0x2f8] sm:$0xf]
        %v4507 = vld [vmem:[%s5 + $0x2fc] sm:$0xf]
        %v4508 = vld [vmem:[%s5 + $0x300] sm:$0xf]
        %v4509 = vld [vmem:[%s5 + $0x304] sm:$0xf]
        %v4510 = vld [vmem:[%s5 + $0x308] sm:$0xf]
        %v4511 = vld [vmem:[%s5 + $0x30c] sm:$0xf]
        %v4512 = vld [vmem:[%s5 + $0x310] sm:$0xf]
        %v4513 = vld [vmem:[%s5 + $0x314] sm:$0xf]
        %v4514 = vld [vmem:[%s5 + $0x318] sm:$0xf]
        %v4515 = vld [vmem:[%s5 + $0x31c] sm:$0xf]
        %v4516 = vld [vmem:[%s5 + $0x320] sm:$0xf]
        %v4517 = vld [vmem:[%s5 + $0x324] sm:$0xf]
        %v4518 = vld [vmem:[%s5 + $0x328] sm:$0xf]
        %v4519 = vld [vmem:[%s5 + $0x32c] sm:$0xf]
        %v4520 = vld [vmem:[%s5 + $0x330] sm:$0xf]
        %v4521 = vld [vmem:[%s5 + $0x334] sm:$0xf]
        %v4522 = vld [vmem:[%s5 + $0x338] sm:$0xf]
        %v4523 = vld [vmem:[%s5 + $0x33c] sm:$0xf]
        %v4524 = vld [vmem:[%s5 + $0x340] sm:$0xf]
        %v4525 = vld [vmem:[%s5 + $0x344] sm:$0xf]
        %v4526 = vld [vmem:[%s5 + $0x348] sm:$0xf]
        %v4527 = vld [vmem:[%s5 + $0x34c] sm:$0xf]
        %v4528 = vld [vmem:[%s5 + $0x350] sm:$0xf]
        %v4529 = vld [vmem:[%s5 + $0x354] sm:$0xf]
        %v4530 = vld [vmem:[%s5 + $0x358] sm:$0xf]
        %v4531 = vld [vmem:[%s5 + $0x35c] sm:$0xf]
        %v4532 = vld [vmem:[%s5 + $0x360] sm:$0xf]
        %v4533 = vld [vmem:[%s5 + $0x364] sm:$0xf]
        %v4534 = vld [vmem:[%s5 + $0x368] sm:$0xf]
        %v4535 = vld [vmem:[%s5 + $0x36c] sm:$0xf]
        %v4536 = vld [vmem:[%s5 + $0x370] sm:$0xf]
        %v4537 = vld [vmem:[%s5 + $0x374] sm:$0xf]
        %v4538 = vld [vmem:[%s5 + $0x378] sm:$0xf]
        %v4539 = vld [vmem:[%s5 + $0x37c] sm:$0xf]
        %v4540 = vld [vmem:[%s5 + $0x380] sm:$0xf]
        %v4541 = vld [vmem:[%s5 + $0x384] sm:$0xf]
        %v4542 = vld [vmem:[%s5 + $0x388] sm:$0xf]
        %v4543 = vld [vmem:[%s5 + $0x38c] sm:$0xf]
        %v4544 = vld [vmem:[%s5 + $0x390] sm:$0xf]
        %v4545 = vld [vmem:[%s5 + $0x394] sm:$0xf]
        %v4546 = vld [vmem:[%s5 + $0x398] sm:$0xf]
        %v4547 = vld [vmem:[%s5 + $0x39c] sm:$0xf]
        %v4548 = vld [vmem:[%s5 + $0x3a0] sm:$0xf]
        %v4549 = vld [vmem:[%s5 + $0x3a4] sm:$0xf]
        %v4550 = vld [vmem:[%s5 + $0x3a8] sm:$0xf]
        %v4551 = vld [vmem:[%s5 + $0x3ac] sm:$0xf]
        %v4552 = vld [vmem:[%s5 + $0x3b0] sm:$0xf]
        %v4553 = vld [vmem:[%s5 + $0x3b4] sm:$0xf]
        %v4554 = vld [vmem:[%s5 + $0x3b8] sm:$0xf]
        %v4555 = vld [vmem:[%s5 + $0x3bc] sm:$0xf]
        %v4556 = vld [vmem:[%s5 + $0x3c0] sm:$0xf]
        %v4557 = vld [vmem:[%s5 + $0x3c4] sm:$0xf]
        %v4558 = vld [vmem:[%s5 + $0x3c8] sm:$0xf]
        %v4559 = vld [vmem:[%s5 + $0x3cc] sm:$0xf]
        %v4560 = vld [vmem:[%s5 + $0x3d0] sm:$0xf]
        %v4561 = vld [vmem:[%s5 + $0x3d4] sm:$0xf]
        %v4562 = vld [vmem:[%s5 + $0x3d8] sm:$0xf]
        %v4563 = vld [vmem:[%s5 + $0x3dc] sm:$0xf]
        %v4564 = vld [vmem:[%s5 + $0x3e0] sm:$0xf]
        %v4565 = vld [vmem:[%s5 + $0x3e4] sm:$0xf]
        %v4566 = vld [vmem:[%s5 + $0x3e8] sm:$0xf]
        %v4567 = vld [vmem:[%s5 + $0x3ec] sm:$0xf]
        %v4568 = vld [vmem:[%s5 + $0x3f0] sm:$0xf]
        %v4569 = vld [vmem:[%s5 + $0x3f4] sm:$0xf]
        %v4570 = vld [vmem:[%s5 + $0x3f8] sm:$0xf]
        %v4571 = vld [vmem:[%s5 + $0x3fc] sm:$0xf]
        %v4572 = vld [vmem:[%s5 + $0x400] sm:$0xf]
        %v4573 = vld [vmem:[%s5 + $0x404] sm:$0xf]
        %v4574 = vld [vmem:[%s5 + $0x408] sm:$0xf]
        %v4575 = vld [vmem:[%s5 + $0x40c] sm:$0xf]
        %v4576 = vld [vmem:[%s5 + $0x410] sm:$0xf]
        %v4577 = vld [vmem:[%s5 + $0x414] sm:$0xf]
        %v4578 = vld [vmem:[%s5 + $0x418] sm:$0xf]
        %v4579 = vld [vmem:[%s5 + $0x41c] sm:$0xf]
        %v4580 = vld [vmem:[%s5 + $0x420] sm:$0xf]
        %v4581 = vld [vmem:[%s5 + $0x424] sm:$0xf]
        %v4582 = vld [vmem:[%s5 + $0x428] sm:$0xf]
        %v4583 = vld [vmem:[%s5 + $0x42c] sm:$0xf]
        %v4584 = vld [vmem:[%s5 + $0x430] sm:$0xf]
        %v4585 = vld [vmem:[%s5 + $0x434] sm:$0xf]
        %v4586 = vld [vmem:[%s5 + $0x438] sm:$0xf]
        %v4587 = vld [vmem:[%s5 + $0x43c] sm:$0xf]
        %v4588 = vld [vmem:[%s5 + $0x440] sm:$0xf]
        %v4589 = vld [vmem:[%s5 + $0x444] sm:$0xf]
        %v4590 = vld [vmem:[%s5 + $0x448] sm:$0xf]
        %v4591 = vld [vmem:[%s5 + $0x44c] sm:$0xf]
        %v4592 = vld [vmem:[%s5 + $0x450] sm:$0xf]
        %v4593 = vld [vmem:[%s5 + $0x454] sm:$0xf]
        %v4594 = vld [vmem:[%s5 + $0x458] sm:$0xf]
        %v4595 = vld [vmem:[%s5 + $0x45c] sm:$0xf]
        %v4596 = vld [vmem:[%s5 + $0x460] sm:$0xf]
        %v4597 = vld [vmem:[%s5 + $0x464] sm:$0xf]
        %v4598 = vld [vmem:[%s5 + $0x468] sm:$0xf]
        %v4599 = vld [vmem:[%s5 + $0x46c] sm:$0xf]
        %v4600 = vld [vmem:[%s5 + $0x470] sm:$0xf]
        %v4601 = vld [vmem:[%s5 + $0x474] sm:$0xf]
        %v4602 = vld [vmem:[%s5 + $0x478] sm:$0xf]
        %v4603 = vld [vmem:[%s5 + $0x47c] sm:$0xf]
        %v4604 = vld [vmem:[%s5 + $0x480] sm:$0xf]
        %v4605 = vld [vmem:[%s5 + $0x484] sm:$0xf]
        %v4606 = vld [vmem:[%s5 + $0x488] sm:$0xf]
        %v4607 = vld [vmem:[%s5 + $0x48c] sm:$0xf]
        %v4608 = vld [vmem:[%s5 + $0x490] sm:$0xf]
        %v4609 = vld [vmem:[%s5 + $0x494] sm:$0xf]
        %v4610 = vld [vmem:[%s5 + $0x498] sm:$0xf]
        %v4611 = vld [vmem:[%s5 + $0x49c] sm:$0xf]
        %v4612 = vld [vmem:[%s5 + $0x4a0] sm:$0xf]
        %v4613 = vld [vmem:[%s5 + $0x4a4] sm:$0xf]
        %v4614 = vld [vmem:[%s5 + $0x4a8] sm:$0xf]
        %v4615 = vld [vmem:[%s5 + $0x4ac] sm:$0xf]
        %v4616 = vld [vmem:[%s5 + $0x4b0] sm:$0xf]
        %v4617 = vld [vmem:[%s5 + $0x4b4] sm:$0xf]
        %v4618 = vld [vmem:[%s5 + $0x4b8] sm:$0xf]
        %v4619 = vld [vmem:[%s5 + $0x4bc] sm:$0xf]
        %v4620 = vld [vmem:[%s5 + $0x4c0] sm:$0xf]
        %v4621 = vld [vmem:[%s5 + $0x4c4] sm:$0xf]
        %v4622 = vld [vmem:[%s5 + $0x4c8] sm:$0xf]
        %v4623 = vld [vmem:[%s5 + $0x4cc] sm:$0xf]
        %v4624 = vld [vmem:[%s5 + $0x4d0] sm:$0xf]
        %v4625 = vld [vmem:[%s5 + $0x4d4] sm:$0xf]
        %v4626 = vld [vmem:[%s5 + $0x4d8] sm:$0xf]
        %v4627 = vld [vmem:[%s5 + $0x4dc] sm:$0xf]
        %v4628 = vld [vmem:[%s5 + $0x4e0] sm:$0xf]
        %v4629 = vld [vmem:[%s5 + $0x4e4] sm:$0xf]
        %v4630 = vld [vmem:[%s5 + $0x4e8] sm:$0xf]
        %v4631 = vld [vmem:[%s5 + $0x4ec] sm:$0xf]
        %v4632 = vld [vmem:[%s5 + $0x4f0] sm:$0xf]
        %v4633 = vld [vmem:[%s5 + $0x4f4] sm:$0xf]
        %v4634 = vld [vmem:[%s5 + $0x4f8] sm:$0xf]
        %v4635 = vld [vmem:[%s5 + $0x4fc] sm:$0xf]
        %v4636 = vld [vmem:[%s5 + $0x500] sm:$0xf]
        %v4637 = vld [vmem:[%s5 + $0x504] sm:$0xf]
        %v4638 = vld [vmem:[%s5 + $0x508] sm:$0xf]
        %v4639 = vld [vmem:[%s5 + $0x50c] sm:$0xf]
        %v4640 = vld [vmem:[%s5 + $0x510] sm:$0xf]
        %v4641 = vld [vmem:[%s5 + $0x514] sm:$0xf]
        %v4642 = vld [vmem:[%s5 + $0x518] sm:$0xf]
        %v4643 = vld [vmem:[%s5 + $0x51c] sm:$0xf]
        %v4644 = vld [vmem:[%s5 + $0x520] sm:$0xf]
        %v4645 = vld [vmem:[%s5 + $0x524] sm:$0xf]
        %v4646 = vld [vmem:[%s5 + $0x528] sm:$0xf]
        %v4647 = vld [vmem:[%s5 + $0x52c] sm:$0xf]
        %v4648 = vld [vmem:[%s5 + $0x530] sm:$0xf]
        %v4649 = vld [vmem:[%s5 + $0x534] sm:$0xf]
        %v4650 = vld [vmem:[%s5 + $0x538] sm:$0xf]
        %v4651 = vld [vmem:[%s5 + $0x53c] sm:$0xf]
        %v4652 = vld [vmem:[%s5 + $0x540] sm:$0xf]
        %v4653 = vld [vmem:[%s5 + $0x544] sm:$0xf]
        %v4654 = vld [vmem:[%s5 + $0x548] sm:$0xf]
        %v4655 = vld [vmem:[%s5 + $0x54c] sm:$0xf]
        %v4656 = vld [vmem:[%s5 + $0x550] sm:$0xf]
        %v4657 = vld [vmem:[%s5 + $0x554] sm:$0xf]
        %v4658 = vld [vmem:[%s5 + $0x558] sm:$0xf]
        %v4659 = vld [vmem:[%s5 + $0x55c] sm:$0xf]
        %v4660 = vld [vmem:[%s5 + $0x560] sm:$0xf]
        %v4661 = vld [vmem:[%s5 + $0x564] sm:$0xf]
        %v4662 = vld [vmem:[%s5 + $0x568] sm:$0xf]
        %v4663 = vld [vmem:[%s5 + $0x56c] sm:$0xf]
        %v4664 = vld [vmem:[%s5 + $0x570] sm:$0xf]
        %v4665 = vld [vmem:[%s5 + $0x574] sm:$0xf]
        %v4666 = vld [vmem:[%s5 + $0x578] sm:$0xf]
        %v4667 = vld [vmem:[%s5 + $0x57c] sm:$0xf]
        %v4668 = vld [vmem:[%s5 + $0x580] sm:$0xf]
        %v4669 = vld [vmem:[%s5 + $0x584] sm:$0xf]
        %v4670 = vld [vmem:[%s5 + $0x588] sm:$0xf]
        %v4671 = vld [vmem:[%s5 + $0x58c] sm:$0xf]
        %v4672 = vld [vmem:[%s5 + $0x590] sm:$0xf]
        %v4673 = vld [vmem:[%s5 + $0x594] sm:$0xf]
        %v4674 = vld [vmem:[%s5 + $0x598] sm:$0xf]
        %v4675 = vld [vmem:[%s5 + $0x59c] sm:$0xf]
        %v4676 = vld [vmem:[%s5 + $0x5a0] sm:$0xf]
        %v4677 = vld [vmem:[%s5 + $0x5a4] sm:$0xf]
        %v4678 = vld [vmem:[%s5 + $0x5a8] sm:$0xf]
        %v4679 = vld [vmem:[%s5 + $0x5ac] sm:$0xf]
        %v4680 = vld [vmem:[%s5 + $0x5b0] sm:$0xf]
        %v4681 = vld [vmem:[%s5 + $0x5b4] sm:$0xf]
        %v4682 = vld [vmem:[%s5 + $0x5b8] sm:$0xf]
        %v4683 = vld [vmem:[%s5 + $0x5bc] sm:$0xf]
        %v4684 = vld [vmem:[%s5 + $0x5c0] sm:$0xf]
        %v4685 = vld [vmem:[%s5 + $0x5c4] sm:$0xf]
        %v4686 = vld [vmem:[%s5 + $0x5c8] sm:$0xf]
        %v4687 = vld [vmem:[%s5 + $0x5cc] sm:$0xf]
        %v4688 = vld [vmem:[%s5 + $0x5d0] sm:$0xf]
        %v4689 = vld [vmem:[%s5 + $0x5d4] sm:$0xf]
        %v4690 = vld [vmem:[%s5 + $0x5d8] sm:$0xf]
        %v4691 = vld [vmem:[%s5 + $0x5dc] sm:$0xf]
        %v4692 = vld [vmem:[%s5 + $0x5e0] sm:$0xf]
        %v4693 = vld [vmem:[%s5 + $0x5e4] sm:$0xf]
        %v4694 = vld [vmem:[%s5 + $0x5e8] sm:$0xf]
        %v4695 = vld [vmem:[%s5 + $0x5ec] sm:$0xf]
        %v4696 = vld [vmem:[%s5 + $0x5f0] sm:$0xf]
        %v4697 = vld [vmem:[%s5 + $0x5f4] sm:$0xf]
        %v4698 = vld [vmem:[%s5 + $0x5f8] sm:$0xf]
        %v4699 = vld [vmem:[%s5 + $0x5fc] sm:$0xf]
        %v4700 = vld [vmem:[%s5 + $0x600] sm:$0xf]
        %v4701 = vld [vmem:[%s5 + $0x604] sm:$0xf]
        %v4702 = vld [vmem:[%s5 + $0x608] sm:$0xf]
        %v4703 = vld [vmem:[%s5 + $0x60c] sm:$0xf]
        %v4704 = vld [vmem:[%s5 + $0x610] sm:$0xf]
        %v4705 = vld [vmem:[%s5 + $0x614] sm:$0xf]
        %v4706 = vld [vmem:[%s5 + $0x618] sm:$0xf]
        %v4707 = vld [vmem:[%s5 + $0x61c] sm:$0xf]
        %v4708 = vld [vmem:[%s5 + $0x620] sm:$0xf]
        %v4709 = vld [vmem:[%s5 + $0x624] sm:$0xf]
        %v4710 = vld [vmem:[%s5 + $0x628] sm:$0xf]
        %v4711 = vld [vmem:[%s5 + $0x62c] sm:$0xf]
        %v4712 = vld [vmem:[%s5 + $0x630] sm:$0xf]
        %v4713 = vld [vmem:[%s5 + $0x634] sm:$0xf]
        %v4714 = vld [vmem:[%s5 + $0x638] sm:$0xf]
        %v4715 = vld [vmem:[%s5 + $0x63c] sm:$0xf]
        %v4716 = vld [vmem:[%s6] sm:$0x1]
        %v4718 = vlaneseq
        %v4719 = vshrl.u32 %v4718, 7
        %v4720 = vsub.s32 0, %v4719
        %v4721 = vrot.slane %v4716, %v4720
        %v5123 = vunpack.c.l.b16 %v4316
        %v5124 = vunpack.c.l.b16 %v4317
        %v5125 = vunpack.c.l.b16 %v4318
        %v5126 = vunpack.c.l.b16 %v4319
        %v5127 = vunpack.c.l.b16 %v4320
        %v5128 = vunpack.c.l.b16 %v4321
        %v5129 = vunpack.c.l.b16 %v4322
        %v5130 = vunpack.c.l.b16 %v4323
        %v5131 = vunpack.c.l.b16 %v4324
        %v5132 = vunpack.c.l.b16 %v4325
        %v5133 = vunpack.c.l.b16 %v4326
        %v5134 = vunpack.c.l.b16 %v4327
        %v5135 = vunpack.c.l.b16 %v4328
        %v5136 = vunpack.c.l.b16 %v4329
        %v5137 = vunpack.c.l.b16 %v4330
        %v5138 = vunpack.c.l.b16 %v4331
        %v5139 = vunpack.c.l.b16 %v4332
        %v5140 = vunpack.c.l.b16 %v4333
        %v5141 = vunpack.c.l.b16 %v4334
        %v5142 = vunpack.c.l.b16 %v4335
        %v5143 = vunpack.c.l.b16 %v4336
        %v5144 = vunpack.c.l.b16 %v4337
        %v5145 = vunpack.c.l.b16 %v4338
        %v5146 = vunpack.c.l.b16 %v4339
        %v5147 = vunpack.c.l.b16 %v4340
        %v5148 = vunpack.c.l.b16 %v4341
        %v5149 = vunpack.c.l.b16 %v4342
        %v5150 = vunpack.c.l.b16 %v4343
        %v5151 = vunpack.c.l.b16 %v4344
        %v5152 = vunpack.c.l.b16 %v4345
        %v5153 = vunpack.c.l.b16 %v4346
        %v5154 = vunpack.c.l.b16 %v4347
        %v5155 = vunpack.c.l.b16 %v4348
        %v5156 = vunpack.c.l.b16 %v4349
        %v5157 = vunpack.c.l.b16 %v4350
        %v5158 = vunpack.c.l.b16 %v4351
        %v5159 = vunpack.c.l.b16 %v4352
        %v5160 = vunpack.c.l.b16 %v4353
        %v5161 = vunpack.c.l.b16 %v4354
        %v5162 = vunpack.c.l.b16 %v4355
        %v5163 = vunpack.c.l.b16 %v4356
        %v5164 = vunpack.c.l.b16 %v4357
        %v5165 = vunpack.c.l.b16 %v4358
        %v5166 = vunpack.c.l.b16 %v4359
        %v5167 = vunpack.c.l.b16 %v4360
        %v5168 = vunpack.c.l.b16 %v4361
        %v5169 = vunpack.c.l.b16 %v4362
        %v5170 = vunpack.c.l.b16 %v4363
        %v5171 = vunpack.c.l.b16 %v4364
        %v5172 = vunpack.c.l.b16 %v4365
        %v5173 = vunpack.c.l.b16 %v4366
        %v5174 = vunpack.c.l.b16 %v4367
        %v5175 = vunpack.c.l.b16 %v4368
        %v5176 = vunpack.c.l.b16 %v4369
        %v5177 = vunpack.c.l.b16 %v4370
        %v5178 = vunpack.c.l.b16 %v4371
        %v5179 = vunpack.c.l.b16 %v4372
        %v5180 = vunpack.c.l.b16 %v4373
        %v5181 = vunpack.c.l.b16 %v4374
        %v5182 = vunpack.c.l.b16 %v4375
        %v5183 = vunpack.c.l.b16 %v4376
        %v5184 = vunpack.c.l.b16 %v4377
        %v5185 = vunpack.c.l.b16 %v4378
        %v5186 = vunpack.c.l.b16 %v4379
        %v5187 = vunpack.c.l.b16 %v4380
        %v5188 = vunpack.c.l.b16 %v4381
        %v5189 = vunpack.c.l.b16 %v4382
        %v5190 = vunpack.c.l.b16 %v4383
        %v5191 = vunpack.c.l.b16 %v4384
        %v5192 = vunpack.c.l.b16 %v4385
        %v5193 = vunpack.c.l.b16 %v4386
        %v5194 = vunpack.c.l.b16 %v4387
        %v5195 = vunpack.c.l.b16 %v4388
        %v5196 = vunpack.c.l.b16 %v4389
        %v5197 = vunpack.c.l.b16 %v4390
        %v5198 = vunpack.c.l.b16 %v4391
        %v5199 = vunpack.c.l.b16 %v4392
        %v5200 = vunpack.c.l.b16 %v4393
        %v5201 = vunpack.c.l.b16 %v4394
        %v5202 = vunpack.c.l.b16 %v4395
        %v5203 = vunpack.c.l.b16 %v4396
        %v5204 = vunpack.c.l.b16 %v4397
        %v5205 = vunpack.c.l.b16 %v4398
        %v5206 = vunpack.c.l.b16 %v4399
        %v5207 = vunpack.c.l.b16 %v4400
        %v5208 = vunpack.c.l.b16 %v4401
        %v5209 = vunpack.c.l.b16 %v4402
        %v5210 = vunpack.c.l.b16 %v4403
        %v5211 = vunpack.c.l.b16 %v4404
        %v5212 = vunpack.c.l.b16 %v4405
        %v5213 = vunpack.c.l.b16 %v4406
        %v5214 = vunpack.c.l.b16 %v4407
        %v5215 = vunpack.c.l.b16 %v4408
        %v5216 = vunpack.c.l.b16 %v4409
        %v5217 = vunpack.c.l.b16 %v4410
        %v5218 = vunpack.c.l.b16 %v4411
        %v5219 = vunpack.c.l.b16 %v4412
        %v5220 = vunpack.c.l.b16 %v4413
        %v5221 = vunpack.c.l.b16 %v4414
        %v5222 = vunpack.c.l.b16 %v4415
        %v5223 = vunpack.c.l.b16 %v4416
        %v5224 = vunpack.c.l.b16 %v4417
        %v5225 = vunpack.c.l.b16 %v4418
        %v5226 = vunpack.c.l.b16 %v4419
        %v5227 = vunpack.c.l.b16 %v4420
        %v5228 = vunpack.c.l.b16 %v4421
        %v5229 = vunpack.c.l.b16 %v4422
        %v5230 = vunpack.c.l.b16 %v4423
        %v5231 = vunpack.c.l.b16 %v4424
        %v5232 = vunpack.c.l.b16 %v4425
        %v5233 = vunpack.c.l.b16 %v4426
        %v5234 = vunpack.c.l.b16 %v4427
        %v5235 = vunpack.c.l.b16 %v4428
        %v5236 = vunpack.c.l.b16 %v4429
        %v5237 = vunpack.c.l.b16 %v4430
        %v5238 = vunpack.c.l.b16 %v4431
        %v5239 = vunpack.c.l.b16 %v4432
        %v5240 = vunpack.c.l.b16 %v4433
        %v5241 = vunpack.c.l.b16 %v4434
        %v5242 = vunpack.c.l.b16 %v4435
        %v5243 = vunpack.c.l.b16 %v4436
        %v5244 = vunpack.c.l.b16 %v4437
        %v5245 = vunpack.c.l.b16 %v4438
        %v5246 = vunpack.c.l.b16 %v4439
        %v5247 = vunpack.c.l.b16 %v4440
        %v5248 = vunpack.c.l.b16 %v4441
        %v5249 = vunpack.c.l.b16 %v4442
        %v5250 = vunpack.c.l.b16 %v4443
        %v5251 = vunpack.c.l.b16 %v4444
        %v5252 = vunpack.c.l.b16 %v4445
        %v5253 = vunpack.c.l.b16 %v4446
        %v5254 = vunpack.c.l.b16 %v4447
        %v5255 = vunpack.c.l.b16 %v4448
        %v5256 = vunpack.c.l.b16 %v4449
        %v5257 = vunpack.c.l.b16 %v4450
        %v5258 = vunpack.c.l.b16 %v4451
        %v5259 = vunpack.c.l.b16 %v4452
        %v5260 = vunpack.c.l.b16 %v4453
        %v5261 = vunpack.c.l.b16 %v4454
        %v5262 = vunpack.c.l.b16 %v4455
        %v5263 = vunpack.c.l.b16 %v4456
        %v5264 = vunpack.c.l.b16 %v4457
        %v5265 = vunpack.c.l.b16 %v4458
        %v5266 = vunpack.c.l.b16 %v4459
        %v5267 = vunpack.c.l.b16 %v4460
        %v5268 = vunpack.c.l.b16 %v4461
        %v5269 = vunpack.c.l.b16 %v4462
        %v5270 = vunpack.c.l.b16 %v4463
        %v5271 = vunpack.c.l.b16 %v4464
        %v5272 = vunpack.c.l.b16 %v4465
        %v5273 = vunpack.c.l.b16 %v4466
        %v5274 = vunpack.c.l.b16 %v4467
        %v5275 = vunpack.c.l.b16 %v4468
        %v5276 = vunpack.c.l.b16 %v4469
        %v5277 = vunpack.c.l.b16 %v4470
        %v5278 = vunpack.c.l.b16 %v4471
        %v5279 = vunpack.c.l.b16 %v4472
        %v5280 = vunpack.c.l.b16 %v4473
        %v5281 = vunpack.c.l.b16 %v4474
        %v5282 = vunpack.c.l.b16 %v4475
        %v5283 = vunpack.c.l.b16 %v4476
        %v5284 = vunpack.c.l.b16 %v4477
        %v5285 = vunpack.c.l.b16 %v4478
        %v5286 = vunpack.c.l.b16 %v4479
        %v5287 = vunpack.c.l.b16 %v4480
        %v5288 = vunpack.c.l.b16 %v4481
        %v5289 = vunpack.c.l.b16 %v4482
        %v5290 = vunpack.c.l.b16 %v4483
        %v5291 = vunpack.c.l.b16 %v4484
        %v5292 = vunpack.c.l.b16 %v4485
        %v5293 = vunpack.c.l.b16 %v4486
        %v5294 = vunpack.c.l.b16 %v4487
        %v5295 = vunpack.c.l.b16 %v4488
        %v5296 = vunpack.c.l.b16 %v4489
        %v5297 = vunpack.c.l.b16 %v4490
        %v5298 = vunpack.c.l.b16 %v4491
        %v5299 = vunpack.c.l.b16 %v4492
        %v5300 = vunpack.c.l.b16 %v4493
        %v5301 = vunpack.c.l.b16 %v4494
        %v5302 = vunpack.c.l.b16 %v4495
        %v5303 = vunpack.c.l.b16 %v4496
        %v5304 = vunpack.c.l.b16 %v4497
        %v5305 = vunpack.c.l.b16 %v4498
        %v5306 = vunpack.c.l.b16 %v4499
        %v5307 = vunpack.c.l.b16 %v4500
        %v5308 = vunpack.c.l.b16 %v4501
        %v5309 = vunpack.c.l.b16 %v4502
        %v5310 = vunpack.c.l.b16 %v4503
        %v5311 = vunpack.c.l.b16 %v4504
        %v5312 = vunpack.c.l.b16 %v4505
        %v5313 = vunpack.c.l.b16 %v4506
        %v5314 = vunpack.c.l.b16 %v4507
        %v5315 = vunpack.c.l.b16 %v4508
        %v5316 = vunpack.c.l.b16 %v4509
        %v5317 = vunpack.c.l.b16 %v4510
        %v5318 = vunpack.c.l.b16 %v4511
        %v5319 = vunpack.c.l.b16 %v4512
        %v5320 = vunpack.c.l.b16 %v4513
        %v5321 = vunpack.c.l.b16 %v4514
        %v5322 = vunpack.c.l.b16 %v4515
        %v5323 = vunpack.c.l.b16 %v4516
        %v5324 = vunpack.c.l.b16 %v4517
        %v5325 = vunpack.c.l.b16 %v4518
        %v5326 = vunpack.c.l.b16 %v4519
        %v5327 = vunpack.c.l.b16 %v4520
        %v5328 = vunpack.c.l.b16 %v4521
        %v5329 = vunpack.c.l.b16 %v4522
        %v5330 = vunpack.c.l.b16 %v4523
        %v5331 = vunpack.c.l.b16 %v4524
        %v5332 = vunpack.c.l.b16 %v4525
        %v5333 = vunpack.c.l.b16 %v4526
        %v5334 = vunpack.c.l.b16 %v4527
        %v5335 = vunpack.c.l.b16 %v4528
        %v5336 = vunpack.c.l.b16 %v4529
        %v5337 = vunpack.c.l.b16 %v4530
        %v5338 = vunpack.c.l.b16 %v4531
        %v5339 = vunpack.c.l.b16 %v4532
        %v5340 = vunpack.c.l.b16 %v4533
        %v5341 = vunpack.c.l.b16 %v4534
        %v5342 = vunpack.c.l.b16 %v4535
        %v5343 = vunpack.c.l.b16 %v4536
        %v5344 = vunpack.c.l.b16 %v4537
        %v5345 = vunpack.c.l.b16 %v4538
        %v5346 = vunpack.c.l.b16 %v4539
        %v5347 = vunpack.c.l.b16 %v4540
        %v5348 = vunpack.c.l.b16 %v4541
        %v5349 = vunpack.c.l.b16 %v4542
        %v5350 = vunpack.c.l.b16 %v4543
        %v5351 = vunpack.c.l.b16 %v4544
        %v5352 = vunpack.c.l.b16 %v4545
        %v5353 = vunpack.c.l.b16 %v4546
        %v5354 = vunpack.c.l.b16 %v4547
        %v5355 = vunpack.c.l.b16 %v4548
        %v5356 = vunpack.c.l.b16 %v4549
        %v5357 = vunpack.c.l.b16 %v4550
        %v5358 = vunpack.c.l.b16 %v4551
        %v5359 = vunpack.c.l.b16 %v4552
        %v5360 = vunpack.c.l.b16 %v4553
        %v5361 = vunpack.c.l.b16 %v4554
        %v5362 = vunpack.c.l.b16 %v4555
        %v5363 = vunpack.c.l.b16 %v4556
        %v5364 = vunpack.c.l.b16 %v4557
        %v5365 = vunpack.c.l.b16 %v4558
        %v5366 = vunpack.c.l.b16 %v4559
        %v5367 = vunpack.c.l.b16 %v4560
        %v5368 = vunpack.c.l.b16 %v4561
        %v5369 = vunpack.c.l.b16 %v4562
        %v5370 = vunpack.c.l.b16 %v4563
        %v5371 = vunpack.c.l.b16 %v4564
        %v5372 = vunpack.c.l.b16 %v4565
        %v5373 = vunpack.c.l.b16 %v4566
        %v5374 = vunpack.c.l.b16 %v4567
        %v5375 = vunpack.c.l.b16 %v4568
        %v5376 = vunpack.c.l.b16 %v4569
        %v5377 = vunpack.c.l.b16 %v4570
        %v5378 = vunpack.c.l.b16 %v4571
        %v5379 = vunpack.c.l.b16 %v4572
        %v5380 = vunpack.c.l.b16 %v4573
        %v5381 = vunpack.c.l.b16 %v4574
        %v5382 = vunpack.c.l.b16 %v4575
        %v5383 = vunpack.c.l.b16 %v4576
        %v5384 = vunpack.c.l.b16 %v4577
        %v5385 = vunpack.c.l.b16 %v4578
        %v5386 = vunpack.c.l.b16 %v4579
        %v5387 = vunpack.c.l.b16 %v4580
        %v5388 = vunpack.c.l.b16 %v4581
        %v5389 = vunpack.c.l.b16 %v4582
        %v5390 = vunpack.c.l.b16 %v4583
        %v5391 = vunpack.c.l.b16 %v4584
        %v5392 = vunpack.c.l.b16 %v4585
        %v5393 = vunpack.c.l.b16 %v4586
        %v5394 = vunpack.c.l.b16 %v4587
        %v5395 = vunpack.c.l.b16 %v4588
        %v5396 = vunpack.c.l.b16 %v4589
        %v5397 = vunpack.c.l.b16 %v4590
        %v5398 = vunpack.c.l.b16 %v4591
        %v5399 = vunpack.c.l.b16 %v4592
        %v5400 = vunpack.c.l.b16 %v4593
        %v5401 = vunpack.c.l.b16 %v4594
        %v5402 = vunpack.c.l.b16 %v4595
        %v5403 = vunpack.c.l.b16 %v4596
        %v5404 = vunpack.c.l.b16 %v4597
        %v5405 = vunpack.c.l.b16 %v4598
        %v5406 = vunpack.c.l.b16 %v4599
        %v5407 = vunpack.c.l.b16 %v4600
        %v5408 = vunpack.c.l.b16 %v4601
        %v5409 = vunpack.c.l.b16 %v4602
        %v5410 = vunpack.c.l.b16 %v4603
        %v5411 = vunpack.c.l.b16 %v4604
        %v5412 = vunpack.c.l.b16 %v4605
        %v5413 = vunpack.c.l.b16 %v4606
        %v5414 = vunpack.c.l.b16 %v4607
        %v5415 = vunpack.c.l.b16 %v4608
        %v5416 = vunpack.c.l.b16 %v4609
        %v5417 = vunpack.c.l.b16 %v4610
        %v5418 = vunpack.c.l.b16 %v4611
        %v5419 = vunpack.c.l.b16 %v4612
        %v5420 = vunpack.c.l.b16 %v4613
        %v5421 = vunpack.c.l.b16 %v4614
        %v5422 = vunpack.c.l.b16 %v4615
        %v5423 = vunpack.c.l.b16 %v4616
        %v5424 = vunpack.c.l.b16 %v4617
        %v5425 = vunpack.c.l.b16 %v4618
        %v5426 = vunpack.c.l.b16 %v4619
        %v5427 = vunpack.c.l.b16 %v4620
        %v5428 = vunpack.c.l.b16 %v4621
        %v5429 = vunpack.c.l.b16 %v4622
        %v5430 = vunpack.c.l.b16 %v4623
        %v5431 = vunpack.c.l.b16 %v4624
        %v5432 = vunpack.c.l.b16 %v4625
        %v5433 = vunpack.c.l.b16 %v4626
        %v5434 = vunpack.c.l.b16 %v4627
        %v5435 = vunpack.c.l.b16 %v4628
        %v5436 = vunpack.c.l.b16 %v4629
        %v5437 = vunpack.c.l.b16 %v4630
        %v5438 = vunpack.c.l.b16 %v4631
        %v5439 = vunpack.c.l.b16 %v4632
        %v5440 = vunpack.c.l.b16 %v4633
        %v5441 = vunpack.c.l.b16 %v4634
        %v5442 = vunpack.c.l.b16 %v4635
        %v5443 = vunpack.c.l.b16 %v4636
        %v5444 = vunpack.c.l.b16 %v4637
        %v5445 = vunpack.c.l.b16 %v4638
        %v5446 = vunpack.c.l.b16 %v4639
        %v5447 = vunpack.c.l.b16 %v4640
        %v5448 = vunpack.c.l.b16 %v4641
        %v5449 = vunpack.c.l.b16 %v4642
        %v5450 = vunpack.c.l.b16 %v4643
        %v5451 = vunpack.c.l.b16 %v4644
        %v5452 = vunpack.c.l.b16 %v4645
        %v5453 = vunpack.c.l.b16 %v4646
        %v5454 = vunpack.c.l.b16 %v4647
        %v5455 = vunpack.c.l.b16 %v4648
        %v5456 = vunpack.c.l.b16 %v4649
        %v5457 = vunpack.c.l.b16 %v4650
        %v5458 = vunpack.c.l.b16 %v4651
        %v5459 = vunpack.c.l.b16 %v4652
        %v5460 = vunpack.c.l.b16 %v4653
        %v5461 = vunpack.c.l.b16 %v4654
        %v5462 = vunpack.c.l.b16 %v4655
        %v5463 = vunpack.c.l.b16 %v4656
        %v5464 = vunpack.c.l.b16 %v4657
        %v5465 = vunpack.c.l.b16 %v4658
        %v5466 = vunpack.c.l.b16 %v4659
        %v5467 = vunpack.c.l.b16 %v4660
        %v5468 = vunpack.c.l.b16 %v4661
        %v5469 = vunpack.c.l.b16 %v4662
        %v5470 = vunpack.c.l.b16 %v4663
        %v5471 = vunpack.c.l.b16 %v4664
        %v5472 = vunpack.c.l.b16 %v4665
        %v5473 = vunpack.c.l.b16 %v4666
        %v5474 = vunpack.c.l.b16 %v4667
        %v5475 = vunpack.c.l.b16 %v4668
        %v5476 = vunpack.c.l.b16 %v4669
        %v5477 = vunpack.c.l.b16 %v4670
        %v5478 = vunpack.c.l.b16 %v4671
        %v5479 = vunpack.c.l.b16 %v4672
        %v5480 = vunpack.c.l.b16 %v4673
        %v5481 = vunpack.c.l.b16 %v4674
        %v5482 = vunpack.c.l.b16 %v4675
        %v5483 = vunpack.c.l.b16 %v4676
        %v5484 = vunpack.c.l.b16 %v4677
        %v5485 = vunpack.c.l.b16 %v4678
        %v5486 = vunpack.c.l.b16 %v4679
        %v5487 = vunpack.c.l.b16 %v4680
        %v5488 = vunpack.c.l.b16 %v4681
        %v5489 = vunpack.c.l.b16 %v4682
        %v5490 = vunpack.c.l.b16 %v4683
        %v5491 = vunpack.c.l.b16 %v4684
        %v5492 = vunpack.c.l.b16 %v4685
        %v5493 = vunpack.c.l.b16 %v4686
        %v5494 = vunpack.c.l.b16 %v4687
        %v5495 = vunpack.c.l.b16 %v4688
        %v5496 = vunpack.c.l.b16 %v4689
        %v5497 = vunpack.c.l.b16 %v4690
        %v5498 = vunpack.c.l.b16 %v4691
        %v5499 = vunpack.c.l.b16 %v4692
        %v5500 = vunpack.c.l.b16 %v4693
        %v5501 = vunpack.c.l.b16 %v4694
        %v5502 = vunpack.c.l.b16 %v4695
        %v5503 = vunpack.c.l.b16 %v4696
        %v5504 = vunpack.c.l.b16 %v4697
        %v5505 = vunpack.c.l.b16 %v4698
        %v5506 = vunpack.c.l.b16 %v4699
        %v5507 = vunpack.c.l.b16 %v4700
        %v5508 = vunpack.c.l.b16 %v4701
        %v5509 = vunpack.c.l.b16 %v4702
        %v5510 = vunpack.c.l.b16 %v4703
        %v5511 = vunpack.c.l.b16 %v4704
        %v5512 = vunpack.c.l.b16 %v4705
        %v5513 = vunpack.c.l.b16 %v4706
        %v5514 = vunpack.c.l.b16 %v4707
        %v5515 = vunpack.c.l.b16 %v4708
        %v5516 = vunpack.c.l.b16 %v4709
        %v5517 = vunpack.c.l.b16 %v4710
        %v5518 = vunpack.c.l.b16 %v4711
        %v5519 = vunpack.c.l.b16 %v4712
        %v5520 = vunpack.c.l.b16 %v4713
        %v5521 = vunpack.c.l.b16 %v4714
        %v5522 = vunpack.c.l.b16 %v4715
        %v5523 = vpack.c.b16 %v5124, %v5123
        %v5524 = vpack.c.b16 %v5126, %v5125
        %v5525 = vpack.c.b16 %v5128, %v5127
        %v5526 = vpack.c.b16 %v5130, %v5129
        %v5527 = vpack.c.b16 %v5132, %v5131
        %v5528 = vpack.c.b16 %v5134, %v5133
        %v5529 = vpack.c.b16 %v5136, %v5135
        %v5530 = vpack.c.b16 %v5138, %v5137
        %v5531 = vpack.c.b16 %v5140, %v5139
        %v5532 = vpack.c.b16 %v5142, %v5141
        %v5533 = vpack.c.b16 %v5144, %v5143
        %v5534 = vpack.c.b16 %v5146, %v5145
        %v5535 = vpack.c.b16 %v5148, %v5147
        %v5536 = vpack.c.b16 %v5150, %v5149
        %v5537 = vpack.c.b16 %v5152, %v5151
        %v5538 = vpack.c.b16 %v5154, %v5153
        %v5539 = vpack.c.b16 %v5156, %v5155
        %v5540 = vpack.c.b16 %v5158, %v5157
        %v5541 = vpack.c.b16 %v5160, %v5159
        %v5542 = vpack.c.b16 %v5162, %v5161
        %v5543 = vpack.c.b16 %v5164, %v5163
        %v5544 = vpack.c.b16 %v5166, %v5165
        %v5545 = vpack.c.b16 %v5168, %v5167
        %v5546 = vpack.c.b16 %v5170, %v5169
        %v5547 = vpack.c.b16 %v5172, %v5171
        %v5548 = vpack.c.b16 %v5174, %v5173
        %v5549 = vpack.c.b16 %v5176, %v5175
        %v5550 = vpack.c.b16 %v5178, %v5177
        %v5551 = vpack.c.b16 %v5180, %v5179
        %v5552 = vpack.c.b16 %v5182, %v5181
        %v5553 = vpack.c.b16 %v5184, %v5183
        %v5554 = vpack.c.b16 %v5186, %v5185
        %v5555 = vpack.c.b16 %v5188, %v5187
        %v5556 = vpack.c.b16 %v5190, %v5189
        %v5557 = vpack.c.b16 %v5192, %v5191
        %v5558 = vpack.c.b16 %v5194, %v5193
        %v5559 = vpack.c.b16 %v5196, %v5195
        %v5560 = vpack.c.b16 %v5198, %v5197
        %v5561 = vpack.c.b16 %v5200, %v5199
        %v5562 = vpack.c.b16 %v5202, %v5201
        %v5563 = vpack.c.b16 %v5204, %v5203
        %v5564 = vpack.c.b16 %v5206, %v5205
        %v5565 = vpack.c.b16 %v5208, %v5207
        %v5566 = vpack.c.b16 %v5210, %v5209
        %v5567 = vpack.c.b16 %v5212, %v5211
        %v5568 = vpack.c.b16 %v5214, %v5213
        %v5569 = vpack.c.b16 %v5216, %v5215
        %v5570 = vpack.c.b16 %v5218, %v5217
        %v5571 = vpack.c.b16 %v5220, %v5219
        %v5572 = vpack.c.b16 %v5222, %v5221
        %v5573 = vpack.c.b16 %v5224, %v5223
        %v5574 = vpack.c.b16 %v5226, %v5225
        %v5575 = vpack.c.b16 %v5228, %v5227
        %v5576 = vpack.c.b16 %v5230, %v5229
        %v5577 = vpack.c.b16 %v5232, %v5231
        %v5578 = vpack.c.b16 %v5234, %v5233
        %v5579 = vpack.c.b16 %v5236, %v5235
        %v5580 = vpack.c.b16 %v5238, %v5237
        %v5581 = vpack.c.b16 %v5240, %v5239
        %v5582 = vpack.c.b16 %v5242, %v5241
        %v5583 = vpack.c.b16 %v5244, %v5243
        %v5584 = vpack.c.b16 %v5246, %v5245
        %v5585 = vpack.c.b16 %v5248, %v5247
        %v5586 = vpack.c.b16 %v5250, %v5249
        %v5587 = vpack.c.b16 %v5252, %v5251
        %v5588 = vpack.c.b16 %v5254, %v5253
        %v5589 = vpack.c.b16 %v5256, %v5255
        %v5590 = vpack.c.b16 %v5258, %v5257
        %v5591 = vpack.c.b16 %v5260, %v5259
        %v5592 = vpack.c.b16 %v5262, %v5261
        %v5593 = vpack.c.b16 %v5264, %v5263
        %v5594 = vpack.c.b16 %v5266, %v5265
        %v5595 = vpack.c.b16 %v5268, %v5267
        %v5596 = vpack.c.b16 %v5270, %v5269
        %v5597 = vpack.c.b16 %v5272, %v5271
        %v5598 = vpack.c.b16 %v5274, %v5273
        %v5599 = vpack.c.b16 %v5276, %v5275
        %v5600 = vpack.c.b16 %v5278, %v5277
        %v5601 = vpack.c.b16 %v5280, %v5279
        %v5602 = vpack.c.b16 %v5282, %v5281
        %v5603 = vpack.c.b16 %v5284, %v5283
        %v5604 = vpack.c.b16 %v5286, %v5285
        %v5605 = vpack.c.b16 %v5288, %v5287
        %v5606 = vpack.c.b16 %v5290, %v5289
        %v5607 = vpack.c.b16 %v5292, %v5291
        %v5608 = vpack.c.b16 %v5294, %v5293
        %v5609 = vpack.c.b16 %v5296, %v5295
        %v5610 = vpack.c.b16 %v5298, %v5297
        %v5611 = vpack.c.b16 %v5300, %v5299
        %v5612 = vpack.c.b16 %v5302, %v5301
        %v5613 = vpack.c.b16 %v5304, %v5303
        %v5614 = vpack.c.b16 %v5306, %v5305
        %v5615 = vpack.c.b16 %v5308, %v5307
        %v5616 = vpack.c.b16 %v5310, %v5309
        %v5617 = vpack.c.b16 %v5312, %v5311
        %v5618 = vpack.c.b16 %v5314, %v5313
        %v5619 = vpack.c.b16 %v5316, %v5315
        %v5620 = vpack.c.b16 %v5318, %v5317
        %v5621 = vpack.c.b16 %v5320, %v5319
        %v5622 = vpack.c.b16 %v5322, %v5321
        %v5623 = vpack.c.b16 %v5324, %v5323
        %v5624 = vpack.c.b16 %v5326, %v5325
        %v5625 = vpack.c.b16 %v5328, %v5327
        %v5626 = vpack.c.b16 %v5330, %v5329
        %v5627 = vpack.c.b16 %v5332, %v5331
        %v5628 = vpack.c.b16 %v5334, %v5333
        %v5629 = vpack.c.b16 %v5336, %v5335
        %v5630 = vpack.c.b16 %v5338, %v5337
        %v5631 = vpack.c.b16 %v5340, %v5339
        %v5632 = vpack.c.b16 %v5342, %v5341
        %v5633 = vpack.c.b16 %v5344, %v5343
        %v5634 = vpack.c.b16 %v5346, %v5345
        %v5635 = vpack.c.b16 %v5348, %v5347
        %v5636 = vpack.c.b16 %v5350, %v5349
        %v5637 = vpack.c.b16 %v5352, %v5351
        %v5638 = vpack.c.b16 %v5354, %v5353
        %v5639 = vpack.c.b16 %v5356, %v5355
        %v5640 = vpack.c.b16 %v5358, %v5357
        %v5641 = vpack.c.b16 %v5360, %v5359
        %v5642 = vpack.c.b16 %v5362, %v5361
        %v5643 = vpack.c.b16 %v5364, %v5363
        %v5644 = vpack.c.b16 %v5366, %v5365
        %v5645 = vpack.c.b16 %v5368, %v5367
        %v5646 = vpack.c.b16 %v5370, %v5369
        %v5647 = vpack.c.b16 %v5372, %v5371
        %v5648 = vpack.c.b16 %v5374, %v5373
        %v5649 = vpack.c.b16 %v5376, %v5375
        %v5650 = vpack.c.b16 %v5378, %v5377
        %v5651 = vpack.c.b16 %v5380, %v5379
        %v5652 = vpack.c.b16 %v5382, %v5381
        %v5653 = vpack.c.b16 %v5384, %v5383
        %v5654 = vpack.c.b16 %v5386, %v5385
        %v5655 = vpack.c.b16 %v5388, %v5387
        %v5656 = vpack.c.b16 %v5390, %v5389
        %v5657 = vpack.c.b16 %v5392, %v5391
        %v5658 = vpack.c.b16 %v5394, %v5393
        %v5659 = vpack.c.b16 %v5396, %v5395
        %v5660 = vpack.c.b16 %v5398, %v5397
        %v5661 = vpack.c.b16 %v5400, %v5399
        %v5662 = vpack.c.b16 %v5402, %v5401
        %v5663 = vpack.c.b16 %v5404, %v5403
        %v5664 = vpack.c.b16 %v5406, %v5405
        %v5665 = vpack.c.b16 %v5408, %v5407
        %v5666 = vpack.c.b16 %v5410, %v5409
        %v5667 = vpack.c.b16 %v5412, %v5411
        %v5668 = vpack.c.b16 %v5414, %v5413
        %v5669 = vpack.c.b16 %v5416, %v5415
        %v5670 = vpack.c.b16 %v5418, %v5417
        %v5671 = vpack.c.b16 %v5420, %v5419
        %v5672 = vpack.c.b16 %v5422, %v5421
        %v5673 = vpack.c.b16 %v5424, %v5423
        %v5674 = vpack.c.b16 %v5426, %v5425
        %v5675 = vpack.c.b16 %v5428, %v5427
        %v5676 = vpack.c.b16 %v5430, %v5429
        %v5677 = vpack.c.b16 %v5432, %v5431
        %v5678 = vpack.c.b16 %v5434, %v5433
        %v5679 = vpack.c.b16 %v5436, %v5435
        %v5680 = vpack.c.b16 %v5438, %v5437
        %v5681 = vpack.c.b16 %v5440, %v5439
        %v5682 = vpack.c.b16 %v5442, %v5441
        %v5683 = vpack.c.b16 %v5444, %v5443
        %v5684 = vpack.c.b16 %v5446, %v5445
        %v5685 = vpack.c.b16 %v5448, %v5447
        %v5686 = vpack.c.b16 %v5450, %v5449
        %v5687 = vpack.c.b16 %v5452, %v5451
        %v5688 = vpack.c.b16 %v5454, %v5453
        %v5689 = vpack.c.b16 %v5456, %v5455
        %v5690 = vpack.c.b16 %v5458, %v5457
        %v5691 = vpack.c.b16 %v5460, %v5459
        %v5692 = vpack.c.b16 %v5462, %v5461
        %v5693 = vpack.c.b16 %v5464, %v5463
        %v5694 = vpack.c.b16 %v5466, %v5465
        %v5695 = vpack.c.b16 %v5468, %v5467
        %v5696 = vpack.c.b16 %v5470, %v5469
        %v5697 = vpack.c.b16 %v5472, %v5471
        %v5698 = vpack.c.b16 %v5474, %v5473
        %v5699 = vpack.c.b16 %v5476, %v5475
        %v5700 = vpack.c.b16 %v5478, %v5477
        %v5701 = vpack.c.b16 %v5480, %v5479
        %v5702 = vpack.c.b16 %v5482, %v5481
        %v5703 = vpack.c.b16 %v5484, %v5483
        %v5704 = vpack.c.b16 %v5486, %v5485
        %v5705 = vpack.c.b16 %v5488, %v5487
        %v5706 = vpack.c.b16 %v5490, %v5489
        %v5707 = vpack.c.b16 %v5492, %v5491
        %v5708 = vpack.c.b16 %v5494, %v5493
        %v5709 = vpack.c.b16 %v5496, %v5495
        %v5710 = vpack.c.b16 %v5498, %v5497
        %v5711 = vpack.c.b16 %v5500, %v5499
        %v5712 = vpack.c.b16 %v5502, %v5501
        %v5713 = vpack.c.b16 %v5504, %v5503
        %v5714 = vpack.c.b16 %v5506, %v5505
        %v5715 = vpack.c.b16 %v5508, %v5507
        %v5716 = vpack.c.b16 %v5510, %v5509
        %v5717 = vpack.c.b16 %v5512, %v5511
        %v5718 = vpack.c.b16 %v5514, %v5513
        %v5719 = vpack.c.b16 %v5516, %v5515
        %v5720 = vpack.c.b16 %v5518, %v5517
        %v5721 = vpack.c.b16 %v5520, %v5519
        %v5722 = vpack.c.b16 %v5522, %v5521
        %5923 = vmatprep.subr.bf16.mxu0 0
        %5924 = vmatpush1.bf16.msra.mxu0 %v5530
        %5925 = vmatprep.subr.bf16.mxu0 0
        %5926 = vmatpush1.bf16.msra.mxu0 %v5529
        %5927 = vmatprep.subr.bf16.mxu0 0
        %5928 = vmatpush1.bf16.msra.mxu0 %v5528
        %5929 = vmatprep.subr.bf16.mxu0 0
        %5930 = vmatpush1.bf16.msra.mxu0 %v5527
        %5931 = vmatprep.subr.bf16.mxu0 0
        %5932 = vmatpush1.bf16.msra.mxu0 %v5526
        %5933 = vmatprep.subr.bf16.mxu0 0
        %5934 = vmatpush1.bf16.msra.mxu0 %v5525
        %5935 = vmatprep.subr.bf16.mxu0 0
        %5936 = vmatpush1.bf16.msra.mxu0 %v5524
        %5937 = vmatprep.subr.bf16.mxu0 0
        %5938 = vmatpush1.bf16.msra.mxu0 %v5523
        %5939 = vmatprep.subr.bf16.mxu0 0
        %5940 = vmatpush2.bf16.msra.mxu0 %v5538
        %5941 = vmatprep.subr.bf16.mxu0 0
        %5942 = vmatpush2.bf16.msra.mxu0 %v5537
        %5943 = vmatprep.subr.bf16.mxu0 0
        %5944 = vmatpush2.bf16.msra.mxu0 %v5536
        %5945 = vmatprep.subr.bf16.mxu0 0
        %5946 = vmatpush2.bf16.msra.mxu0 %v5535
        %5947 = vmatprep.subr.bf16.mxu0 0
        %5948 = vmatpush2.bf16.msra.mxu0 %v5534
        %5949 = vmatprep.subr.bf16.mxu0 0
        %5950 = vmatpush2.bf16.msra.mxu0 %v5533
        %5951 = vmatprep.subr.bf16.mxu0 0
        %5952 = vmatpush2.bf16.msra.mxu0 %v5532
        %5953 = vmatprep.subr.bf16.mxu0 0
        %5954 = vmatpush2.bf16.msra.mxu0 %v5531
        %5955 = vmatprep.mubr.bf16.mxu0 %v3703
        %5956 = vmatmul.mubr.bf16.gmra.mxu0 %v3615
        %v5957 = vpop.f32.mrf.mxu0
        %v5958 = vadd.f32 %v4721, %v5957
        %v5959 = vpop.f32.mrf.mxu0
        %v5960 = vpop.f32.mrf.mxu0
        %v5961 = vadd.f32 %v4721, %v5960
        %v5962 = vpop.f32.mrf.mxu0
        %5963 = vmatprep.mubr.bf16.mxu0 %v3713
        %5964 = vmatmul.mubr.bf16.gmra.mxu0 %v3618
        %v5965 = vpop.f32.mrf.mxu0
        %v5966 = vadd.f32 %v4721, %v5965
        %v5967 = vpop.f32.mrf.mxu0
        %v5968 = vpop.f32.mrf.mxu0
        %v5969 = vadd.f32 %v4721, %v5968
        %v5970 = vpop.f32.mrf.mxu0
        %5971 = vmatprep.mubr.bf16.mxu0 %v3723
        %5972 = vmatmul.mubr.bf16.gmra.mxu0 %v3621
        %v5973 = vpop.f32.mrf.mxu0
        %v5974 = vadd.f32 %v4721, %v5973
        %v5975 = vpop.f32.mrf.mxu0
        %v5976 = vpop.f32.mrf.mxu0
        %v5977 = vadd.f32 %v4721, %v5976
        %v5978 = vpop.f32.mrf.mxu0
        %5979 = vmatprep.mubr.bf16.mxu0 %v3733
        %5980 = vmatmul.mubr.bf16.gmra.mxu0 %v3624
        %v5981 = vpop.f32.mrf.mxu0
        %v5982 = vadd.f32 %v4721, %v5981
        %v5983 = vpop.f32.mrf.mxu0
        %v5984 = vpop.f32.mrf.mxu0
        %v5985 = vadd.f32 %v4721, %v5984
        %v5986 = vpop.f32.mrf.mxu0
        %5987 = vmatprep.mubr.bf16.mxu0 %v3743
        %5988 = vmatmul.mubr.bf16.gmra.mxu0 %v3627
        %v5989 = vpop.f32.mrf.mxu0
        %v5990 = vadd.f32 %v4721, %v5989
        %v5991 = vpop.f32.mrf.mxu0
        %v5992 = vpop.f32.mrf.mxu0
        %v5993 = vadd.f32 %v4721, %v5992
        %v5994 = vpop.f32.mrf.mxu0
        %5995 = vmatprep.mubr.bf16.mxu0 %v3753
        %5996 = vmatmul.mubr.bf16.gmra.mxu0 %v3630
        %v5997 = vpop.f32.mrf.mxu0
        %v5998 = vadd.f32 %v4721, %v5997
        %v5999 = vpop.f32.mrf.mxu0
        %v6000 = vpop.f32.mrf.mxu0
        %v6001 = vadd.f32 %v4721, %v6000
        %v6002 = vpop.f32.mrf.mxu0
        %6003 = vmatprep.mubr.bf16.mxu0 %v3763
        %6004 = vmatmul.mubr.bf16.gmra.mxu0 %v3633
        %v6005 = vpop.f32.mrf.mxu0
        %v6006 = vadd.f32 %v4721, %v6005
        %v6007 = vpop.f32.mrf.mxu0
        %v6008 = vpop.f32.mrf.mxu0
        %v6009 = vadd.f32 %v4721, %v6008
        %v6010 = vpop.f32.mrf.mxu0
        %6011 = vmatprep.mubr.bf16.mxu0 %v3773
        %6012 = vmatmul.mubr.bf16.gmra.mxu0 %v3636
        %v6013 = vpop.f32.mrf.mxu0
        %v6014 = vadd.f32 %v4721, %v6013
        %v6015 = vpop.f32.mrf.mxu0
        %v6016 = vpop.f32.mrf.mxu0
        %v6017 = vadd.f32 %v4721, %v6016
        %v6018 = vpop.f32.mrf.mxu0
        %6019 = vmatprep.mubr.bf16.mxu0 %v3783
        %6020 = vmatmul.mubr.bf16.gmra.mxu0 %v3639
        %v6021 = vpop.f32.mrf.mxu0
        %v6022 = vadd.f32 %v4721, %v6021
        %v6023 = vpop.f32.mrf.mxu0
        %v6024 = vpop.f32.mrf.mxu0
        %v6025 = vadd.f32 %v4721, %v6024
        %v6026 = vpop.f32.mrf.mxu0
        %6027 = vmatprep.mubr.bf16.mxu0 %v3793
        %6028 = vmatmul.mubr.bf16.gmra.mxu0 %v3642
        %v6029 = vpop.f32.mrf.mxu0
        %v6030 = vadd.f32 %v4721, %v6029
        %v6031 = vpop.f32.mrf.mxu0
        %v6032 = vpop.f32.mrf.mxu0
        %v6033 = vadd.f32 %v4721, %v6032
        %v6034 = vpop.f32.mrf.mxu0
        %6035 = vmatprep.mubr.bf16.mxu0 %v3803
        %6036 = vmatmul.mubr.bf16.gmra.mxu0 %v3645
        %v6037 = vpop.f32.mrf.mxu0
        %v6038 = vadd.f32 %v4721, %v6037
        %v6039 = vpop.f32.mrf.mxu0
        %v6040 = vpop.f32.mrf.mxu0
        %v6041 = vadd.f32 %v4721, %v6040
        %v6042 = vpop.f32.mrf.mxu0
        %6043 = vmatprep.mubr.bf16.mxu0 %v3813
        %6044 = vmatmul.mubr.bf16.gmra.mxu0 %v3648
        %v6045 = vpop.f32.mrf.mxu0
        %v6046 = vadd.f32 %v4721, %v6045
        %v6047 = vpop.f32.mrf.mxu0
        %v6048 = vpop.f32.mrf.mxu0
        %v6049 = vadd.f32 %v4721, %v6048
        %v6050 = vpop.f32.mrf.mxu0
        %6051 = vmatprep.mubr.bf16.mxu0 %v3823
        %6052 = vmatmul.mubr.bf16.gmra.mxu0 %v3651
        %v6053 = vpop.f32.mrf.mxu0
        %v6054 = vadd.f32 %v4721, %v6053
        %v6055 = vpop.f32.mrf.mxu0
        %v6056 = vpop.f32.mrf.mxu0
        %v6057 = vadd.f32 %v4721, %v6056
        %v6058 = vpop.f32.mrf.mxu0
        %6059 = vmatprep.mubr.bf16.mxu0 %v3833
        %6060 = vmatmul.mubr.bf16.gmra.mxu0 %v3654
        %v6061 = vpop.f32.mrf.mxu0
        %v6062 = vadd.f32 %v4721, %v6061
        %v6063 = vpop.f32.mrf.mxu0
        %v6064 = vpop.f32.mrf.mxu0
        %v6065 = vadd.f32 %v4721, %v6064
        %v6066 = vpop.f32.mrf.mxu0
        %6067 = vmatprep.mubr.bf16.mxu0 %v3843
        %6068 = vmatmul.mubr.bf16.gmra.mxu0 %v3657
        %v6069 = vpop.f32.mrf.mxu0
        %v6070 = vadd.f32 %v4721, %v6069
        %v6071 = vpop.f32.mrf.mxu0
        %v6072 = vpop.f32.mrf.mxu0
        %v6073 = vadd.f32 %v4721, %v6072
        %v6074 = vpop.f32.mrf.mxu0
        %6075 = vmatprep.mubr.bf16.mxu0 %v3853
        %6076 = vmatmul.mubr.bf16.gmra.mxu0 %v3660
        %v6077 = vpop.f32.mrf.mxu0
        %v6078 = vadd.f32 %v4721, %v6077
        %v6079 = vpop.f32.mrf.mxu0
        %v6080 = vpop.f32.mrf.mxu0
        %v6081 = vadd.f32 %v4721, %v6080
        %v6082 = vpop.f32.mrf.mxu0
        %6083 = vdwg.mxu0
        %6084 = vmatprep.subr.bf16.mxu0 0
        %6085 = vmatpush1.bf16.msra.mxu0 %v5546
        %6086 = vmatprep.subr.bf16.mxu0 0
        %6087 = vmatpush1.bf16.msra.mxu0 %v5545
        %6088 = vmatprep.subr.bf16.mxu0 0
        %6089 = vmatpush1.bf16.msra.mxu0 %v5544
        %6090 = vmatprep.subr.bf16.mxu0 0
        %6091 = vmatpush1.bf16.msra.mxu0 %v5543
        %6092 = vmatprep.subr.bf16.mxu0 0
        %6093 = vmatpush1.bf16.msra.mxu0 %v5542
        %6094 = vmatprep.subr.bf16.mxu0 0
        %6095 = vmatpush1.bf16.msra.mxu0 %v5541
        %6096 = vmatprep.subr.bf16.mxu0 0
        %6097 = vmatpush1.bf16.msra.mxu0 %v5540
        %6098 = vmatprep.subr.bf16.mxu0 0
        %6099 = vmatpush1.bf16.msra.mxu0 %v5539
        %6100 = vmatprep.subr.bf16.mxu0 0
        %6101 = vmatpush2.bf16.msra.mxu0 %v5554
        %6102 = vmatprep.subr.bf16.mxu0 0
        %6103 = vmatpush2.bf16.msra.mxu0 %v5553
        %6104 = vmatprep.subr.bf16.mxu0 0
        %6105 = vmatpush2.bf16.msra.mxu0 %v5552
        %6106 = vmatprep.subr.bf16.mxu0 0
        %6107 = vmatpush2.bf16.msra.mxu0 %v5551
        %6108 = vmatprep.subr.bf16.mxu0 0
        %6109 = vmatpush2.bf16.msra.mxu0 %v5550
        %6110 = vmatprep.subr.bf16.mxu0 0
        %6111 = vmatpush2.bf16.msra.mxu0 %v5549
        %6112 = vmatprep.subr.bf16.mxu0 0
        %6113 = vmatpush2.bf16.msra.mxu0 %v5548
        %6114 = vmatprep.subr.bf16.mxu0 0
        %6115 = vmatpush2.bf16.msra.mxu0 %v5547
        %6116 = vmatprep.mubr.bf16.mxu0 %v4043
        %6117 = vmatmul.mubr.bf16.gmra.mxu0 %v3956
        %v6118 = vpop.f32.mrf.mxu0
        %v6119 = vadd.f32 %v5958, %v6118
        %v6120 = vpop.f32.mrf.mxu0
        %v6121 = vpop.f32.mrf.mxu0
        %v6122 = vadd.f32 %v5961, %v6121
        %v6123 = vpop.f32.mrf.mxu0
        %6124 = vmatprep.mubr.bf16.mxu0 %v4052
        %6125 = vmatmul.mubr.bf16.gmra.mxu0 %v3959
        %v6126 = vpop.f32.mrf.mxu0
        %v6127 = vadd.f32 %v5966, %v6126
        %v6128 = vpop.f32.mrf.mxu0
        %v6129 = vpop.f32.mrf.mxu0
        %v6130 = vadd.f32 %v5969, %v6129
        %v6131 = vpop.f32.mrf.mxu0
        %6132 = vmatprep.mubr.bf16.mxu0 %v4061
        %6133 = vmatmul.mubr.bf16.gmra.mxu0 %v3962
        %v6134 = vpop.f32.mrf.mxu0
        %v6135 = vadd.f32 %v5974, %v6134
        %v6136 = vpop.f32.mrf.mxu0
        %v6137 = vpop.f32.mrf.mxu0
        %v6138 = vadd.f32 %v5977, %v6137
        %v6139 = vpop.f32.mrf.mxu0
        %6140 = vmatprep.mubr.bf16.mxu0 %v4070
        %6141 = vmatmul.mubr.bf16.gmra.mxu0 %v3965
        %v6142 = vpop.f32.mrf.mxu0
        %v6143 = vadd.f32 %v5982, %v6142
        %v6144 = vpop.f32.mrf.mxu0
        %v6145 = vpop.f32.mrf.mxu0
        %v6146 = vadd.f32 %v5985, %v6145
        %v6147 = vpop.f32.mrf.mxu0
        %6148 = vmatprep.mubr.bf16.mxu0 %v4079
        %6149 = vmatmul.mubr.bf16.gmra.mxu0 %v3968
        %v6150 = vpop.f32.mrf.mxu0
        %v6151 = vadd.f32 %v5990, %v6150
        %v6152 = vpop.f32.mrf.mxu0
        %v6153 = vpop.f32.mrf.mxu0
        %v6154 = vadd.f32 %v5993, %v6153
        %v6155 = vpop.f32.mrf.mxu0
        %6156 = vmatprep.mubr.bf16.mxu0 %v4088
        %6157 = vmatmul.mubr.bf16.gmra.mxu0 %v3971
        %v6158 = vpop.f32.mrf.mxu0
        %v6159 = vadd.f32 %v5998, %v6158
        %v6160 = vpop.f32.mrf.mxu0
        %v6161 = vpop.f32.mrf.mxu0
        %v6162 = vadd.f32 %v6001, %v6161
        %v6163 = vpop.f32.mrf.mxu0
        %6164 = vmatprep.mubr.bf16.mxu0 %v4097
        %6165 = vmatmul.mubr.bf16.gmra.mxu0 %v3974
        %v6166 = vpop.f32.mrf.mxu0
        %v6167 = vadd.f32 %v6006, %v6166
        %v6168 = vpop.f32.mrf.mxu0
        %v6169 = vpop.f32.mrf.mxu0
        %v6170 = vadd.f32 %v6009, %v6169
        %v6171 = vpop.f32.mrf.mxu0
        %6172 = vmatprep.mubr.bf16.mxu0 %v4106
        %6173 = vmatmul.mubr.bf16.gmra.mxu0 %v3977
        %v6174 = vpop.f32.mrf.mxu0
        %v6175 = vadd.f32 %v6014, %v6174
        %v6176 = vpop.f32.mrf.mxu0
        %v6177 = vpop.f32.mrf.mxu0
        %v6178 = vadd.f32 %v6017, %v6177
        %v6179 = vpop.f32.mrf.mxu0
        %6180 = vmatprep.mubr.bf16.mxu0 %v4115
        %6181 = vmatmul.mubr.bf16.gmra.mxu0 %v3980
        %v6182 = vpop.f32.mrf.mxu0
        %v6183 = vadd.f32 %v6022, %v6182
        %v6184 = vpop.f32.mrf.mxu0
        %v6185 = vpop.f32.mrf.mxu0
        %v6186 = vadd.f32 %v6025, %v6185
        %v6187 = vpop.f32.mrf.mxu0
        %6188 = vmatprep.mubr.bf16.mxu0 %v4124
        %6189 = vmatmul.mubr.bf16.gmra.mxu0 %v3983
        %v6190 = vpop.f32.mrf.mxu0
        %v6191 = vadd.f32 %v6030, %v6190
        %v6192 = vpop.f32.mrf.mxu0
        %v6193 = vpop.f32.mrf.mxu0
        %v6194 = vadd.f32 %v6033, %v6193
        %v6195 = vpop.f32.mrf.mxu0
        %6196 = vmatprep.mubr.bf16.mxu0 %v4133
        %6197 = vmatmul.mubr.bf16.gmra.mxu0 %v3986
        %v6198 = vpop.f32.mrf.mxu0
        %v6199 = vadd.f32 %v6038, %v6198
        %v6200 = vpop.f32.mrf.mxu0
        %v6201 = vpop.f32.mrf.mxu0
        %v6202 = vadd.f32 %v6041, %v6201
        %v6203 = vpop.f32.mrf.mxu0
        %6204 = vmatprep.mubr.bf16.mxu0 %v4142
        %6205 = vmatmul.mubr.bf16.gmra.mxu0 %v3989
        %v6206 = vpop.f32.mrf.mxu0
        %v6207 = vadd.f32 %v6046, %v6206
        %v6208 = vpop.f32.mrf.mxu0
        %v6209 = vpop.f32.mrf.mxu0
        %v6210 = vadd.f32 %v6049, %v6209
        %v6211 = vpop.f32.mrf.mxu0
        %6212 = vmatprep.mubr.bf16.mxu0 %v4151
        %6213 = vmatmul.mubr.bf16.gmra.mxu0 %v3992
        %v6214 = vpop.f32.mrf.mxu0
        %v6215 = vadd.f32 %v6054, %v6214
        %v6216 = vpop.f32.mrf.mxu0
        %v6217 = vpop.f32.mrf.mxu0
        %v6218 = vadd.f32 %v6057, %v6217
        %v6219 = vpop.f32.mrf.mxu0
        %6220 = vmatprep.mubr.bf16.mxu0 %v4160
        %6221 = vmatmul.mubr.bf16.gmra.mxu0 %v3995
        %v6222 = vpop.f32.mrf.mxu0
        %v6223 = vadd.f32 %v6062, %v6222
        %v6224 = vpop.f32.mrf.mxu0
        %v6225 = vpop.f32.mrf.mxu0
        %v6226 = vadd.f32 %v6065, %v6225
        %v6227 = vpop.f32.mrf.mxu0
        %6228 = vmatprep.mubr.bf16.mxu0 %v4169
        %6229 = vmatmul.mubr.bf16.gmra.mxu0 %v3998
        %v6230 = vpop.f32.mrf.mxu0
        %v6231 = vadd.f32 %v6070, %v6230
        %v6232 = vpop.f32.mrf.mxu0
        %v6233 = vpop.f32.mrf.mxu0
        %v6234 = vadd.f32 %v6073, %v6233
        %v6235 = vpop.f32.mrf.mxu0
        %6236 = vmatprep.mubr.bf16.mxu0 %v4178
        %6237 = vmatmul.mubr.bf16.gmra.mxu0 %v4001
        %v6238 = vpop.f32.mrf.mxu0
        %v6239 = vadd.f32 %v6078, %v6238
        %v6240 = vpop.f32.mrf.mxu0
        %v6241 = vpop.f32.mrf.mxu0
        %v6242 = vadd.f32 %v6081, %v6241
        %v6243 = vpop.f32.mrf.mxu0
        %6244 = vdwg.mxu0
        %6245 = vmatprep.subr.bf16.mxu0 0
        %6246 = vmatpush1.bf16.msra.mxu0 %v5562
        %6247 = vmatprep.subr.bf16.mxu0 0
        %6248 = vmatpush1.bf16.msra.mxu0 %v5561
        %6249 = vmatprep.subr.bf16.mxu0 0
        %6250 = vmatpush1.bf16.msra.mxu0 %v5560
        %6251 = vmatprep.subr.bf16.mxu0 0
        %6252 = vmatpush1.bf16.msra.mxu0 %v5559
        %6253 = vmatprep.subr.bf16.mxu0 0
        %6254 = vmatpush1.bf16.msra.mxu0 %v5558
        %6255 = vmatprep.subr.bf16.mxu0 0
        %6256 = vmatpush1.bf16.msra.mxu0 %v5557
        %6257 = vmatprep.subr.bf16.mxu0 0
        %6258 = vmatpush1.bf16.msra.mxu0 %v5556
        %6259 = vmatprep.subr.bf16.mxu0 0
        %6260 = vmatpush1.bf16.msra.mxu0 %v5555
        %6261 = vmatprep.subr.bf16.mxu0 0
        %6262 = vmatpush2.bf16.msra.mxu0 %v5570
        %6263 = vmatprep.subr.bf16.mxu0 0
        %6264 = vmatpush2.bf16.msra.mxu0 %v5569
        %6265 = vmatprep.subr.bf16.mxu0 0
        %6266 = vmatpush2.bf16.msra.mxu0 %v5568
        %6267 = vmatprep.subr.bf16.mxu0 0
        %6268 = vmatpush2.bf16.msra.mxu0 %v5567
        %6269 = vmatprep.subr.bf16.mxu0 0
        %6270 = vmatpush2.bf16.msra.mxu0 %v5566
        %6271 = vmatprep.subr.bf16.mxu0 0
        %6272 = vmatpush2.bf16.msra.mxu0 %v5565
        %6273 = vmatprep.subr.bf16.mxu0 0
        %6274 = vmatpush2.bf16.msra.mxu0 %v5564
        %6275 = vmatprep.subr.bf16.mxu0 0
        %6276 = vmatpush2.bf16.msra.mxu0 %v5563
        %6277 = vmatprep.mubr.bf16.mxu0 %v3618
        %6278 = vmatmul.mubr.bf16.gmra.mxu0 %v4238
        %v6279 = vpop.f32.mrf.mxu0
        %v6280 = vadd.f32 %v6119, %v6279
        %v6281 = vpop.f32.mrf.mxu0
        %v6282 = vpop.f32.mrf.mxu0
        %v6283 = vadd.f32 %v6122, %v6282
        %v6284 = vpop.f32.mrf.mxu0
        %6285 = vmatprep.mubr.bf16.mxu0 %v3621
        %6286 = vmatmul.mubr.bf16.gmra.mxu0 %v4241
        %v6287 = vpop.f32.mrf.mxu0
        %v6288 = vadd.f32 %v6127, %v6287
        %v6289 = vpop.f32.mrf.mxu0
        %v6290 = vpop.f32.mrf.mxu0
        %v6291 = vadd.f32 %v6130, %v6290
        %v6292 = vpop.f32.mrf.mxu0
        %6293 = vmatprep.mubr.bf16.mxu0 %v3624
        %6294 = vmatmul.mubr.bf16.gmra.mxu0 %v4244
        %v6295 = vpop.f32.mrf.mxu0
        %v6296 = vadd.f32 %v6135, %v6295
        %v6297 = vpop.f32.mrf.mxu0
        %v6298 = vpop.f32.mrf.mxu0
        %v6299 = vadd.f32 %v6138, %v6298
        %v6300 = vpop.f32.mrf.mxu0
        %6301 = vmatprep.mubr.bf16.mxu0 %v3627
        %6302 = vmatmul.mubr.bf16.gmra.mxu0 %v4247
        %v6303 = vpop.f32.mrf.mxu0
        %v6304 = vadd.f32 %v6143, %v6303
        %v6305 = vpop.f32.mrf.mxu0
        %v6306 = vpop.f32.mrf.mxu0
        %v6307 = vadd.f32 %v6146, %v6306
        %v6308 = vpop.f32.mrf.mxu0
        %6309 = vmatprep.mubr.bf16.mxu0 %v3630
        %6310 = vmatmul.mubr.bf16.gmra.mxu0 %v4250
        %v6311 = vpop.f32.mrf.mxu0
        %v6312 = vadd.f32 %v6151, %v6311
        %v6313 = vpop.f32.mrf.mxu0
        %v6314 = vpop.f32.mrf.mxu0
        %v6315 = vadd.f32 %v6154, %v6314
        %v6316 = vpop.f32.mrf.mxu0
        %6317 = vmatprep.mubr.bf16.mxu0 %v3633
        %6318 = vmatmul.mubr.bf16.gmra.mxu0 %v4253
        %v6319 = vpop.f32.mrf.mxu0
        %v6320 = vadd.f32 %v6159, %v6319
        %v6321 = vpop.f32.mrf.mxu0
        %v6322 = vpop.f32.mrf.mxu0
        %v6323 = vadd.f32 %v6162, %v6322
        %v6324 = vpop.f32.mrf.mxu0
        %6325 = vmatprep.mubr.bf16.mxu0 %v3636
        %6326 = vmatmul.mubr.bf16.gmra.mxu0 %v4256
        %v6327 = vpop.f32.mrf.mxu0
        %v6328 = vadd.f32 %v6167, %v6327
        %v6329 = vpop.f32.mrf.mxu0
        %v6330 = vpop.f32.mrf.mxu0
        %v6331 = vadd.f32 %v6170, %v6330
        %v6332 = vpop.f32.mrf.mxu0
        %6333 = vmatprep.mubr.bf16.mxu0 %v3639
        %6334 = vmatmul.mubr.bf16.gmra.mxu0 %v4259
        %v6335 = vpop.f32.mrf.mxu0
        %v6336 = vadd.f32 %v6175, %v6335
        %v6337 = vpop.f32.mrf.mxu0
        %v6338 = vpop.f32.mrf.mxu0
        %v6339 = vadd.f32 %v6178, %v6338
        %v6340 = vpop.f32.mrf.mxu0
        %6341 = vmatprep.mubr.bf16.mxu0 %v3642
        %6342 = vmatmul.mubr.bf16.gmra.mxu0 %v4262
        %v6343 = vpop.f32.mrf.mxu0
        %v6344 = vadd.f32 %v6183, %v6343
        %v6345 = vpop.f32.mrf.mxu0
        %v6346 = vpop.f32.mrf.mxu0
        %v6347 = vadd.f32 %v6186, %v6346
        %v6348 = vpop.f32.mrf.mxu0
        %6349 = vmatprep.mubr.bf16.mxu0 %v3645
        %6350 = vmatmul.mubr.bf16.gmra.mxu0 %v4265
        %v6351 = vpop.f32.mrf.mxu0
        %v6352 = vadd.f32 %v6191, %v6351
        %v6353 = vpop.f32.mrf.mxu0
        %v6354 = vpop.f32.mrf.mxu0
        %v6355 = vadd.f32 %v6194, %v6354
        %v6356 = vpop.f32.mrf.mxu0
        %6357 = vmatprep.mubr.bf16.mxu0 %v3648
        %6358 = vmatmul.mubr.bf16.gmra.mxu0 %v4268
        %v6359 = vpop.f32.mrf.mxu0
        %v6360 = vadd.f32 %v6199, %v6359
        %v6361 = vpop.f32.mrf.mxu0
        %v6362 = vpop.f32.mrf.mxu0
        %v6363 = vadd.f32 %v6202, %v6362
        %v6364 = vpop.f32.mrf.mxu0
        %6365 = vmatprep.mubr.bf16.mxu0 %v3651
        %6366 = vmatmul.mubr.bf16.gmra.mxu0 %v4271
        %v6367 = vpop.f32.mrf.mxu0
        %v6368 = vadd.f32 %v6207, %v6367
        %v6369 = vpop.f32.mrf.mxu0
        %v6370 = vpop.f32.mrf.mxu0
        %v6371 = vadd.f32 %v6210, %v6370
        %v6372 = vpop.f32.mrf.mxu0
        %6373 = vmatprep.mubr.bf16.mxu0 %v3654
        %6374 = vmatmul.mubr.bf16.gmra.mxu0 %v4274
        %v6375 = vpop.f32.mrf.mxu0
        %v6376 = vadd.f32 %v6215, %v6375
        %v6377 = vpop.f32.mrf.mxu0
        %v6378 = vpop.f32.mrf.mxu0
        %v6379 = vadd.f32 %v6218, %v6378
        %v6380 = vpop.f32.mrf.mxu0
        %6381 = vmatprep.mubr.bf16.mxu0 %v3657
        %6382 = vmatmul.mubr.bf16.gmra.mxu0 %v4277
        %v6383 = vpop.f32.mrf.mxu0
        %v6384 = vadd.f32 %v6223, %v6383
        %v6385 = vpop.f32.mrf.mxu0
        %v6386 = vpop.f32.mrf.mxu0
        %v6387 = vadd.f32 %v6226, %v6386
        %v6388 = vpop.f32.mrf.mxu0
        %6389 = vmatprep.mubr.bf16.mxu0 %v3660
        %6390 = vmatmul.mubr.bf16.gmra.mxu0 %v4280
        %v6391 = vpop.f32.mrf.mxu0
        %v6392 = vadd.f32 %v6231, %v6391
        %v6393 = vpop.f32.mrf.mxu0
        %v6394 = vpop.f32.mrf.mxu0
        %v6395 = vadd.f32 %v6234, %v6394
        %v6396 = vpop.f32.mrf.mxu0
        %6397 = vmatprep.mubr.bf16.mxu0 %v3663
        %6398 = vmatmul.mubr.bf16.gmra.mxu0 %v4283
        %v6399 = vpop.f32.mrf.mxu0
        %v6400 = vadd.f32 %v6239, %v6399
        %v6401 = vpop.f32.mrf.mxu0
        %v6402 = vpop.f32.mrf.mxu0
        %v6403 = vadd.f32 %v6242, %v6402
        %v6404 = vpop.f32.mrf.mxu0
        %6405 = vdwg.mxu0
        %6406 = vmatprep.subr.bf16.mxu0 0
        %6407 = vmatpush1.bf16.msra.mxu0 %v5578
        %6408 = vmatprep.subr.bf16.mxu0 0
        %6409 = vmatpush1.bf16.msra.mxu0 %v5577
        %6410 = vmatprep.subr.bf16.mxu0 0
        %6411 = vmatpush1.bf16.msra.mxu0 %v5576
        %6412 = vmatprep.subr.bf16.mxu0 0
        %6413 = vmatpush1.bf16.msra.mxu0 %v5575
        %6414 = vmatprep.subr.bf16.mxu0 0
        %6415 = vmatpush1.bf16.msra.mxu0 %v5574
        %6416 = vmatprep.subr.bf16.mxu0 0
        %6417 = vmatpush1.bf16.msra.mxu0 %v5573
        %6418 = vmatprep.subr.bf16.mxu0 0
        %6419 = vmatpush1.bf16.msra.mxu0 %v5572
        %6420 = vmatprep.subr.bf16.mxu0 0
        %6421 = vmatpush1.bf16.msra.mxu0 %v5571
        %6422 = vmatprep.subr.bf16.mxu0 0
        %6423 = vmatpush2.bf16.msra.mxu0 %v5586
        %6424 = vmatprep.subr.bf16.mxu0 0
        %6425 = vmatpush2.bf16.msra.mxu0 %v5585
        %6426 = vmatprep.subr.bf16.mxu0 0
        %6427 = vmatpush2.bf16.msra.mxu0 %v5584
        %6428 = vmatprep.subr.bf16.mxu0 0
        %6429 = vmatpush2.bf16.msra.mxu0 %v5583
        %6430 = vmatprep.subr.bf16.mxu0 0
        %6431 = vmatpush2.bf16.msra.mxu0 %v5582
        %6432 = vmatprep.subr.bf16.mxu0 0
        %6433 = vmatpush2.bf16.msra.mxu0 %v5581
        %6434 = vmatprep.subr.bf16.mxu0 0
        %6435 = vmatpush2.bf16.msra.mxu0 %v5580
        %6436 = vmatprep.subr.bf16.mxu0 0
        %6437 = vmatpush2.bf16.msra.mxu0 %v5579
        %6438 = vmatprep.mubr.bf16.mxu0 %v3959
        %6439 = vmatmul.mubr.bf16.gmra.mxu0 %v3713
        %v6440 = vpop.f32.mrf.mxu0
        %v6441 = vadd.f32 %v6280, %v6440
        %v6442 = vpop.f32.mrf.mxu0
        %v6443 = vpop.f32.mrf.mxu0
        %v6444 = vadd.f32 %v6283, %v6443
        %v6445 = vpop.f32.mrf.mxu0
        %6446 = vmatprep.mubr.bf16.mxu0 %v3962
        %6447 = vmatmul.mubr.bf16.gmra.mxu0 %v3723
        %v6448 = vpop.f32.mrf.mxu0
        %v6449 = vadd.f32 %v6288, %v6448
        %v6450 = vpop.f32.mrf.mxu0
        %v6451 = vpop.f32.mrf.mxu0
        %v6452 = vadd.f32 %v6291, %v6451
        %v6453 = vpop.f32.mrf.mxu0
        %6454 = vmatprep.mubr.bf16.mxu0 %v3965
        %6455 = vmatmul.mubr.bf16.gmra.mxu0 %v3733
        %v6456 = vpop.f32.mrf.mxu0
        %v6457 = vadd.f32 %v6296, %v6456
        %v6458 = vpop.f32.mrf.mxu0
        %v6459 = vpop.f32.mrf.mxu0
        %v6460 = vadd.f32 %v6299, %v6459
        %v6461 = vpop.f32.mrf.mxu0
        %6462 = vmatprep.mubr.bf16.mxu0 %v3968
        %6463 = vmatmul.mubr.bf16.gmra.mxu0 %v3743
        %v6464 = vpop.f32.mrf.mxu0
        %v6465 = vadd.f32 %v6304, %v6464
        %v6466 = vpop.f32.mrf.mxu0
        %v6467 = vpop.f32.mrf.mxu0
        %v6468 = vadd.f32 %v6307, %v6467
        %v6469 = vpop.f32.mrf.mxu0
        %6470 = vmatprep.mubr.bf16.mxu0 %v3971
        %6471 = vmatmul.mubr.bf16.gmra.mxu0 %v3753
        %v6472 = vpop.f32.mrf.mxu0
        %v6473 = vadd.f32 %v6312, %v6472
        %v6474 = vpop.f32.mrf.mxu0
        %v6475 = vpop.f32.mrf.mxu0
        %v6476 = vadd.f32 %v6315, %v6475
        %v6477 = vpop.f32.mrf.mxu0
        %6478 = vmatprep.mubr.bf16.mxu0 %v3974
        %6479 = vmatmul.mubr.bf16.gmra.mxu0 %v3763
        %v6480 = vpop.f32.mrf.mxu0
        %v6481 = vadd.f32 %v6320, %v6480
        %v6482 = vpop.f32.mrf.mxu0
        %v6483 = vpop.f32.mrf.mxu0
        %v6484 = vadd.f32 %v6323, %v6483
        %v6485 = vpop.f32.mrf.mxu0
        %6486 = vmatprep.mubr.bf16.mxu0 %v3977
        %6487 = vmatmul.mubr.bf16.gmra.mxu0 %v3773
        %v6488 = vpop.f32.mrf.mxu0
        %v6489 = vadd.f32 %v6328, %v6488
        %v6490 = vpop.f32.mrf.mxu0
        %v6491 = vpop.f32.mrf.mxu0
        %v6492 = vadd.f32 %v6331, %v6491
        %v6493 = vpop.f32.mrf.mxu0
        %6494 = vmatprep.mubr.bf16.mxu0 %v3980
        %6495 = vmatmul.mubr.bf16.gmra.mxu0 %v3783
        %v6496 = vpop.f32.mrf.mxu0
        %v6497 = vadd.f32 %v6336, %v6496
        %v6498 = vpop.f32.mrf.mxu0
        %v6499 = vpop.f32.mrf.mxu0
        %v6500 = vadd.f32 %v6339, %v6499
        %v6501 = vpop.f32.mrf.mxu0
        %6502 = vmatprep.mubr.bf16.mxu0 %v3983
        %6503 = vmatmul.mubr.bf16.gmra.mxu0 %v3793
        %v6504 = vpop.f32.mrf.mxu0
        %v6505 = vadd.f32 %v6344, %v6504
        %v6506 = vpop.f32.mrf.mxu0
        %v6507 = vpop.f32.mrf.mxu0
        %v6508 = vadd.f32 %v6347, %v6507
        %v6509 = vpop.f32.mrf.mxu0
        %6510 = vmatprep.mubr.bf16.mxu0 %v3986
        %6511 = vmatmul.mubr.bf16.gmra.mxu0 %v3803
        %v6512 = vpop.f32.mrf.mxu0
        %v6513 = vadd.f32 %v6352, %v6512
        %v6514 = vpop.f32.mrf.mxu0
        %v6515 = vpop.f32.mrf.mxu0
        %v6516 = vadd.f32 %v6355, %v6515
        %v6517 = vpop.f32.mrf.mxu0
        %6518 = vmatprep.mubr.bf16.mxu0 %v3989
        %6519 = vmatmul.mubr.bf16.gmra.mxu0 %v3813
        %v6520 = vpop.f32.mrf.mxu0
        %v6521 = vadd.f32 %v6360, %v6520
        %v6522 = vpop.f32.mrf.mxu0
        %v6523 = vpop.f32.mrf.mxu0
        %v6524 = vadd.f32 %v6363, %v6523
        %v6525 = vpop.f32.mrf.mxu0
        %6526 = vmatprep.mubr.bf16.mxu0 %v3992
        %6527 = vmatmul.mubr.bf16.gmra.mxu0 %v3823
        %v6528 = vpop.f32.mrf.mxu0
        %v6529 = vadd.f32 %v6368, %v6528
        %v6530 = vpop.f32.mrf.mxu0
        %v6531 = vpop.f32.mrf.mxu0
        %v6532 = vadd.f32 %v6371, %v6531
        %v6533 = vpop.f32.mrf.mxu0
        %6534 = vmatprep.mubr.bf16.mxu0 %v3995
        %6535 = vmatmul.mubr.bf16.gmra.mxu0 %v3833
        %v6536 = vpop.f32.mrf.mxu0
        %v6537 = vadd.f32 %v6376, %v6536
        %v6538 = vpop.f32.mrf.mxu0
        %v6539 = vpop.f32.mrf.mxu0
        %v6540 = vadd.f32 %v6379, %v6539
        %v6541 = vpop.f32.mrf.mxu0
        %6542 = vmatprep.mubr.bf16.mxu0 %v3998
        %6543 = vmatmul.mubr.bf16.gmra.mxu0 %v3843
        %v6544 = vpop.f32.mrf.mxu0
        %v6545 = vadd.f32 %v6384, %v6544
        %v6546 = vpop.f32.mrf.mxu0
        %v6547 = vpop.f32.mrf.mxu0
        %v6548 = vadd.f32 %v6387, %v6547
        %v6549 = vpop.f32.mrf.mxu0
        %6550 = vmatprep.mubr.bf16.mxu0 %v4001
        %6551 = vmatmul.mubr.bf16.gmra.mxu0 %v3853
        %v6552 = vpop.f32.mrf.mxu0
        %v6553 = vadd.f32 %v6392, %v6552
        %v6554 = vpop.f32.mrf.mxu0
        %v6555 = vpop.f32.mrf.mxu0
        %v6556 = vadd.f32 %v6395, %v6555
        %v6557 = vpop.f32.mrf.mxu0
        %6558 = vmatprep.mubr.bf16.mxu0 %v4004
        %6559 = vmatmul.mubr.bf16.gmra.mxu0 %v3863
        %v6560 = vpop.f32.mrf.mxu0
        %v6561 = vadd.f32 %v6400, %v6560
        %v6562 = vpop.f32.mrf.mxu0
        %v6563 = vpop.f32.mrf.mxu0
        %v6564 = vadd.f32 %v6403, %v6563
        %v6565 = vpop.f32.mrf.mxu0
        %6566 = vdwg.mxu0
        %6567 = vmatprep.subr.bf16.mxu0 0
        %6568 = vmatpush1.bf16.msra.mxu0 %v5594
        %6569 = vmatprep.subr.bf16.mxu0 0
        %6570 = vmatpush1.bf16.msra.mxu0 %v5593
        %6571 = vmatprep.subr.bf16.mxu0 0
        %6572 = vmatpush1.bf16.msra.mxu0 %v5592
        %6573 = vmatprep.subr.bf16.mxu0 0
        %6574 = vmatpush1.bf16.msra.mxu0 %v5591
        %6575 = vmatprep.subr.bf16.mxu0 0
        %6576 = vmatpush1.bf16.msra.mxu0 %v5590
        %6577 = vmatprep.subr.bf16.mxu0 0
        %6578 = vmatpush1.bf16.msra.mxu0 %v5589
        %6579 = vmatprep.subr.bf16.mxu0 0
        %6580 = vmatpush1.bf16.msra.mxu0 %v5588
        %6581 = vmatprep.subr.bf16.mxu0 0
        %6582 = vmatpush1.bf16.msra.mxu0 %v5587
        %6583 = vmatprep.subr.bf16.mxu0 0
        %6584 = vmatpush2.bf16.msra.mxu0 %v5602
        %6585 = vmatprep.subr.bf16.mxu0 0
        %6586 = vmatpush2.bf16.msra.mxu0 %v5601
        %6587 = vmatprep.subr.bf16.mxu0 0
        %6588 = vmatpush2.bf16.msra.mxu0 %v5600
        %6589 = vmatprep.subr.bf16.mxu0 0
        %6590 = vmatpush2.bf16.msra.mxu0 %v5599
        %6591 = vmatprep.subr.bf16.mxu0 0
        %6592 = vmatpush2.bf16.msra.mxu0 %v5598
        %6593 = vmatprep.subr.bf16.mxu0 0
        %6594 = vmatpush2.bf16.msra.mxu0 %v5597
        %6595 = vmatprep.subr.bf16.mxu0 0
        %6596 = vmatpush2.bf16.msra.mxu0 %v5596
        %6597 = vmatprep.subr.bf16.mxu0 0
        %6598 = vmatpush2.bf16.msra.mxu0 %v5595
        %6599 = vmatprep.mubr.bf16.mxu0 %v4241
        %6600 = vmatmul.mubr.bf16.gmra.mxu0 %v4052
        %v6601 = vpop.f32.mrf.mxu0
        %v6602 = vadd.f32 %v6441, %v6601
        %v6603 = vpop.f32.mrf.mxu0
        %v6604 = vpop.f32.mrf.mxu0
        %v6605 = vadd.f32 %v6444, %v6604
        %v6606 = vpop.f32.mrf.mxu0
        %6607 = vmatprep.mubr.bf16.mxu0 %v4244
        %6608 = vmatmul.mubr.bf16.gmra.mxu0 %v4061
        %v6609 = vpop.f32.mrf.mxu0
        %v6610 = vadd.f32 %v6449, %v6609
        %v6611 = vpop.f32.mrf.mxu0
        %v6612 = vpop.f32.mrf.mxu0
        %v6613 = vadd.f32 %v6452, %v6612
        %v6614 = vpop.f32.mrf.mxu0
        %6615 = vmatprep.mubr.bf16.mxu0 %v4247
        %6616 = vmatmul.mubr.bf16.gmra.mxu0 %v4070
        %v6617 = vpop.f32.mrf.mxu0
        %v6618 = vadd.f32 %v6457, %v6617
        %v6619 = vpop.f32.mrf.mxu0
        %v6620 = vpop.f32.mrf.mxu0
        %v6621 = vadd.f32 %v6460, %v6620
        %v6622 = vpop.f32.mrf.mxu0
        %6623 = vmatprep.mubr.bf16.mxu0 %v4250
        %6624 = vmatmul.mubr.bf16.gmra.mxu0 %v4079
        %v6625 = vpop.f32.mrf.mxu0
        %v6626 = vadd.f32 %v6465, %v6625
        %v6627 = vpop.f32.mrf.mxu0
        %v6628 = vpop.f32.mrf.mxu0
        %v6629 = vadd.f32 %v6468, %v6628
        %v6630 = vpop.f32.mrf.mxu0
        %6631 = vmatprep.mubr.bf16.mxu0 %v4253
        %6632 = vmatmul.mubr.bf16.gmra.mxu0 %v4088
        %v6633 = vpop.f32.mrf.mxu0
        %v6634 = vadd.f32 %v6473, %v6633
        %v6635 = vpop.f32.mrf.mxu0
        %v6636 = vpop.f32.mrf.mxu0
        %v6637 = vadd.f32 %v6476, %v6636
        %v6638 = vpop.f32.mrf.mxu0
        %6639 = vmatprep.mubr.bf16.mxu0 %v4256
        %6640 = vmatmul.mubr.bf16.gmra.mxu0 %v4097
        %v6641 = vpop.f32.mrf.mxu0
        %v6642 = vadd.f32 %v6481, %v6641
        %v6643 = vpop.f32.mrf.mxu0
        %v6644 = vpop.f32.mrf.mxu0
        %v6645 = vadd.f32 %v6484, %v6644
        %v6646 = vpop.f32.mrf.mxu0
        %6647 = vmatprep.mubr.bf16.mxu0 %v4259
        %6648 = vmatmul.mubr.bf16.gmra.mxu0 %v4106
        %v6649 = vpop.f32.mrf.mxu0
        %v6650 = vadd.f32 %v6489, %v6649
        %v6651 = vpop.f32.mrf.mxu0
        %v6652 = vpop.f32.mrf.mxu0
        %v6653 = vadd.f32 %v6492, %v6652
        %v6654 = vpop.f32.mrf.mxu0
        %6655 = vmatprep.mubr.bf16.mxu0 %v4262
        %6656 = vmatmul.mubr.bf16.gmra.mxu0 %v4115
        %v6657 = vpop.f32.mrf.mxu0
        %v6658 = vadd.f32 %v6497, %v6657
        %v6659 = vpop.f32.mrf.mxu0
        %v6660 = vpop.f32.mrf.mxu0
        %v6661 = vadd.f32 %v6500, %v6660
        %v6662 = vpop.f32.mrf.mxu0
        %6663 = vmatprep.mubr.bf16.mxu0 %v4265
        %6664 = vmatmul.mubr.bf16.gmra.mxu0 %v4124
        %v6665 = vpop.f32.mrf.mxu0
        %v6666 = vadd.f32 %v6505, %v6665
        %v6667 = vpop.f32.mrf.mxu0
        %v6668 = vpop.f32.mrf.mxu0
        %v6669 = vadd.f32 %v6508, %v6668
        %v6670 = vpop.f32.mrf.mxu0
        %6671 = vmatprep.mubr.bf16.mxu0 %v4268
        %6672 = vmatmul.mubr.bf16.gmra.mxu0 %v4133
        %v6673 = vpop.f32.mrf.mxu0
        %v6674 = vadd.f32 %v6513, %v6673
        %v6675 = vpop.f32.mrf.mxu0
        %v6676 = vpop.f32.mrf.mxu0
        %v6677 = vadd.f32 %v6516, %v6676
        %v6678 = vpop.f32.mrf.mxu0
        %6679 = vmatprep.mubr.bf16.mxu0 %v4271
        %6680 = vmatmul.mubr.bf16.gmra.mxu0 %v4142
        %v6681 = vpop.f32.mrf.mxu0
        %v6682 = vadd.f32 %v6521, %v6681
        %v6683 = vpop.f32.mrf.mxu0
        %v6684 = vpop.f32.mrf.mxu0
        %v6685 = vadd.f32 %v6524, %v6684
        %v6686 = vpop.f32.mrf.mxu0
        %6687 = vmatprep.mubr.bf16.mxu0 %v4274
        %6688 = vmatmul.mubr.bf16.gmra.mxu0 %v4151
        %v6689 = vpop.f32.mrf.mxu0
        %v6690 = vadd.f32 %v6529, %v6689
        %v6691 = vpop.f32.mrf.mxu0
        %v6692 = vpop.f32.mrf.mxu0
        %v6693 = vadd.f32 %v6532, %v6692
        %v6694 = vpop.f32.mrf.mxu0
        %6695 = vmatprep.mubr.bf16.mxu0 %v4277
        %6696 = vmatmul.mubr.bf16.gmra.mxu0 %v4160
        %v6697 = vpop.f32.mrf.mxu0
        %v6698 = vadd.f32 %v6537, %v6697
        %v6699 = vpop.f32.mrf.mxu0
        %v6700 = vpop.f32.mrf.mxu0
        %v6701 = vadd.f32 %v6540, %v6700
        %v6702 = vpop.f32.mrf.mxu0
        %6703 = vmatprep.mubr.bf16.mxu0 %v4280
        %6704 = vmatmul.mubr.bf16.gmra.mxu0 %v4169
        %v6705 = vpop.f32.mrf.mxu0
        %v6706 = vadd.f32 %v6545, %v6705
        %v6707 = vpop.f32.mrf.mxu0
        %v6708 = vpop.f32.mrf.mxu0
        %v6709 = vadd.f32 %v6548, %v6708
        %v6710 = vpop.f32.mrf.mxu0
        %6711 = vmatprep.mubr.bf16.mxu0 %v4283
        %6712 = vmatmul.mubr.bf16.gmra.mxu0 %v4178
        %v6713 = vpop.f32.mrf.mxu0
        %v6714 = vadd.f32 %v6553, %v6713
        %v6715 = vpop.f32.mrf.mxu0
        %v6716 = vpop.f32.mrf.mxu0
        %v6717 = vadd.f32 %v6556, %v6716
        %v6718 = vpop.f32.mrf.mxu0
        %6719 = vmatprep.mubr.bf16.mxu0 %v4286
        %6720 = vmatmul.mubr.bf16.gmra.mxu0 %v4187
        %v6721 = vpop.f32.mrf.mxu0
        %v6722 = vadd.f32 %v6561, %v6721
        %v6723 = vpop.f32.mrf.mxu0
        %v6724 = vpop.f32.mrf.mxu0
        %v6725 = vadd.f32 %v6564, %v6724
        %v6726 = vpop.f32.mrf.mxu0
        %6727 = vdwg.mxu0
        %6728 = vmatprep.subr.bf16.mxu0 0
        %6729 = vmatpush1.bf16.msra.mxu0 %v5610
        %6730 = vmatprep.subr.bf16.mxu0 0
        %6731 = vmatpush1.bf16.msra.mxu0 %v5609
        %6732 = vmatprep.subr.bf16.mxu0 0
        %6733 = vmatpush1.bf16.msra.mxu0 %v5608
        %6734 = vmatprep.subr.bf16.mxu0 0
        %6735 = vmatpush1.bf16.msra.mxu0 %v5607
        %6736 = vmatprep.subr.bf16.mxu0 0
        %6737 = vmatpush1.bf16.msra.mxu0 %v5606
        %6738 = vmatprep.subr.bf16.mxu0 0
        %6739 = vmatpush1.bf16.msra.mxu0 %v5605
        %6740 = vmatprep.subr.bf16.mxu0 0
        %6741 = vmatpush1.bf16.msra.mxu0 %v5604
        %6742 = vmatprep.subr.bf16.mxu0 0
        %6743 = vmatpush1.bf16.msra.mxu0 %v5603
        %6744 = vmatprep.subr.bf16.mxu0 0
        %6745 = vmatpush2.bf16.msra.mxu0 %v5618
        %6746 = vmatprep.subr.bf16.mxu0 0
        %6747 = vmatpush2.bf16.msra.mxu0 %v5617
        %6748 = vmatprep.subr.bf16.mxu0 0
        %6749 = vmatpush2.bf16.msra.mxu0 %v5616
        %6750 = vmatprep.subr.bf16.mxu0 0
        %6751 = vmatpush2.bf16.msra.mxu0 %v5615
        %6752 = vmatprep.subr.bf16.mxu0 0
        %6753 = vmatpush2.bf16.msra.mxu0 %v5614
        %6754 = vmatprep.subr.bf16.mxu0 0
        %6755 = vmatpush2.bf16.msra.mxu0 %v5613
        %6756 = vmatprep.subr.bf16.mxu0 0
        %6757 = vmatpush2.bf16.msra.mxu0 %v5612
        %6758 = vmatprep.subr.bf16.mxu0 0
        %6759 = vmatpush2.bf16.msra.mxu0 %v5611
        %6760 = vmatprep.mubr.bf16.mxu0 %v3723
        %6761 = vmatmul.mubr.bf16.gmra.mxu0 %v3621
        %v6762 = vpop.f32.mrf.mxu0
        %v6763 = vadd.f32 %v6602, %v6762
        %v6764 = vpop.f32.mrf.mxu0
        %v6765 = vpop.f32.mrf.mxu0
        %v6766 = vadd.f32 %v6605, %v6765
        %v6767 = vpop.f32.mrf.mxu0
        %6768 = vmatprep.mubr.bf16.mxu0 %v3733
        %6769 = vmatmul.mubr.bf16.gmra.mxu0 %v3624
        %v6770 = vpop.f32.mrf.mxu0
        %v6771 = vadd.f32 %v6610, %v6770
        %v6772 = vpop.f32.mrf.mxu0
        %v6773 = vpop.f32.mrf.mxu0
        %v6774 = vadd.f32 %v6613, %v6773
        %v6775 = vpop.f32.mrf.mxu0
        %6776 = vmatprep.mubr.bf16.mxu0 %v3743
        %6777 = vmatmul.mubr.bf16.gmra.mxu0 %v3627
        %v6778 = vpop.f32.mrf.mxu0
        %v6779 = vadd.f32 %v6618, %v6778
        %v6780 = vpop.f32.mrf.mxu0
        %v6781 = vpop.f32.mrf.mxu0
        %v6782 = vadd.f32 %v6621, %v6781
        %v6783 = vpop.f32.mrf.mxu0
        %6784 = vmatprep.mubr.bf16.mxu0 %v3753
        %6785 = vmatmul.mubr.bf16.gmra.mxu0 %v3630
        %v6786 = vpop.f32.mrf.mxu0
        %v6787 = vadd.f32 %v6626, %v6786
        %v6788 = vpop.f32.mrf.mxu0
        %v6789 = vpop.f32.mrf.mxu0
        %v6790 = vadd.f32 %v6629, %v6789
        %v6791 = vpop.f32.mrf.mxu0
        %6792 = vmatprep.mubr.bf16.mxu0 %v3763
        %6793 = vmatmul.mubr.bf16.gmra.mxu0 %v3633
        %v6794 = vpop.f32.mrf.mxu0
        %v6795 = vadd.f32 %v6634, %v6794
        %v6796 = vpop.f32.mrf.mxu0
        %v6797 = vpop.f32.mrf.mxu0
        %v6798 = vadd.f32 %v6637, %v6797
        %v6799 = vpop.f32.mrf.mxu0
        %6800 = vmatprep.mubr.bf16.mxu0 %v3773
        %6801 = vmatmul.mubr.bf16.gmra.mxu0 %v3636
        %v6802 = vpop.f32.mrf.mxu0
        %v6803 = vadd.f32 %v6642, %v6802
        %v6804 = vpop.f32.mrf.mxu0
        %v6805 = vpop.f32.mrf.mxu0
        %v6806 = vadd.f32 %v6645, %v6805
        %v6807 = vpop.f32.mrf.mxu0
        %6808 = vmatprep.mubr.bf16.mxu0 %v3783
        %6809 = vmatmul.mubr.bf16.gmra.mxu0 %v3639
        %v6810 = vpop.f32.mrf.mxu0
        %v6811 = vadd.f32 %v6650, %v6810
        %v6812 = vpop.f32.mrf.mxu0
        %v6813 = vpop.f32.mrf.mxu0
        %v6814 = vadd.f32 %v6653, %v6813
        %v6815 = vpop.f32.mrf.mxu0
        %6816 = vmatprep.mubr.bf16.mxu0 %v3793
        %6817 = vmatmul.mubr.bf16.gmra.mxu0 %v3642
        %v6818 = vpop.f32.mrf.mxu0
        %v6819 = vadd.f32 %v6658, %v6818
        %v6820 = vpop.f32.mrf.mxu0
        %v6821 = vpop.f32.mrf.mxu0
        %v6822 = vadd.f32 %v6661, %v6821
        %v6823 = vpop.f32.mrf.mxu0
        %6824 = vmatprep.mubr.bf16.mxu0 %v3803
        %6825 = vmatmul.mubr.bf16.gmra.mxu0 %v3645
        %v6826 = vpop.f32.mrf.mxu0
        %v6827 = vadd.f32 %v6666, %v6826
        %v6828 = vpop.f32.mrf.mxu0
        %v6829 = vpop.f32.mrf.mxu0
        %v6830 = vadd.f32 %v6669, %v6829
        %v6831 = vpop.f32.mrf.mxu0
        %6832 = vmatprep.mubr.bf16.mxu0 %v3813
        %6833 = vmatmul.mubr.bf16.gmra.mxu0 %v3648
        %v6834 = vpop.f32.mrf.mxu0
        %v6835 = vadd.f32 %v6674, %v6834
        %v6836 = vpop.f32.mrf.mxu0
        %v6837 = vpop.f32.mrf.mxu0
        %v6838 = vadd.f32 %v6677, %v6837
        %v6839 = vpop.f32.mrf.mxu0
        %6840 = vmatprep.mubr.bf16.mxu0 %v3823
        %6841 = vmatmul.mubr.bf16.gmra.mxu0 %v3651
        %v6842 = vpop.f32.mrf.mxu0
        %v6843 = vadd.f32 %v6682, %v6842
        %v6844 = vpop.f32.mrf.mxu0
        %v6845 = vpop.f32.mrf.mxu0
        %v6846 = vadd.f32 %v6685, %v6845
        %v6847 = vpop.f32.mrf.mxu0
        %6848 = vmatprep.mubr.bf16.mxu0 %v3833
        %6849 = vmatmul.mubr.bf16.gmra.mxu0 %v3654
        %v6850 = vpop.f32.mrf.mxu0
        %v6851 = vadd.f32 %v6690, %v6850
        %v6852 = vpop.f32.mrf.mxu0
        %v6853 = vpop.f32.mrf.mxu0
        %v6854 = vadd.f32 %v6693, %v6853
        %v6855 = vpop.f32.mrf.mxu0
        %6856 = vmatprep.mubr.bf16.mxu0 %v3843
        %6857 = vmatmul.mubr.bf16.gmra.mxu0 %v3657
        %v6858 = vpop.f32.mrf.mxu0
        %v6859 = vadd.f32 %v6698, %v6858
        %v6860 = vpop.f32.mrf.mxu0
        %v6861 = vpop.f32.mrf.mxu0
        %v6862 = vadd.f32 %v6701, %v6861
        %v6863 = vpop.f32.mrf.mxu0
        %6864 = vmatprep.mubr.bf16.mxu0 %v3853
        %6865 = vmatmul.mubr.bf16.gmra.mxu0 %v3660
        %v6866 = vpop.f32.mrf.mxu0
        %v6867 = vadd.f32 %v6706, %v6866
        %v6868 = vpop.f32.mrf.mxu0
        %v6869 = vpop.f32.mrf.mxu0
        %v6870 = vadd.f32 %v6709, %v6869
        %v6871 = vpop.f32.mrf.mxu0
        %6872 = vmatprep.mubr.bf16.mxu0 %v3863
        %6873 = vmatmul.mubr.bf16.gmra.mxu0 %v3663
        %v6874 = vpop.f32.mrf.mxu0
        %v6875 = vadd.f32 %v6714, %v6874
        %v6876 = vpop.f32.mrf.mxu0
        %v6877 = vpop.f32.mrf.mxu0
        %v6878 = vadd.f32 %v6717, %v6877
        %v6879 = vpop.f32.mrf.mxu0
        %6880 = vmatprep.mubr.bf16.mxu0 %v3873
        %6881 = vmatmul.mubr.bf16.gmra.mxu0 %v3666
        %v6882 = vpop.f32.mrf.mxu0
        %v6883 = vadd.f32 %v6722, %v6882
        %v6884 = vpop.f32.mrf.mxu0
        %v6885 = vpop.f32.mrf.mxu0
        %v6886 = vadd.f32 %v6725, %v6885
        %v6887 = vpop.f32.mrf.mxu0
        %6888 = vdwg.mxu0
        %6889 = vmatprep.subr.bf16.mxu0 0
        %6890 = vmatpush1.bf16.msra.mxu0 %v5626
        %6891 = vmatprep.subr.bf16.mxu0 0
        %6892 = vmatpush1.bf16.msra.mxu0 %v5625
        %6893 = vmatprep.subr.bf16.mxu0 0
        %6894 = vmatpush1.bf16.msra.mxu0 %v5624
        %6895 = vmatprep.subr.bf16.mxu0 0
        %6896 = vmatpush1.bf16.msra.mxu0 %v5623
        %6897 = vmatprep.subr.bf16.mxu0 0
        %6898 = vmatpush1.bf16.msra.mxu0 %v5622
        %6899 = vmatprep.subr.bf16.mxu0 0
        %6900 = vmatpush1.bf16.msra.mxu0 %v5621
        %6901 = vmatprep.subr.bf16.mxu0 0
        %6902 = vmatpush1.bf16.msra.mxu0 %v5620
        %6903 = vmatprep.subr.bf16.mxu0 0
        %6904 = vmatpush1.bf16.msra.mxu0 %v5619
        %6905 = vmatprep.subr.bf16.mxu0 0
        %6906 = vmatpush2.bf16.msra.mxu0 %v5634
        %6907 = vmatprep.subr.bf16.mxu0 0
        %6908 = vmatpush2.bf16.msra.mxu0 %v5633
        %6909 = vmatprep.subr.bf16.mxu0 0
        %6910 = vmatpush2.bf16.msra.mxu0 %v5632
        %6911 = vmatprep.subr.bf16.mxu0 0
        %6912 = vmatpush2.bf16.msra.mxu0 %v5631
        %6913 = vmatprep.subr.bf16.mxu0 0
        %6914 = vmatpush2.bf16.msra.mxu0 %v5630
        %6915 = vmatprep.subr.bf16.mxu0 0
        %6916 = vmatpush2.bf16.msra.mxu0 %v5629
        %6917 = vmatprep.subr.bf16.mxu0 0
        %6918 = vmatpush2.bf16.msra.mxu0 %v5628
        %6919 = vmatprep.subr.bf16.mxu0 0
        %6920 = vmatpush2.bf16.msra.mxu0 %v5627
        %6921 = vmatprep.mubr.bf16.mxu0 %v4061
        %6922 = vmatmul.mubr.bf16.gmra.mxu0 %v3962
        %v6923 = vpop.f32.mrf.mxu0
        %v6924 = vadd.f32 %v6763, %v6923
        %v6925 = vpop.f32.mrf.mxu0
        %v6926 = vpop.f32.mrf.mxu0
        %v6927 = vadd.f32 %v6766, %v6926
        %v6928 = vpop.f32.mrf.mxu0
        %6929 = vmatprep.mubr.bf16.mxu0 %v4070
        %6930 = vmatmul.mubr.bf16.gmra.mxu0 %v3965
        %v6931 = vpop.f32.mrf.mxu0
        %v6932 = vadd.f32 %v6771, %v6931
        %v6933 = vpop.f32.mrf.mxu0
        %v6934 = vpop.f32.mrf.mxu0
        %v6935 = vadd.f32 %v6774, %v6934
        %v6936 = vpop.f32.mrf.mxu0
        %6937 = vmatprep.mubr.bf16.mxu0 %v4079
        %6938 = vmatmul.mubr.bf16.gmra.mxu0 %v3968
        %v6939 = vpop.f32.mrf.mxu0
        %v6940 = vadd.f32 %v6779, %v6939
        %v6941 = vpop.f32.mrf.mxu0
        %v6942 = vpop.f32.mrf.mxu0
        %v6943 = vadd.f32 %v6782, %v6942
        %v6944 = vpop.f32.mrf.mxu0
        %6945 = vmatprep.mubr.bf16.mxu0 %v4088
        %6946 = vmatmul.mubr.bf16.gmra.mxu0 %v3971
        %v6947 = vpop.f32.mrf.mxu0
        %v6948 = vadd.f32 %v6787, %v6947
        %v6949 = vpop.f32.mrf.mxu0
        %v6950 = vpop.f32.mrf.mxu0
        %v6951 = vadd.f32 %v6790, %v6950
        %v6952 = vpop.f32.mrf.mxu0
        %6953 = vmatprep.mubr.bf16.mxu0 %v4097
        %6954 = vmatmul.mubr.bf16.gmra.mxu0 %v3974
        %v6955 = vpop.f32.mrf.mxu0
        %v6956 = vadd.f32 %v6795, %v6955
        %v6957 = vpop.f32.mrf.mxu0
        %v6958 = vpop.f32.mrf.mxu0
        %v6959 = vadd.f32 %v6798, %v6958
        %v6960 = vpop.f32.mrf.mxu0
        %6961 = vmatprep.mubr.bf16.mxu0 %v4106
        %6962 = vmatmul.mubr.bf16.gmra.mxu0 %v3977
        %v6963 = vpop.f32.mrf.mxu0
        %v6964 = vadd.f32 %v6803, %v6963
        %v6965 = vpop.f32.mrf.mxu0
        %v6966 = vpop.f32.mrf.mxu0
        %v6967 = vadd.f32 %v6806, %v6966
        %v6968 = vpop.f32.mrf.mxu0
        %6969 = vmatprep.mubr.bf16.mxu0 %v4115
        %6970 = vmatmul.mubr.bf16.gmra.mxu0 %v3980
        %v6971 = vpop.f32.mrf.mxu0
        %v6972 = vadd.f32 %v6811, %v6971
        %v6973 = vpop.f32.mrf.mxu0
        %v6974 = vpop.f32.mrf.mxu0
        %v6975 = vadd.f32 %v6814, %v6974
        %v6976 = vpop.f32.mrf.mxu0
        %6977 = vmatprep.mubr.bf16.mxu0 %v4124
        %6978 = vmatmul.mubr.bf16.gmra.mxu0 %v3983
        %v6979 = vpop.f32.mrf.mxu0
        %v6980 = vadd.f32 %v6819, %v6979
        %v6981 = vpop.f32.mrf.mxu0
        %v6982 = vpop.f32.mrf.mxu0
        %v6983 = vadd.f32 %v6822, %v6982
        %v6984 = vpop.f32.mrf.mxu0
        %6985 = vmatprep.mubr.bf16.mxu0 %v4133
        %6986 = vmatmul.mubr.bf16.gmra.mxu0 %v3986
        %v6987 = vpop.f32.mrf.mxu0
        %v6988 = vadd.f32 %v6827, %v6987
        %v6989 = vpop.f32.mrf.mxu0
        %v6990 = vpop.f32.mrf.mxu0
        %v6991 = vadd.f32 %v6830, %v6990
        %v6992 = vpop.f32.mrf.mxu0
        %6993 = vmatprep.mubr.bf16.mxu0 %v4142
        %6994 = vmatmul.mubr.bf16.gmra.mxu0 %v3989
        %v6995 = vpop.f32.mrf.mxu0
        %v6996 = vadd.f32 %v6835, %v6995
        %v6997 = vpop.f32.mrf.mxu0
        %v6998 = vpop.f32.mrf.mxu0
        %v6999 = vadd.f32 %v6838, %v6998
        %v7000 = vpop.f32.mrf.mxu0
        %7001 = vmatprep.mubr.bf16.mxu0 %v4151
        %7002 = vmatmul.mubr.bf16.gmra.mxu0 %v3992
        %v7003 = vpop.f32.mrf.mxu0
        %v7004 = vadd.f32 %v6843, %v7003
        %v7005 = vpop.f32.mrf.mxu0
        %v7006 = vpop.f32.mrf.mxu0
        %v7007 = vadd.f32 %v6846, %v7006
        %v7008 = vpop.f32.mrf.mxu0
        %7009 = vmatprep.mubr.bf16.mxu0 %v4160
        %7010 = vmatmul.mubr.bf16.gmra.mxu0 %v3995
        %v7011 = vpop.f32.mrf.mxu0
        %v7012 = vadd.f32 %v6851, %v7011
        %v7013 = vpop.f32.mrf.mxu0
        %v7014 = vpop.f32.mrf.mxu0
        %v7015 = vadd.f32 %v6854, %v7014
        %v7016 = vpop.f32.mrf.mxu0
        %7017 = vmatprep.mubr.bf16.mxu0 %v4169
        %7018 = vmatmul.mubr.bf16.gmra.mxu0 %v3998
        %v7019 = vpop.f32.mrf.mxu0
        %v7020 = vadd.f32 %v6859, %v7019
        %v7021 = vpop.f32.mrf.mxu0
        %v7022 = vpop.f32.mrf.mxu0
        %v7023 = vadd.f32 %v6862, %v7022
        %v7024 = vpop.f32.mrf.mxu0
        %7025 = vmatprep.mubr.bf16.mxu0 %v4178
        %7026 = vmatmul.mubr.bf16.gmra.mxu0 %v4001
        %v7027 = vpop.f32.mrf.mxu0
        %v7028 = vadd.f32 %v6867, %v7027
        %v7029 = vpop.f32.mrf.mxu0
        %v7030 = vpop.f32.mrf.mxu0
        %v7031 = vadd.f32 %v6870, %v7030
        %v7032 = vpop.f32.mrf.mxu0
        %7033 = vmatprep.mubr.bf16.mxu0 %v4187
        %7034 = vmatmul.mubr.bf16.gmra.mxu0 %v4004
        %v7035 = vpop.f32.mrf.mxu0
        %v7036 = vadd.f32 %v6875, %v7035
        %v7037 = vpop.f32.mrf.mxu0
        %v7038 = vpop.f32.mrf.mxu0
        %v7039 = vadd.f32 %v6878, %v7038
        %v7040 = vpop.f32.mrf.mxu0
        %7041 = vmatprep.mubr.bf16.mxu0 %v4196
        %7042 = vmatmul.mubr.bf16.gmra.mxu0 %v4007
        %v7043 = vpop.f32.mrf.mxu0
        %v7044 = vadd.f32 %v6883, %v7043
        %v7045 = vpop.f32.mrf.mxu0
        %v7046 = vpop.f32.mrf.mxu0
        %v7047 = vadd.f32 %v6886, %v7046
        %v7048 = vpop.f32.mrf.mxu0
        %7049 = vdwg.mxu0
        %7050 = vmatprep.subr.bf16.mxu0 0
        %7051 = vmatpush1.bf16.msra.mxu0 %v5642
        %7052 = vmatprep.subr.bf16.mxu0 0
        %7053 = vmatpush1.bf16.msra.mxu0 %v5641
        %7054 = vmatprep.subr.bf16.mxu0 0
        %7055 = vmatpush1.bf16.msra.mxu0 %v5640
        %7056 = vmatprep.subr.bf16.mxu0 0
        %7057 = vmatpush1.bf16.msra.mxu0 %v5639
        %7058 = vmatprep.subr.bf16.mxu0 0
        %7059 = vmatpush1.bf16.msra.mxu0 %v5638
        %7060 = vmatprep.subr.bf16.mxu0 0
        %7061 = vmatpush1.bf16.msra.mxu0 %v5637
        %7062 = vmatprep.subr.bf16.mxu0 0
        %7063 = vmatpush1.bf16.msra.mxu0 %v5636
        %7064 = vmatprep.subr.bf16.mxu0 0
        %7065 = vmatpush1.bf16.msra.mxu0 %v5635
        %7066 = vmatprep.subr.bf16.mxu0 0
        %7067 = vmatpush2.bf16.msra.mxu0 %v5650
        %7068 = vmatprep.subr.bf16.mxu0 0
        %7069 = vmatpush2.bf16.msra.mxu0 %v5649
        %7070 = vmatprep.subr.bf16.mxu0 0
        %7071 = vmatpush2.bf16.msra.mxu0 %v5648
        %7072 = vmatprep.subr.bf16.mxu0 0
        %7073 = vmatpush2.bf16.msra.mxu0 %v5647
        %7074 = vmatprep.subr.bf16.mxu0 0
        %7075 = vmatpush2.bf16.msra.mxu0 %v5646
        %7076 = vmatprep.subr.bf16.mxu0 0
        %7077 = vmatpush2.bf16.msra.mxu0 %v5645
        %7078 = vmatprep.subr.bf16.mxu0 0
        %7079 = vmatpush2.bf16.msra.mxu0 %v5644
        %7080 = vmatprep.subr.bf16.mxu0 0
        %7081 = vmatpush2.bf16.msra.mxu0 %v5643
        %7082 = vmatprep.mubr.bf16.mxu0 %v3624
        %7083 = vmatmul.mubr.bf16.gmra.mxu0 %v4244
        %v7084 = vpop.f32.mrf.mxu0
        %v7085 = vadd.f32 %v6924, %v7084
        %v7086 = vpop.f32.mrf.mxu0
        %v7087 = vpop.f32.mrf.mxu0
        %v7088 = vadd.f32 %v6927, %v7087
        %v7089 = vpop.f32.mrf.mxu0
        %7090 = vmatprep.mubr.bf16.mxu0 %v3627
        %7091 = vmatmul.mubr.bf16.gmra.mxu0 %v4247
        %v7092 = vpop.f32.mrf.mxu0
        %v7093 = vadd.f32 %v6932, %v7092
        %v7094 = vpop.f32.mrf.mxu0
        %v7095 = vpop.f32.mrf.mxu0
        %v7096 = vadd.f32 %v6935, %v7095
        %v7097 = vpop.f32.mrf.mxu0
        %7098 = vmatprep.mubr.bf16.mxu0 %v3630
        %7099 = vmatmul.mubr.bf16.gmra.mxu0 %v4250
        %v7100 = vpop.f32.mrf.mxu0
        %v7101 = vadd.f32 %v6940, %v7100
        %v7102 = vpop.f32.mrf.mxu0
        %v7103 = vpop.f32.mrf.mxu0
        %v7104 = vadd.f32 %v6943, %v7103
        %v7105 = vpop.f32.mrf.mxu0
        %7106 = vmatprep.mubr.bf16.mxu0 %v3633
        %7107 = vmatmul.mubr.bf16.gmra.mxu0 %v4253
        %v7108 = vpop.f32.mrf.mxu0
        %v7109 = vadd.f32 %v6948, %v7108
        %v7110 = vpop.f32.mrf.mxu0
        %v7111 = vpop.f32.mrf.mxu0
        %v7112 = vadd.f32 %v6951, %v7111
        %v7113 = vpop.f32.mrf.mxu0
        %7114 = vmatprep.mubr.bf16.mxu0 %v3636
        %7115 = vmatmul.mubr.bf16.gmra.mxu0 %v4256
        %v7116 = vpop.f32.mrf.mxu0
        %v7117 = vadd.f32 %v6956, %v7116
        %v7118 = vpop.f32.mrf.mxu0
        %v7119 = vpop.f32.mrf.mxu0
        %v7120 = vadd.f32 %v6959, %v7119
        %v7121 = vpop.f32.mrf.mxu0
        %7122 = vmatprep.mubr.bf16.mxu0 %v3639
        %7123 = vmatmul.mubr.bf16.gmra.mxu0 %v4259
        %v7124 = vpop.f32.mrf.mxu0
        %v7125 = vadd.f32 %v6964, %v7124
        %v7126 = vpop.f32.mrf.mxu0
        %v7127 = vpop.f32.mrf.mxu0
        %v7128 = vadd.f32 %v6967, %v7127
        %v7129 = vpop.f32.mrf.mxu0
        %7130 = vmatprep.mubr.bf16.mxu0 %v3642
        %7131 = vmatmul.mubr.bf16.gmra.mxu0 %v4262
        %v7132 = vpop.f32.mrf.mxu0
        %v7133 = vadd.f32 %v6972, %v7132
        %v7134 = vpop.f32.mrf.mxu0
        %v7135 = vpop.f32.mrf.mxu0
        %v7136 = vadd.f32 %v6975, %v7135
        %v7137 = vpop.f32.mrf.mxu0
        %7138 = vmatprep.mubr.bf16.mxu0 %v3645
        %7139 = vmatmul.mubr.bf16.gmra.mxu0 %v4265
        %v7140 = vpop.f32.mrf.mxu0
        %v7141 = vadd.f32 %v6980, %v7140
        %v7142 = vpop.f32.mrf.mxu0
        %v7143 = vpop.f32.mrf.mxu0
        %v7144 = vadd.f32 %v6983, %v7143
        %v7145 = vpop.f32.mrf.mxu0
        %7146 = vmatprep.mubr.bf16.mxu0 %v3648
        %7147 = vmatmul.mubr.bf16.gmra.mxu0 %v4268
        %v7148 = vpop.f32.mrf.mxu0
        %v7149 = vadd.f32 %v6988, %v7148
        %v7150 = vpop.f32.mrf.mxu0
        %v7151 = vpop.f32.mrf.mxu0
        %v7152 = vadd.f32 %v6991, %v7151
        %v7153 = vpop.f32.mrf.mxu0
        %7154 = vmatprep.mubr.bf16.mxu0 %v3651
        %7155 = vmatmul.mubr.bf16.gmra.mxu0 %v4271
        %v7156 = vpop.f32.mrf.mxu0
        %v7157 = vadd.f32 %v6996, %v7156
        %v7158 = vpop.f32.mrf.mxu0
        %v7159 = vpop.f32.mrf.mxu0
        %v7160 = vadd.f32 %v6999, %v7159
        %v7161 = vpop.f32.mrf.mxu0
        %7162 = vmatprep.mubr.bf16.mxu0 %v3654
        %7163 = vmatmul.mubr.bf16.gmra.mxu0 %v4274
        %v7164 = vpop.f32.mrf.mxu0
        %v7165 = vadd.f32 %v7004, %v7164
        %v7166 = vpop.f32.mrf.mxu0
        %v7167 = vpop.f32.mrf.mxu0
        %v7168 = vadd.f32 %v7007, %v7167
        %v7169 = vpop.f32.mrf.mxu0
        %7170 = vmatprep.mubr.bf16.mxu0 %v3657
        %7171 = vmatmul.mubr.bf16.gmra.mxu0 %v4277
        %v7172 = vpop.f32.mrf.mxu0
        %v7173 = vadd.f32 %v7012, %v7172
        %v7174 = vpop.f32.mrf.mxu0
        %v7175 = vpop.f32.mrf.mxu0
        %v7176 = vadd.f32 %v7015, %v7175
        %v7177 = vpop.f32.mrf.mxu0
        %7178 = vmatprep.mubr.bf16.mxu0 %v3660
        %7179 = vmatmul.mubr.bf16.gmra.mxu0 %v4280
        %v7180 = vpop.f32.mrf.mxu0
        %v7181 = vadd.f32 %v7020, %v7180
        %v7182 = vpop.f32.mrf.mxu0
        %v7183 = vpop.f32.mrf.mxu0
        %v7184 = vadd.f32 %v7023, %v7183
        %v7185 = vpop.f32.mrf.mxu0
        %7186 = vmatprep.mubr.bf16.mxu0 %v3663
        %7187 = vmatmul.mubr.bf16.gmra.mxu0 %v4283
        %v7188 = vpop.f32.mrf.mxu0
        %v7189 = vadd.f32 %v7028, %v7188
        %v7190 = vpop.f32.mrf.mxu0
        %v7191 = vpop.f32.mrf.mxu0
        %v7192 = vadd.f32 %v7031, %v7191
        %v7193 = vpop.f32.mrf.mxu0
        %7194 = vmatprep.mubr.bf16.mxu0 %v3666
        %7195 = vmatmul.mubr.bf16.gmra.mxu0 %v4286
        %v7196 = vpop.f32.mrf.mxu0
        %v7197 = vadd.f32 %v7036, %v7196
        %v7198 = vpop.f32.mrf.mxu0
        %v7199 = vpop.f32.mrf.mxu0
        %v7200 = vadd.f32 %v7039, %v7199
        %v7201 = vpop.f32.mrf.mxu0
        %7202 = vmatprep.mubr.bf16.mxu0 %v3669
        %7203 = vmatmul.mubr.bf16.gmra.mxu0 %v4289
        %v7204 = vpop.f32.mrf.mxu0
        %v7205 = vadd.f32 %v7044, %v7204
        %v7206 = vpop.f32.mrf.mxu0
        %v7207 = vpop.f32.mrf.mxu0
        %v7208 = vadd.f32 %v7047, %v7207
        %v7209 = vpop.f32.mrf.mxu0
        %7210 = vdwg.mxu0
        %7211 = vmatprep.subr.bf16.mxu0 0
        %7212 = vmatpush1.bf16.msra.mxu0 %v5658
        %7213 = vmatprep.subr.bf16.mxu0 0
        %7214 = vmatpush1.bf16.msra.mxu0 %v5657
        %7215 = vmatprep.subr.bf16.mxu0 0
        %7216 = vmatpush1.bf16.msra.mxu0 %v5656
        %7217 = vmatprep.subr.bf16.mxu0 0
        %7218 = vmatpush1.bf16.msra.mxu0 %v5655
        %7219 = vmatprep.subr.bf16.mxu0 0
        %7220 = vmatpush1.bf16.msra.mxu0 %v5654
        %7221 = vmatprep.subr.bf16.mxu0 0
        %7222 = vmatpush1.bf16.msra.mxu0 %v5653
        %7223 = vmatprep.subr.bf16.mxu0 0
        %7224 = vmatpush1.bf16.msra.mxu0 %v5652
        %7225 = vmatprep.subr.bf16.mxu0 0
        %7226 = vmatpush1.bf16.msra.mxu0 %v5651
        %7227 = vmatprep.subr.bf16.mxu0 0
        %7228 = vmatpush2.bf16.msra.mxu0 %v5666
        %7229 = vmatprep.subr.bf16.mxu0 0
        %7230 = vmatpush2.bf16.msra.mxu0 %v5665
        %7231 = vmatprep.subr.bf16.mxu0 0
        %7232 = vmatpush2.bf16.msra.mxu0 %v5664
        %7233 = vmatprep.subr.bf16.mxu0 0
        %7234 = vmatpush2.bf16.msra.mxu0 %v5663
        %7235 = vmatprep.subr.bf16.mxu0 0
        %7236 = vmatpush2.bf16.msra.mxu0 %v5662
        %7237 = vmatprep.subr.bf16.mxu0 0
        %7238 = vmatpush2.bf16.msra.mxu0 %v5661
        %7239 = vmatprep.subr.bf16.mxu0 0
        %7240 = vmatpush2.bf16.msra.mxu0 %v5660
        %7241 = vmatprep.subr.bf16.mxu0 0
        %7242 = vmatpush2.bf16.msra.mxu0 %v5659
        %7243 = vmatprep.mubr.bf16.mxu0 %v3965
        %7244 = vmatmul.mubr.bf16.gmra.mxu0 %v3733
        %v7245 = vpop.f32.mrf.mxu0
        %v7246 = vadd.f32 %v7085, %v7245
        %v7247 = vpop.f32.mrf.mxu0
        %v7248 = vpop.f32.mrf.mxu0
        %v7249 = vadd.f32 %v7088, %v7248
        %v7250 = vpop.f32.mrf.mxu0
        %7251 = vmatprep.mubr.bf16.mxu0 %v3968
        %7252 = vmatmul.mubr.bf16.gmra.mxu0 %v3743
        %v7253 = vpop.f32.mrf.mxu0
        %v7254 = vadd.f32 %v7093, %v7253
        %v7255 = vpop.f32.mrf.mxu0
        %v7256 = vpop.f32.mrf.mxu0
        %v7257 = vadd.f32 %v7096, %v7256
        %v7258 = vpop.f32.mrf.mxu0
        %7259 = vmatprep.mubr.bf16.mxu0 %v3971
        %7260 = vmatmul.mubr.bf16.gmra.mxu0 %v3753
        %v7261 = vpop.f32.mrf.mxu0
        %v7262 = vadd.f32 %v7101, %v7261
        %v7263 = vpop.f32.mrf.mxu0
        %v7264 = vpop.f32.mrf.mxu0
        %v7265 = vadd.f32 %v7104, %v7264
        %v7266 = vpop.f32.mrf.mxu0
        %7267 = vmatprep.mubr.bf16.mxu0 %v3974
        %7268 = vmatmul.mubr.bf16.gmra.mxu0 %v3763
        %v7269 = vpop.f32.mrf.mxu0
        %v7270 = vadd.f32 %v7109, %v7269
        %v7271 = vpop.f32.mrf.mxu0
        %v7272 = vpop.f32.mrf.mxu0
        %v7273 = vadd.f32 %v7112, %v7272
        %v7274 = vpop.f32.mrf.mxu0
        %7275 = vmatprep.mubr.bf16.mxu0 %v3977
        %7276 = vmatmul.mubr.bf16.gmra.mxu0 %v3773
        %v7277 = vpop.f32.mrf.mxu0
        %v7278 = vadd.f32 %v7117, %v7277
        %v7279 = vpop.f32.mrf.mxu0
        %v7280 = vpop.f32.mrf.mxu0
        %v7281 = vadd.f32 %v7120, %v7280
        %v7282 = vpop.f32.mrf.mxu0
        %7283 = vmatprep.mubr.bf16.mxu0 %v3980
        %7284 = vmatmul.mubr.bf16.gmra.mxu0 %v3783
        %v7285 = vpop.f32.mrf.mxu0
        %v7286 = vadd.f32 %v7125, %v7285
        %v7287 = vpop.f32.mrf.mxu0
        %v7288 = vpop.f32.mrf.mxu0
        %v7289 = vadd.f32 %v7128, %v7288
        %v7290 = vpop.f32.mrf.mxu0
        %7291 = vmatprep.mubr.bf16.mxu0 %v3983
        %7292 = vmatmul.mubr.bf16.gmra.mxu0 %v3793
        %v7293 = vpop.f32.mrf.mxu0
        %v7294 = vadd.f32 %v7133, %v7293
        %v7295 = vpop.f32.mrf.mxu0
        %v7296 = vpop.f32.mrf.mxu0
        %v7297 = vadd.f32 %v7136, %v7296
        %v7298 = vpop.f32.mrf.mxu0
        %7299 = vmatprep.mubr.bf16.mxu0 %v3986
        %7300 = vmatmul.mubr.bf16.gmra.mxu0 %v3803
        %v7301 = vpop.f32.mrf.mxu0
        %v7302 = vadd.f32 %v7141, %v7301
        %v7303 = vpop.f32.mrf.mxu0
        %v7304 = vpop.f32.mrf.mxu0
        %v7305 = vadd.f32 %v7144, %v7304
        %v7306 = vpop.f32.mrf.mxu0
        %7307 = vmatprep.mubr.bf16.mxu0 %v3989
        %7308 = vmatmul.mubr.bf16.gmra.mxu0 %v3813
        %v7309 = vpop.f32.mrf.mxu0
        %v7310 = vadd.f32 %v7149, %v7309
        %v7311 = vpop.f32.mrf.mxu0
        %v7312 = vpop.f32.mrf.mxu0
        %v7313 = vadd.f32 %v7152, %v7312
        %v7314 = vpop.f32.mrf.mxu0
        %7315 = vmatprep.mubr.bf16.mxu0 %v3992
        %7316 = vmatmul.mubr.bf16.gmra.mxu0 %v3823
        %v7317 = vpop.f32.mrf.mxu0
        %v7318 = vadd.f32 %v7157, %v7317
        %v7319 = vpop.f32.mrf.mxu0
        %v7320 = vpop.f32.mrf.mxu0
        %v7321 = vadd.f32 %v7160, %v7320
        %v7322 = vpop.f32.mrf.mxu0
        %7323 = vmatprep.mubr.bf16.mxu0 %v3995
        %7324 = vmatmul.mubr.bf16.gmra.mxu0 %v3833
        %v7325 = vpop.f32.mrf.mxu0
        %v7326 = vadd.f32 %v7165, %v7325
        %v7327 = vpop.f32.mrf.mxu0
        %v7328 = vpop.f32.mrf.mxu0
        %v7329 = vadd.f32 %v7168, %v7328
        %v7330 = vpop.f32.mrf.mxu0
        %7331 = vmatprep.mubr.bf16.mxu0 %v3998
        %7332 = vmatmul.mubr.bf16.gmra.mxu0 %v3843
        %v7333 = vpop.f32.mrf.mxu0
        %v7334 = vadd.f32 %v7173, %v7333
        %v7335 = vpop.f32.mrf.mxu0
        %v7336 = vpop.f32.mrf.mxu0
        %v7337 = vadd.f32 %v7176, %v7336
        %v7338 = vpop.f32.mrf.mxu0
        %7339 = vmatprep.mubr.bf16.mxu0 %v4001
        %7340 = vmatmul.mubr.bf16.gmra.mxu0 %v3853
        %v7341 = vpop.f32.mrf.mxu0
        %v7342 = vadd.f32 %v7181, %v7341
        %v7343 = vpop.f32.mrf.mxu0
        %v7344 = vpop.f32.mrf.mxu0
        %v7345 = vadd.f32 %v7184, %v7344
        %v7346 = vpop.f32.mrf.mxu0
        %7347 = vmatprep.mubr.bf16.mxu0 %v4004
        %7348 = vmatmul.mubr.bf16.gmra.mxu0 %v3863
        %v7349 = vpop.f32.mrf.mxu0
        %v7350 = vadd.f32 %v7189, %v7349
        %v7351 = vpop.f32.mrf.mxu0
        %v7352 = vpop.f32.mrf.mxu0
        %v7353 = vadd.f32 %v7192, %v7352
        %v7354 = vpop.f32.mrf.mxu0
        %7355 = vmatprep.mubr.bf16.mxu0 %v4007
        %7356 = vmatmul.mubr.bf16.gmra.mxu0 %v3873
        %v7357 = vpop.f32.mrf.mxu0
        %v7358 = vadd.f32 %v7197, %v7357
        %v7359 = vpop.f32.mrf.mxu0
        %v7360 = vpop.f32.mrf.mxu0
        %v7361 = vadd.f32 %v7200, %v7360
        %v7362 = vpop.f32.mrf.mxu0
        %7363 = vmatprep.mubr.bf16.mxu0 %v4010
        %7364 = vmatmul.mubr.bf16.gmra.mxu0 %v3883
        %v7365 = vpop.f32.mrf.mxu0
        %v7366 = vadd.f32 %v7205, %v7365
        %v7367 = vpop.f32.mrf.mxu0
        %v7368 = vpop.f32.mrf.mxu0
        %v7369 = vadd.f32 %v7208, %v7368
        %v7370 = vpop.f32.mrf.mxu0
        %7371 = vdwg.mxu0
        %7372 = vmatprep.subr.bf16.mxu0 0
        %7373 = vmatpush1.bf16.msra.mxu0 %v5674
        %7374 = vmatprep.subr.bf16.mxu0 0
        %7375 = vmatpush1.bf16.msra.mxu0 %v5673
        %7376 = vmatprep.subr.bf16.mxu0 0
        %7377 = vmatpush1.bf16.msra.mxu0 %v5672
        %7378 = vmatprep.subr.bf16.mxu0 0
        %7379 = vmatpush1.bf16.msra.mxu0 %v5671
        %7380 = vmatprep.subr.bf16.mxu0 0
        %7381 = vmatpush1.bf16.msra.mxu0 %v5670
        %7382 = vmatprep.subr.bf16.mxu0 0
        %7383 = vmatpush1.bf16.msra.mxu0 %v5669
        %7384 = vmatprep.subr.bf16.mxu0 0
        %7385 = vmatpush1.bf16.msra.mxu0 %v5668
        %7386 = vmatprep.subr.bf16.mxu0 0
        %7387 = vmatpush1.bf16.msra.mxu0 %v5667
        %7388 = vmatprep.subr.bf16.mxu0 0
        %7389 = vmatpush2.bf16.msra.mxu0 %v5682
        %7390 = vmatprep.subr.bf16.mxu0 0
        %7391 = vmatpush2.bf16.msra.mxu0 %v5681
        %7392 = vmatprep.subr.bf16.mxu0 0
        %7393 = vmatpush2.bf16.msra.mxu0 %v5680
        %7394 = vmatprep.subr.bf16.mxu0 0
        %7395 = vmatpush2.bf16.msra.mxu0 %v5679
        %7396 = vmatprep.subr.bf16.mxu0 0
        %7397 = vmatpush2.bf16.msra.mxu0 %v5678
        %7398 = vmatprep.subr.bf16.mxu0 0
        %7399 = vmatpush2.bf16.msra.mxu0 %v5677
        %7400 = vmatprep.subr.bf16.mxu0 0
        %7401 = vmatpush2.bf16.msra.mxu0 %v5676
        %7402 = vmatprep.subr.bf16.mxu0 0
        %7403 = vmatpush2.bf16.msra.mxu0 %v5675
        %7404 = vmatprep.mubr.bf16.mxu0 %v4247
        %7405 = vmatmul.mubr.bf16.gmra.mxu0 %v4070
        %v7406 = vpop.f32.mrf.mxu0
        %v7407 = vadd.f32 %v7246, %v7406
        %v7408 = vpop.f32.mrf.mxu0
        %v7409 = vpop.f32.mrf.mxu0
        %v7410 = vadd.f32 %v7249, %v7409
        %v7411 = vpop.f32.mrf.mxu0
        %7412 = vmatprep.mubr.bf16.mxu0 %v4250
        %7413 = vmatmul.mubr.bf16.gmra.mxu0 %v4079
        %v7414 = vpop.f32.mrf.mxu0
        %v7415 = vadd.f32 %v7254, %v7414
        %v7416 = vpop.f32.mrf.mxu0
        %v7417 = vpop.f32.mrf.mxu0
        %v7418 = vadd.f32 %v7257, %v7417
        %v7419 = vpop.f32.mrf.mxu0
        %7420 = vmatprep.mubr.bf16.mxu0 %v4253
        %7421 = vmatmul.mubr.bf16.gmra.mxu0 %v4088
        %v7422 = vpop.f32.mrf.mxu0
        %v7423 = vadd.f32 %v7262, %v7422
        %v7424 = vpop.f32.mrf.mxu0
        %v7425 = vpop.f32.mrf.mxu0
        %v7426 = vadd.f32 %v7265, %v7425
        %v7427 = vpop.f32.mrf.mxu0
        %7428 = vmatprep.mubr.bf16.mxu0 %v4256
        %7429 = vmatmul.mubr.bf16.gmra.mxu0 %v4097
        %v7430 = vpop.f32.mrf.mxu0
        %v7431 = vadd.f32 %v7270, %v7430
        %v7432 = vpop.f32.mrf.mxu0
        %v7433 = vpop.f32.mrf.mxu0
        %v7434 = vadd.f32 %v7273, %v7433
        %v7435 = vpop.f32.mrf.mxu0
        %7436 = vmatprep.mubr.bf16.mxu0 %v4259
        %7437 = vmatmul.mubr.bf16.gmra.mxu0 %v4106
        %v7438 = vpop.f32.mrf.mxu0
        %v7439 = vadd.f32 %v7278, %v7438
        %v7440 = vpop.f32.mrf.mxu0
        %v7441 = vpop.f32.mrf.mxu0
        %v7442 = vadd.f32 %v7281, %v7441
        %v7443 = vpop.f32.mrf.mxu0
        %7444 = vmatprep.mubr.bf16.mxu0 %v4262
        %7445 = vmatmul.mubr.bf16.gmra.mxu0 %v4115
        %v7446 = vpop.f32.mrf.mxu0
        %v7447 = vadd.f32 %v7286, %v7446
        %v7448 = vpop.f32.mrf.mxu0
        %v7449 = vpop.f32.mrf.mxu0
        %v7450 = vadd.f32 %v7289, %v7449
        %v7451 = vpop.f32.mrf.mxu0
        %7452 = vmatprep.mubr.bf16.mxu0 %v4265
        %7453 = vmatmul.mubr.bf16.gmra.mxu0 %v4124
        %v7454 = vpop.f32.mrf.mxu0
        %v7455 = vadd.f32 %v7294, %v7454
        %v7456 = vpop.f32.mrf.mxu0
        %v7457 = vpop.f32.mrf.mxu0
        %v7458 = vadd.f32 %v7297, %v7457
        %v7459 = vpop.f32.mrf.mxu0
        %7460 = vmatprep.mubr.bf16.mxu0 %v4268
        %7461 = vmatmul.mubr.bf16.gmra.mxu0 %v4133
        %v7462 = vpop.f32.mrf.mxu0
        %v7463 = vadd.f32 %v7302, %v7462
        %v7464 = vpop.f32.mrf.mxu0
        %v7465 = vpop.f32.mrf.mxu0
        %v7466 = vadd.f32 %v7305, %v7465
        %v7467 = vpop.f32.mrf.mxu0
        %7468 = vmatprep.mubr.bf16.mxu0 %v4271
        %7469 = vmatmul.mubr.bf16.gmra.mxu0 %v4142
        %v7470 = vpop.f32.mrf.mxu0
        %v7471 = vadd.f32 %v7310, %v7470
        %v7472 = vpop.f32.mrf.mxu0
        %v7473 = vpop.f32.mrf.mxu0
        %v7474 = vadd.f32 %v7313, %v7473
        %v7475 = vpop.f32.mrf.mxu0
        %7476 = vmatprep.mubr.bf16.mxu0 %v4274
        %7477 = vmatmul.mubr.bf16.gmra.mxu0 %v4151
        %v7478 = vpop.f32.mrf.mxu0
        %v7479 = vadd.f32 %v7318, %v7478
        %v7480 = vpop.f32.mrf.mxu0
        %v7481 = vpop.f32.mrf.mxu0
        %v7482 = vadd.f32 %v7321, %v7481
        %v7483 = vpop.f32.mrf.mxu0
        %7484 = vmatprep.mubr.bf16.mxu0 %v4277
        %7485 = vmatmul.mubr.bf16.gmra.mxu0 %v4160
        %v7486 = vpop.f32.mrf.mxu0
        %v7487 = vadd.f32 %v7326, %v7486
        %v7488 = vpop.f32.mrf.mxu0
        %v7489 = vpop.f32.mrf.mxu0
        %v7490 = vadd.f32 %v7329, %v7489
        %v7491 = vpop.f32.mrf.mxu0
        %7492 = vmatprep.mubr.bf16.mxu0 %v4280
        %7493 = vmatmul.mubr.bf16.gmra.mxu0 %v4169
        %v7494 = vpop.f32.mrf.mxu0
        %v7495 = vadd.f32 %v7334, %v7494
        %v7496 = vpop.f32.mrf.mxu0
        %v7497 = vpop.f32.mrf.mxu0
        %v7498 = vadd.f32 %v7337, %v7497
        %v7499 = vpop.f32.mrf.mxu0
        %7500 = vmatprep.mubr.bf16.mxu0 %v4283
        %7501 = vmatmul.mubr.bf16.gmra.mxu0 %v4178
        %v7502 = vpop.f32.mrf.mxu0
        %v7503 = vadd.f32 %v7342, %v7502
        %v7504 = vpop.f32.mrf.mxu0
        %v7505 = vpop.f32.mrf.mxu0
        %v7506 = vadd.f32 %v7345, %v7505
        %v7507 = vpop.f32.mrf.mxu0
        %7508 = vmatprep.mubr.bf16.mxu0 %v4286
        %7509 = vmatmul.mubr.bf16.gmra.mxu0 %v4187
        %v7510 = vpop.f32.mrf.mxu0
        %v7511 = vadd.f32 %v7350, %v7510
        %v7512 = vpop.f32.mrf.mxu0
        %v7513 = vpop.f32.mrf.mxu0
        %v7514 = vadd.f32 %v7353, %v7513
        %v7515 = vpop.f32.mrf.mxu0
        %7516 = vmatprep.mubr.bf16.mxu0 %v4289
        %7517 = vmatmul.mubr.bf16.gmra.mxu0 %v4196
        %v7518 = vpop.f32.mrf.mxu0
        %v7519 = vadd.f32 %v7358, %v7518
        %v7520 = vpop.f32.mrf.mxu0
        %v7521 = vpop.f32.mrf.mxu0
        %v7522 = vadd.f32 %v7361, %v7521
        %v7523 = vpop.f32.mrf.mxu0
        %7524 = vmatprep.mubr.bf16.mxu0 %v4292
        %7525 = vmatmul.mubr.bf16.gmra.mxu0 %v4205
        %v7526 = vpop.f32.mrf.mxu0
        %v7527 = vadd.f32 %v7366, %v7526
        %v7528 = vpop.f32.mrf.mxu0
        %v7529 = vpop.f32.mrf.mxu0
        %v7530 = vadd.f32 %v7369, %v7529
        %v7531 = vpop.f32.mrf.mxu0
        %7532 = vdwg.mxu0
        %7533 = vmatprep.subr.bf16.mxu0 0
        %7534 = vmatpush1.bf16.msra.mxu0 %v5690
        %7535 = vmatprep.subr.bf16.mxu0 0
        %7536 = vmatpush1.bf16.msra.mxu0 %v5689
        %7537 = vmatprep.subr.bf16.mxu0 0
        %7538 = vmatpush1.bf16.msra.mxu0 %v5688
        %7539 = vmatprep.subr.bf16.mxu0 0
        %7540 = vmatpush1.bf16.msra.mxu0 %v5687
        %7541 = vmatprep.subr.bf16.mxu0 0
        %7542 = vmatpush1.bf16.msra.mxu0 %v5686
        %7543 = vmatprep.subr.bf16.mxu0 0
        %7544 = vmatpush1.bf16.msra.mxu0 %v5685
        %7545 = vmatprep.subr.bf16.mxu0 0
        %7546 = vmatpush1.bf16.msra.mxu0 %v5684
        %7547 = vmatprep.subr.bf16.mxu0 0
        %7548 = vmatpush1.bf16.msra.mxu0 %v5683
        %7549 = vmatprep.subr.bf16.mxu0 0
        %7550 = vmatpush2.bf16.msra.mxu0 %v5698
        %7551 = vmatprep.subr.bf16.mxu0 0
        %7552 = vmatpush2.bf16.msra.mxu0 %v5697
        %7553 = vmatprep.subr.bf16.mxu0 0
        %7554 = vmatpush2.bf16.msra.mxu0 %v5696
        %7555 = vmatprep.subr.bf16.mxu0 0
        %7556 = vmatpush2.bf16.msra.mxu0 %v5695
        %7557 = vmatprep.subr.bf16.mxu0 0
        %7558 = vmatpush2.bf16.msra.mxu0 %v5694
        %7559 = vmatprep.subr.bf16.mxu0 0
        %7560 = vmatpush2.bf16.msra.mxu0 %v5693
        %7561 = vmatprep.subr.bf16.mxu0 0
        %7562 = vmatpush2.bf16.msra.mxu0 %v5692
        %7563 = vmatprep.subr.bf16.mxu0 0
        %7564 = vmatpush2.bf16.msra.mxu0 %v5691
        %7565 = vmatprep.mubr.bf16.mxu0 %v3743
        %7566 = vmatmul.mubr.bf16.gmra.mxu0 %v3627
        %v7567 = vpop.f32.mrf.mxu0
        %v7568 = vadd.f32 %v7407, %v7567
        %v7569 = vpop.f32.mrf.mxu0
        %v7570 = vpop.f32.mrf.mxu0
        %v7571 = vadd.f32 %v7410, %v7570
        %v7572 = vpop.f32.mrf.mxu0
        %7573 = vmatprep.mubr.bf16.mxu0 %v3753
        %7574 = vmatmul.mubr.bf16.gmra.mxu0 %v3630
        %v7575 = vpop.f32.mrf.mxu0
        %v7576 = vadd.f32 %v7415, %v7575
        %v7577 = vpop.f32.mrf.mxu0
        %v7578 = vpop.f32.mrf.mxu0
        %v7579 = vadd.f32 %v7418, %v7578
        %v7580 = vpop.f32.mrf.mxu0
        %7581 = vmatprep.mubr.bf16.mxu0 %v3763
        %7582 = vmatmul.mubr.bf16.gmra.mxu0 %v3633
        %v7583 = vpop.f32.mrf.mxu0
        %v7584 = vadd.f32 %v7423, %v7583
        %v7585 = vpop.f32.mrf.mxu0
        %v7586 = vpop.f32.mrf.mxu0
        %v7587 = vadd.f32 %v7426, %v7586
        %v7588 = vpop.f32.mrf.mxu0
        %7589 = vmatprep.mubr.bf16.mxu0 %v3773
        %7590 = vmatmul.mubr.bf16.gmra.mxu0 %v3636
        %v7591 = vpop.f32.mrf.mxu0
        %v7592 = vadd.f32 %v7431, %v7591
        %v7593 = vpop.f32.mrf.mxu0
        %v7594 = vpop.f32.mrf.mxu0
        %v7595 = vadd.f32 %v7434, %v7594
        %v7596 = vpop.f32.mrf.mxu0
        %7597 = vmatprep.mubr.bf16.mxu0 %v3783
        %7598 = vmatmul.mubr.bf16.gmra.mxu0 %v3639
        %v7599 = vpop.f32.mrf.mxu0
        %v7600 = vadd.f32 %v7439, %v7599
        %v7601 = vpop.f32.mrf.mxu0
        %v7602 = vpop.f32.mrf.mxu0
        %v7603 = vadd.f32 %v7442, %v7602
        %v7604 = vpop.f32.mrf.mxu0
        %7605 = vmatprep.mubr.bf16.mxu0 %v3793
        %7606 = vmatmul.mubr.bf16.gmra.mxu0 %v3642
        %v7607 = vpop.f32.mrf.mxu0
        %v7608 = vadd.f32 %v7447, %v7607
        %v7609 = vpop.f32.mrf.mxu0
        %v7610 = vpop.f32.mrf.mxu0
        %v7611 = vadd.f32 %v7450, %v7610
        %v7612 = vpop.f32.mrf.mxu0
        %7613 = vmatprep.mubr.bf16.mxu0 %v3803
        %7614 = vmatmul.mubr.bf16.gmra.mxu0 %v3645
        %v7615 = vpop.f32.mrf.mxu0
        %v7616 = vadd.f32 %v7455, %v7615
        %v7617 = vpop.f32.mrf.mxu0
        %v7618 = vpop.f32.mrf.mxu0
        %v7619 = vadd.f32 %v7458, %v7618
        %v7620 = vpop.f32.mrf.mxu0
        %7621 = vmatprep.mubr.bf16.mxu0 %v3813
        %7622 = vmatmul.mubr.bf16.gmra.mxu0 %v3648
        %v7623 = vpop.f32.mrf.mxu0
        %v7624 = vadd.f32 %v7463, %v7623
        %v7625 = vpop.f32.mrf.mxu0
        %v7626 = vpop.f32.mrf.mxu0
        %v7627 = vadd.f32 %v7466, %v7626
        %v7628 = vpop.f32.mrf.mxu0
        %7629 = vmatprep.mubr.bf16.mxu0 %v3823
        %7630 = vmatmul.mubr.bf16.gmra.mxu0 %v3651
        %v7631 = vpop.f32.mrf.mxu0
        %v7632 = vadd.f32 %v7471, %v7631
        %v7633 = vpop.f32.mrf.mxu0
        %v7634 = vpop.f32.mrf.mxu0
        %v7635 = vadd.f32 %v7474, %v7634
        %v7636 = vpop.f32.mrf.mxu0
        %7637 = vmatprep.mubr.bf16.mxu0 %v3833
        %7638 = vmatmul.mubr.bf16.gmra.mxu0 %v3654
        %v7639 = vpop.f32.mrf.mxu0
        %v7640 = vadd.f32 %v7479, %v7639
        %v7641 = vpop.f32.mrf.mxu0
        %v7642 = vpop.f32.mrf.mxu0
        %v7643 = vadd.f32 %v7482, %v7642
        %v7644 = vpop.f32.mrf.mxu0
        %7645 = vmatprep.mubr.bf16.mxu0 %v3843
        %7646 = vmatmul.mubr.bf16.gmra.mxu0 %v3657
        %v7647 = vpop.f32.mrf.mxu0
        %v7648 = vadd.f32 %v7487, %v7647
        %v7649 = vpop.f32.mrf.mxu0
        %v7650 = vpop.f32.mrf.mxu0
        %v7651 = vadd.f32 %v7490, %v7650
        %v7652 = vpop.f32.mrf.mxu0
        %7653 = vmatprep.mubr.bf16.mxu0 %v3853
        %7654 = vmatmul.mubr.bf16.gmra.mxu0 %v3660
        %v7655 = vpop.f32.mrf.mxu0
        %v7656 = vadd.f32 %v7495, %v7655
        %v7657 = vpop.f32.mrf.mxu0
        %v7658 = vpop.f32.mrf.mxu0
        %v7659 = vadd.f32 %v7498, %v7658
        %v7660 = vpop.f32.mrf.mxu0
        %7661 = vmatprep.mubr.bf16.mxu0 %v3863
        %7662 = vmatmul.mubr.bf16.gmra.mxu0 %v3663
        %v7663 = vpop.f32.mrf.mxu0
        %v7664 = vadd.f32 %v7503, %v7663
        %v7665 = vpop.f32.mrf.mxu0
        %v7666 = vpop.f32.mrf.mxu0
        %v7667 = vadd.f32 %v7506, %v7666
        %v7668 = vpop.f32.mrf.mxu0
        %7669 = vmatprep.mubr.bf16.mxu0 %v3873
        %7670 = vmatmul.mubr.bf16.gmra.mxu0 %v3666
        %v7671 = vpop.f32.mrf.mxu0
        %v7672 = vadd.f32 %v7511, %v7671
        %v7673 = vpop.f32.mrf.mxu0
        %v7674 = vpop.f32.mrf.mxu0
        %v7675 = vadd.f32 %v7514, %v7674
        %v7676 = vpop.f32.mrf.mxu0
        %7677 = vmatprep.mubr.bf16.mxu0 %v3883
        %7678 = vmatmul.mubr.bf16.gmra.mxu0 %v3669
        %v7679 = vpop.f32.mrf.mxu0
        %v7680 = vadd.f32 %v7519, %v7679
        %v7681 = vpop.f32.mrf.mxu0
        %v7682 = vpop.f32.mrf.mxu0
        %v7683 = vadd.f32 %v7522, %v7682
        %v7684 = vpop.f32.mrf.mxu0
        %7685 = vmatprep.mubr.bf16.mxu0 %v3893
        %7686 = vmatmul.mubr.bf16.gmra.mxu0 %v3672
        %v7687 = vpop.f32.mrf.mxu0
        %v7688 = vadd.f32 %v7527, %v7687
        %v7689 = vpop.f32.mrf.mxu0
        %v7690 = vpop.f32.mrf.mxu0
        %v7691 = vadd.f32 %v7530, %v7690
        %v7692 = vpop.f32.mrf.mxu0
        %7693 = vdwg.mxu0
        %7694 = vmatprep.subr.bf16.mxu0 0
        %7695 = vmatpush1.bf16.msra.mxu0 %v5706
        %7696 = vmatprep.subr.bf16.mxu0 0
        %7697 = vmatpush1.bf16.msra.mxu0 %v5705
        %7698 = vmatprep.subr.bf16.mxu0 0
        %7699 = vmatpush1.bf16.msra.mxu0 %v5704
        %7700 = vmatprep.subr.bf16.mxu0 0
        %7701 = vmatpush1.bf16.msra.mxu0 %v5703
        %7702 = vmatprep.subr.bf16.mxu0 0
        %7703 = vmatpush1.bf16.msra.mxu0 %v5702
        %7704 = vmatprep.subr.bf16.mxu0 0
        %7705 = vmatpush1.bf16.msra.mxu0 %v5701
        %7706 = vmatprep.subr.bf16.mxu0 0
        %7707 = vmatpush1.bf16.msra.mxu0 %v5700
        %7708 = vmatprep.subr.bf16.mxu0 0
        %7709 = vmatpush1.bf16.msra.mxu0 %v5699
        %7710 = vmatprep.subr.bf16.mxu0 0
        %7711 = vmatpush2.bf16.msra.mxu0 %v5714
        %7712 = vmatprep.subr.bf16.mxu0 0
        %7713 = vmatpush2.bf16.msra.mxu0 %v5713
        %7714 = vmatprep.subr.bf16.mxu0 0
        %7715 = vmatpush2.bf16.msra.mxu0 %v5712
        %7716 = vmatprep.subr.bf16.mxu0 0
        %7717 = vmatpush2.bf16.msra.mxu0 %v5711
        %7718 = vmatprep.subr.bf16.mxu0 0
        %7719 = vmatpush2.bf16.msra.mxu0 %v5710
        %7720 = vmatprep.subr.bf16.mxu0 0
        %7721 = vmatpush2.bf16.msra.mxu0 %v5709
        %7722 = vmatprep.subr.bf16.mxu0 0
        %7723 = vmatpush2.bf16.msra.mxu0 %v5708
        %7724 = vmatprep.subr.bf16.mxu0 0
        %7725 = vmatpush2.bf16.msra.mxu0 %v5707
        %7726 = vmatprep.mubr.bf16.mxu0 %v4079
        %7727 = vmatmul.mubr.bf16.gmra.mxu0 %v3968
        %v7728 = vpop.f32.mrf.mxu0
        %v7729 = vadd.f32 %v7568, %v7728
        %v7730 = vpop.f32.mrf.mxu0
        %v7731 = vpop.f32.mrf.mxu0
        %v7732 = vadd.f32 %v7571, %v7731
        %v7733 = vpop.f32.mrf.mxu0
        %7734 = vmatprep.mubr.bf16.mxu0 %v4088
        %7735 = vmatmul.mubr.bf16.gmra.mxu0 %v3971
        %v7736 = vpop.f32.mrf.mxu0
        %v7737 = vadd.f32 %v7576, %v7736
        %v7738 = vpop.f32.mrf.mxu0
        %v7739 = vpop.f32.mrf.mxu0
        %v7740 = vadd.f32 %v7579, %v7739
        %v7741 = vpop.f32.mrf.mxu0
        %7742 = vmatprep.mubr.bf16.mxu0 %v4097
        %7743 = vmatmul.mubr.bf16.gmra.mxu0 %v3974
        %v7744 = vpop.f32.mrf.mxu0
        %v7745 = vadd.f32 %v7584, %v7744
        %v7746 = vpop.f32.mrf.mxu0
        %v7747 = vpop.f32.mrf.mxu0
        %v7748 = vadd.f32 %v7587, %v7747
        %v7749 = vpop.f32.mrf.mxu0
        %7750 = vmatprep.mubr.bf16.mxu0 %v4106
        %7751 = vmatmul.mubr.bf16.gmra.mxu0 %v3977
        %v7752 = vpop.f32.mrf.mxu0
        %v7753 = vadd.f32 %v7592, %v7752
        %v7754 = vpop.f32.mrf.mxu0
        %v7755 = vpop.f32.mrf.mxu0
        %v7756 = vadd.f32 %v7595, %v7755
        %v7757 = vpop.f32.mrf.mxu0
        %7758 = vmatprep.mubr.bf16.mxu0 %v4115
        %7759 = vmatmul.mubr.bf16.gmra.mxu0 %v3980
        %v7760 = vpop.f32.mrf.mxu0
        %v7761 = vadd.f32 %v7600, %v7760
        %v7762 = vpop.f32.mrf.mxu0
        %v7763 = vpop.f32.mrf.mxu0
        %v7764 = vadd.f32 %v7603, %v7763
        %v7765 = vpop.f32.mrf.mxu0
        %7766 = vmatprep.mubr.bf16.mxu0 %v4124
        %7767 = vmatmul.mubr.bf16.gmra.mxu0 %v3983
        %v7768 = vpop.f32.mrf.mxu0
        %v7769 = vadd.f32 %v7608, %v7768
        %v7770 = vpop.f32.mrf.mxu0
        %v7771 = vpop.f32.mrf.mxu0
        %v7772 = vadd.f32 %v7611, %v7771
        %v7773 = vpop.f32.mrf.mxu0
        %7774 = vmatprep.mubr.bf16.mxu0 %v4133
        %7775 = vmatmul.mubr.bf16.gmra.mxu0 %v3986
        %v7776 = vpop.f32.mrf.mxu0
        %v7777 = vadd.f32 %v7616, %v7776
        %v7778 = vpop.f32.mrf.mxu0
        %v7779 = vpop.f32.mrf.mxu0
        %v7780 = vadd.f32 %v7619, %v7779
        %v7781 = vpop.f32.mrf.mxu0
        %7782 = vmatprep.mubr.bf16.mxu0 %v4142
        %7783 = vmatmul.mubr.bf16.gmra.mxu0 %v3989
        %v7784 = vpop.f32.mrf.mxu0
        %v7785 = vadd.f32 %v7624, %v7784
        %v7786 = vpop.f32.mrf.mxu0
        %v7787 = vpop.f32.mrf.mxu0
        %v7788 = vadd.f32 %v7627, %v7787
        %v7789 = vpop.f32.mrf.mxu0
        %7790 = vmatprep.mubr.bf16.mxu0 %v4151
        %7791 = vmatmul.mubr.bf16.gmra.mxu0 %v3992
        %v7792 = vpop.f32.mrf.mxu0
        %v7793 = vadd.f32 %v7632, %v7792
        %v7794 = vpop.f32.mrf.mxu0
        %v7795 = vpop.f32.mrf.mxu0
        %v7796 = vadd.f32 %v7635, %v7795
        %v7797 = vpop.f32.mrf.mxu0
        %7798 = vmatprep.mubr.bf16.mxu0 %v4160
        %7799 = vmatmul.mubr.bf16.gmra.mxu0 %v3995
        %v7800 = vpop.f32.mrf.mxu0
        %v7801 = vadd.f32 %v7640, %v7800
        %v7802 = vpop.f32.mrf.mxu0
        %v7803 = vpop.f32.mrf.mxu0
        %v7804 = vadd.f32 %v7643, %v7803
        %v7805 = vpop.f32.mrf.mxu0
        %7806 = vmatprep.mubr.bf16.mxu0 %v4169
        %7807 = vmatmul.mubr.bf16.gmra.mxu0 %v3998
        %v7808 = vpop.f32.mrf.mxu0
        %v7809 = vadd.f32 %v7648, %v7808
        %v7810 = vpop.f32.mrf.mxu0
        %v7811 = vpop.f32.mrf.mxu0
        %v7812 = vadd.f32 %v7651, %v7811
        %v7813 = vpop.f32.mrf.mxu0
        %7814 = vmatprep.mubr.bf16.mxu0 %v4178
        %7815 = vmatmul.mubr.bf16.gmra.mxu0 %v4001
        %v7816 = vpop.f32.mrf.mxu0
        %v7817 = vadd.f32 %v7656, %v7816
        %v7818 = vpop.f32.mrf.mxu0
        %v7819 = vpop.f32.mrf.mxu0
        %v7820 = vadd.f32 %v7659, %v7819
        %v7821 = vpop.f32.mrf.mxu0
        %7822 = vmatprep.mubr.bf16.mxu0 %v4187
        %7823 = vmatmul.mubr.bf16.gmra.mxu0 %v4004
        %v7824 = vpop.f32.mrf.mxu0
        %v7825 = vadd.f32 %v7664, %v7824
        %v7826 = vpop.f32.mrf.mxu0
        %v7827 = vpop.f32.mrf.mxu0
        %v7828 = vadd.f32 %v7667, %v7827
        %v7829 = vpop.f32.mrf.mxu0
        %7830 = vmatprep.mubr.bf16.mxu0 %v4196
        %7831 = vmatmul.mubr.bf16.gmra.mxu0 %v4007
        %v7832 = vpop.f32.mrf.mxu0
        %v7833 = vadd.f32 %v7672, %v7832
        %v7834 = vpop.f32.mrf.mxu0
        %v7835 = vpop.f32.mrf.mxu0
        %v7836 = vadd.f32 %v7675, %v7835
        %v7837 = vpop.f32.mrf.mxu0
        %7838 = vmatprep.mubr.bf16.mxu0 %v4205
        %7839 = vmatmul.mubr.bf16.gmra.mxu0 %v4010
        %v7840 = vpop.f32.mrf.mxu0
        %v7841 = vadd.f32 %v7680, %v7840
        %v7842 = vpop.f32.mrf.mxu0
        %v7843 = vpop.f32.mrf.mxu0
        %v7844 = vadd.f32 %v7683, %v7843
        %v7845 = vpop.f32.mrf.mxu0
        %7846 = vmatprep.mubr.bf16.mxu0 %v4214
        %7847 = vmatmul.mubr.bf16.gmra.mxu0 %v4013
        %v7848 = vpop.f32.mrf.mxu0
        %v7849 = vadd.f32 %v7688, %v7848
        %v7850 = vpop.f32.mrf.mxu0
        %v7851 = vpop.f32.mrf.mxu0
        %v7852 = vadd.f32 %v7691, %v7851
        %v7853 = vpop.f32.mrf.mxu0
        %7854 = vdwg.mxu0
        %7855 = vmatprep.subr.bf16.mxu0 0
        %7856 = vmatpush1.bf16.msra.mxu0 %v5722
        %7857 = vmatprep.subr.bf16.mxu0 0
        %7858 = vmatpush1.bf16.msra.mxu0 %v5721
        %7859 = vmatprep.subr.bf16.mxu0 0
        %7860 = vmatpush1.bf16.msra.mxu0 %v5720
        %7861 = vmatprep.subr.bf16.mxu0 0
        %7862 = vmatpush1.bf16.msra.mxu0 %v5719
        %7863 = vmatprep.subr.bf16.mxu0 0
        %7864 = vmatpush1.bf16.msra.mxu0 %v5718
        %7865 = vmatprep.subr.bf16.mxu0 0
        %7866 = vmatpush1.bf16.msra.mxu0 %v5717
        %7867 = vmatprep.subr.bf16.mxu0 0
        %7868 = vmatpush1.bf16.msra.mxu0 %v5716
        %7869 = vmatprep.subr.bf16.mxu0 0
        %7870 = vmatpush1.bf16.msra.mxu0 %v5715
        %7871 = vmatprep.subr.bf16.mxu0 0
        %7872 = vmatpush2.bf16.msra.mxu0 0
        %7873 = vmatprep.subr.bf16.mxu0 0
        %7874 = vmatpush2.bf16.msra.mxu0 0
        %7875 = vmatprep.subr.bf16.mxu0 0
        %7876 = vmatpush2.bf16.msra.mxu0 0
        %7877 = vmatprep.subr.bf16.mxu0 0
        %7878 = vmatpush2.bf16.msra.mxu0 0
        %7879 = vmatprep.subr.bf16.mxu0 0
        %7880 = vmatpush2.bf16.msra.mxu0 0
        %7881 = vmatprep.subr.bf16.mxu0 0
        %7882 = vmatpush2.bf16.msra.mxu0 0
        %7883 = vmatprep.subr.bf16.mxu0 0
        %7884 = vmatpush2.bf16.msra.mxu0 0
        %7885 = vmatprep.subr.bf16.mxu0 0
        %7886 = vmatpush2.bf16.msra.mxu0 0
        %7887 = vmatprep.mubr.bf16.mxu0 0
        %7888 = vmatmul.mubr.bf16.gmra.mxu0 %v4250
        %v7889 = vpop.f32.mrf.mxu0
        %v7890 = vadd.f32 %v7729, %v7889
        %v7891 = vpop.f32.mrf.mxu0
        %v7892 = vpop.f32.mrf.mxu0
        %v7893 = vadd.f32 %v7732, %v7892
        %v7894 = vpop.f32.mrf.mxu0
        %7895 = vmatprep.mubr.bf16.mxu0 0
        %7896 = vmatmul.mubr.bf16.gmra.mxu0 %v4253
        %v7897 = vpop.f32.mrf.mxu0
        %v7898 = vadd.f32 %v7737, %v7897
        %v7899 = vpop.f32.mrf.mxu0
        %v7900 = vpop.f32.mrf.mxu0
        %v7901 = vadd.f32 %v7740, %v7900
        %v7902 = vpop.f32.mrf.mxu0
        %7903 = vmatprep.mubr.bf16.mxu0 0
        %7904 = vmatmul.mubr.bf16.gmra.mxu0 %v4256
        %v7905 = vpop.f32.mrf.mxu0
        %v7906 = vadd.f32 %v7745, %v7905
        %v7907 = vpop.f32.mrf.mxu0
        %v7908 = vpop.f32.mrf.mxu0
        %v7909 = vadd.f32 %v7748, %v7908
        %v7910 = vpop.f32.mrf.mxu0
        %7911 = vmatprep.mubr.bf16.mxu0 0
        %7912 = vmatmul.mubr.bf16.gmra.mxu0 %v4259
        %v7913 = vpop.f32.mrf.mxu0
        %v7914 = vadd.f32 %v7753, %v7913
        %v7915 = vpop.f32.mrf.mxu0
        %v7916 = vpop.f32.mrf.mxu0
        %v7917 = vadd.f32 %v7756, %v7916
        %v7918 = vpop.f32.mrf.mxu0
        %7919 = vmatprep.mubr.bf16.mxu0 0
        %7920 = vmatmul.mubr.bf16.gmra.mxu0 %v4262
        %v7921 = vpop.f32.mrf.mxu0
        %v7922 = vadd.f32 %v7761, %v7921
        %v7923 = vpop.f32.mrf.mxu0
        %v7924 = vpop.f32.mrf.mxu0
        %v7925 = vadd.f32 %v7764, %v7924
        %v7926 = vpop.f32.mrf.mxu0
        %7927 = vmatprep.mubr.bf16.mxu0 0
        %7928 = vmatmul.mubr.bf16.gmra.mxu0 %v4265
        %v7929 = vpop.f32.mrf.mxu0
        %v7930 = vadd.f32 %v7769, %v7929
        %v7931 = vpop.f32.mrf.mxu0
        %v7932 = vpop.f32.mrf.mxu0
        %v7933 = vadd.f32 %v7772, %v7932
        %v7934 = vpop.f32.mrf.mxu0
        %7935 = vmatprep.mubr.bf16.mxu0 0
        %7936 = vmatmul.mubr.bf16.gmra.mxu0 %v4268
        %v7937 = vpop.f32.mrf.mxu0
        %v7938 = vadd.f32 %v7777, %v7937
        %v7939 = vpop.f32.mrf.mxu0
        %v7940 = vpop.f32.mrf.mxu0
        %v7941 = vadd.f32 %v7780, %v7940
        %v7942 = vpop.f32.mrf.mxu0
        %7943 = vmatprep.mubr.bf16.mxu0 0
        %7944 = vmatmul.mubr.bf16.gmra.mxu0 %v4271
        %v7945 = vpop.f32.mrf.mxu0
        %v7946 = vadd.f32 %v7785, %v7945
        %v7947 = vpop.f32.mrf.mxu0
        %v7948 = vpop.f32.mrf.mxu0
        %v7949 = vadd.f32 %v7788, %v7948
        %v7950 = vpop.f32.mrf.mxu0
        %7951 = vmatprep.mubr.bf16.mxu0 0
        %7952 = vmatmul.mubr.bf16.gmra.mxu0 %v4274
        %v7953 = vpop.f32.mrf.mxu0
        %v7954 = vadd.f32 %v7793, %v7953
        %v7955 = vpop.f32.mrf.mxu0
        %v7956 = vpop.f32.mrf.mxu0
        %v7957 = vadd.f32 %v7796, %v7956
        %v7958 = vpop.f32.mrf.mxu0
        %7959 = vmatprep.mubr.bf16.mxu0 0
        %7960 = vmatmul.mubr.bf16.gmra.mxu0 %v4277
        %v7961 = vpop.f32.mrf.mxu0
        %v7962 = vadd.f32 %v7801, %v7961
        %v7963 = vpop.f32.mrf.mxu0
        %v7964 = vpop.f32.mrf.mxu0
        %v7965 = vadd.f32 %v7804, %v7964
        %v7966 = vpop.f32.mrf.mxu0
        %7967 = vmatprep.mubr.bf16.mxu0 0
        %7968 = vmatmul.mubr.bf16.gmra.mxu0 %v4280
        %v7969 = vpop.f32.mrf.mxu0
        %v7970 = vadd.f32 %v7809, %v7969
        %v7971 = vpop.f32.mrf.mxu0
        %v7972 = vpop.f32.mrf.mxu0
        %v7973 = vadd.f32 %v7812, %v7972
        %v7974 = vpop.f32.mrf.mxu0
        %7975 = vmatprep.mubr.bf16.mxu0 0
        %7976 = vmatmul.mubr.bf16.gmra.mxu0 %v4283
        %v7977 = vpop.f32.mrf.mxu0
        %v7978 = vadd.f32 %v7817, %v7977
        %v7979 = vpop.f32.mrf.mxu0
        %v7980 = vpop.f32.mrf.mxu0
        %v7981 = vadd.f32 %v7820, %v7980
        %v7982 = vpop.f32.mrf.mxu0
        %7983 = vmatprep.mubr.bf16.mxu0 0
        %7984 = vmatmul.mubr.bf16.gmra.mxu0 %v4286
        %v7985 = vpop.f32.mrf.mxu0
        %v7986 = vadd.f32 %v7825, %v7985
        %v7987 = vpop.f32.mrf.mxu0
        %v7988 = vpop.f32.mrf.mxu0
        %v7989 = vadd.f32 %v7828, %v7988
        %v7990 = vpop.f32.mrf.mxu0
        %7991 = vmatprep.mubr.bf16.mxu0 0
        %7992 = vmatmul.mubr.bf16.gmra.mxu0 %v4289
        %v7993 = vpop.f32.mrf.mxu0
        %v7994 = vadd.f32 %v7833, %v7993
        %v7995 = vpop.f32.mrf.mxu0
        %v7996 = vpop.f32.mrf.mxu0
        %v7997 = vadd.f32 %v7836, %v7996
        %v7998 = vpop.f32.mrf.mxu0
        %7999 = vmatprep.mubr.bf16.mxu0 0
        %8000 = vmatmul.mubr.bf16.gmra.mxu0 %v4292
        %v8001 = vpop.f32.mrf.mxu0
        %v8002 = vadd.f32 %v7841, %v8001
        %v8003 = vpop.f32.mrf.mxu0
        %v8004 = vpop.f32.mrf.mxu0
        %v8005 = vadd.f32 %v7844, %v8004
        %v8006 = vpop.f32.mrf.mxu0
        %8007 = vmatprep.mubr.bf16.mxu0 0
        %8008 = vmatmul.mubr.bf16.gmra.mxu0 %v4295
        %v8009 = vpop.f32.mrf.mxu0
        %v8010 = vadd.f32 %v7849, %v8009
        %v8011 = vpop.f32.mrf.mxu0
        %v8012 = vpop.f32.mrf.mxu0
        %v8013 = vadd.f32 %v7852, %v8012
        %v8014 = vpop.f32.mrf.mxu0
        %8015 = vdwg.mxu0
        %v8016 = vpack.c.bf16 %v7893, %v7890
        %v8017 = vpack.c.bf16 %v7901, %v7898
        %v8018 = vpack.c.bf16 %v7909, %v7906
        %v8019 = vpack.c.bf16 %v7917, %v7914
        %v8020 = vpack.c.bf16 %v7925, %v7922
        %v8021 = vpack.c.bf16 %v7933, %v7930
        %v8022 = vpack.c.bf16 %v7941, %v7938
        %v8023 = vpack.c.bf16 %v7949, %v7946
        %v8024 = vpack.c.bf16 %v7957, %v7954
        %v8025 = vpack.c.bf16 %v7965, %v7962
        %v8026 = vpack.c.bf16 %v7973, %v7970
        %v8027 = vpack.c.bf16 %v7981, %v7978
        %v8028 = vpack.c.bf16 %v7989, %v7986
        %v8029 = vpack.c.bf16 %v7997, %v7994
        %v8030 = vpack.c.bf16 %v8005, %v8002
        %v8031 = vpack.c.bf16 %v8013, %v8010
        %v8048 = vunpack.c.l.b16 %v8016
        %v8049 = vunpack.c.h.b16 %v8016
        %v8050 = vunpack.c.l.b16 %v8017
        %v8051 = vunpack.c.h.b16 %v8017
        %v8052 = vunpack.c.l.b16 %v8018
        %v8053 = vunpack.c.h.b16 %v8018
        %v8054 = vunpack.c.l.b16 %v8019
        %v8055 = vunpack.c.h.b16 %v8019
        %v8056 = vunpack.c.l.b16 %v8020
        %v8057 = vunpack.c.h.b16 %v8020
        %v8058 = vunpack.c.l.b16 %v8021
        %v8059 = vunpack.c.h.b16 %v8021
        %v8060 = vunpack.c.l.b16 %v8022
        %v8061 = vunpack.c.h.b16 %v8022
        %v8062 = vunpack.c.l.b16 %v8023
        %v8063 = vunpack.c.h.b16 %v8023
        %v8064 = vunpack.c.l.b16 %v8024
        %v8065 = vunpack.c.h.b16 %v8024
        %v8066 = vunpack.c.l.b16 %v8025
        %v8067 = vunpack.c.h.b16 %v8025
        %v8068 = vunpack.c.l.b16 %v8026
        %v8069 = vunpack.c.h.b16 %v8026
        %v8070 = vunpack.c.l.b16 %v8027
        %v8071 = vunpack.c.h.b16 %v8027
        %v8072 = vunpack.c.l.b16 %v8028
        %v8073 = vunpack.c.h.b16 %v8028
        %v8074 = vunpack.c.l.b16 %v8029
        %v8075 = vunpack.c.h.b16 %v8029
        %v8076 = vunpack.c.l.b16 %v8030
        %v8077 = vunpack.c.h.b16 %v8030
        %v8078 = vunpack.c.l.b16 %v8031
        %v8079 = vunpack.c.h.b16 %v8031
        %v8080 = vpack.c.b16 %v8048, %v8048
        %v8081 = vpack.c.b16 %v8049, %v8049
        %v8082 = vpack.c.b16 %v8050, %v8050
        %v8083 = vpack.c.b16 %v8051, %v8051
        %v8084 = vpack.c.b16 %v8052, %v8052
        %v8085 = vpack.c.b16 %v8053, %v8053
        %v8086 = vpack.c.b16 %v8054, %v8054
        %v8087 = vpack.c.b16 %v8055, %v8055
        %v8088 = vpack.c.b16 %v8056, %v8056
        %v8089 = vpack.c.b16 %v8057, %v8057
        %v8090 = vpack.c.b16 %v8058, %v8058
        %v8091 = vpack.c.b16 %v8059, %v8059
        %v8092 = vpack.c.b16 %v8060, %v8060
        %v8093 = vpack.c.b16 %v8061, %v8061
        %v8094 = vpack.c.b16 %v8062, %v8062
        %v8095 = vpack.c.b16 %v8063, %v8063
        %v8096 = vpack.c.b16 %v8064, %v8064
        %v8097 = vpack.c.b16 %v8065, %v8065
        %v8098 = vpack.c.b16 %v8066, %v8066
        %v8099 = vpack.c.b16 %v8067, %v8067
        %v8100 = vpack.c.b16 %v8068, %v8068
        %v8101 = vpack.c.b16 %v8069, %v8069
        %v8102 = vpack.c.b16 %v8070, %v8070
        %v8103 = vpack.c.b16 %v8071, %v8071
        %v8104 = vpack.c.b16 %v8072, %v8072
        %v8105 = vpack.c.b16 %v8073, %v8073
        %v8106 = vpack.c.b16 %v8074, %v8074
        %v8107 = vpack.c.b16 %v8075, %v8075
        %v8108 = vpack.c.b16 %v8076, %v8076
        %v8109 = vpack.c.b16 %v8077, %v8077
        %v8110 = vpack.c.b16 %v8078, %v8078
        %v8111 = vpack.c.b16 %v8079, %v8079
        %8144 = vst [vmem:[%s450 + $0x8] sm:$0xf] %v8080
        %8145 = vst [vmem:[%s450 + $0x18] sm:$0xf] %v8081
        %8146 = vst [vmem:[%s450 + $0x28] sm:$0xf] %v8082
        %8147 = vst [vmem:[%s450 + $0x38] sm:$0xf] %v8083
        %8148 = vst [vmem:[%s450 + $0x48] sm:$0xf] %v8084
        %8149 = vst [vmem:[%s450 + $0x58] sm:$0xf] %v8085
        %8150 = vst [vmem:[%s450 + $0x68] sm:$0xf] %v8086
        %8151 = vst [vmem:[%s450 + $0x78] sm:$0xf] %v8087
        %8152 = vst [vmem:[%s450 + $0x88] sm:$0xf] %v8088
        %8153 = vst [vmem:[%s450 + $0x98] sm:$0xf] %v8089
        %8154 = vst [vmem:[%s450 + $0xa8] sm:$0xf] %v8090
        %8155 = vst [vmem:[%s450 + $0xb8] sm:$0xf] %v8091
        %8156 = vst [vmem:[%s450 + $0xc8] sm:$0xf] %v8092
        %8157 = vst [vmem:[%s450 + $0xd8] sm:$0xf] %v8093
        %8158 = vst [vmem:[%s450 + $0xe8] sm:$0xf] %v8094
        %8159 = vst [vmem:[%s450 + $0xf8] sm:$0xf] %v8095
        %8160 = vst [vmem:[%s450 + $0x108] sm:$0xf] %v8096
        %8161 = vst [vmem:[%s450 + $0x118] sm:$0xf] %v8097
        %8162 = vst [vmem:[%s450 + $0x128] sm:$0xf] %v8098
        %8163 = vst [vmem:[%s450 + $0x138] sm:$0xf] %v8099
        %8164 = vst [vmem:[%s450 + $0x148] sm:$0xf] %v8100
        %8165 = vst [vmem:[%s450 + $0x158] sm:$0xf] %v8101
        %8166 = vst [vmem:[%s450 + $0x168] sm:$0xf] %v8102
        %8167 = vst [vmem:[%s450 + $0x178] sm:$0xf] %v8103
        %8168 = vst [vmem:[%s450 + $0x188] sm:$0xf] %v8104
        %8169 = vst [vmem:[%s450 + $0x198] sm:$0xf] %v8105
        %8170 = vst [vmem:[%s450 + $0x1a8] sm:$0xf] %v8106
        %8171 = vst [vmem:[%s450 + $0x1b8] sm:$0xf] %v8107
        %8172 = vst [vmem:[%s450 + $0x1c8] sm:$0xf] %v8108
        %8173 = vst [vmem:[%s450 + $0x1d8] sm:$0xf] %v8109
        %8174 = vst [vmem:[%s450 + $0x1e8] sm:$0xf] %v8110
        %8175 = vst [vmem:[%s450 + $0x1f8] sm:$0xf] %v8111
        %v8176 = vsel %vm1154, %v474, -3.4028235e+38
        %v8177 = vsel %vm1154, %v475, -3.4028235e+38
        %v8178 = vsel %vm1155, %v476, -3.4028235e+38
        %v8179 = vsel %vm1155, %v477, -3.4028235e+38
        %v8180 = vsel %vm1156, %v478, -3.4028235e+38
        %v8181 = vsel %vm1156, %v479, -3.4028235e+38
        %v8182 = vsel %vm1157, %v480, -3.4028235e+38
        %v8183 = vsel %vm1157, %v481, -3.4028235e+38
        %v8184 = vsel %vm1158, %v482, -3.4028235e+38
        %v8185 = vsel %vm1158, %v483, -3.4028235e+38
        %v8186 = vsel %vm1159, %v484, -3.4028235e+38
        %v8187 = vsel %vm1159, %v485, -3.4028235e+38
        %v8188 = vsel %vm1160, %v486, -3.4028235e+38
        %v8189 = vsel %vm1160, %v487, -3.4028235e+38
        %v8190 = vsel %vm1161, %v488, -3.4028235e+38
        %v8191 = vsel %vm1161, %v489, -3.4028235e+38
        %v8192 = vsel %vm1162, %v490, -3.4028235e+38
        %v8193 = vsel %vm1162, %v491, -3.4028235e+38
        %v8194 = vsel %vm1163, %v492, -3.4028235e+38
        %v8195 = vsel %vm1163, %v493, -3.4028235e+38
        %v8196 = vsel %vm1164, %v494, -3.4028235e+38
        %v8197 = vsel %vm1164, %v495, -3.4028235e+38
        %v8198 = vsel %vm1165, %v496, -3.4028235e+38
        %v8199 = vsel %vm1165, %v497, -3.4028235e+38
        %v8200 = vsel %vm1166, %v498, -3.4028235e+38
        %v8201 = vsel %vm1166, %v499, -3.4028235e+38
        %v8202 = vsel %vm1167, %v500, -3.4028235e+38
        %v8203 = vsel %vm1167, %v501, -3.4028235e+38
        %v8204 = vsel %vm1168, %v502, -3.4028235e+38
        %v8205 = vsel %vm1168, %v503, -3.4028235e+38
        %v8206 = vsel %vm1169, %v504, -3.4028235e+38
        %v8207 = vsel %vm1169, %v505, -3.4028235e+38
        %v8208 = vsel %vm1170, %v506, -3.4028235e+38
        %v8209 = vsel %vm1170, %v507, -3.4028235e+38
        %v8210 = vsel %vm1171, %v508, -3.4028235e+38
        %v8211 = vsel %vm1171, %v509, -3.4028235e+38
        %v8248 = vrot.slane %v8176, 7
        %v8249 = vrot.slane %v8177, 7
        %v8250 = vsel %vm3612, %v8248, %v8249
        %v8251 = vrot.slane %v8178, 7
        %v8252 = vrot.slane %v8179, 7
        %v8253 = vsel %vm3612, %v8251, %v8252
        %v8254 = vrot.slane %v8180, 7
        %v8255 = vrot.slane %v8181, 7
        %v8256 = vsel %vm3612, %v8254, %v8255
        %v8257 = vrot.slane %v8182, 7
        %v8258 = vrot.slane %v8183, 7
        %v8259 = vsel %vm3612, %v8257, %v8258
        %v8260 = vrot.slane %v8184, 7
        %v8261 = vrot.slane %v8185, 7
        %v8262 = vsel %vm3612, %v8260, %v8261
        %v8263 = vrot.slane %v8186, 7
        %v8264 = vrot.slane %v8187, 7
        %v8265 = vsel %vm3612, %v8263, %v8264
        %v8266 = vrot.slane %v8188, 7
        %v8267 = vrot.slane %v8189, 7
        %v8268 = vsel %vm3612, %v8266, %v8267
        %v8269 = vrot.slane %v8190, 7
        %v8270 = vrot.slane %v8191, 7
        %v8271 = vsel %vm3612, %v8269, %v8270
        %v8272 = vrot.slane %v8192, 7
        %v8273 = vrot.slane %v8193, 7
        %v8274 = vsel %vm3612, %v8272, %v8273
        %v8275 = vrot.slane %v8194, 7
        %v8276 = vrot.slane %v8195, 7
        %v8277 = vsel %vm3612, %v8275, %v8276
        %v8278 = vrot.slane %v8196, 7
        %v8279 = vrot.slane %v8197, 7
        %v8280 = vsel %vm3612, %v8278, %v8279
        %v8281 = vrot.slane %v8198, 7
        %v8282 = vrot.slane %v8199, 7
        %v8283 = vsel %vm3612, %v8281, %v8282
        %v8284 = vrot.slane %v8200, 7
        %v8285 = vrot.slane %v8201, 7
        %v8286 = vsel %vm3612, %v8284, %v8285
        %v8287 = vrot.slane %v8202, 7
        %v8288 = vrot.slane %v8203, 7
        %v8289 = vsel %vm3612, %v8287, %v8288
        %v8290 = vrot.slane %v8204, 7
        %v8291 = vrot.slane %v8205, 7
        %v8292 = vsel %vm3612, %v8290, %v8291
        %v8293 = vrot.slane %v8206, 7
        %v8294 = vrot.slane %v8207, 7
        %v8295 = vsel %vm3612, %v8293, %v8294
        %v8296 = vrot.slane %v8208, 7
        %v8297 = vrot.slane %v8209, 7
        %v8298 = vsel %vm3612, %v8296, %v8297
        %v8299 = vrot.slane %v8210, 7
        %v8300 = vrot.slane %v8211, 7
        %v8301 = vsel %vm3612, %v8299, %v8300
        %v8356 = vsel %vm3612, -3.4028235e+38, %v8248
        %v8357 = vsel %vm3612, -3.4028235e+38, %v8251
        %v8358 = vsel %vm3612, -3.4028235e+38, %v8254
        %v8359 = vsel %vm3612, -3.4028235e+38, %v8257
        %v8360 = vsel %vm3612, -3.4028235e+38, %v8260
        %v8361 = vsel %vm3612, -3.4028235e+38, %v8263
        %v8362 = vsel %vm3612, -3.4028235e+38, %v8266
        %v8363 = vsel %vm3612, -3.4028235e+38, %v8269
        %v8364 = vsel %vm3612, -3.4028235e+38, %v8272
        %v8365 = vsel %vm3612, -3.4028235e+38, %v8275
        %v8366 = vsel %vm3612, -3.4028235e+38, %v8278
        %v8367 = vsel %vm3612, -3.4028235e+38, %v8281
        %v8368 = vsel %vm3612, -3.4028235e+38, %v8284
        %v8369 = vsel %vm3612, -3.4028235e+38, %v8287
        %v8370 = vsel %vm3612, -3.4028235e+38, %v8290
        %v8371 = vsel %vm3612, -3.4028235e+38, %v8293
        %v8372 = vsel %vm3612, -3.4028235e+38, %v8296
        %v8373 = vsel %vm3612, -3.4028235e+38, %v8299
        %v8374 = vsel %vm3612, %v8249, -3.4028235e+38
        %v8375 = vsel %vm3612, %v8252, -3.4028235e+38
        %v8376 = vsel %vm3612, %v8255, -3.4028235e+38
        %v8377 = vsel %vm3612, %v8258, -3.4028235e+38
        %v8378 = vsel %vm3612, %v8261, -3.4028235e+38
        %v8379 = vsel %vm3612, %v8264, -3.4028235e+38
        %v8380 = vsel %vm3612, %v8267, -3.4028235e+38
        %v8381 = vsel %vm3612, %v8270, -3.4028235e+38
        %v8382 = vsel %vm3612, %v8273, -3.4028235e+38
        %v8383 = vsel %vm3612, %v8276, -3.4028235e+38
        %v8384 = vsel %vm3612, %v8279, -3.4028235e+38
        %v8385 = vsel %vm3612, %v8282, -3.4028235e+38
        %v8386 = vsel %vm3612, %v8285, -3.4028235e+38
        %v8387 = vsel %vm3612, %v8288, -3.4028235e+38
        %v8388 = vsel %vm3612, %v8291, -3.4028235e+38
        %v8389 = vsel %vm3612, %v8294, -3.4028235e+38
        %v8390 = vsel %vm3612, %v8297, -3.4028235e+38
        %v8391 = vsel %vm3612, %v8300, -3.4028235e+38
        %vm8428 = vcmask 1046528
        %v8429 = vrot.slane %v8356, 1
        %v8430 = vrot.slane %v8250, 1
        %v8431 = vsel %vm8428, %v8429, %v8430
        %v8432 = vrot.slane %v8374, 1
        %v8433 = vsel %vm8428, %v8430, %v8432
        %v8434 = vrot.slane %v8357, 1
        %v8435 = vrot.slane %v8253, 1
        %v8436 = vsel %vm8428, %v8434, %v8435
        %v8437 = vrot.slane %v8375, 1
        %v8438 = vsel %vm8428, %v8435, %v8437
        %v8439 = vrot.slane %v8358, 1
        %v8440 = vrot.slane %v8256, 1
        %v8441 = vsel %vm8428, %v8439, %v8440
        %v8442 = vrot.slane %v8376, 1
        %v8443 = vsel %vm8428, %v8440, %v8442
        %v8444 = vrot.slane %v8359, 1
        %v8445 = vrot.slane %v8259, 1
        %v8446 = vsel %vm8428, %v8444, %v8445
        %v8447 = vrot.slane %v8377, 1
        %v8448 = vsel %vm8428, %v8445, %v8447
        %v8449 = vrot.slane %v8360, 1
        %v8450 = vrot.slane %v8262, 1
        %v8451 = vsel %vm8428, %v8449, %v8450
        %v8452 = vrot.slane %v8378, 1
        %v8453 = vsel %vm8428, %v8450, %v8452
        %v8454 = vrot.slane %v8361, 1
        %v8455 = vrot.slane %v8265, 1
        %v8456 = vsel %vm8428, %v8454, %v8455
        %v8457 = vrot.slane %v8379, 1
        %v8458 = vsel %vm8428, %v8455, %v8457
        %v8459 = vrot.slane %v8362, 1
        %v8460 = vrot.slane %v8268, 1
        %v8461 = vsel %vm8428, %v8459, %v8460
        %v8462 = vrot.slane %v8380, 1
        %v8463 = vsel %vm8428, %v8460, %v8462
        %v8464 = vrot.slane %v8363, 1
        %v8465 = vrot.slane %v8271, 1
        %v8466 = vsel %vm8428, %v8464, %v8465
        %v8467 = vrot.slane %v8381, 1
        %v8468 = vsel %vm8428, %v8465, %v8467
        %v8469 = vrot.slane %v8364, 1
        %v8470 = vrot.slane %v8274, 1
        %v8471 = vsel %vm8428, %v8469, %v8470
        %v8472 = vrot.slane %v8382, 1
        %v8473 = vsel %vm8428, %v8470, %v8472
        %v8474 = vrot.slane %v8365, 1
        %v8475 = vrot.slane %v8277, 1
        %v8476 = vsel %vm8428, %v8474, %v8475
        %v8477 = vrot.slane %v8383, 1
        %v8478 = vsel %vm8428, %v8475, %v8477
        %v8479 = vrot.slane %v8366, 1
        %v8480 = vrot.slane %v8280, 1
        %v8481 = vsel %vm8428, %v8479, %v8480
        %v8482 = vrot.slane %v8384, 1
        %v8483 = vsel %vm8428, %v8480, %v8482
        %v8484 = vrot.slane %v8367, 1
        %v8485 = vrot.slane %v8283, 1
        %v8486 = vsel %vm8428, %v8484, %v8485
        %v8487 = vrot.slane %v8385, 1
        %v8488 = vsel %vm8428, %v8485, %v8487
        %v8489 = vrot.slane %v8368, 1
        %v8490 = vrot.slane %v8286, 1
        %v8491 = vsel %vm8428, %v8489, %v8490
        %v8492 = vrot.slane %v8386, 1
        %v8493 = vsel %vm8428, %v8490, %v8492
        %v8494 = vrot.slane %v8369, 1
        %v8495 = vrot.slane %v8289, 1
        %v8496 = vsel %vm8428, %v8494, %v8495
        %v8497 = vrot.slane %v8387, 1
        %v8498 = vsel %vm8428, %v8495, %v8497
        %v8499 = vrot.slane %v8370, 1
        %v8500 = vrot.slane %v8292, 1
        %v8501 = vsel %vm8428, %v8499, %v8500
        %v8502 = vrot.slane %v8388, 1
        %v8503 = vsel %vm8428, %v8500, %v8502
        %v8504 = vrot.slane %v8371, 1
        %v8505 = vrot.slane %v8295, 1
        %v8506 = vsel %vm8428, %v8504, %v8505
        %v8507 = vrot.slane %v8389, 1
        %v8508 = vsel %vm8428, %v8505, %v8507
        %v8509 = vrot.slane %v8372, 1
        %v8510 = vrot.slane %v8298, 1
        %v8511 = vsel %vm8428, %v8509, %v8510
        %v8512 = vrot.slane %v8390, 1
        %v8513 = vsel %vm8428, %v8510, %v8512
        %v8514 = vrot.slane %v8373, 1
        %v8515 = vrot.slane %v8301, 1
        %v8516 = vsel %vm8428, %v8514, %v8515
        %v8517 = vrot.slane %v8391, 1
        %v8518 = vsel %vm8428, %v8515, %v8517
        %v8555 = vmax.f32 %v8356, %v8431
        %v8556 = vmax.f32 %v8250, %v8433
        %v8557 = vmax.f32 %v8357, %v8436
        %v8558 = vmax.f32 %v8253, %v8438
        %v8559 = vmax.f32 %v8358, %v8441
        %v8560 = vmax.f32 %v8256, %v8443
        %v8561 = vmax.f32 %v8359, %v8446
        %v8562 = vmax.f32 %v8259, %v8448
        %v8563 = vmax.f32 %v8360, %v8451
        %v8564 = vmax.f32 %v8262, %v8453
        %v8565 = vmax.f32 %v8361, %v8456
        %v8566 = vmax.f32 %v8265, %v8458
        %v8567 = vmax.f32 %v8362, %v8461
        %v8568 = vmax.f32 %v8268, %v8463
        %v8569 = vmax.f32 %v8363, %v8466
        %v8570 = vmax.f32 %v8271, %v8468
        %v8571 = vmax.f32 %v8364, %v8471
        %v8572 = vmax.f32 %v8274, %v8473
        %v8573 = vmax.f32 %v8365, %v8476
        %v8574 = vmax.f32 %v8277, %v8478
        %v8575 = vmax.f32 %v8366, %v8481
        %v8576 = vmax.f32 %v8280, %v8483
        %v8577 = vmax.f32 %v8367, %v8486
        %v8578 = vmax.f32 %v8283, %v8488
        %v8579 = vmax.f32 %v8368, %v8491
        %v8580 = vmax.f32 %v8286, %v8493
        %v8581 = vmax.f32 %v8369, %v8496
        %v8582 = vmax.f32 %v8289, %v8498
        %v8583 = vmax.f32 %v8370, %v8501
        %v8584 = vmax.f32 %v8292, %v8503
        %v8585 = vmax.f32 %v8371, %v8506
        %v8586 = vmax.f32 %v8295, %v8508
        %v8587 = vmax.f32 %v8372, %v8511
        %v8588 = vmax.f32 %v8298, %v8513
        %v8589 = vmax.f32 %v8373, %v8516
        %v8590 = vmax.f32 %v8301, %v8518
        %vm8591 = vcmask 1045504
        %v8592 = vrot.slane %v8356, 2
        %v8593 = vrot.slane %v8250, 2
        %v8594 = vsel %vm8591, %v8592, %v8593
        %v8595 = vrot.slane %v8374, 2
        %v8596 = vsel %vm8591, %v8593, %v8595
        %v8597 = vrot.slane %v8357, 2
        %v8598 = vrot.slane %v8253, 2
        %v8599 = vsel %vm8591, %v8597, %v8598
        %v8600 = vrot.slane %v8375, 2
        %v8601 = vsel %vm8591, %v8598, %v8600
        %v8602 = vrot.slane %v8358, 2
        %v8603 = vrot.slane %v8256, 2
        %v8604 = vsel %vm8591, %v8602, %v8603
        %v8605 = vrot.slane %v8376, 2
        %v8606 = vsel %vm8591, %v8603, %v8605
        %v8607 = vrot.slane %v8359, 2
        %v8608 = vrot.slane %v8259, 2
        %v8609 = vsel %vm8591, %v8607, %v8608
        %v8610 = vrot.slane %v8377, 2
        %v8611 = vsel %vm8591, %v8608, %v8610
        %v8612 = vrot.slane %v8360, 2
        %v8613 = vrot.slane %v8262, 2
        %v8614 = vsel %vm8591, %v8612, %v8613
        %v8615 = vrot.slane %v8378, 2
        %v8616 = vsel %vm8591, %v8613, %v8615
        %v8617 = vrot.slane %v8361, 2
        %v8618 = vrot.slane %v8265, 2
        %v8619 = vsel %vm8591, %v8617, %v8618
        %v8620 = vrot.slane %v8379, 2
        %v8621 = vsel %vm8591, %v8618, %v8620
        %v8622 = vrot.slane %v8362, 2
        %v8623 = vrot.slane %v8268, 2
        %v8624 = vsel %vm8591, %v8622, %v8623
        %v8625 = vrot.slane %v8380, 2
        %v8626 = vsel %vm8591, %v8623, %v8625
        %v8627 = vrot.slane %v8363, 2
        %v8628 = vrot.slane %v8271, 2
        %v8629 = vsel %vm8591, %v8627, %v8628
        %v8630 = vrot.slane %v8381, 2
        %v8631 = vsel %vm8591, %v8628, %v8630
        %v8632 = vrot.slane %v8364, 2
        %v8633 = vrot.slane %v8274, 2
        %v8634 = vsel %vm8591, %v8632, %v8633
        %v8635 = vrot.slane %v8382, 2
        %v8636 = vsel %vm8591, %v8633, %v8635
        %v8637 = vrot.slane %v8365, 2
        %v8638 = vrot.slane %v8277, 2
        %v8639 = vsel %vm8591, %v8637, %v8638
        %v8640 = vrot.slane %v8383, 2
        %v8641 = vsel %vm8591, %v8638, %v8640
        %v8642 = vrot.slane %v8366, 2
        %v8643 = vrot.slane %v8280, 2
        %v8644 = vsel %vm8591, %v8642, %v8643
        %v8645 = vrot.slane %v8384, 2
        %v8646 = vsel %vm8591, %v8643, %v8645
        %v8647 = vrot.slane %v8367, 2
        %v8648 = vrot.slane %v8283, 2
        %v8649 = vsel %vm8591, %v8647, %v8648
        %v8650 = vrot.slane %v8385, 2
        %v8651 = vsel %vm8591, %v8648, %v8650
        %v8652 = vrot.slane %v8368, 2
        %v8653 = vrot.slane %v8286, 2
        %v8654 = vsel %vm8591, %v8652, %v8653
        %v8655 = vrot.slane %v8386, 2
        %v8656 = vsel %vm8591, %v8653, %v8655
        %v8657 = vrot.slane %v8369, 2
        %v8658 = vrot.slane %v8289, 2
        %v8659 = vsel %vm8591, %v8657, %v8658
        %v8660 = vrot.slane %v8387, 2
        %v8661 = vsel %vm8591, %v8658, %v8660
        %v8662 = vrot.slane %v8370, 2
        %v8663 = vrot.slane %v8292, 2
        %v8664 = vsel %vm8591, %v8662, %v8663
        %v8665 = vrot.slane %v8388, 2
        %v8666 = vsel %vm8591, %v8663, %v8665
        %v8667 = vrot.slane %v8371, 2
        %v8668 = vrot.slane %v8295, 2
        %v8669 = vsel %vm8591, %v8667, %v8668
        %v8670 = vrot.slane %v8389, 2
        %v8671 = vsel %vm8591, %v8668, %v8670
        %v8672 = vrot.slane %v8372, 2
        %v8673 = vrot.slane %v8298, 2
        %v8674 = vsel %vm8591, %v8672, %v8673
        %v8675 = vrot.slane %v8390, 2
        %v8676 = vsel %vm8591, %v8673, %v8675
        %v8677 = vrot.slane %v8373, 2
        %v8678 = vrot.slane %v8301, 2
        %v8679 = vsel %vm8591, %v8677, %v8678
        %v8680 = vrot.slane %v8391, 2
        %v8681 = vsel %vm8591, %v8678, %v8680
        %v8718 = vmax.f32 %v8555, %v8594
        %v8719 = vmax.f32 %v8556, %v8596
        %v8720 = vmax.f32 %v8557, %v8599
        %v8721 = vmax.f32 %v8558, %v8601
        %v8722 = vmax.f32 %v8559, %v8604
        %v8723 = vmax.f32 %v8560, %v8606
        %v8724 = vmax.f32 %v8561, %v8609
        %v8725 = vmax.f32 %v8562, %v8611
        %v8726 = vmax.f32 %v8563, %v8614
        %v8727 = vmax.f32 %v8564, %v8616
        %v8728 = vmax.f32 %v8565, %v8619
        %v8729 = vmax.f32 %v8566, %v8621
        %v8730 = vmax.f32 %v8567, %v8624
        %v8731 = vmax.f32 %v8568, %v8626
        %v8732 = vmax.f32 %v8569, %v8629
        %v8733 = vmax.f32 %v8570, %v8631
        %v8734 = vmax.f32 %v8571, %v8634
        %v8735 = vmax.f32 %v8572, %v8636
        %v8736 = vmax.f32 %v8573, %v8639
        %v8737 = vmax.f32 %v8574, %v8641
        %v8738 = vmax.f32 %v8575, %v8644
        %v8739 = vmax.f32 %v8576, %v8646
        %v8740 = vmax.f32 %v8577, %v8649
        %v8741 = vmax.f32 %v8578, %v8651
        %v8742 = vmax.f32 %v8579, %v8654
        %v8743 = vmax.f32 %v8580, %v8656
        %v8744 = vmax.f32 %v8581, %v8659
        %v8745 = vmax.f32 %v8582, %v8661
        %v8746 = vmax.f32 %v8583, %v8664
        %v8747 = vmax.f32 %v8584, %v8666
        %v8748 = vmax.f32 %v8585, %v8669
        %v8749 = vmax.f32 %v8586, %v8671
        %v8750 = vmax.f32 %v8587, %v8674
        %v8751 = vmax.f32 %v8588, %v8676
        %v8752 = vmax.f32 %v8589, %v8679
        %v8753 = vmax.f32 %v8590, %v8681
        %v8754 = vmax.f32 %v8718, %v8720
        %v8755 = vmax.f32 %v8719, %v8721
        %v8756 = vmax.f32 %v8720, %v8722
        %v8757 = vmax.f32 %v8721, %v8723
        %v8758 = vmax.f32 %v8722, %v8724
        %v8759 = vmax.f32 %v8723, %v8725
        %v8760 = vmax.f32 %v8724, %v8726
        %v8761 = vmax.f32 %v8725, %v8727
        %v8762 = vmax.f32 %v8726, %v8728
        %v8763 = vmax.f32 %v8727, %v8729
        %v8764 = vmax.f32 %v8728, %v8730
        %v8765 = vmax.f32 %v8729, %v8731
        %v8766 = vmax.f32 %v8730, %v8732
        %v8767 = vmax.f32 %v8731, %v8733
        %v8768 = vmax.f32 %v8732, %v8734
        %v8769 = vmax.f32 %v8733, %v8735
        %v8770 = vmax.f32 %v8734, %v8736
        %v8771 = vmax.f32 %v8735, %v8737
        %v8772 = vmax.f32 %v8736, %v8738
        %v8773 = vmax.f32 %v8737, %v8739
        %v8774 = vmax.f32 %v8738, %v8740
        %v8775 = vmax.f32 %v8739, %v8741
        %v8776 = vmax.f32 %v8740, %v8742
        %v8777 = vmax.f32 %v8741, %v8743
        %v8778 = vmax.f32 %v8742, %v8744
        %v8779 = vmax.f32 %v8743, %v8745
        %v8780 = vmax.f32 %v8744, %v8746
        %v8781 = vmax.f32 %v8745, %v8747
        %v8782 = vmax.f32 %v8746, %v8748
        %v8783 = vmax.f32 %v8747, %v8749
        %v8784 = vmax.f32 %v8748, %v8750
        %v8785 = vmax.f32 %v8749, %v8751
        %v8786 = vmax.f32 %v8754, %v8722
        %v8787 = vmax.f32 %v8755, %v8723
        %v8788 = vmax.f32 %v8756, %v8724
        %v8789 = vmax.f32 %v8757, %v8725
        %v8790 = vmax.f32 %v8758, %v8726
        %v8791 = vmax.f32 %v8759, %v8727
        %v8792 = vmax.f32 %v8760, %v8728
        %v8793 = vmax.f32 %v8761, %v8729
        %v8794 = vmax.f32 %v8762, %v8730
        %v8795 = vmax.f32 %v8763, %v8731
        %v8796 = vmax.f32 %v8764, %v8732
        %v8797 = vmax.f32 %v8765, %v8733
        %v8798 = vmax.f32 %v8766, %v8734
        %v8799 = vmax.f32 %v8767, %v8735
        %v8800 = vmax.f32 %v8768, %v8736
        %v8801 = vmax.f32 %v8769, %v8737
        %v8802 = vmax.f32 %v8770, %v8738
        %v8803 = vmax.f32 %v8771, %v8739
        %v8804 = vmax.f32 %v8772, %v8740
        %v8805 = vmax.f32 %v8773, %v8741
        %v8806 = vmax.f32 %v8774, %v8742
        %v8807 = vmax.f32 %v8775, %v8743
        %v8808 = vmax.f32 %v8776, %v8744
        %v8809 = vmax.f32 %v8777, %v8745
        %v8810 = vmax.f32 %v8778, %v8746
        %v8811 = vmax.f32 %v8779, %v8747
        %v8812 = vmax.f32 %v8780, %v8748
        %v8813 = vmax.f32 %v8781, %v8749
        %v8814 = vmax.f32 %v8782, %v8750
        %v8815 = vmax.f32 %v8783, %v8751
        %v8816 = vmax.f32 %v8784, %v8752
        %v8817 = vmax.f32 %v8785, %v8753
        %v8818 = vpack.c.bf16 %v8787, %v8786
        %v8819 = vpack.c.bf16 %v8789, %v8788
        %v8820 = vpack.c.bf16 %v8791, %v8790
        %v8821 = vpack.c.bf16 %v8793, %v8792
        %v8822 = vpack.c.bf16 %v8795, %v8794
        %v8823 = vpack.c.bf16 %v8797, %v8796
        %v8824 = vpack.c.bf16 %v8799, %v8798
        %v8825 = vpack.c.bf16 %v8801, %v8800
        %v8826 = vpack.c.bf16 %v8803, %v8802
        %v8827 = vpack.c.bf16 %v8805, %v8804
        %v8828 = vpack.c.bf16 %v8807, %v8806
        %v8829 = vpack.c.bf16 %v8809, %v8808
        %v8830 = vpack.c.bf16 %v8811, %v8810
        %v8831 = vpack.c.bf16 %v8813, %v8812
        %v8832 = vpack.c.bf16 %v8815, %v8814
        %v8833 = vpack.c.bf16 %v8817, %v8816
        %v8834 = vld [vmem:[%s7] sm:$0x3]
        %v8835 = vld [vmem:[%s8] sm:$0x1]
        %v8837 = vlaneseq
        %v8838 = vshrl.u32 %v8837, 7
        %v8839 = vsub.s32 0, %v8838
        %v8840 = vrot.slane %v8835, %v8839
        %v8843 = vsel %vm648, %v8818, 0
        %v8846 = vsel %vm648, %v8819, 0
        %v8849 = vsel %vm648, %v8820, 0
        %v8852 = vsel %vm648, %v8821, 0
        %v8855 = vsel %vm648, %v8822, 0
        %v8858 = vsel %vm648, %v8823, 0
        %v8861 = vsel %vm648, %v8824, 0
        %v8864 = vsel %vm648, %v8825, 0
        %v8867 = vsel %vm648, %v8826, 0
        %v8870 = vsel %vm648, %v8827, 0
        %v8873 = vsel %vm648, %v8828, 0
        %v8876 = vsel %vm648, %v8829, 0
        %v8879 = vsel %vm648, %v8830, 0
        %v8882 = vsel %vm648, %v8831, 0
        %v8885 = vsel %vm648, %v8832, 0
        %v8888 = vsel %vm648, %v8833, 0
        %v8891 = vsel %vm709, %v8834, 0
        %8893 = vmatprep.subr.bf16.mxu0 0
        %8894 = vmatpush1.bf16.msra.mxu0 0
        %8895 = vmatprep.subr.bf16.mxu0 0
        %8896 = vmatpush1.bf16.msra.mxu0 0
        %8897 = vmatprep.subr.bf16.mxu0 0
        %8898 = vmatpush1.bf16.msra.mxu0 0
        %8899 = vmatprep.subr.bf16.mxu0 0
        %8900 = vmatpush1.bf16.msra.mxu0 0
        %8901 = vmatprep.subr.bf16.mxu0 0
        %8902 = vmatpush1.bf16.msra.mxu0 0
        %8903 = vmatprep.subr.bf16.mxu0 0
        %8904 = vmatpush1.bf16.msra.mxu0 0
        %8905 = vmatprep.subr.bf16.mxu0 0
        %8906 = vmatpush1.bf16.msra.mxu0 0
        %8907 = vmatprep.subr.bf16.mxu0 0
        %8908 = vmatpush1.bf16.msra.mxu0 %v8891
        %8909 = vmatprep.subr.bf16.mxu0 0
        %8910 = vmatpush2.bf16.msra.mxu0 0
        %8911 = vmatprep.subr.bf16.mxu0 0
        %8912 = vmatpush2.bf16.msra.mxu0 0
        %8913 = vmatprep.subr.bf16.mxu0 0
        %8914 = vmatpush2.bf16.msra.mxu0 0
        %8915 = vmatprep.subr.bf16.mxu0 0
        %8916 = vmatpush2.bf16.msra.mxu0 0
        %8917 = vmatprep.subr.bf16.mxu0 0
        %8918 = vmatpush2.bf16.msra.mxu0 0
        %8919 = vmatprep.subr.bf16.mxu0 0
        %8920 = vmatpush2.bf16.msra.mxu0 0
        %8921 = vmatprep.subr.bf16.mxu0 0
        %8922 = vmatpush2.bf16.msra.mxu0 0
        %8923 = vmatprep.subr.bf16.mxu0 0
        %8924 = vmatpush2.bf16.msra.mxu0 0
        %8925 = vmatprep.mubr.bf16.mxu0 0
        %8926 = vmatmul.mubr.bf16.gmra.mxu0 %v8843
        %v8927 = vpop.f32.mrf.mxu0
        %v8928 = vadd.f32 %v8840, %v8927
        %v8929 = vpop.f32.mrf.mxu0
        %v8930 = vpop.f32.mrf.mxu0
        %v8931 = vadd.f32 %v8840, %v8930
        %v8932 = vpop.f32.mrf.mxu0
        %8933 = vmatprep.mubr.bf16.mxu0 0
        %8934 = vmatmul.mubr.bf16.gmra.mxu0 %v8846
        %v8935 = vpop.f32.mrf.mxu0
        %v8936 = vadd.f32 %v8840, %v8935
        %v8937 = vpop.f32.mrf.mxu0
        %v8938 = vpop.f32.mrf.mxu0
        %v8939 = vadd.f32 %v8840, %v8938
        %v8940 = vpop.f32.mrf.mxu0
        %8941 = vmatprep.mubr.bf16.mxu0 0
        %8942 = vmatmul.mubr.bf16.gmra.mxu0 %v8849
        %v8943 = vpop.f32.mrf.mxu0
        %v8944 = vadd.f32 %v8840, %v8943
        %v8945 = vpop.f32.mrf.mxu0
        %v8946 = vpop.f32.mrf.mxu0
        %v8947 = vadd.f32 %v8840, %v8946
        %v8948 = vpop.f32.mrf.mxu0
        %8949 = vmatprep.mubr.bf16.mxu0 0
        %8950 = vmatmul.mubr.bf16.gmra.mxu0 %v8852
        %v8951 = vpop.f32.mrf.mxu0
        %v8952 = vadd.f32 %v8840, %v8951
        %v8953 = vpop.f32.mrf.mxu0
        %v8954 = vpop.f32.mrf.mxu0
        %v8955 = vadd.f32 %v8840, %v8954
        %v8956 = vpop.f32.mrf.mxu0
        %8957 = vmatprep.mubr.bf16.mxu0 0
        %8958 = vmatmul.mubr.bf16.gmra.mxu0 %v8855
        %v8959 = vpop.f32.mrf.mxu0
        %v8960 = vadd.f32 %v8840, %v8959
        %v8961 = vpop.f32.mrf.mxu0
        %v8962 = vpop.f32.mrf.mxu0
        %v8963 = vadd.f32 %v8840, %v8962
        %v8964 = vpop.f32.mrf.mxu0
        %8965 = vmatprep.mubr.bf16.mxu0 0
        %8966 = vmatmul.mubr.bf16.gmra.mxu0 %v8858
        %v8967 = vpop.f32.mrf.mxu0
        %v8968 = vadd.f32 %v8840, %v8967
        %v8969 = vpop.f32.mrf.mxu0
        %v8970 = vpop.f32.mrf.mxu0
        %v8971 = vadd.f32 %v8840, %v8970
        %v8972 = vpop.f32.mrf.mxu0
        %8973 = vmatprep.mubr.bf16.mxu0 0
        %8974 = vmatmul.mubr.bf16.gmra.mxu0 %v8861
        %v8975 = vpop.f32.mrf.mxu0
        %v8976 = vadd.f32 %v8840, %v8975
        %v8977 = vpop.f32.mrf.mxu0
        %v8978 = vpop.f32.mrf.mxu0
        %v8979 = vadd.f32 %v8840, %v8978
        %v8980 = vpop.f32.mrf.mxu0
        %8981 = vmatprep.mubr.bf16.mxu0 0
        %8982 = vmatmul.mubr.bf16.gmra.mxu0 %v8864
        %v8983 = vpop.f32.mrf.mxu0
        %v8984 = vadd.f32 %v8840, %v8983
        %v8985 = vpop.f32.mrf.mxu0
        %v8986 = vpop.f32.mrf.mxu0
        %v8987 = vadd.f32 %v8840, %v8986
        %v8988 = vpop.f32.mrf.mxu0
        %8989 = vmatprep.mubr.bf16.mxu0 0
        %8990 = vmatmul.mubr.bf16.gmra.mxu0 %v8867
        %v8991 = vpop.f32.mrf.mxu0
        %v8992 = vadd.f32 %v8840, %v8991
        %v8993 = vpop.f32.mrf.mxu0
        %v8994 = vpop.f32.mrf.mxu0
        %v8995 = vadd.f32 %v8840, %v8994
        %v8996 = vpop.f32.mrf.mxu0
        %8997 = vmatprep.mubr.bf16.mxu0 0
        %8998 = vmatmul.mubr.bf16.gmra.mxu0 %v8870
        %v8999 = vpop.f32.mrf.mxu0
        %v9000 = vadd.f32 %v8840, %v8999
        %v9001 = vpop.f32.mrf.mxu0
        %v9002 = vpop.f32.mrf.mxu0
        %v9003 = vadd.f32 %v8840, %v9002
        %v9004 = vpop.f32.mrf.mxu0
        %9005 = vmatprep.mubr.bf16.mxu0 0
        %9006 = vmatmul.mubr.bf16.gmra.mxu0 %v8873
        %v9007 = vpop.f32.mrf.mxu0
        %v9008 = vadd.f32 %v8840, %v9007
        %v9009 = vpop.f32.mrf.mxu0
        %v9010 = vpop.f32.mrf.mxu0
        %v9011 = vadd.f32 %v8840, %v9010
        %v9012 = vpop.f32.mrf.mxu0
        %9013 = vmatprep.mubr.bf16.mxu0 0
        %9014 = vmatmul.mubr.bf16.gmra.mxu0 %v8876
        %v9015 = vpop.f32.mrf.mxu0
        %v9016 = vadd.f32 %v8840, %v9015
        %v9017 = vpop.f32.mrf.mxu0
        %v9018 = vpop.f32.mrf.mxu0
        %v9019 = vadd.f32 %v8840, %v9018
        %v9020 = vpop.f32.mrf.mxu0
        %9021 = vmatprep.mubr.bf16.mxu0 0
        %9022 = vmatmul.mubr.bf16.gmra.mxu0 %v8879
        %v9023 = vpop.f32.mrf.mxu0
        %v9024 = vadd.f32 %v8840, %v9023
        %v9025 = vpop.f32.mrf.mxu0
        %v9026 = vpop.f32.mrf.mxu0
        %v9027 = vadd.f32 %v8840, %v9026
        %v9028 = vpop.f32.mrf.mxu0
        %9029 = vmatprep.mubr.bf16.mxu0 0
        %9030 = vmatmul.mubr.bf16.gmra.mxu0 %v8882
        %v9031 = vpop.f32.mrf.mxu0
        %v9032 = vadd.f32 %v8840, %v9031
        %v9033 = vpop.f32.mrf.mxu0
        %v9034 = vpop.f32.mrf.mxu0
        %v9035 = vadd.f32 %v8840, %v9034
        %v9036 = vpop.f32.mrf.mxu0
        %9037 = vmatprep.mubr.bf16.mxu0 0
        %9038 = vmatmul.mubr.bf16.gmra.mxu0 %v8885
        %v9039 = vpop.f32.mrf.mxu0
        %v9040 = vadd.f32 %v8840, %v9039
        %v9041 = vpop.f32.mrf.mxu0
        %v9042 = vpop.f32.mrf.mxu0
        %v9043 = vadd.f32 %v8840, %v9042
        %v9044 = vpop.f32.mrf.mxu0
        %9045 = vmatprep.mubr.bf16.mxu0 0
        %9046 = vmatmul.mubr.bf16.gmra.mxu0 %v8888
        %v9047 = vpop.f32.mrf.mxu0
        %v9048 = vadd.f32 %v8840, %v9047
        %v9049 = vpop.f32.mrf.mxu0
        %v9050 = vpop.f32.mrf.mxu0
        %v9051 = vadd.f32 %v8840, %v9050
        %v9052 = vpop.f32.mrf.mxu0
        %9053 = vdwg.mxu0
        %v9054 = vpack.c.bf16 %v8931, %v8928
        %v9055 = vpack.c.bf16 %v8939, %v8936
        %v9056 = vpack.c.bf16 %v8947, %v8944
        %v9057 = vpack.c.bf16 %v8955, %v8952
        %v9058 = vpack.c.bf16 %v8963, %v8960
        %v9059 = vpack.c.bf16 %v8971, %v8968
        %v9060 = vpack.c.bf16 %v8979, %v8976
        %v9061 = vpack.c.bf16 %v8987, %v8984
        %v9062 = vpack.c.bf16 %v8995, %v8992
        %v9063 = vpack.c.bf16 %v9003, %v9000
        %v9064 = vpack.c.bf16 %v9011, %v9008
        %v9065 = vpack.c.bf16 %v9019, %v9016
        %v9066 = vpack.c.bf16 %v9027, %v9024
        %v9067 = vpack.c.bf16 %v9035, %v9032
        %v9068 = vpack.c.bf16 %v9043, %v9040
        %v9069 = vpack.c.bf16 %v9051, %v9048
        %v9086 = vunpack.c.l.b16 %v9054
        %v9087 = vunpack.c.h.b16 %v9054
        %v9088 = vunpack.c.l.b16 %v9055
        %v9089 = vunpack.c.h.b16 %v9055
        %v9090 = vunpack.c.l.b16 %v9056
        %v9091 = vunpack.c.h.b16 %v9056
        %v9092 = vunpack.c.l.b16 %v9057
        %v9093 = vunpack.c.h.b16 %v9057
        %v9094 = vunpack.c.l.b16 %v9058
        %v9095 = vunpack.c.h.b16 %v9058
        %v9096 = vunpack.c.l.b16 %v9059
        %v9097 = vunpack.c.h.b16 %v9059
        %v9098 = vunpack.c.l.b16 %v9060
        %v9099 = vunpack.c.h.b16 %v9060
        %v9100 = vunpack.c.l.b16 %v9061
        %v9101 = vunpack.c.h.b16 %v9061
        %v9102 = vunpack.c.l.b16 %v9062
        %v9103 = vunpack.c.h.b16 %v9062
        %v9104 = vunpack.c.l.b16 %v9063
        %v9105 = vunpack.c.h.b16 %v9063
        %v9106 = vunpack.c.l.b16 %v9064
        %v9107 = vunpack.c.h.b16 %v9064
        %v9108 = vunpack.c.l.b16 %v9065
        %v9109 = vunpack.c.h.b16 %v9065
        %v9110 = vunpack.c.l.b16 %v9066
        %v9111 = vunpack.c.h.b16 %v9066
        %v9112 = vunpack.c.l.b16 %v9067
        %v9113 = vunpack.c.h.b16 %v9067
        %v9114 = vunpack.c.l.b16 %v9068
        %v9115 = vunpack.c.h.b16 %v9068
        %v9116 = vunpack.c.l.b16 %v9069
        %v9117 = vunpack.c.h.b16 %v9069
        %v9118 = vpack.c.b16 %v9086, %v9086
        %v9119 = vpack.c.b16 %v9087, %v9087
        %v9120 = vpack.c.b16 %v9088, %v9088
        %v9121 = vpack.c.b16 %v9089, %v9089
        %v9122 = vpack.c.b16 %v9090, %v9090
        %v9123 = vpack.c.b16 %v9091, %v9091
        %v9124 = vpack.c.b16 %v9092, %v9092
        %v9125 = vpack.c.b16 %v9093, %v9093
        %v9126 = vpack.c.b16 %v9094, %v9094
        %v9127 = vpack.c.b16 %v9095, %v9095
        %v9128 = vpack.c.b16 %v9096, %v9096
        %v9129 = vpack.c.b16 %v9097, %v9097
        %v9130 = vpack.c.b16 %v9098, %v9098
        %v9131 = vpack.c.b16 %v9099, %v9099
        %v9132 = vpack.c.b16 %v9100, %v9100
        %v9133 = vpack.c.b16 %v9101, %v9101
        %v9134 = vpack.c.b16 %v9102, %v9102
        %v9135 = vpack.c.b16 %v9103, %v9103
        %v9136 = vpack.c.b16 %v9104, %v9104
        %v9137 = vpack.c.b16 %v9105, %v9105
        %v9138 = vpack.c.b16 %v9106, %v9106
        %v9139 = vpack.c.b16 %v9107, %v9107
        %v9140 = vpack.c.b16 %v9108, %v9108
        %v9141 = vpack.c.b16 %v9109, %v9109
        %v9142 = vpack.c.b16 %v9110, %v9110
        %v9143 = vpack.c.b16 %v9111, %v9111
        %v9144 = vpack.c.b16 %v9112, %v9112
        %v9145 = vpack.c.b16 %v9113, %v9113
        %v9146 = vpack.c.b16 %v9114, %v9114
        %v9147 = vpack.c.b16 %v9115, %v9115
        %v9148 = vpack.c.b16 %v9116, %v9116
        %v9149 = vpack.c.b16 %v9117, %v9117
        %9182 = vst [vmem:[%s450 + $0xc] sm:$0xf] %v9118
        %9183 = vst [vmem:[%s450 + $0x1c] sm:$0xf] %v9119
        %9184 = vst [vmem:[%s450 + $0x2c] sm:$0xf] %v9120
        %9185 = vst [vmem:[%s450 + $0x3c] sm:$0xf] %v9121
        %9186 = vst [vmem:[%s450 + $0x4c] sm:$0xf] %v9122
        %9187 = vst [vmem:[%s450 + $0x5c] sm:$0xf] %v9123
        %9188 = vst [vmem:[%s450 + $0x6c] sm:$0xf] %v9124
        %9189 = vst [vmem:[%s450 + $0x7c] sm:$0xf] %v9125
        %9190 = vst [vmem:[%s450 + $0x8c] sm:$0xf] %v9126
        %9191 = vst [vmem:[%s450 + $0x9c] sm:$0xf] %v9127
        %9192 = vst [vmem:[%s450 + $0xac] sm:$0xf] %v9128
        %9193 = vst [vmem:[%s450 + $0xbc] sm:$0xf] %v9129
        %9194 = vst [vmem:[%s450 + $0xcc] sm:$0xf] %v9130
        %9195 = vst [vmem:[%s450 + $0xdc] sm:$0xf] %v9131
        %9196 = vst [vmem:[%s450 + $0xec] sm:$0xf] %v9132
        %9197 = vst [vmem:[%s450 + $0xfc] sm:$0xf] %v9133
        %9198 = vst [vmem:[%s450 + $0x10c] sm:$0xf] %v9134
        %9199 = vst [vmem:[%s450 + $0x11c] sm:$0xf] %v9135
        %9200 = vst [vmem:[%s450 + $0x12c] sm:$0xf] %v9136
        %9201 = vst [vmem:[%s450 + $0x13c] sm:$0xf] %v9137
        %9202 = vst [vmem:[%s450 + $0x14c] sm:$0xf] %v9138
        %9203 = vst [vmem:[%s450 + $0x15c] sm:$0xf] %v9139
        %9204 = vst [vmem:[%s450 + $0x16c] sm:$0xf] %v9140
        %9205 = vst [vmem:[%s450 + $0x17c] sm:$0xf] %v9141
        %9206 = vst [vmem:[%s450 + $0x18c] sm:$0xf] %v9142
        %9207 = vst [vmem:[%s450 + $0x19c] sm:$0xf] %v9143
        %9208 = vst [vmem:[%s450 + $0x1ac] sm:$0xf] %v9144
        %9209 = vst [vmem:[%s450 + $0x1bc] sm:$0xf] %v9145
        %9210 = vst [vmem:[%s450 + $0x1cc] sm:$0xf] %v9146
        %9211 = vst [vmem:[%s450 + $0x1dc] sm:$0xf] %v9147
        %9212 = vst [vmem:[%s450 + $0x1ec] sm:$0xf] %v9148
        %9213 = vst [vmem:[%s450 + $0x1fc] sm:$0xf] %v9149
        %v9214 = vadd.f32 %v1179, %v1182
        %v9215 = vadd.f32 %v9214, %v1185
        %v9216 = vadd.f32 %v9215, %v1188
        %v9217 = vadd.f32 %v9216, %v1191
        %v9218 = vadd.f32 %v9217, %v1194
        %v9219 = vadd.f32 %v9218, %v1197
        %v9220 = vadd.f32 %v9219, %v1200
        %v9221 = vadd.f32 %v9220, %v1203
        %v9222 = vadd.f32 %v9221, %v1206
        %v9223 = vadd.f32 %v9222, %v1209
        %v9224 = vadd.f32 %v9223, %v1212
        %v9225 = vadd.f32 %v9224, %v1215
        %v9226 = vadd.f32 %v9225, %v1218
        %v9227 = vadd.f32 %v9226, %v1221
        %v9228 = vadd.f32 %v9227, %v1224
        %v9229 = vadd.f32 %v9228, %v1227
        %v9230 = vadd.f32 %v9229, %v1230
        %v9231 = vadd.f32 %v9230, %v1233
        %v9232 = vadd.f32 %v9231, %v1236
        %v9233 = vadd.f32 %v9232, %v1239
        %v9234 = vadd.f32 %v9233, %v1242
        %v9235 = vadd.f32 %v9234, %v1245
        %v9236 = vadd.f32 %v9235, %v1248
        %v9237 = vadd.f32 %v9236, %v1251
        %v9238 = vadd.f32 %v9237, %v1254
        %v9239 = vadd.f32 %v9238, %v1257
        %v9240 = vadd.f32 %v9239, %v1260
        %v9241 = vadd.f32 %v9240, %v1263
        %v9242 = vadd.f32 %v9241, %v1266
        %v9243 = vadd.f32 %v9242, %v1269
        %v9244 = vadd.f32 %v9243, %v1272
        %v9245 = vrot.slane %v9244, 4
        %v9246 = vadd.f32 %v9244, %v9245
        %v9247 = vrot.slane %v9246, 2
        %v9248 = vadd.f32 %v9246, %v9247
        %v9249 = vrot.slane %v9248, 1
        %v9250 = vadd.f32 %v9248, %v9249
        %v9251 = vadd.f32 %v3266, %v3269
        %v9252 = vadd.f32 %v9251, %v3274
        %v9253 = vadd.f32 %v9252, %v3277
        %v9254 = vadd.f32 %v9253, %v3282
        %v9255 = vadd.f32 %v9254, %v3285
        %v9256 = vadd.f32 %v9255, %v3290
        %v9257 = vadd.f32 %v9256, %v3293
        %v9258 = vadd.f32 %v9257, %v3298
        %v9259 = vadd.f32 %v9258, %v3301
        %v9260 = vadd.f32 %v9259, %v3306
        %v9261 = vadd.f32 %v9260, %v3309
        %v9262 = vadd.f32 %v9261, %v3314
        %v9263 = vadd.f32 %v9262, %v3317
        %v9264 = vadd.f32 %v9263, %v3322
        %v9265 = vadd.f32 %v9264, %v3325
        %v9266 = vadd.f32 %v9265, %v3330
        %v9267 = vadd.f32 %v9266, %v3333
        %v9268 = vadd.f32 %v9267, %v3338
        %v9269 = vadd.f32 %v9268, %v3341
        %v9270 = vadd.f32 %v9269, %v3346
        %v9271 = vadd.f32 %v9270, %v3349
        %v9272 = vadd.f32 %v9271, %v3354
        %v9273 = vadd.f32 %v9272, %v3357
        %v9274 = vadd.f32 %v9273, %v3362
        %v9275 = vadd.f32 %v9274, %v3365
        %v9276 = vadd.f32 %v9275, %v3370
        %v9277 = vadd.f32 %v9276, %v3373
        %v9278 = vadd.f32 %v9277, %v3378
        %v9279 = vadd.f32 %v9278, %v3381
        %v9280 = vadd.f32 %v9279, %v3386
        %v9281 = vadd.f32 %v9280, %v3389
        %v9282 = vrot.slane %v9281, 4
        %v9283 = vadd.f32 %v9281, %v9282
        %v9284 = vrot.slane %v9283, 2
        %v9285 = vadd.f32 %v9283, %v9284
        %v9286 = vrot.slane %v9285, 1
        %v9287 = vadd.f32 %v9285, %v9286
        %v9288 = vadd.f32 %v7890, %v7893
        %v9289 = vadd.f32 %v9288, %v7898
        %v9290 = vadd.f32 %v9289, %v7901
        %v9291 = vadd.f32 %v9290, %v7906
        %v9292 = vadd.f32 %v9291, %v7909
        %v9293 = vadd.f32 %v9292, %v7914
        %v9294 = vadd.f32 %v9293, %v7917
        %v9295 = vadd.f32 %v9294, %v7922
        %v9296 = vadd.f32 %v9295, %v7925
        %v9297 = vadd.f32 %v9296, %v7930
        %v9298 = vadd.f32 %v9297, %v7933
        %v9299 = vadd.f32 %v9298, %v7938
        %v9300 = vadd.f32 %v9299, %v7941
        %v9301 = vadd.f32 %v9300, %v7946
        %v9302 = vadd.f32 %v9301, %v7949
        %v9303 = vadd.f32 %v9302, %v7954
        %v9304 = vadd.f32 %v9303, %v7957
        %v9305 = vadd.f32 %v9304, %v7962
        %v9306 = vadd.f32 %v9305, %v7965
        %v9307 = vadd.f32 %v9306, %v7970
        %v9308 = vadd.f32 %v9307, %v7973
        %v9309 = vadd.f32 %v9308, %v7978
        %v9310 = vadd.f32 %v9309, %v7981
        %v9311 = vadd.f32 %v9310, %v7986
        %v9312 = vadd.f32 %v9311, %v7989
        %v9313 = vadd.f32 %v9312, %v7994
        %v9314 = vadd.f32 %v9313, %v7997
        %v9315 = vadd.f32 %v9314, %v8002
        %v9316 = vadd.f32 %v9315, %v8005
        %v9317 = vadd.f32 %v9316, %v8010
        %v9318 = vadd.f32 %v9317, %v8013
        %v9319 = vrot.slane %v9318, 4
        %v9320 = vadd.f32 %v9318, %v9319
        %v9321 = vrot.slane %v9320, 2
        %v9322 = vadd.f32 %v9320, %v9321
        %v9323 = vrot.slane %v9322, 1
        %v9324 = vadd.f32 %v9322, %v9323
        %v9325 = vadd.f32 %v8928, %v8931
        %v9326 = vadd.f32 %v9325, %v8936
        %v9327 = vadd.f32 %v9326, %v8939
        %v9328 = vadd.f32 %v9327, %v8944
        %v9329 = vadd.f32 %v9328, %v8947
        %v9330 = vadd.f32 %v9329, %v8952
        %v9331 = vadd.f32 %v9330, %v8955
        %v9332 = vadd.f32 %v9331, %v8960
        %v9333 = vadd.f32 %v9332, %v8963
        %v9334 = vadd.f32 %v9333, %v8968
        %v9335 = vadd.f32 %v9334, %v8971
        %v9336 = vadd.f32 %v9335, %v8976
        %v9337 = vadd.f32 %v9336, %v8979
        %v9338 = vadd.f32 %v9337, %v8984
        %v9339 = vadd.f32 %v9338, %v8987
        %v9340 = vadd.f32 %v9339, %v8992
        %v9341 = vadd.f32 %v9340, %v8995
        %v9342 = vadd.f32 %v9341, %v9000
        %v9343 = vadd.f32 %v9342, %v9003
        %v9344 = vadd.f32 %v9343, %v9008
        %v9345 = vadd.f32 %v9344, %v9011
        %v9346 = vadd.f32 %v9345, %v9016
        %v9347 = vadd.f32 %v9346, %v9019
        %v9348 = vadd.f32 %v9347, %v9024
        %v9349 = vadd.f32 %v9348, %v9027
        %v9350 = vadd.f32 %v9349, %v9032
        %v9351 = vadd.f32 %v9350, %v9035
        %v9352 = vadd.f32 %v9351, %v9040
        %v9353 = vadd.f32 %v9352, %v9043
        %v9354 = vadd.f32 %v9353, %v9048
        %v9355 = vadd.f32 %v9354, %v9051
        %v9356 = vrot.slane %v9355, 4
        %v9357 = vadd.f32 %v9355, %v9356
        %v9358 = vrot.slane %v9357, 2
        %v9359 = vadd.f32 %v9357, %v9358
        %v9360 = vrot.slane %v9359, 1
        %v9361 = vadd.f32 %v9359, %v9360
        %v9366 = vcombine.low %v9250, %v9287
        %v9367 = vcombine.low %v9324, %v9361
        %v9369 = vunpack.c.l.s4 1966171168
        %v9370 = vunpack.c.0.s8 %v9369
        %v9371 = vlaneseq
        %v9372 = vshrl.u32 %v9371, 7
        %v9373 = vsub.s32 %v9370, %v9372
        %v9374 = vrot.slane %v9366, %v9373
        %v9376 = vunpack.c.l.s4 1966171168
        %v9377 = vunpack.c.0.s8 %v9376
        %v9378 = vlaneseq
        %v9379 = vshrl.u32 %v9378, 7
        %v9380 = vsub.s32 %v9377, %v9379
        %v9381 = vrot.slane %v9367, %v9380
        %v9382 = vcombine.low %v9374, %v9381
        %v9384 = vunpack.c.l.s4 1966171168
        %v9385 = vunpack.c.0.s8 %v9384
        %v9386 = vlaneseq
        %v9387 = vshrl.u32 %v9386, 7
        %v9388 = vsub.s32 %v9385, %v9387
        %v9389 = vrot.slane %v9382, %v9388
        %v9391 = vlaneseq
        %vm9392 = vcmp.ge.s32.totalorder %v9391, 0
        %vm9393 = vcmp.lt.s32.totalorder %v9391, 512
        %vm9394 = vmand %vm9392, %vm9393
        %9395 = vst.msk [vmem:[%s459] sm:$0xf] %vm9394, %v9389
        %v9396 = vmul.f32 %v1179, %v1179
        %v9397 = vmul.f32 %v1182, %v1182
        %v9398 = vmul.f32 %v1185, %v1185
        %v9399 = vmul.f32 %v1188, %v1188
        %v9400 = vmul.f32 %v1191, %v1191
        %v9401 = vmul.f32 %v1194, %v1194
        %v9402 = vmul.f32 %v1197, %v1197
        %v9403 = vmul.f32 %v1200, %v1200
        %v9404 = vmul.f32 %v1203, %v1203
        %v9405 = vmul.f32 %v1206, %v1206
        %v9406 = vmul.f32 %v1209, %v1209
        %v9407 = vmul.f32 %v1212, %v1212
        %v9408 = vmul.f32 %v1215, %v1215
        %v9409 = vmul.f32 %v1218, %v1218
        %v9410 = vmul.f32 %v1221, %v1221
        %v9411 = vmul.f32 %v1224, %v1224
        %v9412 = vmul.f32 %v1227, %v1227
        %v9413 = vmul.f32 %v1230, %v1230
        %v9414 = vmul.f32 %v1233, %v1233
        %v9415 = vmul.f32 %v1236, %v1236
        %v9416 = vmul.f32 %v1239, %v1239
        %v9417 = vmul.f32 %v1242, %v1242
        %v9418 = vmul.f32 %v1245, %v1245
        %v9419 = vmul.f32 %v1248, %v1248
        %v9420 = vmul.f32 %v1251, %v1251
        %v9421 = vmul.f32 %v1254, %v1254
        %v9422 = vmul.f32 %v1257, %v1257
        %v9423 = vmul.f32 %v1260, %v1260
        %v9424 = vmul.f32 %v1263, %v1263
        %v9425 = vmul.f32 %v1266, %v1266
        %v9426 = vmul.f32 %v1269, %v1269
        %v9427 = vmul.f32 %v1272, %v1272
        %v9428 = vadd.f32 %v9396, %v9397
        %v9429 = vadd.f32 %v9428, %v9398
        %v9430 = vadd.f32 %v9429, %v9399
        %v9431 = vadd.f32 %v9430, %v9400
        %v9432 = vadd.f32 %v9431, %v9401
        %v9433 = vadd.f32 %v9432, %v9402
        %v9434 = vadd.f32 %v9433, %v9403
        %v9435 = vadd.f32 %v9434, %v9404
        %v9436 = vadd.f32 %v9435, %v9405
        %v9437 = vadd.f32 %v9436, %v9406
        %v9438 = vadd.f32 %v9437, %v9407
        %v9439 = vadd.f32 %v9438, %v9408
        %v9440 = vadd.f32 %v9439, %v9409
        %v9441 = vadd.f32 %v9440, %v9410
        %v9442 = vadd.f32 %v9441, %v9411
        %v9443 = vadd.f32 %v9442, %v9412
        %v9444 = vadd.f32 %v9443, %v9413
        %v9445 = vadd.f32 %v9444, %v9414
        %v9446 = vadd.f32 %v9445, %v9415
        %v9447 = vadd.f32 %v9446, %v9416
        %v9448 = vadd.f32 %v9447, %v9417
        %v9449 = vadd.f32 %v9448, %v9418
        %v9450 = vadd.f32 %v9449, %v9419
        %v9451 = vadd.f32 %v9450, %v9420
        %v9452 = vadd.f32 %v9451, %v9421
        %v9453 = vadd.f32 %v9452, %v9422
        %v9454 = vadd.f32 %v9453, %v9423
        %v9455 = vadd.f32 %v9454, %v9424
        %v9456 = vadd.f32 %v9455, %v9425
        %v9457 = vadd.f32 %v9456, %v9426
        %v9458 = vadd.f32 %v9457, %v9427
        %v9459 = vrot.slane %v9458, 4
        %v9460 = vadd.f32 %v9458, %v9459
        %v9461 = vrot.slane %v9460, 2
        %v9462 = vadd.f32 %v9460, %v9461
        %v9463 = vrot.slane %v9462, 1
        %v9464 = vadd.f32 %v9462, %v9463
        %v9465 = vmul.f32 %v3266, %v3266
        %v9466 = vmul.f32 %v3269, %v3269
        %v9467 = vmul.f32 %v3274, %v3274
        %v9468 = vmul.f32 %v3277, %v3277
        %v9469 = vmul.f32 %v3282, %v3282
        %v9470 = vmul.f32 %v3285, %v3285
        %v9471 = vmul.f32 %v3290, %v3290
        %v9472 = vmul.f32 %v3293, %v3293
        %v9473 = vmul.f32 %v3298, %v3298
        %v9474 = vmul.f32 %v3301, %v3301
        %v9475 = vmul.f32 %v3306, %v3306
        %v9476 = vmul.f32 %v3309, %v3309
        %v9477 = vmul.f32 %v3314, %v3314
        %v9478 = vmul.f32 %v3317, %v3317
        %v9479 = vmul.f32 %v3322, %v3322
        %v9480 = vmul.f32 %v3325, %v3325
        %v9481 = vmul.f32 %v3330, %v3330
        %v9482 = vmul.f32 %v3333, %v3333
        %v9483 = vmul.f32 %v3338, %v3338
        %v9484 = vmul.f32 %v3341, %v3341
        %v9485 = vmul.f32 %v3346, %v3346
        %v9486 = vmul.f32 %v3349, %v3349
        %v9487 = vmul.f32 %v3354, %v3354
        %v9488 = vmul.f32 %v3357, %v3357
        %v9489 = vmul.f32 %v3362, %v3362
        %v9490 = vmul.f32 %v3365, %v3365
        %v9491 = vmul.f32 %v3370, %v3370
        %v9492 = vmul.f32 %v3373, %v3373
        %v9493 = vmul.f32 %v3378, %v3378
        %v9494 = vmul.f32 %v3381, %v3381
        %v9495 = vmul.f32 %v3386, %v3386
        %v9496 = vmul.f32 %v3389, %v3389
        %v9497 = vadd.f32 %v9465, %v9466
        %v9498 = vadd.f32 %v9497, %v9467
        %v9499 = vadd.f32 %v9498, %v9468
        %v9500 = vadd.f32 %v9499, %v9469
        %v9501 = vadd.f32 %v9500, %v9470
        %v9502 = vadd.f32 %v9501, %v9471
        %v9503 = vadd.f32 %v9502, %v9472
        %v9504 = vadd.f32 %v9503, %v9473
        %v9505 = vadd.f32 %v9504, %v9474
        %v9506 = vadd.f32 %v9505, %v9475
        %v9507 = vadd.f32 %v9506, %v9476
        %v9508 = vadd.f32 %v9507, %v9477
        %v9509 = vadd.f32 %v9508, %v9478
        %v9510 = vadd.f32 %v9509, %v9479
        %v9511 = vadd.f32 %v9510, %v9480
        %v9512 = vadd.f32 %v9511, %v9481
        %v9513 = vadd.f32 %v9512, %v9482
        %v9514 = vadd.f32 %v9513, %v9483
        %v9515 = vadd.f32 %v9514, %v9484
        %v9516 = vadd.f32 %v9515, %v9485
        %v9517 = vadd.f32 %v9516, %v9486
        %v9518 = vadd.f32 %v9517, %v9487
        %v9519 = vadd.f32 %v9518, %v9488
        %v9520 = vadd.f32 %v9519, %v9489
        %v9521 = vadd.f32 %v9520, %v9490
        %v9522 = vadd.f32 %v9521, %v9491
        %v9523 = vadd.f32 %v9522, %v9492
        %v9524 = vadd.f32 %v9523, %v9493
        %v9525 = vadd.f32 %v9524, %v9494
        %v9526 = vadd.f32 %v9525, %v9495
        %v9527 = vadd.f32 %v9526, %v9496
        %v9528 = vrot.slane %v9527, 4
        %v9529 = vadd.f32 %v9527, %v9528
        %v9530 = vrot.slane %v9529, 2
        %v9531 = vadd.f32 %v9529, %v9530
        %v9532 = vrot.slane %v9531, 1
        %v9533 = vadd.f32 %v9531, %v9532
        %v9534 = vmul.f32 %v7890, %v7890
        %v9535 = vmul.f32 %v7893, %v7893
        %v9536 = vmul.f32 %v7898, %v7898
        %v9537 = vmul.f32 %v7901, %v7901
        %v9538 = vmul.f32 %v7906, %v7906
        %v9539 = vmul.f32 %v7909, %v7909
        %v9540 = vmul.f32 %v7914, %v7914
        %v9541 = vmul.f32 %v7917, %v7917
        %v9542 = vmul.f32 %v7922, %v7922
        %v9543 = vmul.f32 %v7925, %v7925
        %v9544 = vmul.f32 %v7930, %v7930
        %v9545 = vmul.f32 %v7933, %v7933
        %v9546 = vmul.f32 %v7938, %v7938
        %v9547 = vmul.f32 %v7941, %v7941
        %v9548 = vmul.f32 %v7946, %v7946
        %v9549 = vmul.f32 %v7949, %v7949
        %v9550 = vmul.f32 %v7954, %v7954
        %v9551 = vmul.f32 %v7957, %v7957
        %v9552 = vmul.f32 %v7962, %v7962
        %v9553 = vmul.f32 %v7965, %v7965
        %v9554 = vmul.f32 %v7970, %v7970
        %v9555 = vmul.f32 %v7973, %v7973
        %v9556 = vmul.f32 %v7978, %v7978
        %v9557 = vmul.f32 %v7981, %v7981
        %v9558 = vmul.f32 %v7986, %v7986
        %v9559 = vmul.f32 %v7989, %v7989
        %v9560 = vmul.f32 %v7994, %v7994
        %v9561 = vmul.f32 %v7997, %v7997
        %v9562 = vmul.f32 %v8002, %v8002
        %v9563 = vmul.f32 %v8005, %v8005
        %v9564 = vmul.f32 %v8010, %v8010
        %v9565 = vmul.f32 %v8013, %v8013
        %v9566 = vadd.f32 %v9534, %v9535
        %v9567 = vadd.f32 %v9566, %v9536
        %v9568 = vadd.f32 %v9567, %v9537
        %v9569 = vadd.f32 %v9568, %v9538
        %v9570 = vadd.f32 %v9569, %v9539
        %v9571 = vadd.f32 %v9570, %v9540
        %v9572 = vadd.f32 %v9571, %v9541
        %v9573 = vadd.f32 %v9572, %v9542
        %v9574 = vadd.f32 %v9573, %v9543
        %v9575 = vadd.f32 %v9574, %v9544
        %v9576 = vadd.f32 %v9575, %v9545
        %v9577 = vadd.f32 %v9576, %v9546
        %v9578 = vadd.f32 %v9577, %v9547
        %v9579 = vadd.f32 %v9578, %v9548
        %v9580 = vadd.f32 %v9579, %v9549
        %v9581 = vadd.f32 %v9580, %v9550
        %v9582 = vadd.f32 %v9581, %v9551
        %v9583 = vadd.f32 %v9582, %v9552
        %v9584 = vadd.f32 %v9583, %v9553
        %v9585 = vadd.f32 %v9584, %v9554
        %v9586 = vadd.f32 %v9585, %v9555
        %v9587 = vadd.f32 %v9586, %v9556
        %v9588 = vadd.f32 %v9587, %v9557
        %v9589 = vadd.f32 %v9588, %v9558
        %v9590 = vadd.f32 %v9589, %v9559
        %v9591 = vadd.f32 %v9590, %v9560
        %v9592 = vadd.f32 %v9591, %v9561
        %v9593 = vadd.f32 %v9592, %v9562
        %v9594 = vadd.f32 %v9593, %v9563
        %v9595 = vadd.f32 %v9594, %v9564
        %v9596 = vadd.f32 %v9595, %v9565
        %v9597 = vrot.slane %v9596, 4
        %v9598 = vadd.f32 %v9596, %v9597
        %v9599 = vrot.slane %v9598, 2
        %v9600 = vadd.f32 %v9598, %v9599
        %v9601 = vrot.slane %v9600, 1
        %v9602 = vadd.f32 %v9600, %v9601
        %v9603 = vmul.f32 %v8928, %v8928
        %v9604 = vmul.f32 %v8931, %v8931
        %v9605 = vmul.f32 %v8936, %v8936
        %v9606 = vmul.f32 %v8939, %v8939
        %v9607 = vmul.f32 %v8944, %v8944
        %v9608 = vmul.f32 %v8947, %v8947
        %v9609 = vmul.f32 %v8952, %v8952
        %v9610 = vmul.f32 %v8955, %v8955
        %v9611 = vmul.f32 %v8960, %v8960
        %v9612 = vmul.f32 %v8963, %v8963
        %v9613 = vmul.f32 %v8968, %v8968
        %v9614 = vmul.f32 %v8971, %v8971
        %v9615 = vmul.f32 %v8976, %v8976
        %v9616 = vmul.f32 %v8979, %v8979
        %v9617 = vmul.f32 %v8984, %v8984
        %v9618 = vmul.f32 %v8987, %v8987
        %v9619 = vmul.f32 %v8992, %v8992
        %v9620 = vmul.f32 %v8995, %v8995
        %v9621 = vmul.f32 %v9000, %v9000
        %v9622 = vmul.f32 %v9003, %v9003
        %v9623 = vmul.f32 %v9008, %v9008
        %v9624 = vmul.f32 %v9011, %v9011
        %v9625 = vmul.f32 %v9016, %v9016
        %v9626 = vmul.f32 %v9019, %v9019
        %v9627 = vmul.f32 %v9024, %v9024
        %v9628 = vmul.f32 %v9027, %v9027
        %v9629 = vmul.f32 %v9032, %v9032
        %v9630 = vmul.f32 %v9035, %v9035
        %v9631 = vmul.f32 %v9040, %v9040
        %v9632 = vmul.f32 %v9043, %v9043
        %v9633 = vmul.f32 %v9048, %v9048
        %v9634 = vmul.f32 %v9051, %v9051
        %v9635 = vadd.f32 %v9603, %v9604
        %v9636 = vadd.f32 %v9635, %v9605
        %v9637 = vadd.f32 %v9636, %v9606
        %v9638 = vadd.f32 %v9637, %v9607
        %v9639 = vadd.f32 %v9638, %v9608
        %v9640 = vadd.f32 %v9639, %v9609
        %v9641 = vadd.f32 %v9640, %v9610
        %v9642 = vadd.f32 %v9641, %v9611
        %v9643 = vadd.f32 %v9642, %v9612
        %v9644 = vadd.f32 %v9643, %v9613
        %v9645 = vadd.f32 %v9644, %v9614
        %v9646 = vadd.f32 %v9645, %v9615
        %v9647 = vadd.f32 %v9646, %v9616
        %v9648 = vadd.f32 %v9647, %v9617
        %v9649 = vadd.f32 %v9648, %v9618
        %v9650 = vadd.f32 %v9649, %v9619
        %v9651 = vadd.f32 %v9650, %v9620
        %v9652 = vadd.f32 %v9651, %v9621
        %v9653 = vadd.f32 %v9652, %v9622
        %v9654 = vadd.f32 %v9653, %v9623
        %v9655 = vadd.f32 %v9654, %v9624
        %v9656 = vadd.f32 %v9655, %v9625
        %v9657 = vadd.f32 %v9656, %v9626
        %v9658 = vadd.f32 %v9657, %v9627
        %v9659 = vadd.f32 %v9658, %v9628
        %v9660 = vadd.f32 %v9659, %v9629
        %v9661 = vadd.f32 %v9660, %v9630
        %v9662 = vadd.f32 %v9661, %v9631
        %v9663 = vadd.f32 %v9662, %v9632
        %v9664 = vadd.f32 %v9663, %v9633
        %v9665 = vadd.f32 %v9664, %v9634
        %v9666 = vrot.slane %v9665, 4
        %v9667 = vadd.f32 %v9665, %v9666
        %v9668 = vrot.slane %v9667, 2
        %v9669 = vadd.f32 %v9667, %v9668
        %v9670 = vrot.slane %v9669, 1
        %v9671 = vadd.f32 %v9669, %v9670
        %v9676 = vcombine.low %v9464, %v9533
        %v9677 = vcombine.low %v9602, %v9671
        %v9679 = vunpack.c.l.s4 1966171168
        %v9680 = vunpack.c.0.s8 %v9679
        %v9681 = vlaneseq
        %v9682 = vshrl.u32 %v9681, 7
        %v9683 = vsub.s32 %v9680, %v9682
        %v9684 = vrot.slane %v9676, %v9683
        %v9686 = vunpack.c.l.s4 1966171168
        %v9687 = vunpack.c.0.s8 %v9686
        %v9688 = vlaneseq
        %v9689 = vshrl.u32 %v9688, 7
        %v9690 = vsub.s32 %v9687, %v9689
        %v9691 = vrot.slane %v9677, %v9690
        %v9692 = vcombine.low %v9684, %v9691
        %v9694 = vunpack.c.l.s4 1966171168
        %v9695 = vunpack.c.0.s8 %v9694
        %v9696 = vlaneseq
        %v9697 = vshrl.u32 %v9696, 7
        %v9698 = vsub.s32 %v9695, %v9697
        %v9699 = vrot.slane %v9692, %v9698
        %9701 = vst.msk [vmem:[%s467] sm:$0xf] %vm9394, %v9699
        %s9702 = smul.u32 16, %s29
        %p9703 = scmp.lt.s32.totalorder %s28, 1
        %s9704 = scalar_select %p9703, %s28, 1
        %p9705 = scmp.lt.s32.totalorder %s9702, 15
        %s9706 = scalar_select %p9705, %s9702, 15
        %s9707 = smul.addr %s9706, 8
        %s9708 = smul.addr %s9704, 128
        %s9709 = sadd.s32 %s9707, %s9708
        %s9710 = smul.addr %s9709, 4
        %s9711 = scalar_lea.vmem %s9, %s9710
        %p9712 = scmp.lt.s32.totalorder %s28, 1
        %s9713 = scalar_select %p9712, %s28, 1
        %p9714 = scmp.lt.s32.totalorder %s29, 0
        %s9715 = scalar_select %p9714, %s29, 0
        %s9716 = smul.addr %s9715, 4
        %s9717 = smul.addr %s9713, 4
        %s9718 = sadd.s32 %s9716, %s9717
        %s9719 = scalar_lea.vmem %s10, %s9718
        %p9720 = scmp.lt.s32.totalorder %s28, 1
        %s9721 = scalar_select %p9720, %s28, 1
        %p9722 = scmp.lt.s32.totalorder %s29, 0
        %s9723 = scalar_select %p9722, %s29, 0
        %s9724 = smul.addr %s9723, 4
        %s9725 = smul.addr %s9721, 4
        %s9726 = sadd.s32 %s9724, %s9725
        %s9727 = scalar_lea.vmem %s11, %s9726
        // Predicated region
        $region61: #{mcm3_forward.2} parent=55 // pred_check
          %p9728 = pneg %p250
        $region62: #{mcm3_forward.2} parent=55 // pred_check_branch
          %9730 = sbr.rel (%p9728) target = $region64
        $region63: #{mcm3_forward.2} parent=55 // pred_region
          %s9731 = smul.u32 16, %s29
        $region64: #{mcm3_forward.2} parent=55 // pred_fallthru
          _
        // Predicated region
        $region65: #{mcm3_forward.2} parent=55 // pred_check
          %p9732 = pneg %p278
        $region66: #{mcm3_forward.2} parent=55 // pred_check_branch
          %9734 = sbr.rel (%p9732) target = $region68
        $region67: #{mcm3_forward.2} parent=55 // pred_region
          _
        $region68: #{mcm3_forward.2} parent=55 // pred_fallthru
          _
        // Predicated region
        $region69: #{mcm3_forward.2} parent=55 // pred_check
          %p9735 = pneg %p306
        $region70: #{mcm3_forward.2} parent=55 // pred_check_branch
          %9737 = sbr.rel (%p9735) target = $region72
        $region71: #{mcm3_forward.2} parent=55 // pred_region
          _
        $region72: #{mcm3_forward.2} parent=55 // pred_fallthru
          _
      $region56: #{mcm3_forward.2} parent=5 // pred_fallthru
        _
      %p9738 = scmp.le.s32.totalorder 2, %s19
      // Predicated region
      $region73: #{mcm3_forward.2} parent=5 // pred_check
        %p9739 = pneg %p9738
      $region74: #{mcm3_forward.2} parent=5 // pred_check_branch
        %9741 = sbr.rel (%p9739) target = $region76
      $region75: #{mcm3_forward.2} parent=5 // pred_region
        %s9742 = ssub.s32 %s19, 2
        // Predicated region
        $region77: #{mcm3_forward.2} parent=75 // pred_check
          %p9743 = pneg %p256
        $region78: #{mcm3_forward.2} parent=75 // pred_check_branch
          %9745 = sbr.rel (%p9743) target = $region80
        $region79: #{mcm3_forward.2} parent=75 // pred_region
          %s9746 = smul.u32 16, %s31
          %p9747 = scmp.lt.s32.totalorder %s30, 1
          %s9748 = scalar_select %p9747, %s30, 1
          %p9749 = scmp.lt.s32.totalorder %s9746, 15
          %s9750 = scalar_select %p9749, %s9746, 15
          %s9751 = smul.addr %s9750, 8
          %s9752 = smul.addr %s9748, 128
          %s9753 = sadd.s32 %s9751, %s9752
          %s9754 = smul.addr %s9753, 4
          %s9755 = scalar_lea.vmem %s9, %s9754
        $region80: #{mcm3_forward.2} parent=75 // pred_fallthru
          _
        // Predicated region
        $region81: #{mcm3_forward.2} parent=75 // pred_check
          %p9756 = pneg %p284
        $region82: #{mcm3_forward.2} parent=75 // pred_check_branch
          %9758 = sbr.rel (%p9756) target = $region84
        $region83: #{mcm3_forward.2} parent=75 // pred_region
          %p9759 = scmp.lt.s32.totalorder %s30, 1
          %s9760 = scalar_select %p9759, %s30, 1
          %p9761 = scmp.lt.s32.totalorder %s31, 0
          %s9762 = scalar_select %p9761, %s31, 0
          %s9763 = smul.addr %s9762, 4
          %s9764 = smul.addr %s9760, 4
          %s9765 = sadd.s32 %s9763, %s9764
          %s9766 = scalar_lea.vmem %s10, %s9765
        $region84: #{mcm3_forward.2} parent=75 // pred_fallthru
          _
        // Predicated region
        $region85: #{mcm3_forward.2} parent=75 // pred_check
          %p9767 = pneg %p312
        $region86: #{mcm3_forward.2} parent=75 // pred_check_branch
          %9769 = sbr.rel (%p9767) target = $region88
        $region87: #{mcm3_forward.2} parent=75 // pred_region
          %p9770 = scmp.lt.s32.totalorder %s30, 1
          %s9771 = scalar_select %p9770, %s30, 1
          %p9772 = scmp.lt.s32.totalorder %s31, 0
          %s9773 = scalar_select %p9772, %s31, 0
          %s9774 = smul.addr %s9773, 4
          %s9775 = smul.addr %s9771, 4
          %s9776 = sadd.s32 %s9774, %s9775
          %s9777 = scalar_lea.vmem %s11, %s9776
        $region88: #{mcm3_forward.2} parent=75 // pred_fallthru
          _
      $region76: #{mcm3_forward.2} parent=5 // pred_fallthru
        _
    $region6: #{mcm3_forward.2} parent=1 // loop_footer
      %s23 = sadd.s32 1, %s19
    $region7: #{mcm3_forward.2} parent=1 // loop_footer_branch
      %18 = sbr.rel target = $region3
    $region8: #{mcm3_forward.2} parent=1 // loop_exit
      _
    %9778 = vsyncpa [#allocation3], 1
    %s9779 = scalar_lea.sflag [#allocation3], 1
    %9780 = vsyncpa %s9779, 1

</llo_original>
